<compile_context>
chip_gen: v6e
topology: v6e:2x2x1
jax: 0.10.0
libtpu: 0.0.40
codegen_flags: <defaults>
</compile_context>

<pallas_src>
import functools

import jax
import jax.numpy as jnp
from jax import lax
from jax.experimental import pallas as pl
from jax.experimental.pallas import tpu as pltpu

EPS = 1e-5
SLOPE = 0.2   # LeakyReLU negative_slope
HALO = 8      # sublane-aligned halo row block for the 3x3 conv


def _leaky(z):
    return jnp.where(z >= 0, z, SLOPE * z)


def _cparams(sem):
    return pltpu.CompilerParams(
        dimension_semantics=sem,
        vmem_limit_bytes=48 * 1024 * 1024,  # headroom within v7x's 64 MiB VMEM
    )


def _divisor_tile(total, target, multiple=1):
    """Largest divisor of `total` that is <= target and a multiple of `multiple`."""
    for d in range(min(target, total), 0, -1):
        if total % d == 0 and d % multiple == 0:
            return d
    return total


# -----------------------------------------------------------------------------
# Stage 1: ConvTranspose2d(k=2,s=2) as ONE wide GEMM (4 taps fused) + BN1 partials
#   x: (TM, C1) bf16 ; w: (C1, 4*C1h) bf16 (columns ordered (di, dj, cout))
#   y: (TM, 4*C1h) f32 raw output ; st: (1, 2, 4*C1h) f32 per-tile (sum, sumsq)
# -----------------------------------------------------------------------------
def _stage1_kernel(x_ref, w_ref, y_ref, st_ref):
    y = jnp.dot(x_ref[...], w_ref[...], preferred_element_type=jnp.float32)
    y_ref[...] = y
    st_ref[0, 0:1, :] = jnp.sum(y, axis=0, keepdims=True)
    st_ref[0, 1:2, :] = jnp.sum(y * y, axis=0, keepdims=True)


# -----------------------------------------------------------------------------
# Stage 2: BN1+leaky (per tap) + tap de-interleave + split 1x1 conv + BN2 partials
#   y1: (R, W, 4*c1h) f32 raw stage-1 output      x2: (R, 2, W, 2, c2) bf16
#   s1/b1: (1, 1, c1h) f32    w2a: (c1h, oc) bf16    w2b: (c2, oc) bf16
#   y2: (R, 2, W, 2*oc) f32 (reinterprets to NHWC)   st: (1, 2, oc) f32
# -----------------------------------------------------------------------------
def _stage2_kernel(y1_ref, x2_ref, s1_ref, b1_ref, w2a_ref, w2b_ref,
                   y2_ref, st_ref):
    r = y1_ref.shape[0]
    w = y1_ref.shape[1]
    c1h = w2a_ref.shape[0]
    c2 = w2b_ref.shape[0]
    oc = w2a_ref.shape[1]

    s1 = s1_ref[...]
    b1 = b1_ref[...]
    w2a = w2a_ref[...]
    w2b = w2b_ref[...]

    ssum = jnp.zeros((1, oc), jnp.float32)
    ssq = jnp.zeros((1, oc), jnp.float32)
    for di in range(2):
        for dj in range(2):
            t = 2 * di + dj
            # finish stage 1 for this tap (f32), then bf16 for the MXU
            l1 = _leaky(y1_ref[:, :, t * c1h:(t + 1) * c1h] * s1 + b1)
            a = l1.astype(jnp.bfloat16).reshape(r * w, c1h)
            b = x2_ref[:, di, :, dj, :].reshape(r * w, c2)
            y = (jnp.dot(a, w2a, preferred_element_type=jnp.float32)
                 + jnp.dot(b, w2b, preferred_element_type=jnp.float32))
            ssum = ssum + jnp.sum(y, axis=0, keepdims=True)
            ssq = ssq + jnp.sum(y * y, axis=0, keepdims=True)
            y2_ref[:, di, :, dj * oc:(dj + 1) * oc] = y.reshape(r, w, oc)

    st_ref[0, 0:1, :] = ssum
    st_ref[0, 1:2, :] = ssq


# -----------------------------------------------------------------------------
# Stage 3: BN2+leaky + 3x3 conv (in-VMEM im2col, single long-K GEMM) + BN3 partials
#   top/bot: (1, HALO, Wo, C) f32 halo row blocks   mid: (1, TR, Wo, C) f32
#   s2/b2: (1, 1, C) f32   w3: (9*C, C) bf16 (rows ordered (ky, kx, cin))
#   y3: (1, TR, Wo, C) f32 raw conv output          st: (1, 1, 2, C) f32
#   scratch: lext (TR+2, Wo+2, C) bf16 ; xcat (TR*Wo, 9*C) bf16
# -----------------------------------------------------------------------------
def _stage3_kernel(top_ref, mid_ref, bot_ref, s2_ref, b2_ref, w3_ref,
                   y3_ref, st_ref, lext_ref, xcat_ref):
    rb = pl.program_id(1)
    nrb = pl.num_programs(1)
    tr = mid_ref.shape[1]
    wo = mid_ref.shape[2]
    c = mid_ref.shape[3]

    s2 = s2_ref[...]
    b2 = b2_ref[...]

    # zero-padded, BN2+leaky-activated tile (zeros = conv zero padding)
    lext_ref[...] = jnp.zeros(lext_ref.shape, lext_ref.dtype)
    lext_ref[1:tr + 1, 1:wo + 1, :] = _leaky(
        mid_ref[0] * s2 + b2).astype(jnp.bfloat16)

    @pl.when(rb > 0)
    def _():
        top = top_ref[0, HALO - 1:HALO, :, :]
        lext_ref[0:1, 1:wo + 1, :] = _leaky(top * s2 + b2).astype(jnp.bfloat16)

    @pl.when(rb < nrb - 1)
    def _():
        bot = bot_ref[0, 0:1, :, :]
        lext_ref[tr + 1:tr + 2, 1:wo + 1, :] = _leaky(
            bot * s2 + b2).astype(jnp.bfloat16)

    # in-VMEM im2col: 9 shifted views concatenated along K for one deep GEMM
    k = 0
    for ky in range(3):
        for kx in range(3):
            xcat_ref[:, k * c:(k + 1) * c] = (
                lext_ref[ky:ky + tr, kx:kx + wo, :].reshape(tr * wo, c))
            k += 1

    y = jnp.dot(xcat_ref[...], w3_ref[...], preferred_element_type=jnp.float32)
    y3_ref[...] = y.reshape(1, tr, wo, c)
    st_ref[0, 0, 0:1, :] = jnp.sum(y, axis=0, keepdims=True)
    st_ref[0, 0, 1:2, :] = jnp.sum(y * y, axis=0, keepdims=True)


# -----------------------------------------------------------------------------
# Final BN3 normalize + LeakyReLU (gridded elementwise pass)
# -----------------------------------------------------------------------------
def _bn_act_kernel(y_ref, s_ref, b_ref, o_ref):
    o_ref[...] = _leaky(y_ref[...] * s_ref[...] + b_ref[...])


def _bn_scale_shift(sum_, sumsq, count, gamma, beta):
    mean = sum_ / count
    var = jnp.maximum(sumsq / count - mean * mean, 0.0)
    inv = lax.rsqrt(var + EPS)
    scale = gamma * inv
    shift = beta - mean * scale
    return scale, shift


def unet_up_forward(params, inputs1_nchw, inputs2_nchw, *,
                    tm1=1024, rows_b=8, tr=32, tmd=2048):
    f32, bf16 = jnp.float32, jnp.bfloat16

    x1 = jnp.transpose(inputs1_nchw, (0, 2, 3, 1)).astype(f32)   # (N,H,W,C1)
    x2 = jnp.transpose(inputs2_nchw, (0, 2, 3, 1)).astype(f32)   # (N,2H,2W,C2)
    N, H, W, C1 = x1.shape
    c1h = C1 // 2
    Ho, Wo = 2 * H, 2 * W
    C2 = x2.shape[-1]
    oc = params["w2"].shape[0]
    M1 = N * H * W
    M2 = N * Ho * Wo

    assert W % 8 == 0 and Ho % 8 == 0, "spatial dims must be multiples of 8 / 4"

    # ---- weights: bf16 MXU operands, f32 accumulation ----
    # ConvTranspose2d weight (C1, c1h, 2, 2) -> (C1, 4*c1h), cols ordered (di, dj, co)
    w1 = jnp.transpose(params["wt"], (0, 2, 3, 1)).reshape(C1, 4 * c1h).astype(bf16)
    w2 = params["w2"][:, :, 0, 0]                        # (oc, c1h + C2)
    w2a = jnp.transpose(w2[:, :c1h]).astype(bf16)        # (c1h, oc)
    w2b = jnp.transpose(w2[:, c1h:]).astype(bf16)        # (C2, oc)
    # Conv2d 3x3 weight (oc, oc, 3, 3) -> (9*oc, oc), rows ordered (ky, kx, cin)
    w3 = jnp.transpose(params["w3"], (2, 3, 1, 0)).reshape(9 * oc, oc).astype(bf16)

    # ---- stage 1: fused 4-tap ConvTranspose GEMM + BN1 partial stats ----
    tm1 = _divisor_tile(M1, tm1)
    g1n = M1 // tm1
    x1_flat = x1.reshape(M1, C1).astype(bf16)
    y1_raw, st1 = pl.pallas_call(
        _stage1_kernel,
        grid=(g1n,),
        in_specs=[
            pl.BlockSpec((tm1, C1), lambda i: (i, 0)),
            pl.BlockSpec((C1, 4 * c1h), lambda i: (0, 0)),
        ],
        out_specs=(
            pl.BlockSpec((tm1, 4 * c1h), lambda i: (i, 0)),
            pl.BlockSpec((1, 2, 4 * c1h), lambda i: (i, 0, 0)),
        ),
        out_shape=(
            jax.ShapeDtypeStruct((M1, 4 * c1h), f32),
            jax.ShapeDtypeStruct((g1n, 2, 4 * c1h), f32),
        ),
        compiler_params=_cparams(("parallel",)),
    )(x1_flat, w1)

    st1 = jnp.sum(st1, axis=0).reshape(2, 4, c1h).sum(axis=1)   # fold tiles + taps
    scale1, shift1 = _bn_scale_shift(st1[0], st1[1], 4.0 * M1,
                                     params["g1"].reshape(-1),
                                     params["b1"].reshape(-1))
    s1_r = scale1.reshape(1, 1, c1h)
    b1_r = shift1.reshape(1, 1, c1h)

    # ---- stage 2: finish BN1 + de-interleave + split 1x1 conv + BN2 partials ----
    NH = N * H
    rows_b = _divisor_tile(NH, rows_b)
    g2n = NH // rows_b
    y1_v = y1_raw.reshape(NH, W, 4 * c1h)                 # free reinterpretation
    x2_v = x2.reshape(NH, 2, W, 2, C2).astype(bf16)       # free reinterpretation
    y2_raw, st2 = pl.pallas_call(
        _stage2_kernel,
        grid=(g2n,),
        in_specs=[
            pl.BlockSpec((rows_b, W, 4 * c1h), lambda i: (i, 0, 0)),
            pl.BlockSpec((rows_b, 2, W, 2, C2), lambda i: (i, 0, 0, 0, 0)),
            pl.BlockSpec((1, 1, c1h), lambda i: (0, 0, 0)),
            pl.BlockSpec((1, 1, c1h), lambda i: (0, 0, 0)),
            pl.BlockSpec((c1h, oc), lambda i: (0, 0)),
            pl.BlockSpec((C2, oc), lambda i: (0, 0)),
        ],
        out_specs=(
            pl.BlockSpec((rows_b, 2, W, 2 * oc), lambda i: (i, 0, 0, 0)),
            pl.BlockSpec((1, 2, oc), lambda i: (i, 0, 0)),
        ),
        out_shape=(
            jax.ShapeDtypeStruct((NH, 2, W, 2 * oc), f32),
            jax.ShapeDtypeStruct((g2n, 2, oc), f32),
        ),
        compiler_params=_cparams(("parallel",)),
    )(y1_v, x2_v, s1_r, b1_r, w2a, w2b)

    st2 = jnp.sum(st2, axis=0)
    scale2, shift2 = _bn_scale_shift(st2[0], st2[1], float(M2),
                                     params["g2"].reshape(-1),
                                     params["b2"].reshape(-1))
    s2_r = scale2.reshape(1, 1, oc)
    b2_r = shift2.reshape(1, 1, oc)

    # ---- stage 3: 3x3 conv with halo row blocks + in-VMEM im2col + BN3 partials ----
    y2_nhwc = y2_raw.reshape(N, Ho, Wo, oc)               # free reinterpretation
    tr = _divisor_tile(Ho, tr, multiple=HALO)
    nrb = Ho // tr
    nb8 = Ho // HALO
    trb = tr // HALO
    y3_raw, st3 = pl.pallas_call(
        _stage3_kernel,
        grid=(N, nrb),
        in_specs=[
            pl.BlockSpec((1, HALO, Wo, oc),
                         lambda n, r: (n, jnp.maximum(r * trb - 1, 0), 0, 0)),
            pl.BlockSpec((1, tr, Wo, oc), lambda n, r: (n, r, 0, 0)),
            pl.BlockSpec((1, HALO, Wo, oc),
                         lambda n, r: (n, jnp.minimum((r + 1) * trb, nb8 - 1), 0, 0)),
            pl.BlockSpec((1, 1, oc), lambda n, r: (0, 0, 0)),
            pl.BlockSpec((1, 1, oc), lambda n, r: (0, 0, 0)),
            pl.BlockSpec((9 * oc, oc), lambda n, r: (0, 0)),
        ],
        out_specs=(
            pl.BlockSpec((1, tr, Wo, oc), lambda n, r: (n, r, 0, 0)),
            pl.BlockSpec((1, 1, 2, oc), lambda n, r: (n, r, 0, 0)),
        ),
        out_shape=(
            jax.ShapeDtypeStruct((N, Ho, Wo, oc), f32),
            jax.ShapeDtypeStruct((N, nrb, 2, oc), f32),
        ),
        scratch_shapes=[
            pltpu.VMEM((tr + 2, Wo + 2, oc), jnp.bfloat16),
            pltpu.VMEM((tr * Wo, 9 * oc), jnp.bfloat16),
        ],
        compiler_params=_cparams(("parallel", "parallel")),
    )(y2_nhwc, y2_nhwc, y2_nhwc, s2_r, b2_r, w3)

    st3 = jnp.sum(st3, axis=(0, 1))
    scale3, shift3 = _bn_scale_shift(st3[0], st3[1], float(M2),
                                     params["g3"].reshape(-1),
                                     params["b3"].reshape(-1))

    # ---- final BN3 normalize + LeakyReLU ----
    tmd = _divisor_tile(M2, tmd)
    gdn = M2 // tmd
    y3_flat = y3_raw.reshape(M2, oc)
    out_flat = pl.pallas_call(
        _bn_act_kernel,
        grid=(gdn,),
        in_specs=[
            pl.BlockSpec((tmd, oc), lambda i: (i, 0)),
            pl.BlockSpec((1, oc), lambda i: (0, 0)),
            pl.BlockSpec((1, oc), lambda i: (0, 0)),
        ],
        out_specs=pl.BlockSpec((tmd, oc), lambda i: (i, 0)),
        out_shape=jax.ShapeDtypeStruct((M2, oc), f32),
        compiler_params=_cparams(("parallel",)),
    )(y3_flat, scale3.reshape(1, oc), shift3.reshape(1, oc))

    out = out_flat.reshape(N, Ho, Wo, oc)
    return jnp.transpose(out, (0, 3, 1, 2))   # back to NCHW


# ------------------------------ pure-JAX reference ----------------------------
def _bn_leaky_ref(y, gamma, beta):
    mean = jnp.mean(y, axis=(0, 1, 2))
    var = jnp.mean((y - mean) ** 2, axis=(0, 1, 2))
    z = (y - mean) * lax.rsqrt(var + EPS) * gamma + beta
    return jnp.where(z >= 0, z, SLOPE * z)


def _reference(params, inputs1_nchw, inputs2_nchw):
    x1 = jnp.transpose(inputs1_nchw, (0, 2, 3, 1))
    x2 = jnp.transpose(inputs2_nchw, (0, 2, 3, 1))
    N, H, W, C1 = x1.shape
    c1h = C1 // 2
    Ho, Wo = 2 * H, 2 * W
    y1 = jnp.einsum("nhwi,ioab->nhawbo", x1, params["wt"]).reshape(N, Ho, Wo, c1h)
    l1 = _bn_leaky_ref(y1, params["g1"], params["b1"])
    cat = jnp.concatenate([l1, x2], axis=-1)
    y2 = jnp.einsum("nhwc,oc->nhwo", cat, params["w2"][:, :, 0, 0])
    l2 = _bn_leaky_ref(y2, params["g2"], params["b2"])
    pad = jnp.pad(l2, ((0, 0), (1, 1), (1, 1), (0, 0)))
    y3 = sum(
        jnp.einsum("nhwc,oc->nhwo",
                   pad[:, ky:ky + Ho, kx:kx + Wo, :], params["w3"][:, :, ky, kx])
        for ky in range(3) for kx in range(3))
    out = _bn_leaky_ref(y3, params["g3"], params["b3"])
    return jnp.transpose(out, (0, 3, 1, 2))


if __name__ == "__main__":
    N, in_c1, in_c2, out_c, H, W = 2, 8, 4, 8, 16, 16
    c1h = in_c1 // 2

    key = jax.random.PRNGKey(0)
    ks = jax.random.split(key, 11)
    inputs1 = jax.random.normal(ks[0], (N, in_c1, H, W), jnp.float32)
    inputs2 = jax.random.normal(ks[1], (N, in_c2, 2 * H, 2 * W), jnp.float32)

    params = {
        # ConvTranspose2d weight: (in_channels, out_channels, kH, kW)
        "wt": 0.1 * jax.random.normal(ks[2], (in_c1, c1h, 2, 2), jnp.float32),
        "g1": 1.0 + 0.1 * jax.random.normal(ks[3], (c1h,), jnp.float32),
        "b1": 0.1 * jax.random.normal(ks[4], (c1h,), jnp.float32),
        # Conv2d 1x1 weight: (out_channels, in_channels, 1, 1)
        "w2": 0.1 * jax.random.normal(ks[5], (out_c, c1h + in_c2, 1, 1), jnp.float32),
        "g2": 1.0 + 0.1 * jax.random.normal(ks[6], (out_c,), jnp.float32),
        "b2": 0.1 * jax.random.normal(ks[7], (out_c,), jnp.float32),
        # Conv2d 3x3 weight: (out_channels, in_channels, 3, 3)
        "w3": 0.1 * jax.random.normal(ks[8], (out_c, out_c, 3, 3), jnp.float32),
        "g3": 1.0 + 0.1 * jax.random.normal(ks[9], (out_c,), jnp.float32),
        "b3": 0.1 * jax.random.normal(ks[10], (out_c,), jnp.float32),
    }

    # small tiles so every grid has multiple steps at these toy shapes
    fwd = jax.jit(functools.partial(unet_up_forward,
                                    tm1=128, rows_b=4, tr=8, tmd=256))
    out = jax.block_until_ready(fwd(params, inputs1, inputs2))

    assert out.shape == (N, out_c, 2 * H, 2 * W), out.shape
    assert bool(jnp.all(jnp.isfinite(out)))

    ref = _reference(params, inputs1, inputs2)
    max_err = float(jnp.max(jnp.abs(out - ref)))
    assert max_err < 0.15, f"max abs err vs f32 reference: {max_err}"
    print("KERNEL_OK")
</pallas_src>

<mosaic_0001>
module attributes {stable_mosaic.version = 11 : i64} {
  func.func @_stage1_kernel(%arg0: i32, %arg1: memref<128x8xbf16, #tpu.memory_space<vmem>>, %arg2: memref<8x16xbf16, #tpu.memory_space<vmem>>, %arg3: memref<128x16xf32, #tpu.memory_space<vmem>>, %arg4: memref<1x2x16xf32, #tpu.memory_space<vmem>>) attributes {dimension_semantics = [#tpu.dimension_semantics<parallel>], iteration_bounds = array<i64: 4>, scalar_prefetch = 0 : i64, scratch_operands = 0 : i64, tpu.core_type = #tpu.core_type<tc>, window_params = [{transform_indices = @transform_0, window_bounds = array<i64: 128, 8>}, {pipeline_mode = #tpu.pipeline_mode<synchronous>, transform_indices = @transform_1, window_bounds = array<i64: 8, 16>}, {transform_indices = @transform_2, window_bounds = array<i64: 128, 16>}, {transform_indices = @transform_3, window_bounds = array<i64: 1, 2, 16>}]} {
    %c0 = arith.constant 0 : index
    %c0_0 = arith.constant 0 : index
    %0 = vector.load %arg1[%c0, %c0_0] : memref<128x8xbf16, #tpu.memory_space<vmem>>, vector<128x8xbf16>
    %c0_1 = arith.constant 0 : index
    %c0_2 = arith.constant 0 : index
    %1 = vector.load %arg2[%c0_1, %c0_2] : memref<8x16xbf16, #tpu.memory_space<vmem>>, vector<8x16xbf16>
    %cst = arith.constant dense<0.000000e+00> : vector<128x16xf32>
    %2 = tpu.matmul %0, %1, %cst {dimension_numbers = #tpu.dot_dimension_numbers<[1], [0], [0], [1], [0, 0, 1, 1], [], []>} : vector<128x8xbf16>, vector<8x16xbf16>, vector<128x16xf32> -> vector<128x16xf32>
    %c0_3 = arith.constant 0 : index
    %c0_4 = arith.constant 0 : index
    %3 = vector.load %arg3[%c0_3, %c0_4] : memref<128x16xf32, #tpu.memory_space<vmem>>, vector<128x16xf32>
    tpu.vector_store %arg3[%c0_3, %c0_4], %2 {strides = array<i32>} : memref<128x16xf32, #tpu.memory_space<vmem>>, vector<128x16xf32>,
    %cst_5 = arith.constant dense<0.000000e+00> : vector<16xf32>
    %4 = vector.multi_reduction <add>, %2, %cst_5 [0] : vector<128x16xf32> to vector<16xf32>
    %5 = vector.shape_cast %4 : vector<16xf32> to vector<1x16xf32>
    %c0_6 = arith.constant 0 : index
    %c0_7 = arith.constant 0 : index
    %c0_8 = arith.constant 0 : index
    %6 = vector.load %arg4[%c0_6, %c0_7, %c0_8] : memref<1x2x16xf32, #tpu.memory_space<vmem>>, vector<1x1x16xf32>
    %7 = vector.shape_cast %6 : vector<1x1x16xf32> to vector<1x16xf32>
    %8 = vector.shape_cast %5 : vector<1x16xf32> to vector<1x1x16xf32>
    tpu.vector_store %arg4[%c0_6, %c0_7, %c0_8], %8 {strides = array<i32>} : memref<1x2x16xf32, #tpu.memory_space<vmem>>, vector<1x1x16xf32>,
    %9 = arith.mulf %2, %2 : vector<128x16xf32>
    %cst_9 = arith.constant dense<0.000000e+00> : vector<16xf32>
    %10 = vector.multi_reduction <add>, %9, %cst_9 [0] : vector<128x16xf32> to vector<16xf32>
    %11 = vector.shape_cast %10 : vector<16xf32> to vector<1x16xf32>
    %c0_10 = arith.constant 0 : index
    %c1 = arith.constant 1 : index
    %c0_11 = arith.constant 0 : index
    %12 = vector.load %arg4[%c0_10, %c1, %c0_11] : memref<1x2x16xf32, #tpu.memory_space<vmem>>, vector<1x1x16xf32>
    %13 = vector.shape_cast %12 : vector<1x1x16xf32> to vector<1x16xf32>
    %14 = vector.shape_cast %11 : vector<1x16xf32> to vector<1x1x16xf32>
    tpu.vector_store %arg4[%c0_10, %c1, %c0_11], %14 {strides = array<i32>} : memref<1x2x16xf32, #tpu.memory_space<vmem>>, vector<1x1x16xf32>,
    return
  }
  func.func @transform_0(%arg0: i32) -> (i32, i32) {
    %c0_i32 = arith.constant 0 : i32
    %c0_i32_0 = arith.constant 0 : i32
    return %arg0, %c0_i32 : i32, i32
  }
  func.func @transform_1(%arg0: i32) -> (i32, i32) {
    %c0_i32 = arith.constant 0 : i32
    %c0_i32_0 = arith.constant 0 : i32
    %c0_i32_1 = arith.constant 0 : i32
    return %c0_i32, %c0_i32_0 : i32, i32
  }
  func.func @transform_2(%arg0: i32) -> (i32, i32) {
    %c0_i32 = arith.constant 0 : i32
    %c0_i32_0 = arith.constant 0 : i32
    return %arg0, %c0_i32 : i32, i32
  }
  func.func @transform_3(%arg0: i32) -> (i32, i32, i32) {
    %c0_i32 = arith.constant 0 : i32
    %c0_i32_0 = arith.constant 0 : i32
    %c0_i32_1 = arith.constant 0 : i32
    return %arg0, %c0_i32, %c0_i32_0 : i32, i32, i32
  }
}

module attributes {stable_mosaic.version = 11 : i64} {
  func.func @_stage2_kernel(%arg0: i32, %arg1: memref<4x16x16xf32, #tpu.memory_space<vmem>>, %arg2: memref<4x2x16x2x4xbf16, #tpu.memory_space<vmem>>, %arg3: memref<1x1x4xf32, #tpu.memory_space<vmem>>, %arg4: memref<1x1x4xf32, #tpu.memory_space<vmem>>, %arg5: memref<4x8xbf16, #tpu.memory_space<vmem>>, %arg6: memref<4x8xbf16, #tpu.memory_space<vmem>>, %arg7: memref<4x2x16x16xf32, #tpu.memory_space<vmem>>, %arg8: memref<1x2x8xf32, #tpu.memory_space<vmem>>) attributes {dimension_semantics = [#tpu.dimension_semantics<parallel>], iteration_bounds = array<i64: 8>, scalar_prefetch = 0 : i64, scratch_operands = 0 : i64, tpu.core_type = #tpu.core_type<tc>, window_params = [{transform_indices = @transform_0, window_bounds = array<i64: 4, 16, 16>}, {transform_indices = @transform_1, window_bounds = array<i64: 4, 2, 16, 2, 4>}, {pipeline_mode = #tpu.pipeline_mode<synchronous>, transform_indices = @transform_2, window_bounds = array<i64: 1, 1, 4>}, {pipeline_mode = #tpu.pipeline_mode<synchronous>, transform_indices = @transform_3, window_bounds = array<i64: 1, 1, 4>}, {pipeline_mode = #tpu.pipeline_mode<synchronous>, transform_indices = @transform_4, window_bounds = array<i64: 4, 8>}, {pipeline_mode = #tpu.pipeline_mode<synchronous>, transform_indices = @transform_5, window_bounds = array<i64: 4, 8>}, {transform_indices = @transform_6, window_bounds = array<i64: 4, 2, 16, 16>}, {transform_indices = @transform_7, window_bounds = array<i64: 1, 2, 8>}]} {
    %c0 = arith.constant 0 : index
    %c0_0 = arith.constant 0 : index
    %c0_1 = arith.constant 0 : index
    %0 = vector.load %arg3[%c0, %c0_0, %c0_1] : memref<1x1x4xf32, #tpu.memory_space<vmem>>, vector<1x1x4xf32>
    %c0_2 = arith.constant 0 : index
    %c0_3 = arith.constant 0 : index
    %c0_4 = arith.constant 0 : index
    %1 = vector.load %arg4[%c0_2, %c0_3, %c0_4] : memref<1x1x4xf32, #tpu.memory_space<vmem>>, vector<1x1x4xf32>
    %c0_5 = arith.constant 0 : index
    %c0_6 = arith.constant 0 : index
    %2 = vector.load %arg5[%c0_5, %c0_6] : memref<4x8xbf16, #tpu.memory_space<vmem>>, vector<4x8xbf16>
    %c0_7 = arith.constant 0 : index
    %c0_8 = arith.constant 0 : index
    %3 = vector.load %arg6[%c0_7, %c0_8] : memref<4x8xbf16, #tpu.memory_space<vmem>>, vector<4x8xbf16>
    %cst = arith.constant 0.000000e+00 : f32
    %4 = vector.broadcast %cst : f32 to vector<1x8xf32>
    %cst_9 = arith.constant 0.000000e+00 : f32
    %5 = vector.broadcast %cst_9 : f32 to vector<1x8xf32>
    %c0_10 = arith.constant 0 : index
    %c0_11 = arith.constant 0 : index
    %c0_12 = arith.constant 0 : index
    %6 = vector.load %arg1[%c0_10, %c0_11, %c0_12] : memref<4x16x16xf32, #tpu.memory_space<vmem>>, vector<4x16x4xf32>
    %7 = vector.broadcast %0 : vector<1x1x4xf32> to vector<4x16x4xf32>
    %8 = arith.mulf %6, %7 : vector<4x16x4xf32>
    %9 = vector.broadcast %1 : vector<1x1x4xf32> to vector<4x16x4xf32>
    %10 = arith.addf %8, %9 : vector<4x16x4xf32>
    %cst_13 = arith.constant 0.000000e+00 : f32
    %11 = vector.broadcast %cst_13 : f32 to vector<4x16x4xf32>
    %12 = arith.cmpf oge, %10, %11 : vector<4x16x4xf32>
    %cst_14 = arith.constant 2.000000e-01 : f32
    %13 = vector.broadcast %cst_14 : f32 to vector<4x16x4xf32>
    %14 = arith.mulf %13, %10 : vector<4x16x4xf32>
    %15 = arith.select %12, %10, %14 : vector<4x16x4xi1>, vector<4x16x4xf32>
    %16 = arith.truncf %15 : vector<4x16x4xf32> to vector<4x16x4xbf16>
    %17 = vector.shape_cast %16 : vector<4x16x4xbf16> to vector<64x4xbf16>
    %c0_15 = arith.constant 0 : index
    %c0_16 = arith.constant 0 : index
    %c0_17 = arith.constant 0 : index
    %c0_18 = arith.constant 0 : index
    %c0_19 = arith.constant 0 : index
    %18 = vector.load %arg2[%c0_15, %c0_16, %c0_17, %c0_18, %c0_19] : memref<4x2x16x2x4xbf16, #tpu.memory_space<vmem>>, vector<4x1x16x1x4xbf16>
    %19 = vector.shape_cast %18 : vector<4x1x16x1x4xbf16> to vector<4x16x4xbf16>
    %20 = vector.shape_cast %19 : vector<4x16x4xbf16> to vector<64x4xbf16>
    %cst_20 = arith.constant dense<0.000000e+00> : vector<64x8xf32>
    %21 = tpu.matmul %17, %2, %cst_20 {dimension_numbers = #tpu.dot_dimension_numbers<[1], [0], [0], [1], [0, 0, 1, 1], [], []>} : vector<64x4xbf16>, vector<4x8xbf16>, vector<64x8xf32> -> vector<64x8xf32>
    %cst_21 = arith.constant dense<0.000000e+00> : vector<64x8xf32>
    %22 = tpu.matmul %20, %3, %cst_21 {dimension_numbers = #tpu.dot_dimension_numbers<[1], [0], [0], [1], [0, 0, 1, 1], [], []>} : vector<64x4xbf16>, vector<4x8xbf16>, vector<64x8xf32> -> vector<64x8xf32>
    %23 = arith.addf %21, %22 : vector<64x8xf32>
    %cst_22 = arith.constant dense<0.000000e+00> : vector<8xf32>
    %24 = vector.multi_reduction <add>, %23, %cst_22 [0] : vector<64x8xf32> to vector<8xf32>
    %25 = vector.shape_cast %24 : vector<8xf32> to vector<1x8xf32>
    %26 = arith.addf %4, %25 : vector<1x8xf32>
    %27 = arith.mulf %23, %23 : vector<64x8xf32>
    %cst_23 = arith.constant dense<0.000000e+00> : vector<8xf32>
    %28 = vector.multi_reduction <add>, %27, %cst_23 [0] : vector<64x8xf32> to vector<8xf32>
    %29 = vector.shape_cast %28 : vector<8xf32> to vector<1x8xf32>
    %30 = arith.addf %5, %29 : vector<1x8xf32>
    %31 = vector.shape_cast %23 : vector<64x8xf32> to vector<4x16x8xf32>
    %c0_24 = arith.constant 0 : index
    %c0_25 = arith.constant 0 : index
    %c0_26 = arith.constant 0 : index
    %c0_27 = arith.constant 0 : index
    %32 = vector.load %arg7[%c0_24, %c0_25, %c0_26, %c0_27] : memref<4x2x16x16xf32, #tpu.memory_space<vmem>>, vector<4x1x16x8xf32>
    %33 = vector.shape_cast %32 : vector<4x1x16x8xf32> to vector<4x16x8xf32>
    %34 = vector.shape_cast %31 : vector<4x16x8xf32> to vector<4x1x16x8xf32>
    tpu.vector_store %arg7[%c0_24, %c0_25, %c0_26, %c0_27], %34 {strides = array<i32>} : memref<4x2x16x16xf32, #tpu.memory_space<vmem>>, vector<4x1x16x8xf32>,
    %c0_28 = arith.constant 0 : index
    %c0_29 = arith.constant 0 : index
    %c4 = arith.constant 4 : index
    %35 = vector.load %arg1[%c0_28, %c0_29, %c4] : memref<4x16x16xf32, #tpu.memory_space<vmem>>, vector<4x16x4xf32>
    %36 = vector.broadcast %0 : vector<1x1x4xf32> to vector<4x16x4xf32>
    %37 = arith.mulf %35, %36 : vector<4x16x4xf32>
    %38 = vector.broadcast %1 : vector<1x1x4xf32> to vector<4x16x4xf32>
    %39 = arith.addf %37, %38 : vector<4x16x4xf32>
    %cst_30 = arith.constant 0.000000e+00 : f32
    %40 = vector.broadcast %cst_30 : f32 to vector<4x16x4xf32>
    %41 = arith.cmpf oge, %39, %40 : vector<4x16x4xf32>
    %cst_31 = arith.constant 2.000000e-01 : f32
    %42 = vector.broadcast %cst_31 : f32 to vector<4x16x4xf32>
    %43 = arith.mulf %42, %39 : vector<4x16x4xf32>
    %44 = arith.select %41, %39, %43 : vector<4x16x4xi1>, vector<4x16x4xf32>
    %45 = arith.truncf %44 : vector<4x16x4xf32> to vector<4x16x4xbf16>
    %46 = vector.shape_cast %45 : vector<4x16x4xbf16> to vector<64x4xbf16>
    %c0_32 = arith.constant 0 : index
    %c0_33 = arith.constant 0 : index
    %c0_34 = arith.constant 0 : index
    %c1 = arith.constant 1 : index
    %c0_35 = arith.constant 0 : index
    %47 = vector.load %arg2[%c0_32, %c0_33, %c0_34, %c1, %c0_35] : memref<4x2x16x2x4xbf16, #tpu.memory_space<vmem>>, vector<4x1x16x1x4xbf16>
    %48 = vector.shape_cast %47 : vector<4x1x16x1x4xbf16> to vector<4x16x4xbf16>
    %49 = vector.shape_cast %48 : vector<4x16x4xbf16> to vector<64x4xbf16>
    %cst_36 = arith.constant dense<0.000000e+00> : vector<64x8xf32>
    %50 = tpu.matmul %46, %2, %cst_36 {dimension_numbers = #tpu.dot_dimension_numbers<[1], [0], [0], [1], [0, 0, 1, 1], [], []>} : vector<64x4xbf16>, vector<4x8xbf16>, vector<64x8xf32> -> vector<64x8xf32>
    %cst_37 = arith.constant dense<0.000000e+00> : vector<64x8xf32>
    %51 = tpu.matmul %49, %3, %cst_37 {dimension_numbers = #tpu.dot_dimension_numbers<[1], [0], [0], [1], [0, 0, 1, 1], [], []>} : vector<64x4xbf16>, vector<4x8xbf16>, vector<64x8xf32> -> vector<64x8xf32>
    %52 = arith.addf %50, %51 : vector<64x8xf32>
    %cst_38 = arith.constant dense<0.000000e+00> : vector<8xf32>
    %53 = vector.multi_reduction <add>, %52, %cst_38 [0] : vector<64x8xf32> to vector<8xf32>
    %54 = vector.shape_cast %53 : vector<8xf32> to vector<1x8xf32>
    %55 = arith.addf %26, %54 : vector<1x8xf32>
    %56 = arith.mulf %52, %52 : vector<64x8xf32>
    %cst_39 = arith.constant dense<0.000000e+00> : vector<8xf32>
    %57 = vector.multi_reduction <add>, %56, %cst_39 [0] : vector<64x8xf32> to vector<8xf32>
    %58 = vector.shape_cast %57 : vector<8xf32> to vector<1x8xf32>
    %59 = arith.addf %30, %58 : vector<1x8xf32>
    %60 = vector.shape_cast %52 : vector<64x8xf32> to vector<4x16x8xf32>
    %c0_40 = arith.constant 0 : index
    %c0_41 = arith.constant 0 : index
    %c0_42 = arith.constant 0 : index
    %c8 = arith.constant 8 : index
    %61 = vector.load %arg7[%c0_40, %c0_41, %c0_42, %c8] : memref<4x2x16x16xf32, #tpu.memory_space<vmem>>, vector<4x1x16x8xf32>
    %62 = vector.shape_cast %61 : vector<4x1x16x8xf32> to vector<4x16x8xf32>
    %63 = vector.shape_cast %60 : vector<4x16x8xf32> to vector<4x1x16x8xf32>
    tpu.vector_store %arg7[%c0_40, %c0_41, %c0_42, %c8], %63 {strides = array<i32>} : memref<4x2x16x16xf32, #tpu.memory_space<vmem>>, vector<4x1x16x8xf32>,
    %c0_43 = arith.constant 0 : index
    %c0_44 = arith.constant 0 : index
    %c8_45 = arith.constant 8 : index
    %64 = vector.load %arg1[%c0_43, %c0_44, %c8_45] : memref<4x16x16xf32, #tpu.memory_space<vmem>>, vector<4x16x4xf32>
    %65 = vector.broadcast %0 : vector<1x1x4xf32> to vector<4x16x4xf32>
    %66 = arith.mulf %64, %65 : vector<4x16x4xf32>
    %67 = vector.broadcast %1 : vector<1x1x4xf32> to vector<4x16x4xf32>
    %68 = arith.addf %66, %67 : vector<4x16x4xf32>
    %cst_46 = arith.constant 0.000000e+00 : f32
    %69 = vector.broadcast %cst_46 : f32 to vector<4x16x4xf32>
    %70 = arith.cmpf oge, %68, %69 : vector<4x16x4xf32>
    %cst_47 = arith.constant 2.000000e-01 : f32
    %71 = vector.broadcast %cst_47 : f32 to vector<4x16x4xf32>
    %72 = arith.mulf %71, %68 : vector<4x16x4xf32>
    %73 = arith.select %70, %68, %72 : vector<4x16x4xi1>, vector<4x16x4xf32>
    %74 = arith.truncf %73 : vector<4x16x4xf32> to vector<4x16x4xbf16>
    %75 = vector.shape_cast %74 : vector<4x16x4xbf16> to vector<64x4xbf16>
    %c0_48 = arith.constant 0 : index
    %c1_49 = arith.constant 1 : index
    %c0_50 = arith.constant 0 : index
    %c0_51 = arith.constant 0 : index
    %c0_52 = arith.constant 0 : index
    %76 = vector.load %arg2[%c0_48, %c1_49, %c0_50, %c0_51, %c0_52] : memref<4x2x16x2x4xbf16, #tpu.memory_space<vmem>>, vector<4x1x16x1x4xbf16>
    %77 = vector.shape_cast %76 : vector<4x1x16x1x4xbf16> to vector<4x16x4xbf16>
    %78 = vector.shape_cast %77 : vector<4x16x4xbf16> to vector<64x4xbf16>
    %cst_53 = arith.constant dense<0.000000e+00> : vector<64x8xf32>
    %79 = tpu.matmul %75, %2, %cst_53 {dimension_numbers = #tpu.dot_dimension_numbers<[1], [0], [0], [1], [0, 0, 1, 1], [], []>} : vector<64x4xbf16>, vector<4x8xbf16>, vector<64x8xf32> -> vector<64x8xf32>
    %cst_54 = arith.constant dense<0.000000e+00> : vector<64x8xf32>
    %80 = tpu.matmul %78, %3, %cst_54 {dimension_numbers = #tpu.dot_dimension_numbers<[1], [0], [0], [1], [0, 0, 1, 1], [], []>} : vector<64x4xbf16>, vector<4x8xbf16>, vector<64x8xf32> -> vector<64x8xf32>
    %81 = arith.addf %79, %80 : vector<64x8xf32>
    %cst_55 = arith.constant dense<0.000000e+00> : vector<8xf32>
    %82 = vector.multi_reduction <add>, %81, %cst_55 [0] : vector<64x8xf32> to vector<8xf32>
    %83 = vector.shape_cast %82 : vector<8xf32> to vector<1x8xf32>
    %84 = arith.addf %55, %83 : vector<1x8xf32>
    %85 = arith.mulf %81, %81 : vector<64x8xf32>
    %cst_56 = arith.constant dense<0.000000e+00> : vector<8xf32>
    %86 = vector.multi_reduction <add>, %85, %cst_56 [0] : vector<64x8xf32> to vector<8xf32>
    %87 = vector.shape_cast %86 : vector<8xf32> to vector<1x8xf32>
    %88 = arith.addf %59, %87 : vector<1x8xf32>
    %89 = vector.shape_cast %81 : vector<64x8xf32> to vector<4x16x8xf32>
    %c0_57 = arith.constant 0 : index
    %c1_58 = arith.constant 1 : index
    %c0_59 = arith.constant 0 : index
    %c0_60 = arith.constant 0 : index
    %90 = vector.load %arg7[%c0_57, %c1_58, %c0_59, %c0_60] : memref<4x2x16x16xf32, #tpu.memory_space<vmem>>, vector<4x1x16x8xf32>
    %91 = vector.shape_cast %90 : vector<4x1x16x8xf32> to vector<4x16x8xf32>
    %92 = vector.shape_cast %89 : vector<4x16x8xf32> to vector<4x1x16x8xf32>
    tpu.vector_store %arg7[%c0_57, %c1_58, %c0_59, %c0_60], %92 {strides = array<i32>} : memref<4x2x16x16xf32, #tpu.memory_space<vmem>>, vector<4x1x16x8xf32>,
    %c0_61 = arith.constant 0 : index
    %c0_62 = arith.constant 0 : index
    %c12 = arith.constant 12 : index
    %93 = vector.load %arg1[%c0_61, %c0_62, %c12] : memref<4x16x16xf32, #tpu.memory_space<vmem>>, vector<4x16x4xf32>
    %94 = vector.broadcast %0 : vector<1x1x4xf32> to vector<4x16x4xf32>
    %95 = arith.mulf %93, %94 : vector<4x16x4xf32>
    %96 = vector.broadcast %1 : vector<1x1x4xf32> to vector<4x16x4xf32>
    %97 = arith.addf %95, %96 : vector<4x16x4xf32>
    %cst_63 = arith.constant 0.000000e+00 : f32
    %98 = vector.broadcast %cst_63 : f32 to vector<4x16x4xf32>
    %99 = arith.cmpf oge, %97, %98 : vector<4x16x4xf32>
    %cst_64 = arith.constant 2.000000e-01 : f32
    %100 = vector.broadcast %cst_64 : f32 to vector<4x16x4xf32>
    %101 = arith.mulf %100, %97 : vector<4x16x4xf32>
    %102 = arith.select %99, %97, %101 : vector<4x16x4xi1>, vector<4x16x4xf32>
    %103 = arith.truncf %102 : vector<4x16x4xf32> to vector<4x16x4xbf16>
    %104 = vector.shape_cast %103 : vector<4x16x4xbf16> to vector<64x4xbf16>
    %c0_65 = arith.constant 0 : index
    %c1_66 = arith.constant 1 : index
    %c0_67 = arith.constant 0 : index
    %c1_68 = arith.constant 1 : index
    %c0_69 = arith.constant 0 : index
    %105 = vector.load %arg2[%c0_65, %c1_66, %c0_67, %c1_68, %c0_69] : memref<4x2x16x2x4xbf16, #tpu.memory_space<vmem>>, vector<4x1x16x1x4xbf16>
    %106 = vector.shape_cast %105 : vector<4x1x16x1x4xbf16> to vector<4x16x4xbf16>
    %107 = vector.shape_cast %106 : vector<4x16x4xbf16> to vector<64x4xbf16>
    %cst_70 = arith.constant dense<0.000000e+00> : vector<64x8xf32>
    %108 = tpu.matmul %104, %2, %cst_70 {dimension_numbers = #tpu.dot_dimension_numbers<[1], [0], [0], [1], [0, 0, 1, 1], [], []>} : vector<64x4xbf16>, vector<4x8xbf16>, vector<64x8xf32> -> vector<64x8xf32>
    %cst_71 = arith.constant dense<0.000000e+00> : vector<64x8xf32>
    %109 = tpu.matmul %107, %3, %cst_71 {dimension_numbers = #tpu.dot_dimension_numbers<[1], [0], [0], [1], [0, 0, 1, 1], [], []>} : vector<64x4xbf16>, vector<4x8xbf16>, vector<64x8xf32> -> vector<64x8xf32>
    %110 = arith.addf %108, %109 : vector<64x8xf32>
    %cst_72 = arith.constant dense<0.000000e+00> : vector<8xf32>
    %111 = vector.multi_reduction <add>, %110, %cst_72 [0] : vector<64x8xf32> to vector<8xf32>
    %112 = vector.shape_cast %111 : vector<8xf32> to vector<1x8xf32>
    %113 = arith.addf %84, %112 : vector<1x8xf32>
    %114 = arith.mulf %110, %110 : vector<64x8xf32>
    %cst_73 = arith.constant dense<0.000000e+00> : vector<8xf32>
    %115 = vector.multi_reduction <add>, %114, %cst_73 [0] : vector<64x8xf32> to vector<8xf32>
    %116 = vector.shape_cast %115 : vector<8xf32> to vector<1x8xf32>
    %117 = arith.addf %88, %116 : vector<1x8xf32>
    %118 = vector.shape_cast %110 : vector<64x8xf32> to vector<4x16x8xf32>
    %c0_74 = arith.constant 0 : index
    %c1_75 = arith.constant 1 : index
    %c0_76 = arith.constant 0 : index
    %c8_77 = arith.constant 8 : index
    %119 = vector.load %arg7[%c0_74, %c1_75, %c0_76, %c8_77] : memref<4x2x16x16xf32, #tpu.memory_space<vmem>>, vector<4x1x16x8xf32>
    %120 = vector.shape_cast %119 : vector<4x1x16x8xf32> to vector<4x16x8xf32>
    %121 = vector.shape_cast %118 : vector<4x16x8xf32> to vector<4x1x16x8xf32>
    tpu.vector_store %arg7[%c0_74, %c1_75, %c0_76, %c8_77], %121 {strides = array<i32>} : memref<4x2x16x16xf32, #tpu.memory_space<vmem>>, vector<4x1x16x8xf32>,
    %c0_78 = arith.constant 0 : index
    %c0_79 = arith.constant 0 : index
    %c0_80 = arith.constant 0 : index
    %122 = vector.load %arg8[%c0_78, %c0_79, %c0_80] : memref<1x2x8xf32, #tpu.memory_space<vmem>>, vector<1x1x8xf32>
    %123 = vector.shape_cast %122 : vector<1x1x8xf32> to vector<1x8xf32>
    %124 = vector.shape_cast %113 : vector<1x8xf32> to vector<1x1x8xf32>
    tpu.vector_store %arg8[%c0_78, %c0_79, %c0_80], %124 {strides = array<i32>} : memref<1x2x8xf32, #tpu.memory_space<vmem>>, vector<1x1x8xf32>,
    %c0_81 = arith.constant 0 : index
    %c1_82 = arith.constant 1 : index
    %c0_83 = arith.constant 0 : index
    %125 = vector.load %arg8[%c0_81, %c1_82, %c0_83] : memref<1x2x8xf32, #tpu.memory_space<vmem>>, vector<1x1x8xf32>
    %126 = vector.shape_cast %125 : vector<1x1x8xf32> to vector<1x8xf32>
    %127 = vector.shape_cast %117 : vector<1x8xf32> to vector<1x1x8xf32>
    tpu.vector_store %arg8[%c0_81, %c1_82, %c0_83], %127 {strides = array<i32>} : memref<1x2x8xf32, #tpu.memory_space<vmem>>, vector<1x1x8xf32>,
    return
  }
  func.func @transform_0(%arg0: i32) -> (i32, i32, i32) {
    %c0_i32 = arith.constant 0 : i32
    %c0_i32_0 = arith.constant 0 : i32
    %c0_i32_1 = arith.constant 0 : i32
    return %arg0, %c0_i32, %c0_i32_0 : i32, i32, i32
  }
  func.func @transform_1(%arg0: i32) -> (i32, i32, i32, i32, i32) {
    %c0_i32 = arith.constant 0 : i32
    %c0_i32_0 = arith.constant 0 : i32
    %c0_i32_1 = arith.constant 0 : i32
    %c0_i32_2 = arith.constant 0 : i32
    %c0_i32_3 = arith.constant 0 : i32
    return %arg0, %c0_i32, %c0_i32_0, %c0_i32_1, %c0_i32_2 : i32, i32, i32, i32, i32
  }
  func.func @transform_2(%arg0: i32) -> (i32, i32, i32) {
    %c0_i32 = arith.constant 0 : i32
    %c0_i32_0 = arith.constant 0 : i32
    %c0_i32_1 = arith.constant 0 : i32
    %c0_i32_2 = arith.constant 0 : i32
    return %c0_i32, %c0_i32_0, %c0_i32_1 : i32, i32, i32
  }
  func.func @transform_3(%arg0: i32) -> (i32, i32, i32) {
    %c0_i32 = arith.constant 0 : i32
    %c0_i32_0 = arith.constant 0 : i32
    %c0_i32_1 = arith.constant 0 : i32
    %c0_i32_2 = arith.constant 0 : i32
    return %c0_i32, %c0_i32_0, %c0_i32_1 : i32, i32, i32
  }
  func.func @transform_4(%arg0: i32) -> (i32, i32) {
    %c0_i32 = arith.constant 0 : i32
    %c0_i32_0 = arith.constant 0 : i32
    %c0_i32_1 = arith.constant 0 : i32
    return %c0_i32, %c0_i32_0 : i32, i32
  }
  func.func @transform_5(%arg0: i32) -> (i32, i32) {
    %c0_i32 = arith.constant 0 : i32
    %c0_i32_0 = arith.constant 0 : i32
    %c0_i32_1 = arith.constant 0 : i32
    return %c0_i32, %c0_i32_0 : i32, i32
  }
  func.func @transform_6(%arg0: i32) -> (i32, i32, i32, i32) {
    %c0_i32 = arith.constant 0 : i32
    %c0_i32_0 = arith.constant 0 : i32
    %c0_i32_1 = arith.constant 0 : i32
    %c0_i32_2 = arith.constant 0 : i32
    return %arg0, %c0_i32, %c0_i32_0, %c0_i32_1 : i32, i32, i32, i32
  }
  func.func @transform_7(%arg0: i32) -> (i32, i32, i32) {
    %c0_i32 = arith.constant 0 : i32
    %c0_i32_0 = arith.constant 0 : i32
    %c0_i32_1 = arith.constant 0 : i32
    return %arg0, %c0_i32, %c0_i32_0 : i32, i32, i32
  }
}

module attributes {stable_mosaic.version = 11 : i64} {
  func.func @_stage3_kernel(%arg0: i32, %arg1: i32, %arg2: memref<1x8x32x8xf32, #tpu.memory_space<vmem>>, %arg3: memref<1x8x32x8xf32, #tpu.memory_space<vmem>>, %arg4: memref<1x8x32x8xf32, #tpu.memory_space<vmem>>, %arg5: memref<1x1x8xf32, #tpu.memory_space<vmem>>, %arg6: memref<1x1x8xf32, #tpu.memory_space<vmem>>, %arg7: memref<72x8xbf16, #tpu.memory_space<vmem>>, %arg8: memref<1x8x32x8xf32, #tpu.memory_space<vmem>>, %arg9: memref<1x1x2x8xf32, #tpu.memory_space<vmem>>, %arg10: memref<10x34x8xbf16, #tpu.memory_space<vmem>>, %arg11: memref<256x72xbf16, #tpu.memory_space<vmem>>) attributes {dimension_semantics = [#tpu.dimension_semantics<parallel>, #tpu.dimension_semantics<parallel>], iteration_bounds = array<i64: 2, 4>, scalar_prefetch = 0 : i64, scratch_operands = 2 : i64, tpu.core_type = #tpu.core_type<tc>, window_params = [{transform_indices = @transform_0, window_bounds = array<i64: 1, 8, 32, 8>}, {transform_indices = @transform_1, window_bounds = array<i64: 1, 8, 32, 8>}, {transform_indices = @transform_2, window_bounds = array<i64: 1, 8, 32, 8>}, {pipeline_mode = #tpu.pipeline_mode<synchronous>, transform_indices = @transform_3, window_bounds = array<i64: 1, 1, 8>}, {pipeline_mode = #tpu.pipeline_mode<synchronous>, transform_indices = @transform_4, window_bounds = array<i64: 1, 1, 8>}, {pipeline_mode = #tpu.pipeline_mode<synchronous>, transform_indices = @transform_5, window_bounds = array<i64: 72, 8>}, {transform_indices = @transform_6, window_bounds = array<i64: 1, 8, 32, 8>}, {transform_indices = @transform_7, window_bounds = array<i64: 1, 1, 2, 8>}]} {
    %c0 = arith.constant 0 : index
    %c0_0 = arith.constant 0 : index
    %c0_1 = arith.constant 0 : index
    %0 = vector.load %arg5[%c0, %c0_0, %c0_1] : memref<1x1x8xf32, #tpu.memory_space<vmem>>, vector<1x1x8xf32>
    %c0_2 = arith.constant 0 : index
    %c0_3 = arith.constant 0 : index
    %c0_4 = arith.constant 0 : index
    %1 = vector.load %arg6[%c0_2, %c0_3, %c0_4] : memref<1x1x8xf32, #tpu.memory_space<vmem>>, vector<1x1x8xf32>
    %cst = arith.constant 0.000000e+00 : bf16
    %2 = vector.broadcast %cst : bf16 to vector<10x34x8xbf16>
    %c0_5 = arith.constant 0 : index
    %c0_6 = arith.constant 0 : index
    %c0_7 = arith.constant 0 : index
    %3 = vector.load %arg10[%c0_5, %c0_6, %c0_7] : memref<10x34x8xbf16, #tpu.memory_space<vmem>>, vector<10x34x8xbf16>
    tpu.vector_store %arg10[%c0_5, %c0_6, %c0_7], %2 {strides = array<i32>} : memref<10x34x8xbf16, #tpu.memory_space<vmem>>, vector<10x34x8xbf16>,
    %c0_8 = arith.constant 0 : index
    %c0_9 = arith.constant 0 : index
    %c0_10 = arith.constant 0 : index
    %c0_11 = arith.constant 0 : index
    %4 = vector.load %arg3[%c0_8, %c0_9, %c0_10, %c0_11] : memref<1x8x32x8xf32, #tpu.memory_space<vmem>>, vector<1x8x32x8xf32>
    %5 = vector.shape_cast %4 : vector<1x8x32x8xf32> to vector<8x32x8xf32>
    %6 = vector.broadcast %0 : vector<1x1x8xf32> to vector<8x32x8xf32>
    %7 = arith.mulf %5, %6 : vector<8x32x8xf32>
    %8 = vector.broadcast %1 : vector<1x1x8xf32> to vector<8x32x8xf32>
    %9 = arith.addf %7, %8 : vector<8x32x8xf32>
    %cst_12 = arith.constant 0.000000e+00 : f32
    %10 = vector.broadcast %cst_12 : f32 to vector<8x32x8xf32>
    %11 = arith.cmpf oge, %9, %10 : vector<8x32x8xf32>
    %cst_13 = arith.constant 2.000000e-01 : f32
    %12 = vector.broadcast %cst_13 : f32 to vector<8x32x8xf32>
    %13 = arith.mulf %12, %9 : vector<8x32x8xf32>
    %14 = arith.select %11, %9, %13 : vector<8x32x8xi1>, vector<8x32x8xf32>
    %15 = arith.truncf %14 : vector<8x32x8xf32> to vector<8x32x8xbf16>
    %c1 = arith.constant 1 : index
    %c1_14 = arith.constant 1 : index
    %c0_15 = arith.constant 0 : index
    %16 = vector.load %arg10[%c1, %c1_14, %c0_15] : memref<10x34x8xbf16, #tpu.memory_space<vmem>>, vector<8x32x8xbf16>
    tpu.vector_store %arg10[%c1, %c1_14, %c0_15], %15 {strides = array<i32>} : memref<10x34x8xbf16, #tpu.memory_space<vmem>>, vector<8x32x8xbf16>,
    %c0_i32 = arith.constant 0 : i32
    %17 = arith.cmpi sgt, %arg1, %c0_i32 : i32
    %18 = arith.extui %17 : i1 to i32
    %c0_i32_16 = arith.constant 0 : i32
    %19 = arith.cmpi ne, %18, %c0_i32_16 : i32
    scf.if %19 {
      %c0_73 = arith.constant 0 : index
      %c7 = arith.constant 7 : index
      %c0_74 = arith.constant 0 : index
      %c0_75 = arith.constant 0 : index
      %66 = vector.load %arg2[%c0_73, %c7, %c0_74, %c0_75] : memref<1x8x32x8xf32, #tpu.memory_space<vmem>>, vector<1x1x32x8xf32>
      %67 = vector.shape_cast %66 : vector<1x1x32x8xf32> to vector<1x32x8xf32>
      %68 = vector.broadcast %0 : vector<1x1x8xf32> to vector<1x32x8xf32>
      %69 = arith.mulf %67, %68 : vector<1x32x8xf32>
      %70 = vector.broadcast %1 : vector<1x1x8xf32> to vector<1x32x8xf32>
      %71 = arith.addf %69, %70 : vector<1x32x8xf32>
      %cst_76 = arith.constant 0.000000e+00 : f32
      %72 = vector.broadcast %cst_76 : f32 to vector<1x32x8xf32>
      %73 = arith.cmpf oge, %71, %72 : vector<1x32x8xf32>
      %cst_77 = arith.constant 2.000000e-01 : f32
      %74 = vector.broadcast %cst_77 : f32 to vector<1x32x8xf32>
      %75 = arith.mulf %74, %71 : vector<1x32x8xf32>
      %76 = arith.select %73, %71, %75 : vector<1x32x8xi1>, vector<1x32x8xf32>
      %77 = arith.truncf %76 : vector<1x32x8xf32> to vector<1x32x8xbf16>
      %c0_78 = arith.constant 0 : index
      %c1_79 = arith.constant 1 : index
      %c0_80 = arith.constant 0 : index
      %78 = vector.load %arg10[%c0_78, %c1_79, %c0_80] : memref<10x34x8xbf16, #tpu.memory_space<vmem>>, vector<1x32x8xbf16>
      tpu.vector_store %arg10[%c0_78, %c1_79, %c0_80], %77 {strides = array<i32>} : memref<10x34x8xbf16, #tpu.memory_space<vmem>>, vector<1x32x8xbf16>,
    } else {
    }
    %c3_i32 = arith.constant 3 : i32
    %20 = arith.cmpi slt, %arg1, %c3_i32 : i32
    %21 = arith.extui %20 : i1 to i32
    %c0_i32_17 = arith.constant 0 : i32
    %22 = arith.cmpi ne, %21, %c0_i32_17 : i32
    scf.if %22 {
      %c0_73 = arith.constant 0 : index
      %c0_74 = arith.constant 0 : index
      %c0_75 = arith.constant 0 : index
      %c0_76 = arith.constant 0 : index
      %66 = vector.load %arg4[%c0_73, %c0_74, %c0_75, %c0_76] : memref<1x8x32x8xf32, #tpu.memory_space<vmem>>, vector<1x1x32x8xf32>
      %67 = vector.shape_cast %66 : vector<1x1x32x8xf32> to vector<1x32x8xf32>
      %68 = vector.broadcast %0 : vector<1x1x8xf32> to vector<1x32x8xf32>
      %69 = arith.mulf %67, %68 : vector<1x32x8xf32>
      %70 = vector.broadcast %1 : vector<1x1x8xf32> to vector<1x32x8xf32>
      %71 = arith.addf %69, %70 : vector<1x32x8xf32>
      %cst_77 = arith.constant 0.000000e+00 : f32
      %72 = vector.broadcast %cst_77 : f32 to vector<1x32x8xf32>
      %73 = arith.cmpf oge, %71, %72 : vector<1x32x8xf32>
      %cst_78 = arith.constant 2.000000e-01 : f32
      %74 = vector.broadcast %cst_78 : f32 to vector<1x32x8xf32>
      %75 = arith.mulf %74, %71 : vector<1x32x8xf32>
      %76 = arith.select %73, %71, %75 : vector<1x32x8xi1>, vector<1x32x8xf32>
      %77 = arith.truncf %76 : vector<1x32x8xf32> to vector<1x32x8xbf16>
      %c9 = arith.constant 9 : index
      %c1_79 = arith.constant 1 : index
      %c0_80 = arith.constant 0 : index
      %78 = vector.load %arg10[%c9, %c1_79, %c0_80] : memref<10x34x8xbf16, #tpu.memory_space<vmem>>, vector<1x32x8xbf16>
      tpu.vector_store %arg10[%c9, %c1_79, %c0_80], %77 {strides = array<i32>} : memref<10x34x8xbf16, #tpu.memory_space<vmem>>, vector<1x32x8xbf16>,
    } else {
    }
    %c0_18 = arith.constant 0 : index
    %c0_19 = arith.constant 0 : index
    %c0_20 = arith.constant 0 : index
    %23 = vector.load %arg10[%c0_18, %c0_19, %c0_20] : memref<10x34x8xbf16, #tpu.memory_space<vmem>>, vector<8x32x8xbf16>
    %24 = vector.shape_cast %23 : vector<8x32x8xbf16> to vector<256x8xbf16>
    %c0_21 = arith.constant 0 : index
    %c0_22 = arith.constant 0 : index
    %25 = vector.load %arg11[%c0_21, %c0_22] : memref<256x72xbf16, #tpu.memory_space<vmem>>, vector<256x8xbf16>
    tpu.vector_store %arg11[%c0_21, %c0_22], %24 {strides = array<i32>} : memref<256x72xbf16, #tpu.memory_space<vmem>>, vector<256x8xbf16>,
    %c0_23 = arith.constant 0 : index
    %c1_24 = arith.constant 1 : index
    %c0_25 = arith.constant 0 : index
    %26 = vector.load %arg10[%c0_23, %c1_24, %c0_25] : memref<10x34x8xbf16, #tpu.memory_space<vmem>>, vector<8x32x8xbf16>
    %27 = vector.shape_cast %26 : vector<8x32x8xbf16> to vector<256x8xbf16>
    %c0_26 = arith.constant 0 : index
    %c8 = arith.constant 8 : index
    %28 = vector.load %arg11[%c0_26, %c8] : memref<256x72xbf16, #tpu.memory_space<vmem>>, vector<256x8xbf16>
    tpu.vector_store %arg11[%c0_26, %c8], %27 {strides = array<i32>} : memref<256x72xbf16, #tpu.memory_space<vmem>>, vector<256x8xbf16>,
    %c0_27 = arith.constant 0 : index
    %c2 = arith.constant 2 : index
    %c0_28 = arith.constant 0 : index
    %29 = vector.load %arg10[%c0_27, %c2, %c0_28] : memref<10x34x8xbf16, #tpu.memory_space<vmem>>, vector<8x32x8xbf16>
    %30 = vector.shape_cast %29 : vector<8x32x8xbf16> to vector<256x8xbf16>
    %c0_29 = arith.constant 0 : index
    %c16 = arith.constant 16 : index
    %31 = vector.load %arg11[%c0_29, %c16] : memref<256x72xbf16, #tpu.memory_space<vmem>>, vector<256x8xbf16>
    tpu.vector_store %arg11[%c0_29, %c16], %30 {strides = array<i32>} : memref<256x72xbf16, #tpu.memory_space<vmem>>, vector<256x8xbf16>,
    %c1_30 = arith.constant 1 : index
    %c0_31 = arith.constant 0 : index
    %c0_32 = arith.constant 0 : index
    %32 = vector.load %arg10[%c1_30, %c0_31, %c0_32] : memref<10x34x8xbf16, #tpu.memory_space<vmem>>, vector<8x32x8xbf16>
    %33 = vector.shape_cast %32 : vector<8x32x8xbf16> to vector<256x8xbf16>
    %c0_33 = arith.constant 0 : index
    %c24 = arith.constant 24 : index
    %34 = vector.load %arg11[%c0_33, %c24] : memref<256x72xbf16, #tpu.memory_space<vmem>>, vector<256x8xbf16>
    tpu.vector_store %arg11[%c0_33, %c24], %33 {strides = array<i32>} : memref<256x72xbf16, #tpu.memory_space<vmem>>, vector<256x8xbf16>,
    %c1_34 = arith.constant 1 : index
    %c1_35 = arith.constant 1 : index
    %c0_36 = arith.constant 0 : index
    %35 = vector.load %arg10[%c1_34, %c1_35, %c0_36] : memref<10x34x8xbf16, #tpu.memory_space<vmem>>, vector<8x32x8xbf16>
    %36 = vector.shape_cast %35 : vector<8x32x8xbf16> to vector<256x8xbf16>
    %c0_37 = arith.constant 0 : index
    %c32 = arith.constant 32 : index
    %37 = vector.load %arg11[%c0_37, %c32] : memref<256x72xbf16, #tpu.memory_space<vmem>>, vector<256x8xbf16>
    tpu.vector_store %arg11[%c0_37, %c32], %36 {strides = array<i32>} : memref<256x72xbf16, #tpu.memory_space<vmem>>, vector<256x8xbf16>,
    %c1_38 = arith.constant 1 : index
    %c2_39 = arith.constant 2 : index
    %c0_40 = arith.constant 0 : index
    %38 = vector.load %arg10[%c1_38, %c2_39, %c0_40] : memref<10x34x8xbf16, #tpu.memory_space<vmem>>, vector<8x32x8xbf16>
    %39 = vector.shape_cast %38 : vector<8x32x8xbf16> to vector<256x8xbf16>
    %c0_41 = arith.constant 0 : index
    %c40 = arith.constant 40 : index
    %40 = vector.load %arg11[%c0_41, %c40] : memref<256x72xbf16, #tpu.memory_space<vmem>>, vector<256x8xbf16>
    tpu.vector_store %arg11[%c0_41, %c40], %39 {strides = array<i32>} : memref<256x72xbf16, #tpu.memory_space<vmem>>, vector<256x8xbf16>,
    %c2_42 = arith.constant 2 : index
    %c0_43 = arith.constant 0 : index
    %c0_44 = arith.constant 0 : index
    %41 = vector.load %arg10[%c2_42, %c0_43, %c0_44] : memref<10x34x8xbf16, #tpu.memory_space<vmem>>, vector<8x32x8xbf16>
    %42 = vector.shape_cast %41 : vector<8x32x8xbf16> to vector<256x8xbf16>
    %c0_45 = arith.constant 0 : index
    %c48 = arith.constant 48 : index
    %43 = vector.load %arg11[%c0_45, %c48] : memref<256x72xbf16, #tpu.memory_space<vmem>>, vector<256x8xbf16>
    tpu.vector_store %arg11[%c0_45, %c48], %42 {strides = array<i32>} : memref<256x72xbf16, #tpu.memory_space<vmem>>, vector<256x8xbf16>,
    %c2_46 = arith.constant 2 : index
    %c1_47 = arith.constant 1 : index
    %c0_48 = arith.constant 0 : index
    %44 = vector.load %arg10[%c2_46, %c1_47, %c0_48] : memref<10x34x8xbf16, #tpu.memory_space<vmem>>, vector<8x32x8xbf16>
    %45 = vector.shape_cast %44 : vector<8x32x8xbf16> to vector<256x8xbf16>
    %c0_49 = arith.constant 0 : index
    %c56 = arith.constant 56 : index
    %46 = vector.load %arg11[%c0_49, %c56] : memref<256x72xbf16, #tpu.memory_space<vmem>>, vector<256x8xbf16>
    tpu.vector_store %arg11[%c0_49, %c56], %45 {strides = array<i32>} : memref<256x72xbf16, #tpu.memory_space<vmem>>, vector<256x8xbf16>,
    %c2_50 = arith.constant 2 : index
    %c2_51 = arith.constant 2 : index
    %c0_52 = arith.constant 0 : index
    %47 = vector.load %arg10[%c2_50, %c2_51, %c0_52] : memref<10x34x8xbf16, #tpu.memory_space<vmem>>, vector<8x32x8xbf16>
    %48 = vector.shape_cast %47 : vector<8x32x8xbf16> to vector<256x8xbf16>
    %c0_53 = arith.constant 0 : index
    %c64 = arith.constant 64 : index
    %49 = vector.load %arg11[%c0_53, %c64] : memref<256x72xbf16, #tpu.memory_space<vmem>>, vector<256x8xbf16>
    tpu.vector_store %arg11[%c0_53, %c64], %48 {strides = array<i32>} : memref<256x72xbf16, #tpu.memory_space<vmem>>, vector<256x8xbf16>,
    %c0_54 = arith.constant 0 : index
    %c0_55 = arith.constant 0 : index
    %50 = vector.load %arg11[%c0_54, %c0_55] : memref<256x72xbf16, #tpu.memory_space<vmem>>, vector<256x72xbf16>
    %c0_56 = arith.constant 0 : index
    %c0_57 = arith.constant 0 : index
    %51 = vector.load %arg7[%c0_56, %c0_57] : memref<72x8xbf16, #tpu.memory_space<vmem>>, vector<72x8xbf16>
    %cst_58 = arith.constant dense<0.000000e+00> : vector<256x8xf32>
    %52 = tpu.matmul %50, %51, %cst_58 {dimension_numbers = #tpu.dot_dimension_numbers<[1], [0], [0], [1], [0, 0, 1, 1], [], []>} : vector<256x72xbf16>, vector<72x8xbf16>, vector<256x8xf32> -> vector<256x8xf32>
    %53 = vector.shape_cast %52 : vector<256x8xf32> to vector<1x8x32x8xf32>
    %c0_59 = arith.constant 0 : index
    %c0_60 = arith.constant 0 : index
    %c0_61 = arith.constant 0 : index
    %c0_62 = arith.constant 0 : index
    %54 = vector.load %arg8[%c0_59, %c0_60, %c0_61, %c0_62] : memref<1x8x32x8xf32, #tpu.memory_space<vmem>>, vector<1x8x32x8xf32>
    tpu.vector_store %arg8[%c0_59, %c0_60, %c0_61, %c0_62], %53 {strides = array<i32>} : memref<1x8x32x8xf32, #tpu.memory_space<vmem>>, vector<1x8x32x8xf32>,
    %cst_63 = arith.constant dense<0.000000e+00> : vector<8xf32>
    %55 = vector.multi_reduction <add>, %52, %cst_63 [0] : vector<256x8xf32> to vector<8xf32>
    %56 = vector.shape_cast %55 : vector<8xf32> to vector<1x8xf32>
    %c0_64 = arith.constant 0 : index
    %c0_65 = arith.constant 0 : index
    %c0_66 = arith.constant 0 : index
    %c0_67 = arith.constant 0 : index
    %57 = vector.load %arg9[%c0_64, %c0_65, %c0_66, %c0_67] : memref<1x1x2x8xf32, #tpu.memory_space<vmem>>, vector<1x1x1x8xf32>
    %58 = vector.shape_cast %57 : vector<1x1x1x8xf32> to vector<1x8xf32>
    %59 = vector.shape_cast %56 : vector<1x8xf32> to vector<1x1x1x8xf32>
    tpu.vector_store %arg9[%c0_64, %c0_65, %c0_66, %c0_67], %59 {strides = array<i32>} : memref<1x1x2x8xf32, #tpu.memory_space<vmem>>, vector<1x1x1x8xf32>,
    %60 = arith.mulf %52, %52 : vector<256x8xf32>
    %cst_68 = arith.constant dense<0.000000e+00> : vector<8xf32>
    %61 = vector.multi_reduction <add>, %60, %cst_68 [0] : vector<256x8xf32> to vector<8xf32>
    %62 = vector.shape_cast %61 : vector<8xf32> to vector<1x8xf32>
    %c0_69 = arith.constant 0 : index
    %c0_70 = arith.constant 0 : index
    %c1_71 = arith.constant 1 : index
    %c0_72 = arith.constant 0 : index
    %63 = vector.load %arg9[%c0_69, %c0_70, %c1_71, %c0_72] : memref<1x1x2x8xf32, #tpu.memory_space<vmem>>, vector<1x1x1x8xf32>
    %64 = vector.shape_cast %63 : vector<1x1x1x8xf32> to vector<1x8xf32>
    %65 = vector.shape_cast %62 : vector<1x8xf32> to vector<1x1x1x8xf32>
    tpu.vector_store %arg9[%c0_69, %c0_70, %c1_71, %c0_72], %65 {strides = array<i32>} : memref<1x1x2x8xf32, #tpu.memory_space<vmem>>, vector<1x1x1x8xf32>,
    return
  }
  func.func @transform_0(%arg0: i32, %arg1: i32) -> (i32, i32, i32, i32) {
    %c1_i32 = arith.constant 1 : i32
    %0 = arith.muli %arg1, %c1_i32 : i32
    %c1_i32_0 = arith.constant 1 : i32
    %1 = arith.subi %0, %c1_i32_0 : i32
    %c0_i32 = arith.constant 0 : i32
    %2 = arith.maxsi %1, %c0_i32 : i32
    %c0_i32_1 = arith.constant 0 : i32
    %c0_i32_2 = arith.constant 0 : i32
    %c0_i32_3 = arith.constant 0 : i32
    return %arg0, %2, %c0_i32_1, %c0_i32_2 : i32, i32, i32, i32
  }
  func.func @transform_1(%arg0: i32, %arg1: i32) -> (i32, i32, i32, i32) {
    %c0_i32 = arith.constant 0 : i32
    %c0_i32_0 = arith.constant 0 : i32
    %c0_i32_1 = arith.constant 0 : i32
    return %arg0, %arg1, %c0_i32, %c0_i32_0 : i32, i32, i32, i32
  }
  func.func @transform_2(%arg0: i32, %arg1: i32) -> (i32, i32, i32, i32) {
    %c1_i32 = arith.constant 1 : i32
    %0 = arith.addi %arg1, %c1_i32 : i32
    %c1_i32_0 = arith.constant 1 : i32
    %1 = arith.muli %0, %c1_i32_0 : i32
    %c3_i32 = arith.constant 3 : i32
    %2 = arith.minsi %1, %c3_i32 : i32
    %c0_i32 = arith.constant 0 : i32
    %c0_i32_1 = arith.constant 0 : i32
    %c0_i32_2 = arith.constant 0 : i32
    return %arg0, %2, %c0_i32, %c0_i32_1 : i32, i32, i32, i32
  }
  func.func @transform_3(%arg0: i32, %arg1: i32) -> (i32, i32, i32) {
    %c0_i32 = arith.constant 0 : i32
    %c0_i32_0 = arith.constant 0 : i32
    %c0_i32_1 = arith.constant 0 : i32
    %c0_i32_2 = arith.constant 0 : i32
    return %c0_i32, %c0_i32_0, %c0_i32_1 : i32, i32, i32
  }
  func.func @transform_4(%arg0: i32, %arg1: i32) -> (i32, i32, i32) {
    %c0_i32 = arith.constant 0 : i32
    %c0_i32_0 = arith.constant 0 : i32
    %c0_i32_1 = arith.constant 0 : i32
    %c0_i32_2 = arith.constant 0 : i32
    return %c0_i32, %c0_i32_0, %c0_i32_1 : i32, i32, i32
  }
  func.func @transform_5(%arg0: i32, %arg1: i32) -> (i32, i32) {
    %c0_i32 = arith.constant 0 : i32
    %c0_i32_0 = arith.constant 0 : i32
    %c0_i32_1 = arith.constant 0 : i32
    return %c0_i32, %c0_i32_0 : i32, i32
  }
  func.func @transform_6(%arg0: i32, %arg1: i32) -> (i32, i32, i32, i32) {
    %c0_i32 = arith.constant 0 : i32
    %c0_i32_0 = arith.constant 0 : i32
    %c0_i32_1 = arith.constant 0 : i32
    return %arg0, %arg1, %c0_i32, %c0_i32_0 : i32, i32, i32, i32
  }
  func.func @transform_7(%arg0: i32, %arg1: i32) -> (i32, i32, i32, i32) {
    %c0_i32 = arith.constant 0 : i32
    %c0_i32_0 = arith.constant 0 : i32
    %c0_i32_1 = arith.constant 0 : i32
    return %arg0, %arg1, %c0_i32, %c0_i32_0 : i32, i32, i32, i32
  }
}

module attributes {stable_mosaic.version = 11 : i64} {
  func.func @_bn_act_kernel(%arg0: i32, %arg1: memref<256x8xf32, #tpu.memory_space<vmem>>, %arg2: memref<1x8xf32, #tpu.memory_space<vmem>>, %arg3: memref<1x8xf32, #tpu.memory_space<vmem>>, %arg4: memref<256x8xf32, #tpu.memory_space<vmem>>) attributes {dimension_semantics = [#tpu.dimension_semantics<parallel>], iteration_bounds = array<i64: 8>, scalar_prefetch = 0 : i64, scratch_operands = 0 : i64, tpu.core_type = #tpu.core_type<tc>, window_params = [{transform_indices = @transform_0, window_bounds = array<i64: 256, 8>}, {pipeline_mode = #tpu.pipeline_mode<synchronous>, transform_indices = @transform_1, window_bounds = array<i64: 1, 8>}, {pipeline_mode = #tpu.pipeline_mode<synchronous>, transform_indices = @transform_2, window_bounds = array<i64: 1, 8>}, {transform_indices = @transform_3, window_bounds = array<i64: 256, 8>}]} {
    %c0 = arith.constant 0 : index
    %c0_0 = arith.constant 0 : index
    %0 = vector.load %arg1[%c0, %c0_0] : memref<256x8xf32, #tpu.memory_space<vmem>>, vector<256x8xf32>
    %c0_1 = arith.constant 0 : index
    %c0_2 = arith.constant 0 : index
    %1 = vector.load %arg2[%c0_1, %c0_2] : memref<1x8xf32, #tpu.memory_space<vmem>>, vector<1x8xf32>
    %2 = vector.broadcast %1 : vector<1x8xf32> to vector<256x8xf32>
    %3 = arith.mulf %0, %2 : vector<256x8xf32>
    %c0_3 = arith.constant 0 : index
    %c0_4 = arith.constant 0 : index
    %4 = vector.load %arg3[%c0_3, %c0_4] : memref<1x8xf32, #tpu.memory_space<vmem>>, vector<1x8xf32>
    %5 = vector.broadcast %4 : vector<1x8xf32> to vector<256x8xf32>
    %6 = arith.addf %3, %5 : vector<256x8xf32>
    %cst = arith.constant 0.000000e+00 : f32
    %7 = vector.broadcast %cst : f32 to vector<256x8xf32>
    %8 = arith.cmpf oge, %6, %7 : vector<256x8xf32>
    %cst_5 = arith.constant 2.000000e-01 : f32
    %9 = vector.broadcast %cst_5 : f32 to vector<256x8xf32>
    %10 = arith.mulf %9, %6 : vector<256x8xf32>
    %11 = arith.select %8, %6, %10 : vector<256x8xi1>, vector<256x8xf32>
    %c0_6 = arith.constant 0 : index
    %c0_7 = arith.constant 0 : index
    %12 = vector.load %arg4[%c0_6, %c0_7] : memref<256x8xf32, #tpu.memory_space<vmem>>, vector<256x8xf32>
    tpu.vector_store %arg4[%c0_6, %c0_7], %11 {strides = array<i32>} : memref<256x8xf32, #tpu.memory_space<vmem>>, vector<256x8xf32>,
    return
  }
  func.func @transform_0(%arg0: i32) -> (i32, i32) {
    %c0_i32 = arith.constant 0 : i32
    %c0_i32_0 = arith.constant 0 : i32
    return %arg0, %c0_i32 : i32, i32
  }
  func.func @transform_1(%arg0: i32) -> (i32, i32) {
    %c0_i32 = arith.constant 0 : i32
    %c0_i32_0 = arith.constant 0 : i32
    %c0_i32_1 = arith.constant 0 : i32
    return %c0_i32, %c0_i32_0 : i32, i32
  }
  func.func @transform_2(%arg0: i32) -> (i32, i32) {
    %c0_i32 = arith.constant 0 : i32
    %c0_i32_0 = arith.constant 0 : i32
    %c0_i32_1 = arith.constant 0 : i32
    return %c0_i32, %c0_i32_0 : i32, i32
  }
  func.func @transform_3(%arg0: i32) -> (i32, i32) {
    %c0_i32 = arith.constant 0 : i32
    %c0_i32_0 = arith.constant 0 : i32
    return %arg0, %c0_i32 : i32, i32
  }
}

</mosaic_0001>

<llo_original>
// kernel: unet_up_forward.4
$region0: #{unet_up_forward.4}
  #allocation0 [shape = 'u32[]', space=smem, size = 0x4, offset = 0x4, fixed_abs, tag = 'smem constant byte address 0x4 - core index']
  #allocation1 [shape = 'u32[144,128]{1,0:T(1,128)}', space=vmem, size = 0x12000, scoped, tag = 'internal scratch']
  %s0 = inlined_call_operand.vmem [shape: bf16[512,8], index: 0, kind: input, shape index: {}]
  %s1 = inlined_call_operand.vmem [shape: bf16[8,16], index: 1, kind: input, shape index: {}]
  %s2 = inlined_call_operand.vmem [shape: f32[512,16], index: 2, kind: output, shape index: {0}]
  %s3 = inlined_call_operand.vmem [shape: f32[4,2,16], index: 3, kind: output, shape index: {1}]
  %4 = xla_tuple %s2, %s3
  %s5 = sld [smem:[#allocation0]]
  $region49: #{unet_up_forward.4} parent=0
    _
  %s7 = ssub.s32 1, %s5
  %s8 = scalar_select 0, %s7, %s5
  loop: start=0, step=1, limit=6
  $region2: #{unet_up_forward.4} parent=0 // loop_pre_header
    _
  $region3: #{unet_up_forward.4} parent=0 // loop_header
    %s10 = sphi 0, %s14
    %p11 = scmp.ge.s32.totalorder %s10, 6
    %s20 = sphi 0, %s22
    %s23 = sphi 0, %s20
    %s24 = sphi 0, %s23
    %s40 = sphi 0, %s24
    %s44 = sphi 0, %s44
    %s46 = sphi 0, %s44
    %s47 = sphi 0, %s46
    %s61 = sphi 0, %s47
    %s67 = sphi 0, %s69
    %s70 = sphi 0, %s67
    %s71 = sphi 0, %s70
    %s87 = sphi 0, %s71
    %s93 = sphi 0, %s95
    %s96 = sphi 0, %s93
    %s97 = sphi 0, %s96
    %s113 = sphi 0, %s97
  $region4: #{unet_up_forward.4} parent=0 // loop_header_branch
    %13 = sbr.rel (%p11) target = $region8
  $region5: #{unet_up_forward.4} parent=0 // loop_body
    %s15 = ssub.s32 %s10, 1
    %s16 = ssub.s32 %s10, 2
    %s17 = sadd.s32 %s10, 1
    %s18 = ssub.s32 %s10, %s17
    %p19 = scmp.eq.s32.totalorder %s18, 0
    %s21 = sadd.s32 %s20, 1
    %s22 = scalar_select %p19, %s20, %s21
    %p25 = pneg %p19
    %p26 = scmp.eq.s32.totalorder %s10, 3
    %p27 = por %p25, %p26
    %p28 = scmp.ne.s32.totalorder %s20, %s23
    %p29 = scmp.eq.s32.totalorder %s10, 0
    %p30 = por %p28, %p29
    %p31 = scmp.ne.s32.totalorder %s20, %s23
    %p32 = scmp.eq.s32.totalorder %s15, 3
    %p33 = por %p31, %p32
    %p34 = scmp.ne.s32.totalorder %s23, %s24
    %p35 = scmp.eq.s32.totalorder %s15, 0
    %p36 = por %p34, %p35
    %p37 = scmp.ne.s32.totalorder %s23, %s24
    %p38 = scmp.eq.s32.totalorder %s16, 3
    %p39 = por %p37, %p38
    %p41 = scmp.ne.s32.totalorder %s24, %s40
    %p42 = scmp.eq.s32.totalorder %s16, 0
    %p43 = por %p41, %p42
    %s45 = sadd.s32 %s44, 1
    %p48 = scmp.eq.s32.totalorder %s10, 3
    %p49 = scmp.ne.s32.totalorder %s44, %s46
    %p50 = scmp.eq.s32.totalorder %s10, 0
    %p51 = por %p49, %p50
    %p52 = scmp.ne.s32.totalorder %s44, %s46
    %p53 = scmp.eq.s32.totalorder %s15, 3
    %p54 = por %p52, %p53
    %p55 = scmp.ne.s32.totalorder %s46, %s47
    %p56 = scmp.eq.s32.totalorder %s15, 0
    %p57 = por %p55, %p56
    %p58 = scmp.ne.s32.totalorder %s46, %s47
    %p59 = scmp.eq.s32.totalorder %s16, 3
    %p60 = por %p58, %p59
    %p62 = scmp.ne.s32.totalorder %s47, %s61
    %p63 = scmp.eq.s32.totalorder %s16, 0
    %p64 = por %p62, %p63
    %s65 = ssub.s32 %s10, %s17
    %p66 = scmp.eq.s32.totalorder %s65, 0
    %s68 = sadd.s32 %s67, 1
    %s69 = scalar_select %p66, %s67, %s68
    %p72 = pneg %p66
    %p73 = scmp.eq.s32.totalorder %s10, 3
    %p74 = por %p72, %p73
    %p75 = scmp.ne.s32.totalorder %s67, %s70
    %p76 = scmp.eq.s32.totalorder %s10, 0
    %p77 = por %p75, %p76
    %p78 = scmp.ne.s32.totalorder %s67, %s70
    %p79 = scmp.eq.s32.totalorder %s15, 3
    %p80 = por %p78, %p79
    %p81 = scmp.ne.s32.totalorder %s70, %s71
    %p82 = scmp.eq.s32.totalorder %s15, 0
    %p83 = por %p81, %p82
    %p84 = scmp.ne.s32.totalorder %s70, %s71
    %p85 = scmp.eq.s32.totalorder %s16, 3
    %p86 = por %p84, %p85
    %p88 = scmp.ne.s32.totalorder %s71, %s87
    %p89 = scmp.eq.s32.totalorder %s16, 0
    %p90 = por %p88, %p89
    %s91 = ssub.s32 %s10, %s17
    %p92 = scmp.eq.s32.totalorder %s91, 0
    %s94 = sadd.s32 %s93, 1
    %s95 = scalar_select %p92, %s93, %s94
    %p98 = pneg %p92
    %p99 = scmp.eq.s32.totalorder %s10, 3
    %p100 = por %p98, %p99
    %p101 = scmp.ne.s32.totalorder %s93, %s96
    %p102 = scmp.eq.s32.totalorder %s10, 0
    %p103 = por %p101, %p102
    %p104 = scmp.ne.s32.totalorder %s93, %s96
    %p105 = scmp.eq.s32.totalorder %s15, 3
    %p106 = por %p104, %p105
    %p107 = scmp.ne.s32.totalorder %s96, %s97
    %p108 = scmp.eq.s32.totalorder %s15, 0
    %p109 = por %p107, %p108
    %p110 = scmp.ne.s32.totalorder %s96, %s97
    %p111 = scmp.eq.s32.totalorder %s16, 3
    %p112 = por %p110, %p111
    %p114 = scmp.ne.s32.totalorder %s97, %s113
    %p115 = scmp.eq.s32.totalorder %s16, 0
    %p116 = por %p114, %p115
    %p117 = scmp.le.s32.totalorder 1, %s10
    %p118 = scmp.lt.s32.totalorder %s10, 5
    %p119 = pnand %p117, %p118
    %p120 = pneg %p119
    // Predicated region
    $region9: #{unet_up_forward.4} parent=5 // pred_check
      _
    $region10: #{unet_up_forward.4} parent=5 // pred_check_branch
      %122 = sbr.rel (%p119) target = $region12
    $region11: #{unet_up_forward.4} parent=5 // pred_region
      %s123 = ssub.s32 %s10, 1
      // Predicated region
      $region13: #{unet_up_forward.4} parent=11 // pred_check
        %p124 = pneg %p57
      $region14: #{unet_up_forward.4} parent=11 // pred_check_branch
        %126 = sbr.rel (%p124) target = $region16
      $region15: #{unet_up_forward.4} parent=11 // pred_region
        _
      $region16: #{unet_up_forward.4} parent=11 // pred_fallthru
        _
    $region12: #{unet_up_forward.4} parent=5 // pred_fallthru
      _
    %p127 = scmp.lt.s32.totalorder %s10, 4
    // Predicated region
    $region17: #{unet_up_forward.4} parent=5 // pred_check
      %p128 = pneg %p127
    $region18: #{unet_up_forward.4} parent=5 // pred_check_branch
      %130 = sbr.rel (%p128) target = $region20
    $region19: #{unet_up_forward.4} parent=5 // pred_region
      // Predicated region
      $region21: #{unet_up_forward.4} parent=19 // pred_check
        %p131 = pneg %p30
      $region22: #{unet_up_forward.4} parent=19 // pred_check_branch
        %133 = sbr.rel (%p131) target = $region24
      $region23: #{unet_up_forward.4} parent=19 // pred_region
        %s134 = smul.u32 16, %s10
        %p135 = scmp.lt.s32.totalorder %s134, 63
        %s136 = scalar_select %p135, %s134, 63
        %s137 = smul.addr %s136, 4
        %s138 = scalar_lea.vmem %s0, %s137
        %s139 = smul.u32 16, %s10
      $region24: #{unet_up_forward.4} parent=19 // pred_fallthru
        _
    $region20: #{unet_up_forward.4} parent=5 // pred_fallthru
      _
    %p140 = scmp.le.s32.totalorder 1, %s10
    %p141 = scmp.lt.s32.totalorder %s10, 5
    %p142 = pnand %p140, %p141
    %p143 = pneg %p142
    // Predicated region
    $region25: #{unet_up_forward.4} parent=5 // pred_check
      _
    $region26: #{unet_up_forward.4} parent=5 // pred_check_branch
      %145 = sbr.rel (%p142) target = $region28
    $region27: #{unet_up_forward.4} parent=5 // pred_region
      %s146 = ssub.s32 %s10, 1
      %s147 = smul.u32 16, %s15
      %p148 = scmp.lt.s32.totalorder %s147, 63
      %s149 = scalar_select %p148, %s147, 63
      %s150 = smul.addr %s149, 4
      %s151 = scalar_lea.vmem %s0, %s150
      %p152 = pneg %p36
      %p153 = pneg %p33
      %p154 = pneg %p57
      %p155 = pneg %p54
      %p156 = pneg %p83
      %p157 = pneg %p80
      %s158 = smul.u32 16, %s15
      %p159 = scmp.lt.s32.totalorder %s158, 63
      %s160 = scalar_select %p159, %s158, 63
      %s161 = smul.addr %s160, 8
      %s162 = scalar_lea.vmem %s2, %s161
      %p163 = pneg %p109
      %p164 = pneg %p106
      %p165 = scmp.lt.s32.totalorder %s15, 3
      %s166 = scalar_select %p165, %s15, 3
      %s167 = smul.addr %s166, 2
      %s168 = scalar_lea.vmem %s3, %s167
      %s169 = smul.u32 16, %s15
      %p170 = scmp.lt.s32.totalorder %s169, 63
      %s171 = scalar_select %p170, %s169, 63
      %s172 = smul.addr %s171, 4
      %s173 = scalar_lea.vmem %s0, %s172
      %s174 = smul.u32 16, %s15
      %s175 = smul.u32 16, %s15
      %p176 = scmp.lt.s32.totalorder %s175, 63
      %s177 = scalar_select %p176, %s175, 63
      %s178 = smul.addr %s177, 8
      %s179 = scalar_lea.vmem %s2, %s178
      %s180 = smul.u32 16, %s15
      %p181 = scmp.lt.s32.totalorder %s15, 3
      %s182 = scalar_select %p181, %s15, 3
      %s183 = smul.addr %s182, 2
      %s184 = scalar_lea.vmem %s3, %s183
      %v186 = vld [vmem:[%s173] sm:$0xf]
      %v187 = vld [vmem:[%s173 + $0x4] sm:$0xf]
      %v188 = vld [vmem:[%s173 + $0x8] sm:$0xf]
      %v189 = vld [vmem:[%s173 + $0xc] sm:$0xf]
      %v190 = vld [vmem:[%s173 + $0x10] sm:$0xf]
      %v191 = vld [vmem:[%s173 + $0x14] sm:$0xf]
      %v192 = vld [vmem:[%s173 + $0x18] sm:$0xf]
      %v193 = vld [vmem:[%s173 + $0x1c] sm:$0xf]
      %v194 = vld [vmem:[%s173 + $0x20] sm:$0xf]
      %v195 = vld [vmem:[%s173 + $0x24] sm:$0xf]
      %v196 = vld [vmem:[%s173 + $0x28] sm:$0xf]
      %v197 = vld [vmem:[%s173 + $0x2c] sm:$0xf]
      %v198 = vld [vmem:[%s173 + $0x30] sm:$0xf]
      %v199 = vld [vmem:[%s173 + $0x34] sm:$0xf]
      %v200 = vld [vmem:[%s173 + $0x38] sm:$0xf]
      %v201 = vld [vmem:[%s173 + $0x3c] sm:$0xf]
      %v202 = vld [vmem:[%s1] sm:$0xf]
      %v219 = vunpack.c.l.b16 %v186
      %v220 = vunpack.c.l.b16 %v187
      %v221 = vunpack.c.l.b16 %v188
      %v222 = vunpack.c.l.b16 %v189
      %v223 = vunpack.c.l.b16 %v190
      %v224 = vunpack.c.l.b16 %v191
      %v225 = vunpack.c.l.b16 %v192
      %v226 = vunpack.c.l.b16 %v193
      %v227 = vunpack.c.l.b16 %v194
      %v228 = vunpack.c.l.b16 %v195
      %v229 = vunpack.c.l.b16 %v196
      %v230 = vunpack.c.l.b16 %v197
      %v231 = vunpack.c.l.b16 %v198
      %v232 = vunpack.c.l.b16 %v199
      %v233 = vunpack.c.l.b16 %v200
      %v234 = vunpack.c.l.b16 %v201
      %v235 = vpack.c.b16 %v220, %v219
      %v236 = vpack.c.b16 %v222, %v221
      %v237 = vpack.c.b16 %v224, %v223
      %v238 = vpack.c.b16 %v226, %v225
      %v239 = vpack.c.b16 %v228, %v227
      %v240 = vpack.c.b16 %v230, %v229
      %v241 = vpack.c.b16 %v232, %v231
      %v242 = vpack.c.b16 %v234, %v233
      %vm243 = vcmask 64512
      %v245 = vsel %vm243, %v235, 0
      %v248 = vsel %vm243, %v236, 0
      %v251 = vsel %vm243, %v237, 0
      %v254 = vsel %vm243, %v238, 0
      %v257 = vsel %vm243, %v239, 0
      %v260 = vsel %vm243, %v240, 0
      %v263 = vsel %vm243, %v241, 0
      %v266 = vsel %vm243, %v242, 0
      %vm268 = vcmask 1043456
      %v270 = vsel %vm268, %v202, 0
      %272 = vmatprep.subr.bf16.mxu0 0
      %273 = vmatpush1.bf16.msra.mxu0 0
      %274 = vmatprep.subr.bf16.mxu0 0
      %275 = vmatpush1.bf16.msra.mxu0 0
      %276 = vmatprep.subr.bf16.mxu0 0
      %277 = vmatpush1.bf16.msra.mxu0 0
      %278 = vmatprep.subr.bf16.mxu0 0
      %279 = vmatpush1.bf16.msra.mxu0 0
      %280 = vmatprep.subr.bf16.mxu0 0
      %281 = vmatpush1.bf16.msra.mxu0 0
      %282 = vmatprep.subr.bf16.mxu0 0
      %283 = vmatpush1.bf16.msra.mxu0 0
      %284 = vmatprep.subr.bf16.mxu0 0
      %285 = vmatpush1.bf16.msra.mxu0 0
      %286 = vmatprep.subr.bf16.mxu0 0
      %287 = vmatpush1.bf16.msra.mxu0 %v270
      %288 = vmatprep.subr.bf16.mxu0 0
      %289 = vmatpush2.bf16.msra.mxu0 0
      %290 = vmatprep.subr.bf16.mxu0 0
      %291 = vmatpush2.bf16.msra.mxu0 0
      %292 = vmatprep.subr.bf16.mxu0 0
      %293 = vmatpush2.bf16.msra.mxu0 0
      %294 = vmatprep.subr.bf16.mxu0 0
      %295 = vmatpush2.bf16.msra.mxu0 0
      %296 = vmatprep.subr.bf16.mxu0 0
      %297 = vmatpush2.bf16.msra.mxu0 0
      %298 = vmatprep.subr.bf16.mxu0 0
      %299 = vmatpush2.bf16.msra.mxu0 0
      %300 = vmatprep.subr.bf16.mxu0 0
      %301 = vmatpush2.bf16.msra.mxu0 0
      %302 = vmatprep.subr.bf16.mxu0 0
      %303 = vmatpush2.bf16.msra.mxu0 0
      %304 = vmatprep.mubr.bf16.mxu0 0
      %305 = vmatmul.mubr.bf16.gmra.mxu0 %v245
      %v306 = vpop.f32.mrf.mxu0
      %v307 = vadd.f32 0.0, %v306
      %v308 = vpop.f32.mrf.mxu0
      %v309 = vpop.f32.mrf.mxu0
      %v310 = vadd.f32 0.0, %v309
      %v311 = vpop.f32.mrf.mxu0
      %312 = vmatprep.mubr.bf16.mxu0 0
      %313 = vmatmul.mubr.bf16.gmra.mxu0 %v248
      %v314 = vpop.f32.mrf.mxu0
      %v315 = vadd.f32 0.0, %v314
      %v316 = vpop.f32.mrf.mxu0
      %v317 = vpop.f32.mrf.mxu0
      %v318 = vadd.f32 0.0, %v317
      %v319 = vpop.f32.mrf.mxu0
      %320 = vmatprep.mubr.bf16.mxu0 0
      %321 = vmatmul.mubr.bf16.gmra.mxu0 %v251
      %v322 = vpop.f32.mrf.mxu0
      %v323 = vadd.f32 0.0, %v322
      %v324 = vpop.f32.mrf.mxu0
      %v325 = vpop.f32.mrf.mxu0
      %v326 = vadd.f32 0.0, %v325
      %v327 = vpop.f32.mrf.mxu0
      %328 = vmatprep.mubr.bf16.mxu0 0
      %329 = vmatmul.mubr.bf16.gmra.mxu0 %v254
      %v330 = vpop.f32.mrf.mxu0
      %v331 = vadd.f32 0.0, %v330
      %v332 = vpop.f32.mrf.mxu0
      %v333 = vpop.f32.mrf.mxu0
      %v334 = vadd.f32 0.0, %v333
      %v335 = vpop.f32.mrf.mxu0
      %336 = vmatprep.mubr.bf16.mxu0 0
      %337 = vmatmul.mubr.bf16.gmra.mxu0 %v257
      %v338 = vpop.f32.mrf.mxu0
      %v339 = vadd.f32 0.0, %v338
      %v340 = vpop.f32.mrf.mxu0
      %v341 = vpop.f32.mrf.mxu0
      %v342 = vadd.f32 0.0, %v341
      %v343 = vpop.f32.mrf.mxu0
      %344 = vmatprep.mubr.bf16.mxu0 0
      %345 = vmatmul.mubr.bf16.gmra.mxu0 %v260
      %v346 = vpop.f32.mrf.mxu0
      %v347 = vadd.f32 0.0, %v346
      %v348 = vpop.f32.mrf.mxu0
      %v349 = vpop.f32.mrf.mxu0
      %v350 = vadd.f32 0.0, %v349
      %v351 = vpop.f32.mrf.mxu0
      %352 = vmatprep.mubr.bf16.mxu0 0
      %353 = vmatmul.mubr.bf16.gmra.mxu0 %v263
      %v354 = vpop.f32.mrf.mxu0
      %v355 = vadd.f32 0.0, %v354
      %v356 = vpop.f32.mrf.mxu0
      %v357 = vpop.f32.mrf.mxu0
      %v358 = vadd.f32 0.0, %v357
      %v359 = vpop.f32.mrf.mxu0
      %360 = vmatprep.mubr.bf16.mxu0 0
      %361 = vmatmul.mubr.bf16.gmra.mxu0 %v266
      %v362 = vpop.f32.mrf.mxu0
      %v363 = vadd.f32 0.0, %v362
      %v364 = vpop.f32.mrf.mxu0
      %v365 = vpop.f32.mrf.mxu0
      %v366 = vadd.f32 0.0, %v365
      %v367 = vpop.f32.mrf.mxu0
      %368 = vdwg.mxu0
      %vm369 = vcmask 130048
      %370 = vst.msk [vmem:[%s179] sm:$0xff] %vm369, %v307
      %371 = vst.msk [vmem:[%s179 + $0x8] sm:$0xff] %vm369, %v310
      %372 = vst.msk [vmem:[%s179 + $0x10] sm:$0xff] %vm369, %v315
      %373 = vst.msk [vmem:[%s179 + $0x18] sm:$0xff] %vm369, %v318
      %374 = vst.msk [vmem:[%s179 + $0x20] sm:$0xff] %vm369, %v323
      %375 = vst.msk [vmem:[%s179 + $0x28] sm:$0xff] %vm369, %v326
      %376 = vst.msk [vmem:[%s179 + $0x30] sm:$0xff] %vm369, %v331
      %377 = vst.msk [vmem:[%s179 + $0x38] sm:$0xff] %vm369, %v334
      %378 = vst.msk [vmem:[%s179 + $0x40] sm:$0xff] %vm369, %v339
      %379 = vst.msk [vmem:[%s179 + $0x48] sm:$0xff] %vm369, %v342
      %380 = vst.msk [vmem:[%s179 + $0x50] sm:$0xff] %vm369, %v347
      %381 = vst.msk [vmem:[%s179 + $0x58] sm:$0xff] %vm369, %v350
      %382 = vst.msk [vmem:[%s179 + $0x60] sm:$0xff] %vm369, %v355
      %383 = vst.msk [vmem:[%s179 + $0x68] sm:$0xff] %vm369, %v358
      %384 = vst.msk [vmem:[%s179 + $0x70] sm:$0xff] %vm369, %v363
      %385 = vst.msk [vmem:[%s179 + $0x78] sm:$0xff] %vm369, %v366
      %v386 = vsel %vm369, %v307, 0.0
      %v387 = vsel %vm369, %v310, 0.0
      %v388 = vadd.f32 %v386, %v387
      %v389 = vsel %vm369, %v315, 0.0
      %v390 = vadd.f32 %v388, %v389
      %v391 = vsel %vm369, %v318, 0.0
      %v392 = vadd.f32 %v390, %v391
      %v393 = vsel %vm369, %v323, 0.0
      %v394 = vadd.f32 %v392, %v393
      %v395 = vsel %vm369, %v326, 0.0
      %v396 = vadd.f32 %v394, %v395
      %v397 = vsel %vm369, %v331, 0.0
      %v398 = vadd.f32 %v396, %v397
      %v399 = vsel %vm369, %v334, 0.0
      %v400 = vadd.f32 %v398, %v399
      %v401 = vsel %vm369, %v339, 0.0
      %v402 = vadd.f32 %v400, %v401
      %v403 = vsel %vm369, %v342, 0.0
      %v404 = vadd.f32 %v402, %v403
      %v405 = vsel %vm369, %v347, 0.0
      %v406 = vadd.f32 %v404, %v405
      %v407 = vsel %vm369, %v350, 0.0
      %v408 = vadd.f32 %v406, %v407
      %v409 = vsel %vm369, %v355, 0.0
      %v410 = vadd.f32 %v408, %v409
      %v411 = vsel %vm369, %v358, 0.0
      %v412 = vadd.f32 %v410, %v411
      %v413 = vsel %vm369, %v363, 0.0
      %v414 = vadd.f32 %v412, %v413
      %v415 = vsel %vm369, %v366, 0.0
      %v416 = vadd.f32 %v414, %v415
      %v417 = vrot.slane %v416, 4
      %v418 = vadd.f32 %v416, %v417
      %v419 = vrot.slane %v418, 2
      %v420 = vadd.f32 %v418, %v419
      %v421 = vrot.slane %v420, 1
      %v422 = vadd.f32 %v420, %v421
      %vm423 = vcmask 122880
      %424 = vst.msk [vmem:[%s184] sm:$0x1] %vm423, %v422
      %v425 = vmul.f32 %v307, %v307
      %v426 = vmul.f32 %v310, %v310
      %v427 = vmul.f32 %v315, %v315
      %v428 = vmul.f32 %v318, %v318
      %v429 = vmul.f32 %v323, %v323
      %v430 = vmul.f32 %v326, %v326
      %v431 = vmul.f32 %v331, %v331
      %v432 = vmul.f32 %v334, %v334
      %v433 = vmul.f32 %v339, %v339
      %v434 = vmul.f32 %v342, %v342
      %v435 = vmul.f32 %v347, %v347
      %v436 = vmul.f32 %v350, %v350
      %v437 = vmul.f32 %v355, %v355
      %v438 = vmul.f32 %v358, %v358
      %v439 = vmul.f32 %v363, %v363
      %v440 = vmul.f32 %v366, %v366
      %v441 = vsel %vm369, %v425, 0.0
      %v442 = vsel %vm369, %v426, 0.0
      %v443 = vadd.f32 %v441, %v442
      %v444 = vsel %vm369, %v427, 0.0
      %v445 = vadd.f32 %v443, %v444
      %v446 = vsel %vm369, %v428, 0.0
      %v447 = vadd.f32 %v445, %v446
      %v448 = vsel %vm369, %v429, 0.0
      %v449 = vadd.f32 %v447, %v448
      %v450 = vsel %vm369, %v430, 0.0
      %v451 = vadd.f32 %v449, %v450
      %v452 = vsel %vm369, %v431, 0.0
      %v453 = vadd.f32 %v451, %v452
      %v454 = vsel %vm369, %v432, 0.0
      %v455 = vadd.f32 %v453, %v454
      %v456 = vsel %vm369, %v433, 0.0
      %v457 = vadd.f32 %v455, %v456
      %v458 = vsel %vm369, %v434, 0.0
      %v459 = vadd.f32 %v457, %v458
      %v460 = vsel %vm369, %v435, 0.0
      %v461 = vadd.f32 %v459, %v460
      %v462 = vsel %vm369, %v436, 0.0
      %v463 = vadd.f32 %v461, %v462
      %v464 = vsel %vm369, %v437, 0.0
      %v465 = vadd.f32 %v463, %v464
      %v466 = vsel %vm369, %v438, 0.0
      %v467 = vadd.f32 %v465, %v466
      %v468 = vsel %vm369, %v439, 0.0
      %v469 = vadd.f32 %v467, %v468
      %v470 = vsel %vm369, %v440, 0.0
      %v471 = vadd.f32 %v469, %v470
      %v472 = vrot.slane %v471, 4
      %v473 = vadd.f32 %v471, %v472
      %v474 = vrot.slane %v473, 2
      %v475 = vadd.f32 %v473, %v474
      %v476 = vrot.slane %v475, 1
      %v477 = vadd.f32 %v475, %v476
      %478 = vst.msk [vmem:[%s184 + $0x1] sm:$0x1] %vm423, %v477
      %s479 = smul.u32 16, %s15
      %p480 = scmp.lt.s32.totalorder %s479, 63
      %s481 = scalar_select %p480, %s479, 63
      %s482 = smul.addr %s481, 8
      %s483 = scalar_lea.vmem %s2, %s482
      %p484 = scmp.lt.s32.totalorder %s15, 3
      %s485 = scalar_select %p484, %s15, 3
      %s486 = smul.addr %s485, 2
      %s487 = scalar_lea.vmem %s3, %s486
      // Predicated region
      $region29: #{unet_up_forward.4} parent=27 // pred_check
        %p488 = pneg %p80
      $region30: #{unet_up_forward.4} parent=27 // pred_check_branch
        %490 = sbr.rel (%p488) target = $region32
      $region31: #{unet_up_forward.4} parent=27 // pred_region
        %s491 = smul.u32 16, %s15
      $region32: #{unet_up_forward.4} parent=27 // pred_fallthru
        _
      // Predicated region
      $region33: #{unet_up_forward.4} parent=27 // pred_check
        %p492 = pneg %p106
      $region34: #{unet_up_forward.4} parent=27 // pred_check_branch
        %494 = sbr.rel (%p492) target = $region36
      $region35: #{unet_up_forward.4} parent=27 // pred_region
        _
      $region36: #{unet_up_forward.4} parent=27 // pred_fallthru
        _
    $region28: #{unet_up_forward.4} parent=5 // pred_fallthru
      _
    %p495 = scmp.le.s32.totalorder 2, %s10
    // Predicated region
    $region37: #{unet_up_forward.4} parent=5 // pred_check
      %p496 = pneg %p495
    $region38: #{unet_up_forward.4} parent=5 // pred_check_branch
      %498 = sbr.rel (%p496) target = $region40
    $region39: #{unet_up_forward.4} parent=5 // pred_region
      %s499 = ssub.s32 %s10, 2
      // Predicated region
      $region41: #{unet_up_forward.4} parent=39 // pred_check
        %p500 = pneg %p86
      $region42: #{unet_up_forward.4} parent=39 // pred_check_branch
        %502 = sbr.rel (%p500) target = $region44
      $region43: #{unet_up_forward.4} parent=39 // pred_region
        %s503 = smul.u32 16, %s16
        %p504 = scmp.lt.s32.totalorder %s503, 63
        %s505 = scalar_select %p504, %s503, 63
        %s506 = smul.addr %s505, 8
        %s507 = scalar_lea.vmem %s2, %s506
      $region44: #{unet_up_forward.4} parent=39 // pred_fallthru
        _
      // Predicated region
      $region45: #{unet_up_forward.4} parent=39 // pred_check
        %p508 = pneg %p112
      $region46: #{unet_up_forward.4} parent=39 // pred_check_branch
        %510 = sbr.rel (%p508) target = $region48
      $region47: #{unet_up_forward.4} parent=39 // pred_region
        %p511 = scmp.lt.s32.totalorder %s16, 3
        %s512 = scalar_select %p511, %s16, 3
        %s513 = smul.addr %s512, 2
        %s514 = scalar_lea.vmem %s3, %s513
      $region48: #{unet_up_forward.4} parent=39 // pred_fallthru
        _
    $region40: #{unet_up_forward.4} parent=5 // pred_fallthru
      _
  $region6: #{unet_up_forward.4} parent=0 // loop_footer
    %s14 = sadd.s32 1, %s10
  $region7: #{unet_up_forward.4} parent=0 // loop_footer_branch
    %9 = sbr.rel target = $region3
  $region8: #{unet_up_forward.4} parent=0 // loop_exit
    _

// kernel: unet_up_forward.7
$region0: #{unet_up_forward.7}
  #allocation0 [shape = 'u32[]', space=smem, size = 0x4, offset = 0x4, fixed_abs, tag = 'smem constant byte address 0x4 - core index']
  #allocation1 [shape = 'u32[144,128]{1,0:T(1,128)}', space=vmem, size = 0x12000, scoped, tag = 'internal scratch']
  %s0 = inlined_call_operand.vmem [shape: f32[2048,8], index: 0, kind: input, shape index: {}]
  %s1 = inlined_call_operand.vmem [shape: f32[1,8], index: 1, kind: input, shape index: {}]
  %s2 = inlined_call_operand.vmem [shape: f32[1,8], index: 2, kind: input, shape index: {}]
  %s3 = inlined_call_operand.vmem [shape: f32[2048,8], index: 3, kind: output, shape index: {}]
  %s4 = sld [smem:[#allocation0]]
  $region45: #{unet_up_forward.7} parent=0
    _
  %s6 = ssub.s32 1, %s4
  %s7 = scalar_select 0, %s6, %s4
  loop: start=0, step=1, limit=10
  $region2: #{unet_up_forward.7} parent=0 // loop_pre_header
    _
  $region3: #{unet_up_forward.7} parent=0 // loop_header
    %s9 = sphi 0, %s13
    %p10 = scmp.ge.s32.totalorder %s9, 10
    %s19 = sphi 0, %s21
    %s22 = sphi 0, %s19
    %s23 = sphi 0, %s22
    %s39 = sphi 0, %s23
    %s43 = sphi 0, %s43
    %s45 = sphi 0, %s43
    %s46 = sphi 0, %s45
    %s60 = sphi 0, %s46
    %s64 = sphi 0, %s64
    %s66 = sphi 0, %s64
    %s67 = sphi 0, %s66
    %s81 = sphi 0, %s67
    %s87 = sphi 0, %s89
    %s90 = sphi 0, %s87
    %s91 = sphi 0, %s90
    %s107 = sphi 0, %s91
  $region4: #{unet_up_forward.7} parent=0 // loop_header_branch
    %12 = sbr.rel (%p10) target = $region8
  $region5: #{unet_up_forward.7} parent=0 // loop_body
    %s14 = ssub.s32 %s9, 1
    %s15 = ssub.s32 %s9, 2
    %s16 = sadd.s32 %s9, 1
    %s17 = ssub.s32 %s9, %s16
    %p18 = scmp.eq.s32.totalorder %s17, 0
    %s20 = sadd.s32 %s19, 1
    %s21 = scalar_select %p18, %s19, %s20
    %p24 = pneg %p18
    %p25 = scmp.eq.s32.totalorder %s9, 7
    %p26 = por %p24, %p25
    %p27 = scmp.ne.s32.totalorder %s19, %s22
    %p28 = scmp.eq.s32.totalorder %s9, 0
    %p29 = por %p27, %p28
    %p30 = scmp.ne.s32.totalorder %s19, %s22
    %p31 = scmp.eq.s32.totalorder %s14, 7
    %p32 = por %p30, %p31
    %p33 = scmp.ne.s32.totalorder %s22, %s23
    %p34 = scmp.eq.s32.totalorder %s14, 0
    %p35 = por %p33, %p34
    %p36 = scmp.ne.s32.totalorder %s22, %s23
    %p37 = scmp.eq.s32.totalorder %s15, 7
    %p38 = por %p36, %p37
    %p40 = scmp.ne.s32.totalorder %s23, %s39
    %p41 = scmp.eq.s32.totalorder %s15, 0
    %p42 = por %p40, %p41
    %s44 = sadd.s32 %s43, 1
    %p47 = scmp.eq.s32.totalorder %s9, 7
    %p48 = scmp.ne.s32.totalorder %s43, %s45
    %p49 = scmp.eq.s32.totalorder %s9, 0
    %p50 = por %p48, %p49
    %p51 = scmp.ne.s32.totalorder %s43, %s45
    %p52 = scmp.eq.s32.totalorder %s14, 7
    %p53 = por %p51, %p52
    %p54 = scmp.ne.s32.totalorder %s45, %s46
    %p55 = scmp.eq.s32.totalorder %s14, 0
    %p56 = por %p54, %p55
    %p57 = scmp.ne.s32.totalorder %s45, %s46
    %p58 = scmp.eq.s32.totalorder %s15, 7
    %p59 = por %p57, %p58
    %p61 = scmp.ne.s32.totalorder %s46, %s60
    %p62 = scmp.eq.s32.totalorder %s15, 0
    %p63 = por %p61, %p62
    %s65 = sadd.s32 %s64, 1
    %p68 = scmp.eq.s32.totalorder %s9, 7
    %p69 = scmp.ne.s32.totalorder %s64, %s66
    %p70 = scmp.eq.s32.totalorder %s9, 0
    %p71 = por %p69, %p70
    %p72 = scmp.ne.s32.totalorder %s64, %s66
    %p73 = scmp.eq.s32.totalorder %s14, 7
    %p74 = por %p72, %p73
    %p75 = scmp.ne.s32.totalorder %s66, %s67
    %p76 = scmp.eq.s32.totalorder %s14, 0
    %p77 = por %p75, %p76
    %p78 = scmp.ne.s32.totalorder %s66, %s67
    %p79 = scmp.eq.s32.totalorder %s15, 7
    %p80 = por %p78, %p79
    %p82 = scmp.ne.s32.totalorder %s67, %s81
    %p83 = scmp.eq.s32.totalorder %s15, 0
    %p84 = por %p82, %p83
    %s85 = ssub.s32 %s9, %s16
    %p86 = scmp.eq.s32.totalorder %s85, 0
    %s88 = sadd.s32 %s87, 1
    %s89 = scalar_select %p86, %s87, %s88
    %p92 = pneg %p86
    %p93 = scmp.eq.s32.totalorder %s9, 7
    %p94 = por %p92, %p93
    %p95 = scmp.ne.s32.totalorder %s87, %s90
    %p96 = scmp.eq.s32.totalorder %s9, 0
    %p97 = por %p95, %p96
    %p98 = scmp.ne.s32.totalorder %s87, %s90
    %p99 = scmp.eq.s32.totalorder %s14, 7
    %p100 = por %p98, %p99
    %p101 = scmp.ne.s32.totalorder %s90, %s91
    %p102 = scmp.eq.s32.totalorder %s14, 0
    %p103 = por %p101, %p102
    %p104 = scmp.ne.s32.totalorder %s90, %s91
    %p105 = scmp.eq.s32.totalorder %s15, 7
    %p106 = por %p104, %p105
    %p108 = scmp.ne.s32.totalorder %s91, %s107
    %p109 = scmp.eq.s32.totalorder %s15, 0
    %p110 = por %p108, %p109
    %p111 = scmp.le.s32.totalorder 1, %s9
    %p112 = scmp.lt.s32.totalorder %s9, 9
    %p113 = pnand %p111, %p112
    %p114 = pneg %p113
    // Predicated region
    $region9: #{unet_up_forward.7} parent=5 // pred_check
      _
    $region10: #{unet_up_forward.7} parent=5 // pred_check_branch
      %116 = sbr.rel (%p113) target = $region12
    $region11: #{unet_up_forward.7} parent=5 // pred_region
      %s117 = ssub.s32 %s9, 1
      // Predicated region
      $region13: #{unet_up_forward.7} parent=11 // pred_check
        %p118 = pneg %p56
      $region14: #{unet_up_forward.7} parent=11 // pred_check_branch
        %120 = sbr.rel (%p118) target = $region16
      $region15: #{unet_up_forward.7} parent=11 // pred_region
        _
      $region16: #{unet_up_forward.7} parent=11 // pred_fallthru
        _
      // Predicated region
      $region17: #{unet_up_forward.7} parent=11 // pred_check
        %p121 = pneg %p77
      $region18: #{unet_up_forward.7} parent=11 // pred_check_branch
        %123 = sbr.rel (%p121) target = $region20
      $region19: #{unet_up_forward.7} parent=11 // pred_region
        _
      $region20: #{unet_up_forward.7} parent=11 // pred_fallthru
        _
    $region12: #{unet_up_forward.7} parent=5 // pred_fallthru
      _
    %p124 = scmp.lt.s32.totalorder %s9, 8
    // Predicated region
    $region21: #{unet_up_forward.7} parent=5 // pred_check
      %p125 = pneg %p124
    $region22: #{unet_up_forward.7} parent=5 // pred_check_branch
      %127 = sbr.rel (%p125) target = $region24
    $region23: #{unet_up_forward.7} parent=5 // pred_region
      // Predicated region
      $region25: #{unet_up_forward.7} parent=23 // pred_check
        %p128 = pneg %p29
      $region26: #{unet_up_forward.7} parent=23 // pred_check_branch
        %130 = sbr.rel (%p128) target = $region28
      $region27: #{unet_up_forward.7} parent=23 // pred_region
        %s131 = smul.u32 32, %s9
        %p132 = scmp.lt.s32.totalorder %s131, 255
        %s133 = scalar_select %p132, %s131, 255
        %s134 = smul.addr %s133, 8
        %s135 = scalar_lea.vmem %s0, %s134
        %s136 = smul.u32 32, %s9
      $region28: #{unet_up_forward.7} parent=23 // pred_fallthru
        _
    $region24: #{unet_up_forward.7} parent=5 // pred_fallthru
      _
    %p137 = scmp.le.s32.totalorder 1, %s9
    %p138 = scmp.lt.s32.totalorder %s9, 9
    %p139 = pnand %p137, %p138
    %p140 = pneg %p139
    // Predicated region
    $region29: #{unet_up_forward.7} parent=5 // pred_check
      _
    $region30: #{unet_up_forward.7} parent=5 // pred_check_branch
      %142 = sbr.rel (%p139) target = $region32
    $region31: #{unet_up_forward.7} parent=5 // pred_region
      %s143 = ssub.s32 %s9, 1
      %s144 = smul.u32 32, %s14
      %p145 = scmp.lt.s32.totalorder %s144, 255
      %s146 = scalar_select %p145, %s144, 255
      %s147 = smul.addr %s146, 8
      %s148 = scalar_lea.vmem %s0, %s147
      %p149 = pneg %p35
      %p150 = pneg %p32
      %p151 = pneg %p56
      %p152 = pneg %p53
      %p153 = pneg %p77
      %p154 = pneg %p74
      %p155 = pneg %p103
      %p156 = pneg %p100
      %s157 = smul.u32 32, %s14
      %p158 = scmp.lt.s32.totalorder %s157, 255
      %s159 = scalar_select %p158, %s157, 255
      %s160 = smul.addr %s159, 8
      %s161 = scalar_lea.vmem %s3, %s160
      %s162 = smul.u32 32, %s14
      %p163 = scmp.lt.s32.totalorder %s162, 255
      %s164 = scalar_select %p163, %s162, 255
      %s165 = smul.addr %s164, 8
      %s166 = scalar_lea.vmem %s0, %s165
      %s167 = smul.u32 32, %s14
      %s168 = smul.u32 32, %s14
      %p169 = scmp.lt.s32.totalorder %s168, 255
      %s170 = scalar_select %p169, %s168, 255
      %s171 = smul.addr %s170, 8
      %s172 = scalar_lea.vmem %s3, %s171
      %s173 = smul.u32 32, %s14
      %v174 = vld [vmem:[%s166] sm:$0xff]
      %v175 = vld [vmem:[%s166 + $0x8] sm:$0xff]
      %v176 = vld [vmem:[%s166 + $0x10] sm:$0xff]
      %v177 = vld [vmem:[%s166 + $0x18] sm:$0xff]
      %v178 = vld [vmem:[%s166 + $0x20] sm:$0xff]
      %v179 = vld [vmem:[%s166 + $0x28] sm:$0xff]
      %v180 = vld [vmem:[%s166 + $0x30] sm:$0xff]
      %v181 = vld [vmem:[%s166 + $0x38] sm:$0xff]
      %v182 = vld [vmem:[%s166 + $0x40] sm:$0xff]
      %v183 = vld [vmem:[%s166 + $0x48] sm:$0xff]
      %v184 = vld [vmem:[%s166 + $0x50] sm:$0xff]
      %v185 = vld [vmem:[%s166 + $0x58] sm:$0xff]
      %v186 = vld [vmem:[%s166 + $0x60] sm:$0xff]
      %v187 = vld [vmem:[%s166 + $0x68] sm:$0xff]
      %v188 = vld [vmem:[%s166 + $0x70] sm:$0xff]
      %v189 = vld [vmem:[%s166 + $0x78] sm:$0xff]
      %v190 = vld [vmem:[%s166 + $0x80] sm:$0xff]
      %v191 = vld [vmem:[%s166 + $0x88] sm:$0xff]
      %v192 = vld [vmem:[%s166 + $0x90] sm:$0xff]
      %v193 = vld [vmem:[%s166 + $0x98] sm:$0xff]
      %v194 = vld [vmem:[%s166 + $0xa0] sm:$0xff]
      %v195 = vld [vmem:[%s166 + $0xa8] sm:$0xff]
      %v196 = vld [vmem:[%s166 + $0xb0] sm:$0xff]
      %v197 = vld [vmem:[%s166 + $0xb8] sm:$0xff]
      %v198 = vld [vmem:[%s166 + $0xc0] sm:$0xff]
      %v199 = vld [vmem:[%s166 + $0xc8] sm:$0xff]
      %v200 = vld [vmem:[%s166 + $0xd0] sm:$0xff]
      %v201 = vld [vmem:[%s166 + $0xd8] sm:$0xff]
      %v202 = vld [vmem:[%s166 + $0xe0] sm:$0xff]
      %v203 = vld [vmem:[%s166 + $0xe8] sm:$0xff]
      %v204 = vld [vmem:[%s166 + $0xf0] sm:$0xff]
      %v205 = vld [vmem:[%s166 + $0xf8] sm:$0xff]
      %v206 = vld [vmem:[%s1] sm:$0x1]
      %v208 = vlaneseq
      %v209 = vshrl.u32 %v208, 7
      %v210 = vsub.s32 0, %v209
      %v211 = vrot.slane %v206, %v210
      %v213 = vmul.f32 %v174, %v211
      %v214 = vmul.f32 %v175, %v211
      %v215 = vmul.f32 %v176, %v211
      %v216 = vmul.f32 %v177, %v211
      %v217 = vmul.f32 %v178, %v211
      %v218 = vmul.f32 %v179, %v211
      %v219 = vmul.f32 %v180, %v211
      %v220 = vmul.f32 %v181, %v211
      %v221 = vmul.f32 %v182, %v211
      %v222 = vmul.f32 %v183, %v211
      %v223 = vmul.f32 %v184, %v211
      %v224 = vmul.f32 %v185, %v211
      %v225 = vmul.f32 %v186, %v211
      %v226 = vmul.f32 %v187, %v211
      %v227 = vmul.f32 %v188, %v211
      %v228 = vmul.f32 %v189, %v211
      %v229 = vmul.f32 %v190, %v211
      %v230 = vmul.f32 %v191, %v211
      %v231 = vmul.f32 %v192, %v211
      %v232 = vmul.f32 %v193, %v211
      %v233 = vmul.f32 %v194, %v211
      %v234 = vmul.f32 %v195, %v211
      %v235 = vmul.f32 %v196, %v211
      %v236 = vmul.f32 %v197, %v211
      %v237 = vmul.f32 %v198, %v211
      %v238 = vmul.f32 %v199, %v211
      %v239 = vmul.f32 %v200, %v211
      %v240 = vmul.f32 %v201, %v211
      %v241 = vmul.f32 %v202, %v211
      %v242 = vmul.f32 %v203, %v211
      %v243 = vmul.f32 %v204, %v211
      %v244 = vmul.f32 %v205, %v211
      %v245 = vld [vmem:[%s2] sm:$0x1]
      %v247 = vlaneseq
      %v248 = vshrl.u32 %v247, 7
      %v249 = vsub.s32 0, %v248
      %v250 = vrot.slane %v245, %v249
      %v252 = vadd.f32 %v213, %v250
      %v253 = vadd.f32 %v214, %v250
      %v254 = vadd.f32 %v215, %v250
      %v255 = vadd.f32 %v216, %v250
      %v256 = vadd.f32 %v217, %v250
      %v257 = vadd.f32 %v218, %v250
      %v258 = vadd.f32 %v219, %v250
      %v259 = vadd.f32 %v220, %v250
      %v260 = vadd.f32 %v221, %v250
      %v261 = vadd.f32 %v222, %v250
      %v262 = vadd.f32 %v223, %v250
      %v263 = vadd.f32 %v224, %v250
      %v264 = vadd.f32 %v225, %v250
      %v265 = vadd.f32 %v226, %v250
      %v266 = vadd.f32 %v227, %v250
      %v267 = vadd.f32 %v228, %v250
      %v268 = vadd.f32 %v229, %v250
      %v269 = vadd.f32 %v230, %v250
      %v270 = vadd.f32 %v231, %v250
      %v271 = vadd.f32 %v232, %v250
      %v272 = vadd.f32 %v233, %v250
      %v273 = vadd.f32 %v234, %v250
      %v274 = vadd.f32 %v235, %v250
      %v275 = vadd.f32 %v236, %v250
      %v276 = vadd.f32 %v237, %v250
      %v277 = vadd.f32 %v238, %v250
      %v278 = vadd.f32 %v239, %v250
      %v279 = vadd.f32 %v240, %v250
      %v280 = vadd.f32 %v241, %v250
      %v281 = vadd.f32 %v242, %v250
      %v282 = vadd.f32 %v243, %v250
      %v283 = vadd.f32 %v244, %v250
      %vm284 = vcmp.ge.f32.partialorder %v252, 0.0
      %vm285 = vcmp.ge.f32.partialorder %v253, 0.0
      %vm286 = vcmp.ge.f32.partialorder %v254, 0.0
      %vm287 = vcmp.ge.f32.partialorder %v255, 0.0
      %vm288 = vcmp.ge.f32.partialorder %v256, 0.0
      %vm289 = vcmp.ge.f32.partialorder %v257, 0.0
      %vm290 = vcmp.ge.f32.partialorder %v258, 0.0
      %vm291 = vcmp.ge.f32.partialorder %v259, 0.0
      %vm292 = vcmp.ge.f32.partialorder %v260, 0.0
      %vm293 = vcmp.ge.f32.partialorder %v261, 0.0
      %vm294 = vcmp.ge.f32.partialorder %v262, 0.0
      %vm295 = vcmp.ge.f32.partialorder %v263, 0.0
      %vm296 = vcmp.ge.f32.partialorder %v264, 0.0
      %vm297 = vcmp.ge.f32.partialorder %v265, 0.0
      %vm298 = vcmp.ge.f32.partialorder %v266, 0.0
      %vm299 = vcmp.ge.f32.partialorder %v267, 0.0
      %vm300 = vcmp.ge.f32.partialorder %v268, 0.0
      %vm301 = vcmp.ge.f32.partialorder %v269, 0.0
      %vm302 = vcmp.ge.f32.partialorder %v270, 0.0
      %vm303 = vcmp.ge.f32.partialorder %v271, 0.0
      %vm304 = vcmp.ge.f32.partialorder %v272, 0.0
      %vm305 = vcmp.ge.f32.partialorder %v273, 0.0
      %vm306 = vcmp.ge.f32.partialorder %v274, 0.0
      %vm307 = vcmp.ge.f32.partialorder %v275, 0.0
      %vm308 = vcmp.ge.f32.partialorder %v276, 0.0
      %vm309 = vcmp.ge.f32.partialorder %v277, 0.0
      %vm310 = vcmp.ge.f32.partialorder %v278, 0.0
      %vm311 = vcmp.ge.f32.partialorder %v279, 0.0
      %vm312 = vcmp.ge.f32.partialorder %v280, 0.0
      %vm313 = vcmp.ge.f32.partialorder %v281, 0.0
      %vm314 = vcmp.ge.f32.partialorder %v282, 0.0
      %vm315 = vcmp.ge.f32.partialorder %v283, 0.0
      %v316 = vmul.f32 %v252, 0.2
      %v317 = vmul.f32 %v253, 0.2
      %v318 = vmul.f32 %v254, 0.2
      %v319 = vmul.f32 %v255, 0.2
      %v320 = vmul.f32 %v256, 0.2
      %v321 = vmul.f32 %v257, 0.2
      %v322 = vmul.f32 %v258, 0.2
      %v323 = vmul.f32 %v259, 0.2
      %v324 = vmul.f32 %v260, 0.2
      %v325 = vmul.f32 %v261, 0.2
      %v326 = vmul.f32 %v262, 0.2
      %v327 = vmul.f32 %v263, 0.2
      %v328 = vmul.f32 %v264, 0.2
      %v329 = vmul.f32 %v265, 0.2
      %v330 = vmul.f32 %v266, 0.2
      %v331 = vmul.f32 %v267, 0.2
      %v332 = vmul.f32 %v268, 0.2
      %v333 = vmul.f32 %v269, 0.2
      %v334 = vmul.f32 %v270, 0.2
      %v335 = vmul.f32 %v271, 0.2
      %v336 = vmul.f32 %v272, 0.2
      %v337 = vmul.f32 %v273, 0.2
      %v338 = vmul.f32 %v274, 0.2
      %v339 = vmul.f32 %v275, 0.2
      %v340 = vmul.f32 %v276, 0.2
      %v341 = vmul.f32 %v277, 0.2
      %v342 = vmul.f32 %v278, 0.2
      %v343 = vmul.f32 %v279, 0.2
      %v344 = vmul.f32 %v280, 0.2
      %v345 = vmul.f32 %v281, 0.2
      %v346 = vmul.f32 %v282, 0.2
      %v347 = vmul.f32 %v283, 0.2
      %v348 = vsel %vm284, %v252, %v316
      %v349 = vsel %vm285, %v253, %v317
      %v350 = vsel %vm286, %v254, %v318
      %v351 = vsel %vm287, %v255, %v319
      %v352 = vsel %vm288, %v256, %v320
      %v353 = vsel %vm289, %v257, %v321
      %v354 = vsel %vm290, %v258, %v322
      %v355 = vsel %vm291, %v259, %v323
      %v356 = vsel %vm292, %v260, %v324
      %v357 = vsel %vm293, %v261, %v325
      %v358 = vsel %vm294, %v262, %v326
      %v359 = vsel %vm295, %v263, %v327
      %v360 = vsel %vm296, %v264, %v328
      %v361 = vsel %vm297, %v265, %v329
      %v362 = vsel %vm298, %v266, %v330
      %v363 = vsel %vm299, %v267, %v331
      %v364 = vsel %vm300, %v268, %v332
      %v365 = vsel %vm301, %v269, %v333
      %v366 = vsel %vm302, %v270, %v334
      %v367 = vsel %vm303, %v271, %v335
      %v368 = vsel %vm304, %v272, %v336
      %v369 = vsel %vm305, %v273, %v337
      %v370 = vsel %vm306, %v274, %v338
      %v371 = vsel %vm307, %v275, %v339
      %v372 = vsel %vm308, %v276, %v340
      %v373 = vsel %vm309, %v277, %v341
      %v374 = vsel %vm310, %v278, %v342
      %v375 = vsel %vm311, %v279, %v343
      %v376 = vsel %vm312, %v280, %v344
      %v377 = vsel %vm313, %v281, %v345
      %v378 = vsel %vm314, %v282, %v346
      %v379 = vsel %vm315, %v283, %v347
      %vm380 = vcmask 64512
      %381 = vst.msk [vmem:[%s172] sm:$0xff] %vm380, %v348
      %382 = vst.msk [vmem:[%s172 + $0x8] sm:$0xff] %vm380, %v349
      %383 = vst.msk [vmem:[%s172 + $0x10] sm:$0xff] %vm380, %v350
      %384 = vst.msk [vmem:[%s172 + $0x18] sm:$0xff] %vm380, %v351
      %385 = vst.msk [vmem:[%s172 + $0x20] sm:$0xff] %vm380, %v352
      %386 = vst.msk [vmem:[%s172 + $0x28] sm:$0xff] %vm380, %v353
      %387 = vst.msk [vmem:[%s172 + $0x30] sm:$0xff] %vm380, %v354
      %388 = vst.msk [vmem:[%s172 + $0x38] sm:$0xff] %vm380, %v355
      %389 = vst.msk [vmem:[%s172 + $0x40] sm:$0xff] %vm380, %v356
      %390 = vst.msk [vmem:[%s172 + $0x48] sm:$0xff] %vm380, %v357
      %391 = vst.msk [vmem:[%s172 + $0x50] sm:$0xff] %vm380, %v358
      %392 = vst.msk [vmem:[%s172 + $0x58] sm:$0xff] %vm380, %v359
      %393 = vst.msk [vmem:[%s172 + $0x60] sm:$0xff] %vm380, %v360
      %394 = vst.msk [vmem:[%s172 + $0x68] sm:$0xff] %vm380, %v361
      %395 = vst.msk [vmem:[%s172 + $0x70] sm:$0xff] %vm380, %v362
      %396 = vst.msk [vmem:[%s172 + $0x78] sm:$0xff] %vm380, %v363
      %397 = vst.msk [vmem:[%s172 + $0x80] sm:$0xff] %vm380, %v364
      %398 = vst.msk [vmem:[%s172 + $0x88] sm:$0xff] %vm380, %v365
      %399 = vst.msk [vmem:[%s172 + $0x90] sm:$0xff] %vm380, %v366
      %400 = vst.msk [vmem:[%s172 + $0x98] sm:$0xff] %vm380, %v367
      %401 = vst.msk [vmem:[%s172 + $0xa0] sm:$0xff] %vm380, %v368
      %402 = vst.msk [vmem:[%s172 + $0xa8] sm:$0xff] %vm380, %v369
      %403 = vst.msk [vmem:[%s172 + $0xb0] sm:$0xff] %vm380, %v370
      %404 = vst.msk [vmem:[%s172 + $0xb8] sm:$0xff] %vm380, %v371
      %405 = vst.msk [vmem:[%s172 + $0xc0] sm:$0xff] %vm380, %v372
      %406 = vst.msk [vmem:[%s172 + $0xc8] sm:$0xff] %vm380, %v373
      %407 = vst.msk [vmem:[%s172 + $0xd0] sm:$0xff] %vm380, %v374
      %408 = vst.msk [vmem:[%s172 + $0xd8] sm:$0xff] %vm380, %v375
      %409 = vst.msk [vmem:[%s172 + $0xe0] sm:$0xff] %vm380, %v376
      %410 = vst.msk [vmem:[%s172 + $0xe8] sm:$0xff] %vm380, %v377
      %411 = vst.msk [vmem:[%s172 + $0xf0] sm:$0xff] %vm380, %v378
      %412 = vst.msk [vmem:[%s172 + $0xf8] sm:$0xff] %vm380, %v379
      %s413 = smul.u32 32, %s14
      %p414 = scmp.lt.s32.totalorder %s413, 255
      %s415 = scalar_select %p414, %s413, 255
      %s416 = smul.addr %s415, 8
      %s417 = scalar_lea.vmem %s3, %s416
      // Predicated region
      $region33: #{unet_up_forward.7} parent=31 // pred_check
        %p418 = pneg %p100
      $region34: #{unet_up_forward.7} parent=31 // pred_check_branch
        %420 = sbr.rel (%p418) target = $region36
      $region35: #{unet_up_forward.7} parent=31 // pred_region
        %s421 = smul.u32 32, %s14
      $region36: #{unet_up_forward.7} parent=31 // pred_fallthru
        _
    $region32: #{unet_up_forward.7} parent=5 // pred_fallthru
      _
    %p422 = scmp.le.s32.totalorder 2, %s9
    // Predicated region
    $region37: #{unet_up_forward.7} parent=5 // pred_check
      %p423 = pneg %p422
    $region38: #{unet_up_forward.7} parent=5 // pred_check_branch
      %425 = sbr.rel (%p423) target = $region40
    $region39: #{unet_up_forward.7} parent=5 // pred_region
      %s426 = ssub.s32 %s9, 2
      // Predicated region
      $region41: #{unet_up_forward.7} parent=39 // pred_check
        %p427 = pneg %p106
      $region42: #{unet_up_forward.7} parent=39 // pred_check_branch
        %429 = sbr.rel (%p427) target = $region44
      $region43: #{unet_up_forward.7} parent=39 // pred_region
        %s430 = smul.u32 32, %s15
        %p431 = scmp.lt.s32.totalorder %s430, 255
        %s432 = scalar_select %p431, %s430, 255
        %s433 = smul.addr %s432, 8
        %s434 = scalar_lea.vmem %s3, %s433
      $region44: #{unet_up_forward.7} parent=39 // pred_fallthru
        _
    $region40: #{unet_up_forward.7} parent=5 // pred_fallthru
      _
  $region6: #{unet_up_forward.7} parent=0 // loop_footer
    %s13 = sadd.s32 1, %s9
  $region7: #{unet_up_forward.7} parent=0 // loop_footer_branch
    %8 = sbr.rel target = $region3
  $region8: #{unet_up_forward.7} parent=0 // loop_exit
    _

// kernel: unet_up_forward.5
$region0: #{unet_up_forward.5}
  #allocation0 [shape = 'u32[]', space=smem, size = 0x4, offset = 0x4, fixed_abs, tag = 'smem constant byte address 0x4 - core index']
  #allocation1 [shape = 'u32[144,128]{1,0:T(1,128)}', space=vmem, size = 0x12000, scoped, tag = 'internal scratch']
  %s0 = inlined_call_operand.vmem [shape: f32[32,16,16], index: 0, kind: input, shape index: {}]
  %s1 = inlined_call_operand.vmem [shape: bf16[32,2,16,2,4], index: 1, kind: input, shape index: {}]
  %s2 = inlined_call_operand.vmem [shape: f32[1,1,4], index: 2, kind: input, shape index: {}]
  %s3 = inlined_call_operand.vmem [shape: f32[1,1,4], index: 3, kind: input, shape index: {}]
  %s4 = inlined_call_operand.vmem [shape: bf16[4,8], index: 4, kind: input, shape index: {}]
  %s5 = inlined_call_operand.vmem [shape: bf16[4,8], index: 5, kind: input, shape index: {}]
  %s6 = inlined_call_operand.vmem [shape: f32[32,2,16,16], index: 6, kind: output, shape index: {0}]
  %s7 = inlined_call_operand.vmem [shape: f32[8,2,8], index: 7, kind: output, shape index: {1}]
  %8 = xla_tuple %s6, %s7
  %s9 = sld [smem:[#allocation0]]
  $region65: #{unet_up_forward.5} parent=0
    _
  %s11 = ssub.s32 1, %s9
  %s12 = scalar_select 0, %s11, %s9
  loop: start=0, step=1, limit=10
  $region2: #{unet_up_forward.5} parent=0 // loop_pre_header
    _
  $region3: #{unet_up_forward.5} parent=0 // loop_header
    %s14 = sphi 0, %s18
    %p15 = scmp.ge.s32.totalorder %s14, 10
    %s24 = sphi 0, %s26
    %s27 = sphi 0, %s24
    %s28 = sphi 0, %s27
    %s44 = sphi 0, %s28
    %s50 = sphi 0, %s52
    %s53 = sphi 0, %s50
    %s54 = sphi 0, %s53
    %s70 = sphi 0, %s54
    %s74 = sphi 0, %s74
    %s76 = sphi 0, %s74
    %s77 = sphi 0, %s76
    %s91 = sphi 0, %s77
    %s95 = sphi 0, %s95
    %s97 = sphi 0, %s95
    %s98 = sphi 0, %s97
    %s112 = sphi 0, %s98
    %s116 = sphi 0, %s116
    %s118 = sphi 0, %s116
    %s119 = sphi 0, %s118
    %s133 = sphi 0, %s119
    %s137 = sphi 0, %s137
    %s139 = sphi 0, %s137
    %s140 = sphi 0, %s139
    %s154 = sphi 0, %s140
    %s160 = sphi 0, %s162
    %s163 = sphi 0, %s160
    %s164 = sphi 0, %s163
    %s180 = sphi 0, %s164
    %s186 = sphi 0, %s188
    %s189 = sphi 0, %s186
    %s190 = sphi 0, %s189
    %s206 = sphi 0, %s190
  $region4: #{unet_up_forward.5} parent=0 // loop_header_branch
    %17 = sbr.rel (%p15) target = $region8
  $region5: #{unet_up_forward.5} parent=0 // loop_body
    %s19 = ssub.s32 %s14, 1
    %s20 = ssub.s32 %s14, 2
    %s21 = sadd.s32 %s14, 1
    %s22 = ssub.s32 %s14, %s21
    %p23 = scmp.eq.s32.totalorder %s22, 0
    %s25 = sadd.s32 %s24, 1
    %s26 = scalar_select %p23, %s24, %s25
    %p29 = pneg %p23
    %p30 = scmp.eq.s32.totalorder %s14, 7
    %p31 = por %p29, %p30
    %p32 = scmp.ne.s32.totalorder %s24, %s27
    %p33 = scmp.eq.s32.totalorder %s14, 0
    %p34 = por %p32, %p33
    %p35 = scmp.ne.s32.totalorder %s24, %s27
    %p36 = scmp.eq.s32.totalorder %s19, 7
    %p37 = por %p35, %p36
    %p38 = scmp.ne.s32.totalorder %s27, %s28
    %p39 = scmp.eq.s32.totalorder %s19, 0
    %p40 = por %p38, %p39
    %p41 = scmp.ne.s32.totalorder %s27, %s28
    %p42 = scmp.eq.s32.totalorder %s20, 7
    %p43 = por %p41, %p42
    %p45 = scmp.ne.s32.totalorder %s28, %s44
    %p46 = scmp.eq.s32.totalorder %s20, 0
    %p47 = por %p45, %p46
    %s48 = ssub.s32 %s14, %s21
    %p49 = scmp.eq.s32.totalorder %s48, 0
    %s51 = sadd.s32 %s50, 1
    %s52 = scalar_select %p49, %s50, %s51
    %p55 = pneg %p49
    %p56 = scmp.eq.s32.totalorder %s14, 7
    %p57 = por %p55, %p56
    %p58 = scmp.ne.s32.totalorder %s50, %s53
    %p59 = scmp.eq.s32.totalorder %s14, 0
    %p60 = por %p58, %p59
    %p61 = scmp.ne.s32.totalorder %s50, %s53
    %p62 = scmp.eq.s32.totalorder %s19, 7
    %p63 = por %p61, %p62
    %p64 = scmp.ne.s32.totalorder %s53, %s54
    %p65 = scmp.eq.s32.totalorder %s19, 0
    %p66 = por %p64, %p65
    %p67 = scmp.ne.s32.totalorder %s53, %s54
    %p68 = scmp.eq.s32.totalorder %s20, 7
    %p69 = por %p67, %p68
    %p71 = scmp.ne.s32.totalorder %s54, %s70
    %p72 = scmp.eq.s32.totalorder %s20, 0
    %p73 = por %p71, %p72
    %s75 = sadd.s32 %s74, 1
    %p78 = scmp.eq.s32.totalorder %s14, 7
    %p79 = scmp.ne.s32.totalorder %s74, %s76
    %p80 = scmp.eq.s32.totalorder %s14, 0
    %p81 = por %p79, %p80
    %p82 = scmp.ne.s32.totalorder %s74, %s76
    %p83 = scmp.eq.s32.totalorder %s19, 7
    %p84 = por %p82, %p83
    %p85 = scmp.ne.s32.totalorder %s76, %s77
    %p86 = scmp.eq.s32.totalorder %s19, 0
    %p87 = por %p85, %p86
    %p88 = scmp.ne.s32.totalorder %s76, %s77
    %p89 = scmp.eq.s32.totalorder %s20, 7
    %p90 = por %p88, %p89
    %p92 = scmp.ne.s32.totalorder %s77, %s91
    %p93 = scmp.eq.s32.totalorder %s20, 0
    %p94 = por %p92, %p93
    %s96 = sadd.s32 %s95, 1
    %p99 = scmp.eq.s32.totalorder %s14, 7
    %p100 = scmp.ne.s32.totalorder %s95, %s97
    %p101 = scmp.eq.s32.totalorder %s14, 0
    %p102 = por %p100, %p101
    %p103 = scmp.ne.s32.totalorder %s95, %s97
    %p104 = scmp.eq.s32.totalorder %s19, 7
    %p105 = por %p103, %p104
    %p106 = scmp.ne.s32.totalorder %s97, %s98
    %p107 = scmp.eq.s32.totalorder %s19, 0
    %p108 = por %p106, %p107
    %p109 = scmp.ne.s32.totalorder %s97, %s98
    %p110 = scmp.eq.s32.totalorder %s20, 7
    %p111 = por %p109, %p110
    %p113 = scmp.ne.s32.totalorder %s98, %s112
    %p114 = scmp.eq.s32.totalorder %s20, 0
    %p115 = por %p113, %p114
    %s117 = sadd.s32 %s116, 1
    %p120 = scmp.eq.s32.totalorder %s14, 7
    %p121 = scmp.ne.s32.totalorder %s116, %s118
    %p122 = scmp.eq.s32.totalorder %s14, 0
    %p123 = por %p121, %p122
    %p124 = scmp.ne.s32.totalorder %s116, %s118
    %p125 = scmp.eq.s32.totalorder %s19, 7
    %p126 = por %p124, %p125
    %p127 = scmp.ne.s32.totalorder %s118, %s119
    %p128 = scmp.eq.s32.totalorder %s19, 0
    %p129 = por %p127, %p128
    %p130 = scmp.ne.s32.totalorder %s118, %s119
    %p131 = scmp.eq.s32.totalorder %s20, 7
    %p132 = por %p130, %p131
    %p134 = scmp.ne.s32.totalorder %s119, %s133
    %p135 = scmp.eq.s32.totalorder %s20, 0
    %p136 = por %p134, %p135
    %s138 = sadd.s32 %s137, 1
    %p141 = scmp.eq.s32.totalorder %s14, 7
    %p142 = scmp.ne.s32.totalorder %s137, %s139
    %p143 = scmp.eq.s32.totalorder %s14, 0
    %p144 = por %p142, %p143
    %p145 = scmp.ne.s32.totalorder %s137, %s139
    %p146 = scmp.eq.s32.totalorder %s19, 7
    %p147 = por %p145, %p146
    %p148 = scmp.ne.s32.totalorder %s139, %s140
    %p149 = scmp.eq.s32.totalorder %s19, 0
    %p150 = por %p148, %p149
    %p151 = scmp.ne.s32.totalorder %s139, %s140
    %p152 = scmp.eq.s32.totalorder %s20, 7
    %p153 = por %p151, %p152
    %p155 = scmp.ne.s32.totalorder %s140, %s154
    %p156 = scmp.eq.s32.totalorder %s20, 0
    %p157 = por %p155, %p156
    %s158 = ssub.s32 %s14, %s21
    %p159 = scmp.eq.s32.totalorder %s158, 0
    %s161 = sadd.s32 %s160, 1
    %s162 = scalar_select %p159, %s160, %s161
    %p165 = pneg %p159
    %p166 = scmp.eq.s32.totalorder %s14, 7
    %p167 = por %p165, %p166
    %p168 = scmp.ne.s32.totalorder %s160, %s163
    %p169 = scmp.eq.s32.totalorder %s14, 0
    %p170 = por %p168, %p169
    %p171 = scmp.ne.s32.totalorder %s160, %s163
    %p172 = scmp.eq.s32.totalorder %s19, 7
    %p173 = por %p171, %p172
    %p174 = scmp.ne.s32.totalorder %s163, %s164
    %p175 = scmp.eq.s32.totalorder %s19, 0
    %p176 = por %p174, %p175
    %p177 = scmp.ne.s32.totalorder %s163, %s164
    %p178 = scmp.eq.s32.totalorder %s20, 7
    %p179 = por %p177, %p178
    %p181 = scmp.ne.s32.totalorder %s164, %s180
    %p182 = scmp.eq.s32.totalorder %s20, 0
    %p183 = por %p181, %p182
    %s184 = ssub.s32 %s14, %s21
    %p185 = scmp.eq.s32.totalorder %s184, 0
    %s187 = sadd.s32 %s186, 1
    %s188 = scalar_select %p185, %s186, %s187
    %p191 = pneg %p185
    %p192 = scmp.eq.s32.totalorder %s14, 7
    %p193 = por %p191, %p192
    %p194 = scmp.ne.s32.totalorder %s186, %s189
    %p195 = scmp.eq.s32.totalorder %s14, 0
    %p196 = por %p194, %p195
    %p197 = scmp.ne.s32.totalorder %s186, %s189
    %p198 = scmp.eq.s32.totalorder %s19, 7
    %p199 = por %p197, %p198
    %p200 = scmp.ne.s32.totalorder %s189, %s190
    %p201 = scmp.eq.s32.totalorder %s19, 0
    %p202 = por %p200, %p201
    %p203 = scmp.ne.s32.totalorder %s189, %s190
    %p204 = scmp.eq.s32.totalorder %s20, 7
    %p205 = por %p203, %p204
    %p207 = scmp.ne.s32.totalorder %s190, %s206
    %p208 = scmp.eq.s32.totalorder %s20, 0
    %p209 = por %p207, %p208
    %p210 = scmp.le.s32.totalorder 1, %s14
    %p211 = scmp.lt.s32.totalorder %s14, 9
    %p212 = pnand %p210, %p211
    %p213 = pneg %p212
    // Predicated region
    $region9: #{unet_up_forward.5} parent=5 // pred_check
      _
    $region10: #{unet_up_forward.5} parent=5 // pred_check_branch
      %215 = sbr.rel (%p212) target = $region12
    $region11: #{unet_up_forward.5} parent=5 // pred_region
      %s216 = ssub.s32 %s14, 1
      // Predicated region
      $region13: #{unet_up_forward.5} parent=11 // pred_check
        %p217 = pneg %p87
      $region14: #{unet_up_forward.5} parent=11 // pred_check_branch
        %219 = sbr.rel (%p217) target = $region16
      $region15: #{unet_up_forward.5} parent=11 // pred_region
        _
      $region16: #{unet_up_forward.5} parent=11 // pred_fallthru
        _
      // Predicated region
      $region17: #{unet_up_forward.5} parent=11 // pred_check
        %p220 = pneg %p108
      $region18: #{unet_up_forward.5} parent=11 // pred_check_branch
        %222 = sbr.rel (%p220) target = $region20
      $region19: #{unet_up_forward.5} parent=11 // pred_region
        _
      $region20: #{unet_up_forward.5} parent=11 // pred_fallthru
        _
      // Predicated region
      $region21: #{unet_up_forward.5} parent=11 // pred_check
        %p223 = pneg %p129
      $region22: #{unet_up_forward.5} parent=11 // pred_check_branch
        %225 = sbr.rel (%p223) target = $region24
      $region23: #{unet_up_forward.5} parent=11 // pred_region
        _
      $region24: #{unet_up_forward.5} parent=11 // pred_fallthru
        _
      // Predicated region
      $region25: #{unet_up_forward.5} parent=11 // pred_check
        %p226 = pneg %p150
      $region26: #{unet_up_forward.5} parent=11 // pred_check_branch
        %228 = sbr.rel (%p226) target = $region28
      $region27: #{unet_up_forward.5} parent=11 // pred_region
        _
      $region28: #{unet_up_forward.5} parent=11 // pred_fallthru
        _
    $region12: #{unet_up_forward.5} parent=5 // pred_fallthru
      _
    %p229 = scmp.lt.s32.totalorder %s14, 8
    // Predicated region
    $region29: #{unet_up_forward.5} parent=5 // pred_check
      %p230 = pneg %p229
    $region30: #{unet_up_forward.5} parent=5 // pred_check_branch
      %232 = sbr.rel (%p230) target = $region32
    $region31: #{unet_up_forward.5} parent=5 // pred_region
      // Predicated region
      $region33: #{unet_up_forward.5} parent=31 // pred_check
        %p233 = pneg %p34
      $region34: #{unet_up_forward.5} parent=31 // pred_check_branch
        %235 = sbr.rel (%p233) target = $region36
      $region35: #{unet_up_forward.5} parent=31 // pred_region
        %s236 = smul.u32 4, %s14
        %p237 = scmp.lt.s32.totalorder %s236, 31
        %s238 = scalar_select %p237, %s236, 31
        %s239 = smul.addr %s238, 2
        %s240 = smul.addr %s239, 8
        %s241 = scalar_lea.vmem %s0, %s240
        %s242 = smul.u32 4, %s14
      $region36: #{unet_up_forward.5} parent=31 // pred_fallthru
        _
      // Predicated region
      $region37: #{unet_up_forward.5} parent=31 // pred_check
        %p243 = pneg %p60
      $region38: #{unet_up_forward.5} parent=31 // pred_check_branch
        %245 = sbr.rel (%p243) target = $region40
      $region39: #{unet_up_forward.5} parent=31 // pred_region
        %s246 = smul.u32 4, %s14
        %p247 = scmp.lt.s32.totalorder %s246, 31
        %s248 = scalar_select %p247, %s246, 31
        %s249 = smul.addr %s248, 32
        %s250 = scalar_lea.vmem %s1, %s249
        %s251 = smul.u32 4, %s14
      $region40: #{unet_up_forward.5} parent=31 // pred_fallthru
        _
    $region32: #{unet_up_forward.5} parent=5 // pred_fallthru
      _
    %p252 = scmp.le.s32.totalorder 1, %s14
    %p253 = scmp.lt.s32.totalorder %s14, 9
    %p254 = pnand %p252, %p253
    %p255 = pneg %p254
    // Predicated region
    $region41: #{unet_up_forward.5} parent=5 // pred_check
      _
    $region42: #{unet_up_forward.5} parent=5 // pred_check_branch
      %257 = sbr.rel (%p254) target = $region44
    $region43: #{unet_up_forward.5} parent=5 // pred_region
      %s258 = ssub.s32 %s14, 1
      %s259 = smul.u32 4, %s19
      %p260 = scmp.lt.s32.totalorder %s259, 31
      %s261 = scalar_select %p260, %s259, 31
      %s262 = smul.addr %s261, 2
      %s263 = smul.addr %s262, 8
      %s264 = scalar_lea.vmem %s0, %s263
      %p265 = pneg %p40
      %p266 = pneg %p37
      %s267 = smul.u32 4, %s19
      %p268 = scmp.lt.s32.totalorder %s267, 31
      %s269 = scalar_select %p268, %s267, 31
      %s270 = smul.addr %s269, 32
      %s271 = scalar_lea.vmem %s1, %s270
      %p272 = pneg %p66
      %p273 = pneg %p63
      %p274 = pneg %p87
      %p275 = pneg %p84
      %p276 = pneg %p108
      %p277 = pneg %p105
      %p278 = pneg %p129
      %p279 = pneg %p126
      %p280 = pneg %p150
      %p281 = pneg %p147
      %p282 = pneg %p176
      %p283 = pneg %p173
      %s284 = smul.u32 4, %s19
      %p285 = scmp.lt.s32.totalorder %s284, 31
      %s286 = scalar_select %p285, %s284, 31
      %s287 = smul.addr %s286, 4
      %s288 = smul.addr %s287, 8
      %s289 = scalar_lea.vmem %s6, %s288
      %p290 = pneg %p202
      %p291 = pneg %p199
      %p292 = scmp.lt.s32.totalorder %s19, 7
      %s293 = scalar_select %p292, %s19, 7
      %s294 = smul.addr %s293, 2
      %s295 = scalar_lea.vmem %s7, %s294
      %s296 = smul.u32 4, %s19
      %p297 = scmp.lt.s32.totalorder %s296, 31
      %s298 = scalar_select %p297, %s296, 31
      %s299 = smul.addr %s298, 2
      %s300 = smul.addr %s299, 8
      %s301 = scalar_lea.vmem %s0, %s300
      %s302 = smul.u32 4, %s19
      %s303 = smul.u32 4, %s19
      %p304 = scmp.lt.s32.totalorder %s303, 31
      %s305 = scalar_select %p304, %s303, 31
      %s306 = smul.addr %s305, 32
      %s307 = scalar_lea.vmem %s1, %s306
      %s308 = smul.u32 4, %s19
      %s309 = smul.u32 4, %s19
      %p310 = scmp.lt.s32.totalorder %s309, 31
      %s311 = scalar_select %p310, %s309, 31
      %s312 = smul.addr %s311, 4
      %s313 = smul.addr %s312, 8
      %s314 = scalar_lea.vmem %s6, %s313
      %s315 = smul.u32 4, %s19
      %p316 = scmp.lt.s32.totalorder %s19, 7
      %s317 = scalar_select %p316, %s19, 7
      %s318 = smul.addr %s317, 2
      %s319 = scalar_lea.vmem %s7, %s318
      %v321 = vld [vmem:[%s2] sm:$0x1]
      %v322 = vld [vmem:[%s3] sm:$0x1]
      %v323 = vld [vmem:[%s4] sm:$0x3]
      %v324 = vld [vmem:[%s5] sm:$0x3]
      %v325 = vld [vmem:[%s301] sm:$0xff]
      %v326 = vld [vmem:[%s301 + $0x8] sm:$0xff]
      %v327 = vld [vmem:[%s301 + $0x10] sm:$0xff]
      %v328 = vld [vmem:[%s301 + $0x18] sm:$0xff]
      %v329 = vld [vmem:[%s301 + $0x20] sm:$0xff]
      %v330 = vld [vmem:[%s301 + $0x28] sm:$0xff]
      %v331 = vld [vmem:[%s301 + $0x30] sm:$0xff]
      %v332 = vld [vmem:[%s301 + $0x38] sm:$0xff]
      %v334 = vlaneseq
      %v335 = vshrl.u32 %v334, 7
      %v336 = vsub.s32 0, %v335
      %v337 = vrot.slane %v321, %v336
      %v339 = vmul.f32 %v325, %v337
      %v340 = vmul.f32 %v326, %v337
      %v341 = vmul.f32 %v327, %v337
      %v342 = vmul.f32 %v328, %v337
      %v343 = vmul.f32 %v329, %v337
      %v344 = vmul.f32 %v330, %v337
      %v345 = vmul.f32 %v331, %v337
      %v346 = vmul.f32 %v332, %v337
      %v348 = vlaneseq
      %v349 = vshrl.u32 %v348, 7
      %v350 = vsub.s32 0, %v349
      %v351 = vrot.slane %v322, %v350
      %v353 = vadd.f32 %v339, %v351
      %v354 = vadd.f32 %v340, %v351
      %v355 = vadd.f32 %v341, %v351
      %v356 = vadd.f32 %v342, %v351
      %v357 = vadd.f32 %v343, %v351
      %v358 = vadd.f32 %v344, %v351
      %v359 = vadd.f32 %v345, %v351
      %v360 = vadd.f32 %v346, %v351
      %vm361 = vcmp.ge.f32.partialorder %v353, 0.0
      %vm362 = vcmp.ge.f32.partialorder %v354, 0.0
      %vm363 = vcmp.ge.f32.partialorder %v355, 0.0
      %vm364 = vcmp.ge.f32.partialorder %v356, 0.0
      %vm365 = vcmp.ge.f32.partialorder %v357, 0.0
      %vm366 = vcmp.ge.f32.partialorder %v358, 0.0
      %vm367 = vcmp.ge.f32.partialorder %v359, 0.0
      %vm368 = vcmp.ge.f32.partialorder %v360, 0.0
      %v369 = vmul.f32 %v353, 0.2
      %v370 = vmul.f32 %v354, 0.2
      %v371 = vmul.f32 %v355, 0.2
      %v372 = vmul.f32 %v356, 0.2
      %v373 = vmul.f32 %v357, 0.2
      %v374 = vmul.f32 %v358, 0.2
      %v375 = vmul.f32 %v359, 0.2
      %v376 = vmul.f32 %v360, 0.2
      %v377 = vsel %vm361, %v353, %v369
      %v378 = vsel %vm362, %v354, %v370
      %v379 = vsel %vm363, %v355, %v371
      %v380 = vsel %vm364, %v356, %v372
      %v381 = vsel %vm365, %v357, %v373
      %v382 = vsel %vm366, %v358, %v374
      %v383 = vsel %vm367, %v359, %v375
      %v384 = vsel %vm368, %v360, %v376
      %v385 = vpack.c.bf16 %v378, %v377
      %v386 = vpack.c.bf16 %v380, %v379
      %v387 = vpack.c.bf16 %v382, %v381
      %v388 = vpack.c.bf16 %v384, %v383
      %v389 = vld [vmem:[%s307] sm:$0x1]
      %v390 = vld [vmem:[%s307 + $0x1] sm:$0x1]
      %v391 = vld [vmem:[%s307 + $0x2] sm:$0x1]
      %v392 = vld [vmem:[%s307 + $0x3] sm:$0x1]
      %v393 = vld [vmem:[%s307 + $0x4] sm:$0x1]
      %v394 = vld [vmem:[%s307 + $0x5] sm:$0x1]
      %v395 = vld [vmem:[%s307 + $0x6] sm:$0x1]
      %v396 = vld [vmem:[%s307 + $0x7] sm:$0x1]
      %v397 = vld [vmem:[%s307 + $0x8] sm:$0x1]
      %v398 = vld [vmem:[%s307 + $0x9] sm:$0x1]
      %v399 = vld [vmem:[%s307 + $0xa] sm:$0x1]
      %v400 = vld [vmem:[%s307 + $0xb] sm:$0x1]
      %v401 = vld [vmem:[%s307 + $0xc] sm:$0x1]
      %v402 = vld [vmem:[%s307 + $0xd] sm:$0x1]
      %v403 = vld [vmem:[%s307 + $0xe] sm:$0x1]
      %v404 = vld [vmem:[%s307 + $0xf] sm:$0x1]
      %v405 = vld [vmem:[%s307 + $0x20] sm:$0x1]
      %v406 = vld [vmem:[%s307 + $0x21] sm:$0x1]
      %v407 = vld [vmem:[%s307 + $0x22] sm:$0x1]
      %v408 = vld [vmem:[%s307 + $0x23] sm:$0x1]
      %v409 = vld [vmem:[%s307 + $0x24] sm:$0x1]
      %v410 = vld [vmem:[%s307 + $0x25] sm:$0x1]
      %v411 = vld [vmem:[%s307 + $0x26] sm:$0x1]
      %v412 = vld [vmem:[%s307 + $0x27] sm:$0x1]
      %v413 = vld [vmem:[%s307 + $0x28] sm:$0x1]
      %v414 = vld [vmem:[%s307 + $0x29] sm:$0x1]
      %v415 = vld [vmem:[%s307 + $0x2a] sm:$0x1]
      %v416 = vld [vmem:[%s307 + $0x2b] sm:$0x1]
      %v417 = vld [vmem:[%s307 + $0x2c] sm:$0x1]
      %v418 = vld [vmem:[%s307 + $0x2d] sm:$0x1]
      %v419 = vld [vmem:[%s307 + $0x2e] sm:$0x1]
      %v420 = vld [vmem:[%s307 + $0x2f] sm:$0x1]
      %v421 = vld [vmem:[%s307 + $0x40] sm:$0x1]
      %v422 = vld [vmem:[%s307 + $0x41] sm:$0x1]
      %v423 = vld [vmem:[%s307 + $0x42] sm:$0x1]
      %v424 = vld [vmem:[%s307 + $0x43] sm:$0x1]
      %v425 = vld [vmem:[%s307 + $0x44] sm:$0x1]
      %v426 = vld [vmem:[%s307 + $0x45] sm:$0x1]
      %v427 = vld [vmem:[%s307 + $0x46] sm:$0x1]
      %v428 = vld [vmem:[%s307 + $0x47] sm:$0x1]
      %v429 = vld [vmem:[%s307 + $0x48] sm:$0x1]
      %v430 = vld [vmem:[%s307 + $0x49] sm:$0x1]
      %v431 = vld [vmem:[%s307 + $0x4a] sm:$0x1]
      %v432 = vld [vmem:[%s307 + $0x4b] sm:$0x1]
      %v433 = vld [vmem:[%s307 + $0x4c] sm:$0x1]
      %v434 = vld [vmem:[%s307 + $0x4d] sm:$0x1]
      %v435 = vld [vmem:[%s307 + $0x4e] sm:$0x1]
      %v436 = vld [vmem:[%s307 + $0x4f] sm:$0x1]
      %v437 = vld [vmem:[%s307 + $0x60] sm:$0x1]
      %v438 = vld [vmem:[%s307 + $0x61] sm:$0x1]
      %v439 = vld [vmem:[%s307 + $0x62] sm:$0x1]
      %v440 = vld [vmem:[%s307 + $0x63] sm:$0x1]
      %v441 = vld [vmem:[%s307 + $0x64] sm:$0x1]
      %v442 = vld [vmem:[%s307 + $0x65] sm:$0x1]
      %v443 = vld [vmem:[%s307 + $0x66] sm:$0x1]
      %v444 = vld [vmem:[%s307 + $0x67] sm:$0x1]
      %v445 = vld [vmem:[%s307 + $0x68] sm:$0x1]
      %v446 = vld [vmem:[%s307 + $0x69] sm:$0x1]
      %v447 = vld [vmem:[%s307 + $0x6a] sm:$0x1]
      %v448 = vld [vmem:[%s307 + $0x6b] sm:$0x1]
      %v449 = vld [vmem:[%s307 + $0x6c] sm:$0x1]
      %v450 = vld [vmem:[%s307 + $0x6d] sm:$0x1]
      %v451 = vld [vmem:[%s307 + $0x6e] sm:$0x1]
      %v452 = vld [vmem:[%s307 + $0x6f] sm:$0x1]
      %v518 = vunpack.c.l.s4 1966171168
      %v519 = vunpack.c.0.s8 %v518
      %v520 = vlaneseq
      %v521 = vshrl.u32 %v520, 7
      %v522 = vsub.s32 %v519, %v521
      %v523 = vrot.slane %v389, %v522
      %v525 = vunpack.c.l.s4 1966171168
      %v526 = vunpack.c.0.s8 %v525
      %v527 = vlaneseq
      %v528 = vshrl.u32 %v527, 7
      %v529 = vsub.s32 %v526, %v528
      %v530 = vrot.slane %v523, %v529
      %v532 = vunpack.c.l.s4 1966171168
      %v533 = vunpack.c.0.s8 %v532
      %v534 = vlaneseq
      %v535 = vshrl.u32 %v534, 7
      %v536 = vsub.s32 %v533, %v535
      %v537 = vrot.slane %v390, %v536
      %v539 = vunpack.c.l.s4 1966171168
      %v540 = vunpack.c.0.s8 %v539
      %v541 = vlaneseq
      %v542 = vshrl.u32 %v541, 7
      %v543 = vsub.s32 %v540, %v542
      %v544 = vrot.slane %v537, %v543
      %v546 = vunpack.c.l.s4 1966171168
      %v547 = vunpack.c.0.s8 %v546
      %v548 = vlaneseq
      %v549 = vshrl.u32 %v548, 7
      %v550 = vsub.s32 %v547, %v549
      %v551 = vrot.slane %v391, %v550
      %v553 = vunpack.c.l.s4 1966171168
      %v554 = vunpack.c.0.s8 %v553
      %v555 = vlaneseq
      %v556 = vshrl.u32 %v555, 7
      %v557 = vsub.s32 %v554, %v556
      %v558 = vrot.slane %v551, %v557
      %v560 = vunpack.c.l.s4 1966171168
      %v561 = vunpack.c.0.s8 %v560
      %v562 = vlaneseq
      %v563 = vshrl.u32 %v562, 7
      %v564 = vsub.s32 %v561, %v563
      %v565 = vrot.slane %v392, %v564
      %v567 = vunpack.c.l.s4 1966171168
      %v568 = vunpack.c.0.s8 %v567
      %v569 = vlaneseq
      %v570 = vshrl.u32 %v569, 7
      %v571 = vsub.s32 %v568, %v570
      %v572 = vrot.slane %v565, %v571
      %v574 = vunpack.c.l.s4 1966171168
      %v575 = vunpack.c.0.s8 %v574
      %v576 = vlaneseq
      %v577 = vshrl.u32 %v576, 7
      %v578 = vsub.s32 %v575, %v577
      %v579 = vrot.slane %v393, %v578
      %v581 = vunpack.c.l.s4 1966171168
      %v582 = vunpack.c.0.s8 %v581
      %v583 = vlaneseq
      %v584 = vshrl.u32 %v583, 7
      %v585 = vsub.s32 %v582, %v584
      %v586 = vrot.slane %v579, %v585
      %v588 = vunpack.c.l.s4 1966171168
      %v589 = vunpack.c.0.s8 %v588
      %v590 = vlaneseq
      %v591 = vshrl.u32 %v590, 7
      %v592 = vsub.s32 %v589, %v591
      %v593 = vrot.slane %v394, %v592
      %v595 = vunpack.c.l.s4 1966171168
      %v596 = vunpack.c.0.s8 %v595
      %v597 = vlaneseq
      %v598 = vshrl.u32 %v597, 7
      %v599 = vsub.s32 %v596, %v598
      %v600 = vrot.slane %v593, %v599
      %v602 = vunpack.c.l.s4 1966171168
      %v603 = vunpack.c.0.s8 %v602
      %v604 = vlaneseq
      %v605 = vshrl.u32 %v604, 7
      %v606 = vsub.s32 %v603, %v605
      %v607 = vrot.slane %v395, %v606
      %v609 = vunpack.c.l.s4 1966171168
      %v610 = vunpack.c.0.s8 %v609
      %v611 = vlaneseq
      %v612 = vshrl.u32 %v611, 7
      %v613 = vsub.s32 %v610, %v612
      %v614 = vrot.slane %v607, %v613
      %v616 = vunpack.c.l.s4 1966171168
      %v617 = vunpack.c.0.s8 %v616
      %v618 = vlaneseq
      %v619 = vshrl.u32 %v618, 7
      %v620 = vsub.s32 %v617, %v619
      %v621 = vrot.slane %v396, %v620
      %v623 = vunpack.c.l.s4 1966171168
      %v624 = vunpack.c.0.s8 %v623
      %v625 = vlaneseq
      %v626 = vshrl.u32 %v625, 7
      %v627 = vsub.s32 %v624, %v626
      %v628 = vrot.slane %v621, %v627
      %v630 = vunpack.c.l.s4 1966171168
      %v631 = vunpack.c.0.s8 %v630
      %v632 = vlaneseq
      %v633 = vshrl.u32 %v632, 7
      %v634 = vsub.s32 %v631, %v633
      %v635 = vrot.slane %v397, %v634
      %v637 = vunpack.c.l.s4 1966171168
      %v638 = vunpack.c.0.s8 %v637
      %v639 = vlaneseq
      %v640 = vshrl.u32 %v639, 7
      %v641 = vsub.s32 %v638, %v640
      %v642 = vrot.slane %v635, %v641
      %v644 = vunpack.c.l.s4 1966171168
      %v645 = vunpack.c.0.s8 %v644
      %v646 = vlaneseq
      %v647 = vshrl.u32 %v646, 7
      %v648 = vsub.s32 %v645, %v647
      %v649 = vrot.slane %v398, %v648
      %v651 = vunpack.c.l.s4 1966171168
      %v652 = vunpack.c.0.s8 %v651
      %v653 = vlaneseq
      %v654 = vshrl.u32 %v653, 7
      %v655 = vsub.s32 %v652, %v654
      %v656 = vrot.slane %v649, %v655
      %v658 = vunpack.c.l.s4 1966171168
      %v659 = vunpack.c.0.s8 %v658
      %v660 = vlaneseq
      %v661 = vshrl.u32 %v660, 7
      %v662 = vsub.s32 %v659, %v661
      %v663 = vrot.slane %v399, %v662
      %v665 = vunpack.c.l.s4 1966171168
      %v666 = vunpack.c.0.s8 %v665
      %v667 = vlaneseq
      %v668 = vshrl.u32 %v667, 7
      %v669 = vsub.s32 %v666, %v668
      %v670 = vrot.slane %v663, %v669
      %v672 = vunpack.c.l.s4 1966171168
      %v673 = vunpack.c.0.s8 %v672
      %v674 = vlaneseq
      %v675 = vshrl.u32 %v674, 7
      %v676 = vsub.s32 %v673, %v675
      %v677 = vrot.slane %v400, %v676
      %v679 = vunpack.c.l.s4 1966171168
      %v680 = vunpack.c.0.s8 %v679
      %v681 = vlaneseq
      %v682 = vshrl.u32 %v681, 7
      %v683 = vsub.s32 %v680, %v682
      %v684 = vrot.slane %v677, %v683
      %v686 = vunpack.c.l.s4 1966171168
      %v687 = vunpack.c.0.s8 %v686
      %v688 = vlaneseq
      %v689 = vshrl.u32 %v688, 7
      %v690 = vsub.s32 %v687, %v689
      %v691 = vrot.slane %v401, %v690
      %v693 = vunpack.c.l.s4 1966171168
      %v694 = vunpack.c.0.s8 %v693
      %v695 = vlaneseq
      %v696 = vshrl.u32 %v695, 7
      %v697 = vsub.s32 %v694, %v696
      %v698 = vrot.slane %v691, %v697
      %v700 = vunpack.c.l.s4 1966171168
      %v701 = vunpack.c.0.s8 %v700
      %v702 = vlaneseq
      %v703 = vshrl.u32 %v702, 7
      %v704 = vsub.s32 %v701, %v703
      %v705 = vrot.slane %v402, %v704
      %v707 = vunpack.c.l.s4 1966171168
      %v708 = vunpack.c.0.s8 %v707
      %v709 = vlaneseq
      %v710 = vshrl.u32 %v709, 7
      %v711 = vsub.s32 %v708, %v710
      %v712 = vrot.slane %v705, %v711
      %v714 = vunpack.c.l.s4 1966171168
      %v715 = vunpack.c.0.s8 %v714
      %v716 = vlaneseq
      %v717 = vshrl.u32 %v716, 7
      %v718 = vsub.s32 %v715, %v717
      %v719 = vrot.slane %v403, %v718
      %v721 = vunpack.c.l.s4 1966171168
      %v722 = vunpack.c.0.s8 %v721
      %v723 = vlaneseq
      %v724 = vshrl.u32 %v723, 7
      %v725 = vsub.s32 %v722, %v724
      %v726 = vrot.slane %v719, %v725
      %v728 = vunpack.c.l.s4 1966171168
      %v729 = vunpack.c.0.s8 %v728
      %v730 = vlaneseq
      %v731 = vshrl.u32 %v730, 7
      %v732 = vsub.s32 %v729, %v731
      %v733 = vrot.slane %v404, %v732
      %v735 = vunpack.c.l.s4 1966171168
      %v736 = vunpack.c.0.s8 %v735
      %v737 = vlaneseq
      %v738 = vshrl.u32 %v737, 7
      %v739 = vsub.s32 %v736, %v738
      %v740 = vrot.slane %v733, %v739
      %v742 = vunpack.c.l.s4 1966171168
      %v743 = vunpack.c.0.s8 %v742
      %v744 = vlaneseq
      %v745 = vshrl.u32 %v744, 7
      %v746 = vsub.s32 %v743, %v745
      %v747 = vrot.slane %v405, %v746
      %v749 = vunpack.c.l.s4 1966171168
      %v750 = vunpack.c.0.s8 %v749
      %v751 = vlaneseq
      %v752 = vshrl.u32 %v751, 7
      %v753 = vsub.s32 %v750, %v752
      %v754 = vrot.slane %v747, %v753
      %v756 = vunpack.c.l.s4 1966171168
      %v757 = vunpack.c.0.s8 %v756
      %v758 = vlaneseq
      %v759 = vshrl.u32 %v758, 7
      %v760 = vsub.s32 %v757, %v759
      %v761 = vrot.slane %v406, %v760
      %v763 = vunpack.c.l.s4 1966171168
      %v764 = vunpack.c.0.s8 %v763
      %v765 = vlaneseq
      %v766 = vshrl.u32 %v765, 7
      %v767 = vsub.s32 %v764, %v766
      %v768 = vrot.slane %v761, %v767
      %v770 = vunpack.c.l.s4 1966171168
      %v771 = vunpack.c.0.s8 %v770
      %v772 = vlaneseq
      %v773 = vshrl.u32 %v772, 7
      %v774 = vsub.s32 %v771, %v773
      %v775 = vrot.slane %v407, %v774
      %v777 = vunpack.c.l.s4 1966171168
      %v778 = vunpack.c.0.s8 %v777
      %v779 = vlaneseq
      %v780 = vshrl.u32 %v779, 7
      %v781 = vsub.s32 %v778, %v780
      %v782 = vrot.slane %v775, %v781
      %v784 = vunpack.c.l.s4 1966171168
      %v785 = vunpack.c.0.s8 %v784
      %v786 = vlaneseq
      %v787 = vshrl.u32 %v786, 7
      %v788 = vsub.s32 %v785, %v787
      %v789 = vrot.slane %v408, %v788
      %v791 = vunpack.c.l.s4 1966171168
      %v792 = vunpack.c.0.s8 %v791
      %v793 = vlaneseq
      %v794 = vshrl.u32 %v793, 7
      %v795 = vsub.s32 %v792, %v794
      %v796 = vrot.slane %v789, %v795
      %v798 = vunpack.c.l.s4 1966171168
      %v799 = vunpack.c.0.s8 %v798
      %v800 = vlaneseq
      %v801 = vshrl.u32 %v800, 7
      %v802 = vsub.s32 %v799, %v801
      %v803 = vrot.slane %v409, %v802
      %v805 = vunpack.c.l.s4 1966171168
      %v806 = vunpack.c.0.s8 %v805
      %v807 = vlaneseq
      %v808 = vshrl.u32 %v807, 7
      %v809 = vsub.s32 %v806, %v808
      %v810 = vrot.slane %v803, %v809
      %v812 = vunpack.c.l.s4 1966171168
      %v813 = vunpack.c.0.s8 %v812
      %v814 = vlaneseq
      %v815 = vshrl.u32 %v814, 7
      %v816 = vsub.s32 %v813, %v815
      %v817 = vrot.slane %v410, %v816
      %v819 = vunpack.c.l.s4 1966171168
      %v820 = vunpack.c.0.s8 %v819
      %v821 = vlaneseq
      %v822 = vshrl.u32 %v821, 7
      %v823 = vsub.s32 %v820, %v822
      %v824 = vrot.slane %v817, %v823
      %v826 = vunpack.c.l.s4 1966171168
      %v827 = vunpack.c.0.s8 %v826
      %v828 = vlaneseq
      %v829 = vshrl.u32 %v828, 7
      %v830 = vsub.s32 %v827, %v829
      %v831 = vrot.slane %v411, %v830
      %v833 = vunpack.c.l.s4 1966171168
      %v834 = vunpack.c.0.s8 %v833
      %v835 = vlaneseq
      %v836 = vshrl.u32 %v835, 7
      %v837 = vsub.s32 %v834, %v836
      %v838 = vrot.slane %v831, %v837
      %v840 = vunpack.c.l.s4 1966171168
      %v841 = vunpack.c.0.s8 %v840
      %v842 = vlaneseq
      %v843 = vshrl.u32 %v842, 7
      %v844 = vsub.s32 %v841, %v843
      %v845 = vrot.slane %v412, %v844
      %v847 = vunpack.c.l.s4 1966171168
      %v848 = vunpack.c.0.s8 %v847
      %v849 = vlaneseq
      %v850 = vshrl.u32 %v849, 7
      %v851 = vsub.s32 %v848, %v850
      %v852 = vrot.slane %v845, %v851
      %v854 = vunpack.c.l.s4 1966171168
      %v855 = vunpack.c.0.s8 %v854
      %v856 = vlaneseq
      %v857 = vshrl.u32 %v856, 7
      %v858 = vsub.s32 %v855, %v857
      %v859 = vrot.slane %v413, %v858
      %v861 = vunpack.c.l.s4 1966171168
      %v862 = vunpack.c.0.s8 %v861
      %v863 = vlaneseq
      %v864 = vshrl.u32 %v863, 7
      %v865 = vsub.s32 %v862, %v864
      %v866 = vrot.slane %v859, %v865
      %v868 = vunpack.c.l.s4 1966171168
      %v869 = vunpack.c.0.s8 %v868
      %v870 = vlaneseq
      %v871 = vshrl.u32 %v870, 7
      %v872 = vsub.s32 %v869, %v871
      %v873 = vrot.slane %v414, %v872
      %v875 = vunpack.c.l.s4 1966171168
      %v876 = vunpack.c.0.s8 %v875
      %v877 = vlaneseq
      %v878 = vshrl.u32 %v877, 7
      %v879 = vsub.s32 %v876, %v878
      %v880 = vrot.slane %v873, %v879
      %v882 = vunpack.c.l.s4 1966171168
      %v883 = vunpack.c.0.s8 %v882
      %v884 = vlaneseq
      %v885 = vshrl.u32 %v884, 7
      %v886 = vsub.s32 %v883, %v885
      %v887 = vrot.slane %v415, %v886
      %v889 = vunpack.c.l.s4 1966171168
      %v890 = vunpack.c.0.s8 %v889
      %v891 = vlaneseq
      %v892 = vshrl.u32 %v891, 7
      %v893 = vsub.s32 %v890, %v892
      %v894 = vrot.slane %v887, %v893
      %v896 = vunpack.c.l.s4 1966171168
      %v897 = vunpack.c.0.s8 %v896
      %v898 = vlaneseq
      %v899 = vshrl.u32 %v898, 7
      %v900 = vsub.s32 %v897, %v899
      %v901 = vrot.slane %v416, %v900
      %v903 = vunpack.c.l.s4 1966171168
      %v904 = vunpack.c.0.s8 %v903
      %v905 = vlaneseq
      %v906 = vshrl.u32 %v905, 7
      %v907 = vsub.s32 %v904, %v906
      %v908 = vrot.slane %v901, %v907
      %v910 = vunpack.c.l.s4 1966171168
      %v911 = vunpack.c.0.s8 %v910
      %v912 = vlaneseq
      %v913 = vshrl.u32 %v912, 7
      %v914 = vsub.s32 %v911, %v913
      %v915 = vrot.slane %v417, %v914
      %v917 = vunpack.c.l.s4 1966171168
      %v918 = vunpack.c.0.s8 %v917
      %v919 = vlaneseq
      %v920 = vshrl.u32 %v919, 7
      %v921 = vsub.s32 %v918, %v920
      %v922 = vrot.slane %v915, %v921
      %v924 = vunpack.c.l.s4 1966171168
      %v925 = vunpack.c.0.s8 %v924
      %v926 = vlaneseq
      %v927 = vshrl.u32 %v926, 7
      %v928 = vsub.s32 %v925, %v927
      %v929 = vrot.slane %v418, %v928
      %v931 = vunpack.c.l.s4 1966171168
      %v932 = vunpack.c.0.s8 %v931
      %v933 = vlaneseq
      %v934 = vshrl.u32 %v933, 7
      %v935 = vsub.s32 %v932, %v934
      %v936 = vrot.slane %v929, %v935
      %v938 = vunpack.c.l.s4 1966171168
      %v939 = vunpack.c.0.s8 %v938
      %v940 = vlaneseq
      %v941 = vshrl.u32 %v940, 7
      %v942 = vsub.s32 %v939, %v941
      %v943 = vrot.slane %v419, %v942
      %v945 = vunpack.c.l.s4 1966171168
      %v946 = vunpack.c.0.s8 %v945
      %v947 = vlaneseq
      %v948 = vshrl.u32 %v947, 7
      %v949 = vsub.s32 %v946, %v948
      %v950 = vrot.slane %v943, %v949
      %v952 = vunpack.c.l.s4 1966171168
      %v953 = vunpack.c.0.s8 %v952
      %v954 = vlaneseq
      %v955 = vshrl.u32 %v954, 7
      %v956 = vsub.s32 %v953, %v955
      %v957 = vrot.slane %v420, %v956
      %v959 = vunpack.c.l.s4 1966171168
      %v960 = vunpack.c.0.s8 %v959
      %v961 = vlaneseq
      %v962 = vshrl.u32 %v961, 7
      %v963 = vsub.s32 %v960, %v962
      %v964 = vrot.slane %v957, %v963
      %v966 = vunpack.c.l.s4 1966171168
      %v967 = vunpack.c.0.s8 %v966
      %v968 = vlaneseq
      %v969 = vshrl.u32 %v968, 7
      %v970 = vsub.s32 %v967, %v969
      %v971 = vrot.slane %v421, %v970
      %v973 = vunpack.c.l.s4 1966171168
      %v974 = vunpack.c.0.s8 %v973
      %v975 = vlaneseq
      %v976 = vshrl.u32 %v975, 7
      %v977 = vsub.s32 %v974, %v976
      %v978 = vrot.slane %v971, %v977
      %v980 = vunpack.c.l.s4 1966171168
      %v981 = vunpack.c.0.s8 %v980
      %v982 = vlaneseq
      %v983 = vshrl.u32 %v982, 7
      %v984 = vsub.s32 %v981, %v983
      %v985 = vrot.slane %v422, %v984
      %v987 = vunpack.c.l.s4 1966171168
      %v988 = vunpack.c.0.s8 %v987
      %v989 = vlaneseq
      %v990 = vshrl.u32 %v989, 7
      %v991 = vsub.s32 %v988, %v990
      %v992 = vrot.slane %v985, %v991
      %v994 = vunpack.c.l.s4 1966171168
      %v995 = vunpack.c.0.s8 %v994
      %v996 = vlaneseq
      %v997 = vshrl.u32 %v996, 7
      %v998 = vsub.s32 %v995, %v997
      %v999 = vrot.slane %v423, %v998
      %v1001 = vunpack.c.l.s4 1966171168
      %v1002 = vunpack.c.0.s8 %v1001
      %v1003 = vlaneseq
      %v1004 = vshrl.u32 %v1003, 7
      %v1005 = vsub.s32 %v1002, %v1004
      %v1006 = vrot.slane %v999, %v1005
      %v1008 = vunpack.c.l.s4 1966171168
      %v1009 = vunpack.c.0.s8 %v1008
      %v1010 = vlaneseq
      %v1011 = vshrl.u32 %v1010, 7
      %v1012 = vsub.s32 %v1009, %v1011
      %v1013 = vrot.slane %v424, %v1012
      %v1015 = vunpack.c.l.s4 1966171168
      %v1016 = vunpack.c.0.s8 %v1015
      %v1017 = vlaneseq
      %v1018 = vshrl.u32 %v1017, 7
      %v1019 = vsub.s32 %v1016, %v1018
      %v1020 = vrot.slane %v1013, %v1019
      %v1022 = vunpack.c.l.s4 1966171168
      %v1023 = vunpack.c.0.s8 %v1022
      %v1024 = vlaneseq
      %v1025 = vshrl.u32 %v1024, 7
      %v1026 = vsub.s32 %v1023, %v1025
      %v1027 = vrot.slane %v425, %v1026
      %v1029 = vunpack.c.l.s4 1966171168
      %v1030 = vunpack.c.0.s8 %v1029
      %v1031 = vlaneseq
      %v1032 = vshrl.u32 %v1031, 7
      %v1033 = vsub.s32 %v1030, %v1032
      %v1034 = vrot.slane %v1027, %v1033
      %v1036 = vunpack.c.l.s4 1966171168
      %v1037 = vunpack.c.0.s8 %v1036
      %v1038 = vlaneseq
      %v1039 = vshrl.u32 %v1038, 7
      %v1040 = vsub.s32 %v1037, %v1039
      %v1041 = vrot.slane %v426, %v1040
      %v1043 = vunpack.c.l.s4 1966171168
      %v1044 = vunpack.c.0.s8 %v1043
      %v1045 = vlaneseq
      %v1046 = vshrl.u32 %v1045, 7
      %v1047 = vsub.s32 %v1044, %v1046
      %v1048 = vrot.slane %v1041, %v1047
      %v1050 = vunpack.c.l.s4 1966171168
      %v1051 = vunpack.c.0.s8 %v1050
      %v1052 = vlaneseq
      %v1053 = vshrl.u32 %v1052, 7
      %v1054 = vsub.s32 %v1051, %v1053
      %v1055 = vrot.slane %v427, %v1054
      %v1057 = vunpack.c.l.s4 1966171168
      %v1058 = vunpack.c.0.s8 %v1057
      %v1059 = vlaneseq
      %v1060 = vshrl.u32 %v1059, 7
      %v1061 = vsub.s32 %v1058, %v1060
      %v1062 = vrot.slane %v1055, %v1061
      %v1064 = vunpack.c.l.s4 1966171168
      %v1065 = vunpack.c.0.s8 %v1064
      %v1066 = vlaneseq
      %v1067 = vshrl.u32 %v1066, 7
      %v1068 = vsub.s32 %v1065, %v1067
      %v1069 = vrot.slane %v428, %v1068
      %v1071 = vunpack.c.l.s4 1966171168
      %v1072 = vunpack.c.0.s8 %v1071
      %v1073 = vlaneseq
      %v1074 = vshrl.u32 %v1073, 7
      %v1075 = vsub.s32 %v1072, %v1074
      %v1076 = vrot.slane %v1069, %v1075
      %v1078 = vunpack.c.l.s4 1966171168
      %v1079 = vunpack.c.0.s8 %v1078
      %v1080 = vlaneseq
      %v1081 = vshrl.u32 %v1080, 7
      %v1082 = vsub.s32 %v1079, %v1081
      %v1083 = vrot.slane %v429, %v1082
      %v1085 = vunpack.c.l.s4 1966171168
      %v1086 = vunpack.c.0.s8 %v1085
      %v1087 = vlaneseq
      %v1088 = vshrl.u32 %v1087, 7
      %v1089 = vsub.s32 %v1086, %v1088
      %v1090 = vrot.slane %v1083, %v1089
      %v1092 = vunpack.c.l.s4 1966171168
      %v1093 = vunpack.c.0.s8 %v1092
      %v1094 = vlaneseq
      %v1095 = vshrl.u32 %v1094, 7
      %v1096 = vsub.s32 %v1093, %v1095
      %v1097 = vrot.slane %v430, %v1096
      %v1099 = vunpack.c.l.s4 1966171168
      %v1100 = vunpack.c.0.s8 %v1099
      %v1101 = vlaneseq
      %v1102 = vshrl.u32 %v1101, 7
      %v1103 = vsub.s32 %v1100, %v1102
      %v1104 = vrot.slane %v1097, %v1103
      %v1106 = vunpack.c.l.s4 1966171168
      %v1107 = vunpack.c.0.s8 %v1106
      %v1108 = vlaneseq
      %v1109 = vshrl.u32 %v1108, 7
      %v1110 = vsub.s32 %v1107, %v1109
      %v1111 = vrot.slane %v431, %v1110
      %v1113 = vunpack.c.l.s4 1966171168
      %v1114 = vunpack.c.0.s8 %v1113
      %v1115 = vlaneseq
      %v1116 = vshrl.u32 %v1115, 7
      %v1117 = vsub.s32 %v1114, %v1116
      %v1118 = vrot.slane %v1111, %v1117
      %v1120 = vunpack.c.l.s4 1966171168
      %v1121 = vunpack.c.0.s8 %v1120
      %v1122 = vlaneseq
      %v1123 = vshrl.u32 %v1122, 7
      %v1124 = vsub.s32 %v1121, %v1123
      %v1125 = vrot.slane %v432, %v1124
      %v1127 = vunpack.c.l.s4 1966171168
      %v1128 = vunpack.c.0.s8 %v1127
      %v1129 = vlaneseq
      %v1130 = vshrl.u32 %v1129, 7
      %v1131 = vsub.s32 %v1128, %v1130
      %v1132 = vrot.slane %v1125, %v1131
      %v1134 = vunpack.c.l.s4 1966171168
      %v1135 = vunpack.c.0.s8 %v1134
      %v1136 = vlaneseq
      %v1137 = vshrl.u32 %v1136, 7
      %v1138 = vsub.s32 %v1135, %v1137
      %v1139 = vrot.slane %v433, %v1138
      %v1141 = vunpack.c.l.s4 1966171168
      %v1142 = vunpack.c.0.s8 %v1141
      %v1143 = vlaneseq
      %v1144 = vshrl.u32 %v1143, 7
      %v1145 = vsub.s32 %v1142, %v1144
      %v1146 = vrot.slane %v1139, %v1145
      %v1148 = vunpack.c.l.s4 1966171168
      %v1149 = vunpack.c.0.s8 %v1148
      %v1150 = vlaneseq
      %v1151 = vshrl.u32 %v1150, 7
      %v1152 = vsub.s32 %v1149, %v1151
      %v1153 = vrot.slane %v434, %v1152
      %v1155 = vunpack.c.l.s4 1966171168
      %v1156 = vunpack.c.0.s8 %v1155
      %v1157 = vlaneseq
      %v1158 = vshrl.u32 %v1157, 7
      %v1159 = vsub.s32 %v1156, %v1158
      %v1160 = vrot.slane %v1153, %v1159
      %v1162 = vunpack.c.l.s4 1966171168
      %v1163 = vunpack.c.0.s8 %v1162
      %v1164 = vlaneseq
      %v1165 = vshrl.u32 %v1164, 7
      %v1166 = vsub.s32 %v1163, %v1165
      %v1167 = vrot.slane %v435, %v1166
      %v1169 = vunpack.c.l.s4 1966171168
      %v1170 = vunpack.c.0.s8 %v1169
      %v1171 = vlaneseq
      %v1172 = vshrl.u32 %v1171, 7
      %v1173 = vsub.s32 %v1170, %v1172
      %v1174 = vrot.slane %v1167, %v1173
      %v1176 = vunpack.c.l.s4 1966171168
      %v1177 = vunpack.c.0.s8 %v1176
      %v1178 = vlaneseq
      %v1179 = vshrl.u32 %v1178, 7
      %v1180 = vsub.s32 %v1177, %v1179
      %v1181 = vrot.slane %v436, %v1180
      %v1183 = vunpack.c.l.s4 1966171168
      %v1184 = vunpack.c.0.s8 %v1183
      %v1185 = vlaneseq
      %v1186 = vshrl.u32 %v1185, 7
      %v1187 = vsub.s32 %v1184, %v1186
      %v1188 = vrot.slane %v1181, %v1187
      %v1190 = vunpack.c.l.s4 1966171168
      %v1191 = vunpack.c.0.s8 %v1190
      %v1192 = vlaneseq
      %v1193 = vshrl.u32 %v1192, 7
      %v1194 = vsub.s32 %v1191, %v1193
      %v1195 = vrot.slane %v437, %v1194
      %v1197 = vunpack.c.l.s4 1966171168
      %v1198 = vunpack.c.0.s8 %v1197
      %v1199 = vlaneseq
      %v1200 = vshrl.u32 %v1199, 7
      %v1201 = vsub.s32 %v1198, %v1200
      %v1202 = vrot.slane %v1195, %v1201
      %v1204 = vunpack.c.l.s4 1966171168
      %v1205 = vunpack.c.0.s8 %v1204
      %v1206 = vlaneseq
      %v1207 = vshrl.u32 %v1206, 7
      %v1208 = vsub.s32 %v1205, %v1207
      %v1209 = vrot.slane %v438, %v1208
      %v1211 = vunpack.c.l.s4 1966171168
      %v1212 = vunpack.c.0.s8 %v1211
      %v1213 = vlaneseq
      %v1214 = vshrl.u32 %v1213, 7
      %v1215 = vsub.s32 %v1212, %v1214
      %v1216 = vrot.slane %v1209, %v1215
      %v1218 = vunpack.c.l.s4 1966171168
      %v1219 = vunpack.c.0.s8 %v1218
      %v1220 = vlaneseq
      %v1221 = vshrl.u32 %v1220, 7
      %v1222 = vsub.s32 %v1219, %v1221
      %v1223 = vrot.slane %v439, %v1222
      %v1225 = vunpack.c.l.s4 1966171168
      %v1226 = vunpack.c.0.s8 %v1225
      %v1227 = vlaneseq
      %v1228 = vshrl.u32 %v1227, 7
      %v1229 = vsub.s32 %v1226, %v1228
      %v1230 = vrot.slane %v1223, %v1229
      %v1232 = vunpack.c.l.s4 1966171168
      %v1233 = vunpack.c.0.s8 %v1232
      %v1234 = vlaneseq
      %v1235 = vshrl.u32 %v1234, 7
      %v1236 = vsub.s32 %v1233, %v1235
      %v1237 = vrot.slane %v440, %v1236
      %v1239 = vunpack.c.l.s4 1966171168
      %v1240 = vunpack.c.0.s8 %v1239
      %v1241 = vlaneseq
      %v1242 = vshrl.u32 %v1241, 7
      %v1243 = vsub.s32 %v1240, %v1242
      %v1244 = vrot.slane %v1237, %v1243
      %v1246 = vunpack.c.l.s4 1966171168
      %v1247 = vunpack.c.0.s8 %v1246
      %v1248 = vlaneseq
      %v1249 = vshrl.u32 %v1248, 7
      %v1250 = vsub.s32 %v1247, %v1249
      %v1251 = vrot.slane %v441, %v1250
      %v1253 = vunpack.c.l.s4 1966171168
      %v1254 = vunpack.c.0.s8 %v1253
      %v1255 = vlaneseq
      %v1256 = vshrl.u32 %v1255, 7
      %v1257 = vsub.s32 %v1254, %v1256
      %v1258 = vrot.slane %v1251, %v1257
      %v1260 = vunpack.c.l.s4 1966171168
      %v1261 = vunpack.c.0.s8 %v1260
      %v1262 = vlaneseq
      %v1263 = vshrl.u32 %v1262, 7
      %v1264 = vsub.s32 %v1261, %v1263
      %v1265 = vrot.slane %v442, %v1264
      %v1267 = vunpack.c.l.s4 1966171168
      %v1268 = vunpack.c.0.s8 %v1267
      %v1269 = vlaneseq
      %v1270 = vshrl.u32 %v1269, 7
      %v1271 = vsub.s32 %v1268, %v1270
      %v1272 = vrot.slane %v1265, %v1271
      %v1274 = vunpack.c.l.s4 1966171168
      %v1275 = vunpack.c.0.s8 %v1274
      %v1276 = vlaneseq
      %v1277 = vshrl.u32 %v1276, 7
      %v1278 = vsub.s32 %v1275, %v1277
      %v1279 = vrot.slane %v443, %v1278
      %v1281 = vunpack.c.l.s4 1966171168
      %v1282 = vunpack.c.0.s8 %v1281
      %v1283 = vlaneseq
      %v1284 = vshrl.u32 %v1283, 7
      %v1285 = vsub.s32 %v1282, %v1284
      %v1286 = vrot.slane %v1279, %v1285
      %v1288 = vunpack.c.l.s4 1966171168
      %v1289 = vunpack.c.0.s8 %v1288
      %v1290 = vlaneseq
      %v1291 = vshrl.u32 %v1290, 7
      %v1292 = vsub.s32 %v1289, %v1291
      %v1293 = vrot.slane %v444, %v1292
      %v1295 = vunpack.c.l.s4 1966171168
      %v1296 = vunpack.c.0.s8 %v1295
      %v1297 = vlaneseq
      %v1298 = vshrl.u32 %v1297, 7
      %v1299 = vsub.s32 %v1296, %v1298
      %v1300 = vrot.slane %v1293, %v1299
      %v1302 = vunpack.c.l.s4 1966171168
      %v1303 = vunpack.c.0.s8 %v1302
      %v1304 = vlaneseq
      %v1305 = vshrl.u32 %v1304, 7
      %v1306 = vsub.s32 %v1303, %v1305
      %v1307 = vrot.slane %v445, %v1306
      %v1309 = vunpack.c.l.s4 1966171168
      %v1310 = vunpack.c.0.s8 %v1309
      %v1311 = vlaneseq
      %v1312 = vshrl.u32 %v1311, 7
      %v1313 = vsub.s32 %v1310, %v1312
      %v1314 = vrot.slane %v1307, %v1313
      %v1316 = vunpack.c.l.s4 1966171168
      %v1317 = vunpack.c.0.s8 %v1316
      %v1318 = vlaneseq
      %v1319 = vshrl.u32 %v1318, 7
      %v1320 = vsub.s32 %v1317, %v1319
      %v1321 = vrot.slane %v446, %v1320
      %v1323 = vunpack.c.l.s4 1966171168
      %v1324 = vunpack.c.0.s8 %v1323
      %v1325 = vlaneseq
      %v1326 = vshrl.u32 %v1325, 7
      %v1327 = vsub.s32 %v1324, %v1326
      %v1328 = vrot.slane %v1321, %v1327
      %v1330 = vunpack.c.l.s4 1966171168
      %v1331 = vunpack.c.0.s8 %v1330
      %v1332 = vlaneseq
      %v1333 = vshrl.u32 %v1332, 7
      %v1334 = vsub.s32 %v1331, %v1333
      %v1335 = vrot.slane %v447, %v1334
      %v1337 = vunpack.c.l.s4 1966171168
      %v1338 = vunpack.c.0.s8 %v1337
      %v1339 = vlaneseq
      %v1340 = vshrl.u32 %v1339, 7
      %v1341 = vsub.s32 %v1338, %v1340
      %v1342 = vrot.slane %v1335, %v1341
      %v1344 = vunpack.c.l.s4 1966171168
      %v1345 = vunpack.c.0.s8 %v1344
      %v1346 = vlaneseq
      %v1347 = vshrl.u32 %v1346, 7
      %v1348 = vsub.s32 %v1345, %v1347
      %v1349 = vrot.slane %v448, %v1348
      %v1351 = vunpack.c.l.s4 1966171168
      %v1352 = vunpack.c.0.s8 %v1351
      %v1353 = vlaneseq
      %v1354 = vshrl.u32 %v1353, 7
      %v1355 = vsub.s32 %v1352, %v1354
      %v1356 = vrot.slane %v1349, %v1355
      %v1358 = vunpack.c.l.s4 1966171168
      %v1359 = vunpack.c.0.s8 %v1358
      %v1360 = vlaneseq
      %v1361 = vshrl.u32 %v1360, 7
      %v1362 = vsub.s32 %v1359, %v1361
      %v1363 = vrot.slane %v449, %v1362
      %v1365 = vunpack.c.l.s4 1966171168
      %v1366 = vunpack.c.0.s8 %v1365
      %v1367 = vlaneseq
      %v1368 = vshrl.u32 %v1367, 7
      %v1369 = vsub.s32 %v1366, %v1368
      %v1370 = vrot.slane %v1363, %v1369
      %v1372 = vunpack.c.l.s4 1966171168
      %v1373 = vunpack.c.0.s8 %v1372
      %v1374 = vlaneseq
      %v1375 = vshrl.u32 %v1374, 7
      %v1376 = vsub.s32 %v1373, %v1375
      %v1377 = vrot.slane %v450, %v1376
      %v1379 = vunpack.c.l.s4 1966171168
      %v1380 = vunpack.c.0.s8 %v1379
      %v1381 = vlaneseq
      %v1382 = vshrl.u32 %v1381, 7
      %v1383 = vsub.s32 %v1380, %v1382
      %v1384 = vrot.slane %v1377, %v1383
      %v1386 = vunpack.c.l.s4 1966171168
      %v1387 = vunpack.c.0.s8 %v1386
      %v1388 = vlaneseq
      %v1389 = vshrl.u32 %v1388, 7
      %v1390 = vsub.s32 %v1387, %v1389
      %v1391 = vrot.slane %v451, %v1390
      %v1393 = vunpack.c.l.s4 1966171168
      %v1394 = vunpack.c.0.s8 %v1393
      %v1395 = vlaneseq
      %v1396 = vshrl.u32 %v1395, 7
      %v1397 = vsub.s32 %v1394, %v1396
      %v1398 = vrot.slane %v1391, %v1397
      %v1400 = vunpack.c.l.s4 1966171168
      %v1401 = vunpack.c.0.s8 %v1400
      %v1402 = vlaneseq
      %v1403 = vshrl.u32 %v1402, 7
      %v1404 = vsub.s32 %v1401, %v1403
      %v1405 = vrot.slane %v452, %v1404
      %v1407 = vunpack.c.l.s4 1966171168
      %v1408 = vunpack.c.0.s8 %v1407
      %v1409 = vlaneseq
      %v1410 = vshrl.u32 %v1409, 7
      %v1411 = vsub.s32 %v1408, %v1410
      %v1412 = vrot.slane %v1405, %v1411
      %v1413 = vunpack.c.l.b16 %v530
      %v1414 = vunpack.c.l.b16 %v544
      %v1415 = vunpack.c.l.b16 %v558
      %v1416 = vunpack.c.l.b16 %v572
      %v1417 = vunpack.c.l.b16 %v586
      %v1418 = vunpack.c.l.b16 %v600
      %v1419 = vunpack.c.l.b16 %v614
      %v1420 = vunpack.c.l.b16 %v628
      %v1421 = vunpack.c.l.b16 %v642
      %v1422 = vunpack.c.l.b16 %v656
      %v1423 = vunpack.c.l.b16 %v670
      %v1424 = vunpack.c.l.b16 %v684
      %v1425 = vunpack.c.l.b16 %v698
      %v1426 = vunpack.c.l.b16 %v712
      %v1427 = vunpack.c.l.b16 %v726
      %v1428 = vunpack.c.l.b16 %v740
      %v1429 = vunpack.c.l.b16 %v754
      %v1430 = vunpack.c.l.b16 %v768
      %v1431 = vunpack.c.l.b16 %v782
      %v1432 = vunpack.c.l.b16 %v796
      %v1433 = vunpack.c.l.b16 %v810
      %v1434 = vunpack.c.l.b16 %v824
      %v1435 = vunpack.c.l.b16 %v838
      %v1436 = vunpack.c.l.b16 %v852
      %v1437 = vunpack.c.l.b16 %v866
      %v1438 = vunpack.c.l.b16 %v880
      %v1439 = vunpack.c.l.b16 %v894
      %v1440 = vunpack.c.l.b16 %v908
      %v1441 = vunpack.c.l.b16 %v922
      %v1442 = vunpack.c.l.b16 %v936
      %v1443 = vunpack.c.l.b16 %v950
      %v1444 = vunpack.c.l.b16 %v964
      %v1445 = vunpack.c.l.b16 %v978
      %v1446 = vunpack.c.l.b16 %v992
      %v1447 = vunpack.c.l.b16 %v1006
      %v1448 = vunpack.c.l.b16 %v1020
      %v1449 = vunpack.c.l.b16 %v1034
      %v1450 = vunpack.c.l.b16 %v1048
      %v1451 = vunpack.c.l.b16 %v1062
      %v1452 = vunpack.c.l.b16 %v1076
      %v1453 = vunpack.c.l.b16 %v1090
      %v1454 = vunpack.c.l.b16 %v1104
      %v1455 = vunpack.c.l.b16 %v1118
      %v1456 = vunpack.c.l.b16 %v1132
      %v1457 = vunpack.c.l.b16 %v1146
      %v1458 = vunpack.c.l.b16 %v1160
      %v1459 = vunpack.c.l.b16 %v1174
      %v1460 = vunpack.c.l.b16 %v1188
      %v1461 = vunpack.c.l.b16 %v1202
      %v1462 = vunpack.c.l.b16 %v1216
      %v1463 = vunpack.c.l.b16 %v1230
      %v1464 = vunpack.c.l.b16 %v1244
      %v1465 = vunpack.c.l.b16 %v1258
      %v1466 = vunpack.c.l.b16 %v1272
      %v1467 = vunpack.c.l.b16 %v1286
      %v1468 = vunpack.c.l.b16 %v1300
      %v1469 = vunpack.c.l.b16 %v1314
      %v1470 = vunpack.c.l.b16 %v1328
      %v1471 = vunpack.c.l.b16 %v1342
      %v1472 = vunpack.c.l.b16 %v1356
      %v1473 = vunpack.c.l.b16 %v1370
      %v1474 = vunpack.c.l.b16 %v1384
      %v1475 = vunpack.c.l.b16 %v1398
      %v1476 = vunpack.c.l.b16 %v1412
      %v1477 = vrot.slane %v1414, 7
      %vm1478 = vcmask 1041409
      %v1479 = vsel %vm1478, %v1477, %v1413
      %v1480 = vrot.slane %v1415, 6
      %vm1481 = vcmask 1042434
      %v1482 = vsel %vm1481, %v1480, %v1479
      %v1483 = vrot.slane %v1416, 5
      %vm1484 = vcmask 1043459
      %v1485 = vsel %vm1484, %v1483, %v1482
      %v1486 = vrot.slane %v1417, 4
      %vm1487 = vcmask 1044484
      %v1488 = vsel %vm1487, %v1486, %v1485
      %v1489 = vrot.slane %v1418, 3
      %vm1490 = vcmask 1045509
      %v1491 = vsel %vm1490, %v1489, %v1488
      %v1492 = vrot.slane %v1419, 2
      %vm1493 = vcmask 1046534
      %v1494 = vsel %vm1493, %v1492, %v1491
      %v1495 = vrot.slane %v1420, 1
      %vm1496 = vcmask 1047559
      %v1497 = vsel %vm1496, %v1495, %v1494
      %v1498 = vrot.slane %v1422, 7
      %v1499 = vsel %vm1478, %v1498, %v1421
      %v1500 = vrot.slane %v1423, 6
      %v1501 = vsel %vm1481, %v1500, %v1499
      %v1502 = vrot.slane %v1424, 5
      %v1503 = vsel %vm1484, %v1502, %v1501
      %v1504 = vrot.slane %v1425, 4
      %v1505 = vsel %vm1487, %v1504, %v1503
      %v1506 = vrot.slane %v1426, 3
      %v1507 = vsel %vm1490, %v1506, %v1505
      %v1508 = vrot.slane %v1427, 2
      %v1509 = vsel %vm1493, %v1508, %v1507
      %v1510 = vrot.slane %v1428, 1
      %v1511 = vsel %vm1496, %v1510, %v1509
      %v1512 = vrot.slane %v1430, 7
      %v1513 = vsel %vm1478, %v1512, %v1429
      %v1514 = vrot.slane %v1431, 6
      %v1515 = vsel %vm1481, %v1514, %v1513
      %v1516 = vrot.slane %v1432, 5
      %v1517 = vsel %vm1484, %v1516, %v1515
      %v1518 = vrot.slane %v1433, 4
      %v1519 = vsel %vm1487, %v1518, %v1517
      %v1520 = vrot.slane %v1434, 3
      %v1521 = vsel %vm1490, %v1520, %v1519
      %v1522 = vrot.slane %v1435, 2
      %v1523 = vsel %vm1493, %v1522, %v1521
      %v1524 = vrot.slane %v1436, 1
      %v1525 = vsel %vm1496, %v1524, %v1523
      %v1526 = vrot.slane %v1438, 7
      %v1527 = vsel %vm1478, %v1526, %v1437
      %v1528 = vrot.slane %v1439, 6
      %v1529 = vsel %vm1481, %v1528, %v1527
      %v1530 = vrot.slane %v1440, 5
      %v1531 = vsel %vm1484, %v1530, %v1529
      %v1532 = vrot.slane %v1441, 4
      %v1533 = vsel %vm1487, %v1532, %v1531
      %v1534 = vrot.slane %v1442, 3
      %v1535 = vsel %vm1490, %v1534, %v1533
      %v1536 = vrot.slane %v1443, 2
      %v1537 = vsel %vm1493, %v1536, %v1535
      %v1538 = vrot.slane %v1444, 1
      %v1539 = vsel %vm1496, %v1538, %v1537
      %v1540 = vrot.slane %v1446, 7
      %v1541 = vsel %vm1478, %v1540, %v1445
      %v1542 = vrot.slane %v1447, 6
      %v1543 = vsel %vm1481, %v1542, %v1541
      %v1544 = vrot.slane %v1448, 5
      %v1545 = vsel %vm1484, %v1544, %v1543
      %v1546 = vrot.slane %v1449, 4
      %v1547 = vsel %vm1487, %v1546, %v1545
      %v1548 = vrot.slane %v1450, 3
      %v1549 = vsel %vm1490, %v1548, %v1547
      %v1550 = vrot.slane %v1451, 2
      %v1551 = vsel %vm1493, %v1550, %v1549
      %v1552 = vrot.slane %v1452, 1
      %v1553 = vsel %vm1496, %v1552, %v1551
      %v1554 = vrot.slane %v1454, 7
      %v1555 = vsel %vm1478, %v1554, %v1453
      %v1556 = vrot.slane %v1455, 6
      %v1557 = vsel %vm1481, %v1556, %v1555
      %v1558 = vrot.slane %v1456, 5
      %v1559 = vsel %vm1484, %v1558, %v1557
      %v1560 = vrot.slane %v1457, 4
      %v1561 = vsel %vm1487, %v1560, %v1559
      %v1562 = vrot.slane %v1458, 3
      %v1563 = vsel %vm1490, %v1562, %v1561
      %v1564 = vrot.slane %v1459, 2
      %v1565 = vsel %vm1493, %v1564, %v1563
      %v1566 = vrot.slane %v1460, 1
      %v1567 = vsel %vm1496, %v1566, %v1565
      %v1568 = vrot.slane %v1462, 7
      %v1569 = vsel %vm1478, %v1568, %v1461
      %v1570 = vrot.slane %v1463, 6
      %v1571 = vsel %vm1481, %v1570, %v1569
      %v1572 = vrot.slane %v1464, 5
      %v1573 = vsel %vm1484, %v1572, %v1571
      %v1574 = vrot.slane %v1465, 4
      %v1575 = vsel %vm1487, %v1574, %v1573
      %v1576 = vrot.slane %v1466, 3
      %v1577 = vsel %vm1490, %v1576, %v1575
      %v1578 = vrot.slane %v1467, 2
      %v1579 = vsel %vm1493, %v1578, %v1577
      %v1580 = vrot.slane %v1468, 1
      %v1581 = vsel %vm1496, %v1580, %v1579
      %v1582 = vrot.slane %v1470, 7
      %v1583 = vsel %vm1478, %v1582, %v1469
      %v1584 = vrot.slane %v1471, 6
      %v1585 = vsel %vm1481, %v1584, %v1583
      %v1586 = vrot.slane %v1472, 5
      %v1587 = vsel %vm1484, %v1586, %v1585
      %v1588 = vrot.slane %v1473, 4
      %v1589 = vsel %vm1487, %v1588, %v1587
      %v1590 = vrot.slane %v1474, 3
      %v1591 = vsel %vm1490, %v1590, %v1589
      %v1592 = vrot.slane %v1475, 2
      %v1593 = vsel %vm1493, %v1592, %v1591
      %v1594 = vrot.slane %v1476, 1
      %v1595 = vsel %vm1496, %v1594, %v1593
      %v1596 = vpack.c.b16 %v1511, %v1497
      %v1597 = vpack.c.b16 %v1539, %v1525
      %v1598 = vpack.c.b16 %v1567, %v1553
      %v1599 = vpack.c.b16 %v1595, %v1581
      %vm1600 = vcmask 31744
      %v1602 = vsel %vm1600, %v1596, 0
      %v1605 = vsel %vm1600, %v1597, 0
      %v1608 = vsel %vm1600, %v1598, 0
      %v1611 = vsel %vm1600, %v1599, 0
      %vm1613 = vcmask 1041408
      %v1615 = vsel %vm1613, %v324, 0
      %1617 = vmatprep.subr.bf16.mxu0 0
      %1618 = vmatpush1.bf16.msra.mxu0 0
      %1619 = vmatprep.subr.bf16.mxu0 0
      %1620 = vmatpush1.bf16.msra.mxu0 0
      %1621 = vmatprep.subr.bf16.mxu0 0
      %1622 = vmatpush1.bf16.msra.mxu0 0
      %1623 = vmatprep.subr.bf16.mxu0 0
      %1624 = vmatpush1.bf16.msra.mxu0 0
      %1625 = vmatprep.subr.bf16.mxu0 0
      %1626 = vmatpush1.bf16.msra.mxu0 0
      %1627 = vmatprep.subr.bf16.mxu0 0
      %1628 = vmatpush1.bf16.msra.mxu0 0
      %1629 = vmatprep.subr.bf16.mxu0 0
      %1630 = vmatpush1.bf16.msra.mxu0 0
      %1631 = vmatprep.subr.bf16.mxu0 0
      %1632 = vmatpush1.bf16.msra.mxu0 %v1615
      %1633 = vmatprep.subr.bf16.mxu0 0
      %1634 = vmatpush2.bf16.msra.mxu0 0
      %1635 = vmatprep.subr.bf16.mxu0 0
      %1636 = vmatpush2.bf16.msra.mxu0 0
      %1637 = vmatprep.subr.bf16.mxu0 0
      %1638 = vmatpush2.bf16.msra.mxu0 0
      %1639 = vmatprep.subr.bf16.mxu0 0
      %1640 = vmatpush2.bf16.msra.mxu0 0
      %1641 = vmatprep.subr.bf16.mxu0 0
      %1642 = vmatpush2.bf16.msra.mxu0 0
      %1643 = vmatprep.subr.bf16.mxu0 0
      %1644 = vmatpush2.bf16.msra.mxu0 0
      %1645 = vmatprep.subr.bf16.mxu0 0
      %1646 = vmatpush2.bf16.msra.mxu0 0
      %1647 = vmatprep.subr.bf16.mxu0 0
      %1648 = vmatpush2.bf16.msra.mxu0 0
      %1649 = vmatprep.mubr.bf16.mxu0 0
      %1650 = vmatmul.mubr.bf16.gmra.mxu0 %v1602
      %v1651 = vpop.f32.mrf.mxu0
      %v1652 = vadd.f32 0.0, %v1651
      %v1653 = vpop.f32.mrf.mxu0
      %v1654 = vpop.f32.mrf.mxu0
      %v1655 = vadd.f32 0.0, %v1654
      %v1656 = vpop.f32.mrf.mxu0
      %1657 = vmatprep.mubr.bf16.mxu0 0
      %1658 = vmatmul.mubr.bf16.gmra.mxu0 %v1605
      %v1659 = vpop.f32.mrf.mxu0
      %v1660 = vadd.f32 0.0, %v1659
      %v1661 = vpop.f32.mrf.mxu0
      %v1662 = vpop.f32.mrf.mxu0
      %v1663 = vadd.f32 0.0, %v1662
      %v1664 = vpop.f32.mrf.mxu0
      %1665 = vmatprep.mubr.bf16.mxu0 0
      %1666 = vmatmul.mubr.bf16.gmra.mxu0 %v1608
      %v1667 = vpop.f32.mrf.mxu0
      %v1668 = vadd.f32 0.0, %v1667
      %v1669 = vpop.f32.mrf.mxu0
      %v1670 = vpop.f32.mrf.mxu0
      %v1671 = vadd.f32 0.0, %v1670
      %v1672 = vpop.f32.mrf.mxu0
      %1673 = vmatprep.mubr.bf16.mxu0 0
      %1674 = vmatmul.mubr.bf16.gmra.mxu0 %v1611
      %v1675 = vpop.f32.mrf.mxu0
      %v1676 = vadd.f32 0.0, %v1675
      %v1677 = vpop.f32.mrf.mxu0
      %v1678 = vpop.f32.mrf.mxu0
      %v1679 = vadd.f32 0.0, %v1678
      %v1680 = vpop.f32.mrf.mxu0
      %1681 = vdwg.mxu0
      %v1683 = vsel %vm1600, %v385, 0
      %v1686 = vsel %vm1600, %v386, 0
      %v1689 = vsel %vm1600, %v387, 0
      %v1692 = vsel %vm1600, %v388, 0
      %v1695 = vsel %vm1613, %v323, 0
      %1697 = vmatprep.subr.bf16.mxu0 0
      %1698 = vmatpush1.bf16.msra.mxu0 0
      %1699 = vmatprep.subr.bf16.mxu0 0
      %1700 = vmatpush1.bf16.msra.mxu0 0
      %1701 = vmatprep.subr.bf16.mxu0 0
      %1702 = vmatpush1.bf16.msra.mxu0 0
      %1703 = vmatprep.subr.bf16.mxu0 0
      %1704 = vmatpush1.bf16.msra.mxu0 0
      %1705 = vmatprep.subr.bf16.mxu0 0
      %1706 = vmatpush1.bf16.msra.mxu0 0
      %1707 = vmatprep.subr.bf16.mxu0 0
      %1708 = vmatpush1.bf16.msra.mxu0 0
      %1709 = vmatprep.subr.bf16.mxu0 0
      %1710 = vmatpush1.bf16.msra.mxu0 0
      %1711 = vmatprep.subr.bf16.mxu0 0
      %1712 = vmatpush1.bf16.msra.mxu0 %v1695
      %1713 = vmatprep.subr.bf16.mxu0 0
      %1714 = vmatpush2.bf16.msra.mxu0 0
      %1715 = vmatprep.subr.bf16.mxu0 0
      %1716 = vmatpush2.bf16.msra.mxu0 0
      %1717 = vmatprep.subr.bf16.mxu0 0
      %1718 = vmatpush2.bf16.msra.mxu0 0
      %1719 = vmatprep.subr.bf16.mxu0 0
      %1720 = vmatpush2.bf16.msra.mxu0 0
      %1721 = vmatprep.subr.bf16.mxu0 0
      %1722 = vmatpush2.bf16.msra.mxu0 0
      %1723 = vmatprep.subr.bf16.mxu0 0
      %1724 = vmatpush2.bf16.msra.mxu0 0
      %1725 = vmatprep.subr.bf16.mxu0 0
      %1726 = vmatpush2.bf16.msra.mxu0 0
      %1727 = vmatprep.subr.bf16.mxu0 0
      %1728 = vmatpush2.bf16.msra.mxu0 0
      %1729 = vmatprep.mubr.bf16.mxu0 0
      %1730 = vmatmul.mubr.bf16.gmra.mxu0 %v1683
      %v1731 = vpop.f32.mrf.mxu0
      %v1732 = vadd.f32 %v1652, %v1731
      %v1733 = vpop.f32.mrf.mxu0
      %v1734 = vpop.f32.mrf.mxu0
      %v1735 = vadd.f32 %v1655, %v1734
      %v1736 = vpop.f32.mrf.mxu0
      %1737 = vmatprep.mubr.bf16.mxu0 0
      %1738 = vmatmul.mubr.bf16.gmra.mxu0 %v1686
      %v1739 = vpop.f32.mrf.mxu0
      %v1740 = vadd.f32 %v1660, %v1739
      %v1741 = vpop.f32.mrf.mxu0
      %v1742 = vpop.f32.mrf.mxu0
      %v1743 = vadd.f32 %v1663, %v1742
      %v1744 = vpop.f32.mrf.mxu0
      %1745 = vmatprep.mubr.bf16.mxu0 0
      %1746 = vmatmul.mubr.bf16.gmra.mxu0 %v1689
      %v1747 = vpop.f32.mrf.mxu0
      %v1748 = vadd.f32 %v1668, %v1747
      %v1749 = vpop.f32.mrf.mxu0
      %v1750 = vpop.f32.mrf.mxu0
      %v1751 = vadd.f32 %v1671, %v1750
      %v1752 = vpop.f32.mrf.mxu0
      %1753 = vmatprep.mubr.bf16.mxu0 0
      %1754 = vmatmul.mubr.bf16.gmra.mxu0 %v1692
      %v1755 = vpop.f32.mrf.mxu0
      %v1756 = vadd.f32 %v1676, %v1755
      %v1757 = vpop.f32.mrf.mxu0
      %v1758 = vpop.f32.mrf.mxu0
      %v1759 = vadd.f32 %v1679, %v1758
      %v1760 = vpop.f32.mrf.mxu0
      %1761 = vdwg.mxu0
      %vm1762 = vcmask 64512
      %v1763 = vsel %vm1762, %v1732, 0.0
      %v1764 = vsel %vm1762, %v1735, 0.0
      %v1765 = vadd.f32 %v1763, %v1764
      %v1766 = vsel %vm1762, %v1740, 0.0
      %v1767 = vadd.f32 %v1765, %v1766
      %v1768 = vsel %vm1762, %v1743, 0.0
      %v1769 = vadd.f32 %v1767, %v1768
      %v1770 = vsel %vm1762, %v1748, 0.0
      %v1771 = vadd.f32 %v1769, %v1770
      %v1772 = vsel %vm1762, %v1751, 0.0
      %v1773 = vadd.f32 %v1771, %v1772
      %v1774 = vsel %vm1762, %v1756, 0.0
      %v1775 = vadd.f32 %v1773, %v1774
      %v1776 = vsel %vm1762, %v1759, 0.0
      %v1777 = vadd.f32 %v1775, %v1776
      %v1778 = vrot.slane %v1777, 4
      %v1779 = vadd.f32 %v1777, %v1778
      %v1780 = vrot.slane %v1779, 2
      %v1781 = vadd.f32 %v1779, %v1780
      %v1782 = vrot.slane %v1781, 1
      %v1783 = vadd.f32 %v1781, %v1782
      %v1784 = vadd.f32 %v1783, 0.0
      %v1785 = vmul.f32 %v1732, %v1732
      %v1786 = vmul.f32 %v1735, %v1735
      %v1787 = vmul.f32 %v1740, %v1740
      %v1788 = vmul.f32 %v1743, %v1743
      %v1789 = vmul.f32 %v1748, %v1748
      %v1790 = vmul.f32 %v1751, %v1751
      %v1791 = vmul.f32 %v1756, %v1756
      %v1792 = vmul.f32 %v1759, %v1759
      %v1793 = vsel %vm1762, %v1785, 0.0
      %v1794 = vsel %vm1762, %v1786, 0.0
      %v1795 = vadd.f32 %v1793, %v1794
      %v1796 = vsel %vm1762, %v1787, 0.0
      %v1797 = vadd.f32 %v1795, %v1796
      %v1798 = vsel %vm1762, %v1788, 0.0
      %v1799 = vadd.f32 %v1797, %v1798
      %v1800 = vsel %vm1762, %v1789, 0.0
      %v1801 = vadd.f32 %v1799, %v1800
      %v1802 = vsel %vm1762, %v1790, 0.0
      %v1803 = vadd.f32 %v1801, %v1802
      %v1804 = vsel %vm1762, %v1791, 0.0
      %v1805 = vadd.f32 %v1803, %v1804
      %v1806 = vsel %vm1762, %v1792, 0.0
      %v1807 = vadd.f32 %v1805, %v1806
      %v1808 = vrot.slane %v1807, 4
      %v1809 = vadd.f32 %v1807, %v1808
      %v1810 = vrot.slane %v1809, 2
      %v1811 = vadd.f32 %v1809, %v1810
      %v1812 = vrot.slane %v1811, 1
      %v1813 = vadd.f32 %v1811, %v1812
      %v1814 = vadd.f32 %v1813, 0.0
      %1815 = vst.msk [vmem:[%s314] sm:$0xff] %vm1762, %v1732
      %1816 = vst.msk [vmem:[%s314 + $0x8] sm:$0xff] %vm1762, %v1735
      %1817 = vst.msk [vmem:[%s314 + $0x20] sm:$0xff] %vm1762, %v1740
      %1818 = vst.msk [vmem:[%s314 + $0x28] sm:$0xff] %vm1762, %v1743
      %1819 = vst.msk [vmem:[%s314 + $0x40] sm:$0xff] %vm1762, %v1748
      %1820 = vst.msk [vmem:[%s314 + $0x48] sm:$0xff] %vm1762, %v1751
      %1821 = vst.msk [vmem:[%s314 + $0x60] sm:$0xff] %vm1762, %v1756
      %1822 = vst.msk [vmem:[%s314 + $0x68] sm:$0xff] %vm1762, %v1759
      %v1823 = vld [vmem:[%s301] sm:$0xff]
      %v1824 = vld [vmem:[%s301 + $0x8] sm:$0xff]
      %v1825 = vld [vmem:[%s301 + $0x10] sm:$0xff]
      %v1826 = vld [vmem:[%s301 + $0x18] sm:$0xff]
      %v1827 = vld [vmem:[%s301 + $0x20] sm:$0xff]
      %v1828 = vld [vmem:[%s301 + $0x28] sm:$0xff]
      %v1829 = vld [vmem:[%s301 + $0x30] sm:$0xff]
      %v1830 = vld [vmem:[%s301 + $0x38] sm:$0xff]
      %1831 = vrot.lane.b32.xlu0 %v337, 4
      %v1832 = vpop.permute.xlu0 %1831
      %v1834 = vmul.f32 %v1823, %v1832
      %v1835 = vmul.f32 %v1824, %v1832
      %v1836 = vmul.f32 %v1825, %v1832
      %v1837 = vmul.f32 %v1826, %v1832
      %v1838 = vmul.f32 %v1827, %v1832
      %v1839 = vmul.f32 %v1828, %v1832
      %v1840 = vmul.f32 %v1829, %v1832
      %v1841 = vmul.f32 %v1830, %v1832
      %1842 = vrot.lane.b32.xlu0 %v351, 4
      %v1843 = vpop.permute.xlu0 %1842
      %v1845 = vadd.f32 %v1834, %v1843
      %v1846 = vadd.f32 %v1835, %v1843
      %v1847 = vadd.f32 %v1836, %v1843
      %v1848 = vadd.f32 %v1837, %v1843
      %v1849 = vadd.f32 %v1838, %v1843
      %v1850 = vadd.f32 %v1839, %v1843
      %v1851 = vadd.f32 %v1840, %v1843
      %v1852 = vadd.f32 %v1841, %v1843
      %vm1853 = vcmp.ge.f32.partialorder %v1845, 0.0
      %vm1854 = vcmp.ge.f32.partialorder %v1846, 0.0
      %vm1855 = vcmp.ge.f32.partialorder %v1847, 0.0
      %vm1856 = vcmp.ge.f32.partialorder %v1848, 0.0
      %vm1857 = vcmp.ge.f32.partialorder %v1849, 0.0
      %vm1858 = vcmp.ge.f32.partialorder %v1850, 0.0
      %vm1859 = vcmp.ge.f32.partialorder %v1851, 0.0
      %vm1860 = vcmp.ge.f32.partialorder %v1852, 0.0
      %v1861 = vmul.f32 %v1845, 0.2
      %v1862 = vmul.f32 %v1846, 0.2
      %v1863 = vmul.f32 %v1847, 0.2
      %v1864 = vmul.f32 %v1848, 0.2
      %v1865 = vmul.f32 %v1849, 0.2
      %v1866 = vmul.f32 %v1850, 0.2
      %v1867 = vmul.f32 %v1851, 0.2
      %v1868 = vmul.f32 %v1852, 0.2
      %v1869 = vsel %vm1853, %v1845, %v1861
      %v1870 = vsel %vm1854, %v1846, %v1862
      %v1871 = vsel %vm1855, %v1847, %v1863
      %v1872 = vsel %vm1856, %v1848, %v1864
      %v1873 = vsel %vm1857, %v1849, %v1865
      %v1874 = vsel %vm1858, %v1850, %v1866
      %v1875 = vsel %vm1859, %v1851, %v1867
      %v1876 = vsel %vm1860, %v1852, %v1868
      %v1877 = vpack.c.bf16 %v1870, %v1869
      %v1878 = vpack.c.bf16 %v1872, %v1871
      %v1879 = vpack.c.bf16 %v1874, %v1873
      %v1880 = vpack.c.bf16 %v1876, %v1875
      %v1881 = vld [vmem:[%s307] sm:$0x1]
      %v1882 = vld [vmem:[%s307 + $0x1] sm:$0x1]
      %v1883 = vld [vmem:[%s307 + $0x2] sm:$0x1]
      %v1884 = vld [vmem:[%s307 + $0x3] sm:$0x1]
      %v1885 = vld [vmem:[%s307 + $0x4] sm:$0x1]
      %v1886 = vld [vmem:[%s307 + $0x5] sm:$0x1]
      %v1887 = vld [vmem:[%s307 + $0x6] sm:$0x1]
      %v1888 = vld [vmem:[%s307 + $0x7] sm:$0x1]
      %v1889 = vld [vmem:[%s307 + $0x8] sm:$0x1]
      %v1890 = vld [vmem:[%s307 + $0x9] sm:$0x1]
      %v1891 = vld [vmem:[%s307 + $0xa] sm:$0x1]
      %v1892 = vld [vmem:[%s307 + $0xb] sm:$0x1]
      %v1893 = vld [vmem:[%s307 + $0xc] sm:$0x1]
      %v1894 = vld [vmem:[%s307 + $0xd] sm:$0x1]
      %v1895 = vld [vmem:[%s307 + $0xe] sm:$0x1]
      %v1896 = vld [vmem:[%s307 + $0xf] sm:$0x1]
      %v1897 = vld [vmem:[%s307 + $0x20] sm:$0x1]
      %v1898 = vld [vmem:[%s307 + $0x21] sm:$0x1]
      %v1899 = vld [vmem:[%s307 + $0x22] sm:$0x1]
      %v1900 = vld [vmem:[%s307 + $0x23] sm:$0x1]
      %v1901 = vld [vmem:[%s307 + $0x24] sm:$0x1]
      %v1902 = vld [vmem:[%s307 + $0x25] sm:$0x1]
      %v1903 = vld [vmem:[%s307 + $0x26] sm:$0x1]
      %v1904 = vld [vmem:[%s307 + $0x27] sm:$0x1]
      %v1905 = vld [vmem:[%s307 + $0x28] sm:$0x1]
      %v1906 = vld [vmem:[%s307 + $0x29] sm:$0x1]
      %v1907 = vld [vmem:[%s307 + $0x2a] sm:$0x1]
      %v1908 = vld [vmem:[%s307 + $0x2b] sm:$0x1]
      %v1909 = vld [vmem:[%s307 + $0x2c] sm:$0x1]
      %v1910 = vld [vmem:[%s307 + $0x2d] sm:$0x1]
      %v1911 = vld [vmem:[%s307 + $0x2e] sm:$0x1]
      %v1912 = vld [vmem:[%s307 + $0x2f] sm:$0x1]
      %v1913 = vld [vmem:[%s307 + $0x40] sm:$0x1]
      %v1914 = vld [vmem:[%s307 + $0x41] sm:$0x1]
      %v1915 = vld [vmem:[%s307 + $0x42] sm:$0x1]
      %v1916 = vld [vmem:[%s307 + $0x43] sm:$0x1]
      %v1917 = vld [vmem:[%s307 + $0x44] sm:$0x1]
      %v1918 = vld [vmem:[%s307 + $0x45] sm:$0x1]
      %v1919 = vld [vmem:[%s307 + $0x46] sm:$0x1]
      %v1920 = vld [vmem:[%s307 + $0x47] sm:$0x1]
      %v1921 = vld [vmem:[%s307 + $0x48] sm:$0x1]
      %v1922 = vld [vmem:[%s307 + $0x49] sm:$0x1]
      %v1923 = vld [vmem:[%s307 + $0x4a] sm:$0x1]
      %v1924 = vld [vmem:[%s307 + $0x4b] sm:$0x1]
      %v1925 = vld [vmem:[%s307 + $0x4c] sm:$0x1]
      %v1926 = vld [vmem:[%s307 + $0x4d] sm:$0x1]
      %v1927 = vld [vmem:[%s307 + $0x4e] sm:$0x1]
      %v1928 = vld [vmem:[%s307 + $0x4f] sm:$0x1]
      %v1929 = vld [vmem:[%s307 + $0x60] sm:$0x1]
      %v1930 = vld [vmem:[%s307 + $0x61] sm:$0x1]
      %v1931 = vld [vmem:[%s307 + $0x62] sm:$0x1]
      %v1932 = vld [vmem:[%s307 + $0x63] sm:$0x1]
      %v1933 = vld [vmem:[%s307 + $0x64] sm:$0x1]
      %v1934 = vld [vmem:[%s307 + $0x65] sm:$0x1]
      %v1935 = vld [vmem:[%s307 + $0x66] sm:$0x1]
      %v1936 = vld [vmem:[%s307 + $0x67] sm:$0x1]
      %v1937 = vld [vmem:[%s307 + $0x68] sm:$0x1]
      %v1938 = vld [vmem:[%s307 + $0x69] sm:$0x1]
      %v1939 = vld [vmem:[%s307 + $0x6a] sm:$0x1]
      %v1940 = vld [vmem:[%s307 + $0x6b] sm:$0x1]
      %v1941 = vld [vmem:[%s307 + $0x6c] sm:$0x1]
      %v1942 = vld [vmem:[%s307 + $0x6d] sm:$0x1]
      %v1943 = vld [vmem:[%s307 + $0x6e] sm:$0x1]
      %v1944 = vld [vmem:[%s307 + $0x6f] sm:$0x1]
      %v2010 = vunpack.c.l.s4 1966171168
      %v2011 = vunpack.c.0.s8 %v2010
      %v2012 = vlaneseq
      %v2013 = vshrl.u32 %v2012, 7
      %v2014 = vsub.s32 %v2011, %v2013
      %v2015 = vrot.slane %v1881, %v2014
      %v2017 = vunpack.c.l.s4 1966171168
      %v2018 = vunpack.c.0.s8 %v2017
      %v2019 = vlaneseq
      %v2020 = vshrl.u32 %v2019, 7
      %v2021 = vsub.s32 %v2018, %v2020
      %v2022 = vrot.slane %v2015, %v2021
      %v2024 = vunpack.c.l.s4 1966171168
      %v2025 = vunpack.c.0.s8 %v2024
      %v2026 = vlaneseq
      %v2027 = vshrl.u32 %v2026, 7
      %v2028 = vsub.s32 %v2025, %v2027
      %v2029 = vrot.slane %v1882, %v2028
      %v2031 = vunpack.c.l.s4 1966171168
      %v2032 = vunpack.c.0.s8 %v2031
      %v2033 = vlaneseq
      %v2034 = vshrl.u32 %v2033, 7
      %v2035 = vsub.s32 %v2032, %v2034
      %v2036 = vrot.slane %v2029, %v2035
      %v2038 = vunpack.c.l.s4 1966171168
      %v2039 = vunpack.c.0.s8 %v2038
      %v2040 = vlaneseq
      %v2041 = vshrl.u32 %v2040, 7
      %v2042 = vsub.s32 %v2039, %v2041
      %v2043 = vrot.slane %v1883, %v2042
      %v2045 = vunpack.c.l.s4 1966171168
      %v2046 = vunpack.c.0.s8 %v2045
      %v2047 = vlaneseq
      %v2048 = vshrl.u32 %v2047, 7
      %v2049 = vsub.s32 %v2046, %v2048
      %v2050 = vrot.slane %v2043, %v2049
      %v2052 = vunpack.c.l.s4 1966171168
      %v2053 = vunpack.c.0.s8 %v2052
      %v2054 = vlaneseq
      %v2055 = vshrl.u32 %v2054, 7
      %v2056 = vsub.s32 %v2053, %v2055
      %v2057 = vrot.slane %v1884, %v2056
      %v2059 = vunpack.c.l.s4 1966171168
      %v2060 = vunpack.c.0.s8 %v2059
      %v2061 = vlaneseq
      %v2062 = vshrl.u32 %v2061, 7
      %v2063 = vsub.s32 %v2060, %v2062
      %v2064 = vrot.slane %v2057, %v2063
      %v2066 = vunpack.c.l.s4 1966171168
      %v2067 = vunpack.c.0.s8 %v2066
      %v2068 = vlaneseq
      %v2069 = vshrl.u32 %v2068, 7
      %v2070 = vsub.s32 %v2067, %v2069
      %v2071 = vrot.slane %v1885, %v2070
      %v2073 = vunpack.c.l.s4 1966171168
      %v2074 = vunpack.c.0.s8 %v2073
      %v2075 = vlaneseq
      %v2076 = vshrl.u32 %v2075, 7
      %v2077 = vsub.s32 %v2074, %v2076
      %v2078 = vrot.slane %v2071, %v2077
      %v2080 = vunpack.c.l.s4 1966171168
      %v2081 = vunpack.c.0.s8 %v2080
      %v2082 = vlaneseq
      %v2083 = vshrl.u32 %v2082, 7
      %v2084 = vsub.s32 %v2081, %v2083
      %v2085 = vrot.slane %v1886, %v2084
      %v2087 = vunpack.c.l.s4 1966171168
      %v2088 = vunpack.c.0.s8 %v2087
      %v2089 = vlaneseq
      %v2090 = vshrl.u32 %v2089, 7
      %v2091 = vsub.s32 %v2088, %v2090
      %v2092 = vrot.slane %v2085, %v2091
      %v2094 = vunpack.c.l.s4 1966171168
      %v2095 = vunpack.c.0.s8 %v2094
      %v2096 = vlaneseq
      %v2097 = vshrl.u32 %v2096, 7
      %v2098 = vsub.s32 %v2095, %v2097
      %v2099 = vrot.slane %v1887, %v2098
      %v2101 = vunpack.c.l.s4 1966171168
      %v2102 = vunpack.c.0.s8 %v2101
      %v2103 = vlaneseq
      %v2104 = vshrl.u32 %v2103, 7
      %v2105 = vsub.s32 %v2102, %v2104
      %v2106 = vrot.slane %v2099, %v2105
      %v2108 = vunpack.c.l.s4 1966171168
      %v2109 = vunpack.c.0.s8 %v2108
      %v2110 = vlaneseq
      %v2111 = vshrl.u32 %v2110, 7
      %v2112 = vsub.s32 %v2109, %v2111
      %v2113 = vrot.slane %v1888, %v2112
      %v2115 = vunpack.c.l.s4 1966171168
      %v2116 = vunpack.c.0.s8 %v2115
      %v2117 = vlaneseq
      %v2118 = vshrl.u32 %v2117, 7
      %v2119 = vsub.s32 %v2116, %v2118
      %v2120 = vrot.slane %v2113, %v2119
      %v2122 = vunpack.c.l.s4 1966171168
      %v2123 = vunpack.c.0.s8 %v2122
      %v2124 = vlaneseq
      %v2125 = vshrl.u32 %v2124, 7
      %v2126 = vsub.s32 %v2123, %v2125
      %v2127 = vrot.slane %v1889, %v2126
      %v2129 = vunpack.c.l.s4 1966171168
      %v2130 = vunpack.c.0.s8 %v2129
      %v2131 = vlaneseq
      %v2132 = vshrl.u32 %v2131, 7
      %v2133 = vsub.s32 %v2130, %v2132
      %v2134 = vrot.slane %v2127, %v2133
      %v2136 = vunpack.c.l.s4 1966171168
      %v2137 = vunpack.c.0.s8 %v2136
      %v2138 = vlaneseq
      %v2139 = vshrl.u32 %v2138, 7
      %v2140 = vsub.s32 %v2137, %v2139
      %v2141 = vrot.slane %v1890, %v2140
      %v2143 = vunpack.c.l.s4 1966171168
      %v2144 = vunpack.c.0.s8 %v2143
      %v2145 = vlaneseq
      %v2146 = vshrl.u32 %v2145, 7
      %v2147 = vsub.s32 %v2144, %v2146
      %v2148 = vrot.slane %v2141, %v2147
      %v2150 = vunpack.c.l.s4 1966171168
      %v2151 = vunpack.c.0.s8 %v2150
      %v2152 = vlaneseq
      %v2153 = vshrl.u32 %v2152, 7
      %v2154 = vsub.s32 %v2151, %v2153
      %v2155 = vrot.slane %v1891, %v2154
      %v2157 = vunpack.c.l.s4 1966171168
      %v2158 = vunpack.c.0.s8 %v2157
      %v2159 = vlaneseq
      %v2160 = vshrl.u32 %v2159, 7
      %v2161 = vsub.s32 %v2158, %v2160
      %v2162 = vrot.slane %v2155, %v2161
      %v2164 = vunpack.c.l.s4 1966171168
      %v2165 = vunpack.c.0.s8 %v2164
      %v2166 = vlaneseq
      %v2167 = vshrl.u32 %v2166, 7
      %v2168 = vsub.s32 %v2165, %v2167
      %v2169 = vrot.slane %v1892, %v2168
      %v2171 = vunpack.c.l.s4 1966171168
      %v2172 = vunpack.c.0.s8 %v2171
      %v2173 = vlaneseq
      %v2174 = vshrl.u32 %v2173, 7
      %v2175 = vsub.s32 %v2172, %v2174
      %v2176 = vrot.slane %v2169, %v2175
      %v2178 = vunpack.c.l.s4 1966171168
      %v2179 = vunpack.c.0.s8 %v2178
      %v2180 = vlaneseq
      %v2181 = vshrl.u32 %v2180, 7
      %v2182 = vsub.s32 %v2179, %v2181
      %v2183 = vrot.slane %v1893, %v2182
      %v2185 = vunpack.c.l.s4 1966171168
      %v2186 = vunpack.c.0.s8 %v2185
      %v2187 = vlaneseq
      %v2188 = vshrl.u32 %v2187, 7
      %v2189 = vsub.s32 %v2186, %v2188
      %v2190 = vrot.slane %v2183, %v2189
      %v2192 = vunpack.c.l.s4 1966171168
      %v2193 = vunpack.c.0.s8 %v2192
      %v2194 = vlaneseq
      %v2195 = vshrl.u32 %v2194, 7
      %v2196 = vsub.s32 %v2193, %v2195
      %v2197 = vrot.slane %v1894, %v2196
      %v2199 = vunpack.c.l.s4 1966171168
      %v2200 = vunpack.c.0.s8 %v2199
      %v2201 = vlaneseq
      %v2202 = vshrl.u32 %v2201, 7
      %v2203 = vsub.s32 %v2200, %v2202
      %v2204 = vrot.slane %v2197, %v2203
      %v2206 = vunpack.c.l.s4 1966171168
      %v2207 = vunpack.c.0.s8 %v2206
      %v2208 = vlaneseq
      %v2209 = vshrl.u32 %v2208, 7
      %v2210 = vsub.s32 %v2207, %v2209
      %v2211 = vrot.slane %v1895, %v2210
      %v2213 = vunpack.c.l.s4 1966171168
      %v2214 = vunpack.c.0.s8 %v2213
      %v2215 = vlaneseq
      %v2216 = vshrl.u32 %v2215, 7
      %v2217 = vsub.s32 %v2214, %v2216
      %v2218 = vrot.slane %v2211, %v2217
      %v2220 = vunpack.c.l.s4 1966171168
      %v2221 = vunpack.c.0.s8 %v2220
      %v2222 = vlaneseq
      %v2223 = vshrl.u32 %v2222, 7
      %v2224 = vsub.s32 %v2221, %v2223
      %v2225 = vrot.slane %v1896, %v2224
      %v2227 = vunpack.c.l.s4 1966171168
      %v2228 = vunpack.c.0.s8 %v2227
      %v2229 = vlaneseq
      %v2230 = vshrl.u32 %v2229, 7
      %v2231 = vsub.s32 %v2228, %v2230
      %v2232 = vrot.slane %v2225, %v2231
      %v2234 = vunpack.c.l.s4 1966171168
      %v2235 = vunpack.c.0.s8 %v2234
      %v2236 = vlaneseq
      %v2237 = vshrl.u32 %v2236, 7
      %v2238 = vsub.s32 %v2235, %v2237
      %v2239 = vrot.slane %v1897, %v2238
      %v2241 = vunpack.c.l.s4 1966171168
      %v2242 = vunpack.c.0.s8 %v2241
      %v2243 = vlaneseq
      %v2244 = vshrl.u32 %v2243, 7
      %v2245 = vsub.s32 %v2242, %v2244
      %v2246 = vrot.slane %v2239, %v2245
      %v2248 = vunpack.c.l.s4 1966171168
      %v2249 = vunpack.c.0.s8 %v2248
      %v2250 = vlaneseq
      %v2251 = vshrl.u32 %v2250, 7
      %v2252 = vsub.s32 %v2249, %v2251
      %v2253 = vrot.slane %v1898, %v2252
      %v2255 = vunpack.c.l.s4 1966171168
      %v2256 = vunpack.c.0.s8 %v2255
      %v2257 = vlaneseq
      %v2258 = vshrl.u32 %v2257, 7
      %v2259 = vsub.s32 %v2256, %v2258
      %v2260 = vrot.slane %v2253, %v2259
      %v2262 = vunpack.c.l.s4 1966171168
      %v2263 = vunpack.c.0.s8 %v2262
      %v2264 = vlaneseq
      %v2265 = vshrl.u32 %v2264, 7
      %v2266 = vsub.s32 %v2263, %v2265
      %v2267 = vrot.slane %v1899, %v2266
      %v2269 = vunpack.c.l.s4 1966171168
      %v2270 = vunpack.c.0.s8 %v2269
      %v2271 = vlaneseq
      %v2272 = vshrl.u32 %v2271, 7
      %v2273 = vsub.s32 %v2270, %v2272
      %v2274 = vrot.slane %v2267, %v2273
      %v2276 = vunpack.c.l.s4 1966171168
      %v2277 = vunpack.c.0.s8 %v2276
      %v2278 = vlaneseq
      %v2279 = vshrl.u32 %v2278, 7
      %v2280 = vsub.s32 %v2277, %v2279
      %v2281 = vrot.slane %v1900, %v2280
      %v2283 = vunpack.c.l.s4 1966171168
      %v2284 = vunpack.c.0.s8 %v2283
      %v2285 = vlaneseq
      %v2286 = vshrl.u32 %v2285, 7
      %v2287 = vsub.s32 %v2284, %v2286
      %v2288 = vrot.slane %v2281, %v2287
      %v2290 = vunpack.c.l.s4 1966171168
      %v2291 = vunpack.c.0.s8 %v2290
      %v2292 = vlaneseq
      %v2293 = vshrl.u32 %v2292, 7
      %v2294 = vsub.s32 %v2291, %v2293
      %v2295 = vrot.slane %v1901, %v2294
      %v2297 = vunpack.c.l.s4 1966171168
      %v2298 = vunpack.c.0.s8 %v2297
      %v2299 = vlaneseq
      %v2300 = vshrl.u32 %v2299, 7
      %v2301 = vsub.s32 %v2298, %v2300
      %v2302 = vrot.slane %v2295, %v2301
      %v2304 = vunpack.c.l.s4 1966171168
      %v2305 = vunpack.c.0.s8 %v2304
      %v2306 = vlaneseq
      %v2307 = vshrl.u32 %v2306, 7
      %v2308 = vsub.s32 %v2305, %v2307
      %v2309 = vrot.slane %v1902, %v2308
      %v2311 = vunpack.c.l.s4 1966171168
      %v2312 = vunpack.c.0.s8 %v2311
      %v2313 = vlaneseq
      %v2314 = vshrl.u32 %v2313, 7
      %v2315 = vsub.s32 %v2312, %v2314
      %v2316 = vrot.slane %v2309, %v2315
      %v2318 = vunpack.c.l.s4 1966171168
      %v2319 = vunpack.c.0.s8 %v2318
      %v2320 = vlaneseq
      %v2321 = vshrl.u32 %v2320, 7
      %v2322 = vsub.s32 %v2319, %v2321
      %v2323 = vrot.slane %v1903, %v2322
      %v2325 = vunpack.c.l.s4 1966171168
      %v2326 = vunpack.c.0.s8 %v2325
      %v2327 = vlaneseq
      %v2328 = vshrl.u32 %v2327, 7
      %v2329 = vsub.s32 %v2326, %v2328
      %v2330 = vrot.slane %v2323, %v2329
      %v2332 = vunpack.c.l.s4 1966171168
      %v2333 = vunpack.c.0.s8 %v2332
      %v2334 = vlaneseq
      %v2335 = vshrl.u32 %v2334, 7
      %v2336 = vsub.s32 %v2333, %v2335
      %v2337 = vrot.slane %v1904, %v2336
      %v2339 = vunpack.c.l.s4 1966171168
      %v2340 = vunpack.c.0.s8 %v2339
      %v2341 = vlaneseq
      %v2342 = vshrl.u32 %v2341, 7
      %v2343 = vsub.s32 %v2340, %v2342
      %v2344 = vrot.slane %v2337, %v2343
      %v2346 = vunpack.c.l.s4 1966171168
      %v2347 = vunpack.c.0.s8 %v2346
      %v2348 = vlaneseq
      %v2349 = vshrl.u32 %v2348, 7
      %v2350 = vsub.s32 %v2347, %v2349
      %v2351 = vrot.slane %v1905, %v2350
      %v2353 = vunpack.c.l.s4 1966171168
      %v2354 = vunpack.c.0.s8 %v2353
      %v2355 = vlaneseq
      %v2356 = vshrl.u32 %v2355, 7
      %v2357 = vsub.s32 %v2354, %v2356
      %v2358 = vrot.slane %v2351, %v2357
      %v2360 = vunpack.c.l.s4 1966171168
      %v2361 = vunpack.c.0.s8 %v2360
      %v2362 = vlaneseq
      %v2363 = vshrl.u32 %v2362, 7
      %v2364 = vsub.s32 %v2361, %v2363
      %v2365 = vrot.slane %v1906, %v2364
      %v2367 = vunpack.c.l.s4 1966171168
      %v2368 = vunpack.c.0.s8 %v2367
      %v2369 = vlaneseq
      %v2370 = vshrl.u32 %v2369, 7
      %v2371 = vsub.s32 %v2368, %v2370
      %v2372 = vrot.slane %v2365, %v2371
      %v2374 = vunpack.c.l.s4 1966171168
      %v2375 = vunpack.c.0.s8 %v2374
      %v2376 = vlaneseq
      %v2377 = vshrl.u32 %v2376, 7
      %v2378 = vsub.s32 %v2375, %v2377
      %v2379 = vrot.slane %v1907, %v2378
      %v2381 = vunpack.c.l.s4 1966171168
      %v2382 = vunpack.c.0.s8 %v2381
      %v2383 = vlaneseq
      %v2384 = vshrl.u32 %v2383, 7
      %v2385 = vsub.s32 %v2382, %v2384
      %v2386 = vrot.slane %v2379, %v2385
      %v2388 = vunpack.c.l.s4 1966171168
      %v2389 = vunpack.c.0.s8 %v2388
      %v2390 = vlaneseq
      %v2391 = vshrl.u32 %v2390, 7
      %v2392 = vsub.s32 %v2389, %v2391
      %v2393 = vrot.slane %v1908, %v2392
      %v2395 = vunpack.c.l.s4 1966171168
      %v2396 = vunpack.c.0.s8 %v2395
      %v2397 = vlaneseq
      %v2398 = vshrl.u32 %v2397, 7
      %v2399 = vsub.s32 %v2396, %v2398
      %v2400 = vrot.slane %v2393, %v2399
      %v2402 = vunpack.c.l.s4 1966171168
      %v2403 = vunpack.c.0.s8 %v2402
      %v2404 = vlaneseq
      %v2405 = vshrl.u32 %v2404, 7
      %v2406 = vsub.s32 %v2403, %v2405
      %v2407 = vrot.slane %v1909, %v2406
      %v2409 = vunpack.c.l.s4 1966171168
      %v2410 = vunpack.c.0.s8 %v2409
      %v2411 = vlaneseq
      %v2412 = vshrl.u32 %v2411, 7
      %v2413 = vsub.s32 %v2410, %v2412
      %v2414 = vrot.slane %v2407, %v2413
      %v2416 = vunpack.c.l.s4 1966171168
      %v2417 = vunpack.c.0.s8 %v2416
      %v2418 = vlaneseq
      %v2419 = vshrl.u32 %v2418, 7
      %v2420 = vsub.s32 %v2417, %v2419
      %v2421 = vrot.slane %v1910, %v2420
      %v2423 = vunpack.c.l.s4 1966171168
      %v2424 = vunpack.c.0.s8 %v2423
      %v2425 = vlaneseq
      %v2426 = vshrl.u32 %v2425, 7
      %v2427 = vsub.s32 %v2424, %v2426
      %v2428 = vrot.slane %v2421, %v2427
      %v2430 = vunpack.c.l.s4 1966171168
      %v2431 = vunpack.c.0.s8 %v2430
      %v2432 = vlaneseq
      %v2433 = vshrl.u32 %v2432, 7
      %v2434 = vsub.s32 %v2431, %v2433
      %v2435 = vrot.slane %v1911, %v2434
      %v2437 = vunpack.c.l.s4 1966171168
      %v2438 = vunpack.c.0.s8 %v2437
      %v2439 = vlaneseq
      %v2440 = vshrl.u32 %v2439, 7
      %v2441 = vsub.s32 %v2438, %v2440
      %v2442 = vrot.slane %v2435, %v2441
      %v2444 = vunpack.c.l.s4 1966171168
      %v2445 = vunpack.c.0.s8 %v2444
      %v2446 = vlaneseq
      %v2447 = vshrl.u32 %v2446, 7
      %v2448 = vsub.s32 %v2445, %v2447
      %v2449 = vrot.slane %v1912, %v2448
      %v2451 = vunpack.c.l.s4 1966171168
      %v2452 = vunpack.c.0.s8 %v2451
      %v2453 = vlaneseq
      %v2454 = vshrl.u32 %v2453, 7
      %v2455 = vsub.s32 %v2452, %v2454
      %v2456 = vrot.slane %v2449, %v2455
      %v2458 = vunpack.c.l.s4 1966171168
      %v2459 = vunpack.c.0.s8 %v2458
      %v2460 = vlaneseq
      %v2461 = vshrl.u32 %v2460, 7
      %v2462 = vsub.s32 %v2459, %v2461
      %v2463 = vrot.slane %v1913, %v2462
      %v2465 = vunpack.c.l.s4 1966171168
      %v2466 = vunpack.c.0.s8 %v2465
      %v2467 = vlaneseq
      %v2468 = vshrl.u32 %v2467, 7
      %v2469 = vsub.s32 %v2466, %v2468
      %v2470 = vrot.slane %v2463, %v2469
      %v2472 = vunpack.c.l.s4 1966171168
      %v2473 = vunpack.c.0.s8 %v2472
      %v2474 = vlaneseq
      %v2475 = vshrl.u32 %v2474, 7
      %v2476 = vsub.s32 %v2473, %v2475
      %v2477 = vrot.slane %v1914, %v2476
      %v2479 = vunpack.c.l.s4 1966171168
      %v2480 = vunpack.c.0.s8 %v2479
      %v2481 = vlaneseq
      %v2482 = vshrl.u32 %v2481, 7
      %v2483 = vsub.s32 %v2480, %v2482
      %v2484 = vrot.slane %v2477, %v2483
      %v2486 = vunpack.c.l.s4 1966171168
      %v2487 = vunpack.c.0.s8 %v2486
      %v2488 = vlaneseq
      %v2489 = vshrl.u32 %v2488, 7
      %v2490 = vsub.s32 %v2487, %v2489
      %v2491 = vrot.slane %v1915, %v2490
      %v2493 = vunpack.c.l.s4 1966171168
      %v2494 = vunpack.c.0.s8 %v2493
      %v2495 = vlaneseq
      %v2496 = vshrl.u32 %v2495, 7
      %v2497 = vsub.s32 %v2494, %v2496
      %v2498 = vrot.slane %v2491, %v2497
      %v2500 = vunpack.c.l.s4 1966171168
      %v2501 = vunpack.c.0.s8 %v2500
      %v2502 = vlaneseq
      %v2503 = vshrl.u32 %v2502, 7
      %v2504 = vsub.s32 %v2501, %v2503
      %v2505 = vrot.slane %v1916, %v2504
      %v2507 = vunpack.c.l.s4 1966171168
      %v2508 = vunpack.c.0.s8 %v2507
      %v2509 = vlaneseq
      %v2510 = vshrl.u32 %v2509, 7
      %v2511 = vsub.s32 %v2508, %v2510
      %v2512 = vrot.slane %v2505, %v2511
      %v2514 = vunpack.c.l.s4 1966171168
      %v2515 = vunpack.c.0.s8 %v2514
      %v2516 = vlaneseq
      %v2517 = vshrl.u32 %v2516, 7
      %v2518 = vsub.s32 %v2515, %v2517
      %v2519 = vrot.slane %v1917, %v2518
      %v2521 = vunpack.c.l.s4 1966171168
      %v2522 = vunpack.c.0.s8 %v2521
      %v2523 = vlaneseq
      %v2524 = vshrl.u32 %v2523, 7
      %v2525 = vsub.s32 %v2522, %v2524
      %v2526 = vrot.slane %v2519, %v2525
      %v2528 = vunpack.c.l.s4 1966171168
      %v2529 = vunpack.c.0.s8 %v2528
      %v2530 = vlaneseq
      %v2531 = vshrl.u32 %v2530, 7
      %v2532 = vsub.s32 %v2529, %v2531
      %v2533 = vrot.slane %v1918, %v2532
      %v2535 = vunpack.c.l.s4 1966171168
      %v2536 = vunpack.c.0.s8 %v2535
      %v2537 = vlaneseq
      %v2538 = vshrl.u32 %v2537, 7
      %v2539 = vsub.s32 %v2536, %v2538
      %v2540 = vrot.slane %v2533, %v2539
      %v2542 = vunpack.c.l.s4 1966171168
      %v2543 = vunpack.c.0.s8 %v2542
      %v2544 = vlaneseq
      %v2545 = vshrl.u32 %v2544, 7
      %v2546 = vsub.s32 %v2543, %v2545
      %v2547 = vrot.slane %v1919, %v2546
      %v2549 = vunpack.c.l.s4 1966171168
      %v2550 = vunpack.c.0.s8 %v2549
      %v2551 = vlaneseq
      %v2552 = vshrl.u32 %v2551, 7
      %v2553 = vsub.s32 %v2550, %v2552
      %v2554 = vrot.slane %v2547, %v2553
      %v2556 = vunpack.c.l.s4 1966171168
      %v2557 = vunpack.c.0.s8 %v2556
      %v2558 = vlaneseq
      %v2559 = vshrl.u32 %v2558, 7
      %v2560 = vsub.s32 %v2557, %v2559
      %v2561 = vrot.slane %v1920, %v2560
      %v2563 = vunpack.c.l.s4 1966171168
      %v2564 = vunpack.c.0.s8 %v2563
      %v2565 = vlaneseq
      %v2566 = vshrl.u32 %v2565, 7
      %v2567 = vsub.s32 %v2564, %v2566
      %v2568 = vrot.slane %v2561, %v2567
      %v2570 = vunpack.c.l.s4 1966171168
      %v2571 = vunpack.c.0.s8 %v2570
      %v2572 = vlaneseq
      %v2573 = vshrl.u32 %v2572, 7
      %v2574 = vsub.s32 %v2571, %v2573
      %v2575 = vrot.slane %v1921, %v2574
      %v2577 = vunpack.c.l.s4 1966171168
      %v2578 = vunpack.c.0.s8 %v2577
      %v2579 = vlaneseq
      %v2580 = vshrl.u32 %v2579, 7
      %v2581 = vsub.s32 %v2578, %v2580
      %v2582 = vrot.slane %v2575, %v2581
      %v2584 = vunpack.c.l.s4 1966171168
      %v2585 = vunpack.c.0.s8 %v2584
      %v2586 = vlaneseq
      %v2587 = vshrl.u32 %v2586, 7
      %v2588 = vsub.s32 %v2585, %v2587
      %v2589 = vrot.slane %v1922, %v2588
      %v2591 = vunpack.c.l.s4 1966171168
      %v2592 = vunpack.c.0.s8 %v2591
      %v2593 = vlaneseq
      %v2594 = vshrl.u32 %v2593, 7
      %v2595 = vsub.s32 %v2592, %v2594
      %v2596 = vrot.slane %v2589, %v2595
      %v2598 = vunpack.c.l.s4 1966171168
      %v2599 = vunpack.c.0.s8 %v2598
      %v2600 = vlaneseq
      %v2601 = vshrl.u32 %v2600, 7
      %v2602 = vsub.s32 %v2599, %v2601
      %v2603 = vrot.slane %v1923, %v2602
      %v2605 = vunpack.c.l.s4 1966171168
      %v2606 = vunpack.c.0.s8 %v2605
      %v2607 = vlaneseq
      %v2608 = vshrl.u32 %v2607, 7
      %v2609 = vsub.s32 %v2606, %v2608
      %v2610 = vrot.slane %v2603, %v2609
      %v2612 = vunpack.c.l.s4 1966171168
      %v2613 = vunpack.c.0.s8 %v2612
      %v2614 = vlaneseq
      %v2615 = vshrl.u32 %v2614, 7
      %v2616 = vsub.s32 %v2613, %v2615
      %v2617 = vrot.slane %v1924, %v2616
      %v2619 = vunpack.c.l.s4 1966171168
      %v2620 = vunpack.c.0.s8 %v2619
      %v2621 = vlaneseq
      %v2622 = vshrl.u32 %v2621, 7
      %v2623 = vsub.s32 %v2620, %v2622
      %v2624 = vrot.slane %v2617, %v2623
      %v2626 = vunpack.c.l.s4 1966171168
      %v2627 = vunpack.c.0.s8 %v2626
      %v2628 = vlaneseq
      %v2629 = vshrl.u32 %v2628, 7
      %v2630 = vsub.s32 %v2627, %v2629
      %v2631 = vrot.slane %v1925, %v2630
      %v2633 = vunpack.c.l.s4 1966171168
      %v2634 = vunpack.c.0.s8 %v2633
      %v2635 = vlaneseq
      %v2636 = vshrl.u32 %v2635, 7
      %v2637 = vsub.s32 %v2634, %v2636
      %v2638 = vrot.slane %v2631, %v2637
      %v2640 = vunpack.c.l.s4 1966171168
      %v2641 = vunpack.c.0.s8 %v2640
      %v2642 = vlaneseq
      %v2643 = vshrl.u32 %v2642, 7
      %v2644 = vsub.s32 %v2641, %v2643
      %v2645 = vrot.slane %v1926, %v2644
      %v2647 = vunpack.c.l.s4 1966171168
      %v2648 = vunpack.c.0.s8 %v2647
      %v2649 = vlaneseq
      %v2650 = vshrl.u32 %v2649, 7
      %v2651 = vsub.s32 %v2648, %v2650
      %v2652 = vrot.slane %v2645, %v2651
      %v2654 = vunpack.c.l.s4 1966171168
      %v2655 = vunpack.c.0.s8 %v2654
      %v2656 = vlaneseq
      %v2657 = vshrl.u32 %v2656, 7
      %v2658 = vsub.s32 %v2655, %v2657
      %v2659 = vrot.slane %v1927, %v2658
      %v2661 = vunpack.c.l.s4 1966171168
      %v2662 = vunpack.c.0.s8 %v2661
      %v2663 = vlaneseq
      %v2664 = vshrl.u32 %v2663, 7
      %v2665 = vsub.s32 %v2662, %v2664
      %v2666 = vrot.slane %v2659, %v2665
      %v2668 = vunpack.c.l.s4 1966171168
      %v2669 = vunpack.c.0.s8 %v2668
      %v2670 = vlaneseq
      %v2671 = vshrl.u32 %v2670, 7
      %v2672 = vsub.s32 %v2669, %v2671
      %v2673 = vrot.slane %v1928, %v2672
      %v2675 = vunpack.c.l.s4 1966171168
      %v2676 = vunpack.c.0.s8 %v2675
      %v2677 = vlaneseq
      %v2678 = vshrl.u32 %v2677, 7
      %v2679 = vsub.s32 %v2676, %v2678
      %v2680 = vrot.slane %v2673, %v2679
      %v2682 = vunpack.c.l.s4 1966171168
      %v2683 = vunpack.c.0.s8 %v2682
      %v2684 = vlaneseq
      %v2685 = vshrl.u32 %v2684, 7
      %v2686 = vsub.s32 %v2683, %v2685
      %v2687 = vrot.slane %v1929, %v2686
      %v2689 = vunpack.c.l.s4 1966171168
      %v2690 = vunpack.c.0.s8 %v2689
      %v2691 = vlaneseq
      %v2692 = vshrl.u32 %v2691, 7
      %v2693 = vsub.s32 %v2690, %v2692
      %v2694 = vrot.slane %v2687, %v2693
      %v2696 = vunpack.c.l.s4 1966171168
      %v2697 = vunpack.c.0.s8 %v2696
      %v2698 = vlaneseq
      %v2699 = vshrl.u32 %v2698, 7
      %v2700 = vsub.s32 %v2697, %v2699
      %v2701 = vrot.slane %v1930, %v2700
      %v2703 = vunpack.c.l.s4 1966171168
      %v2704 = vunpack.c.0.s8 %v2703
      %v2705 = vlaneseq
      %v2706 = vshrl.u32 %v2705, 7
      %v2707 = vsub.s32 %v2704, %v2706
      %v2708 = vrot.slane %v2701, %v2707
      %v2710 = vunpack.c.l.s4 1966171168
      %v2711 = vunpack.c.0.s8 %v2710
      %v2712 = vlaneseq
      %v2713 = vshrl.u32 %v2712, 7
      %v2714 = vsub.s32 %v2711, %v2713
      %v2715 = vrot.slane %v1931, %v2714
      %v2717 = vunpack.c.l.s4 1966171168
      %v2718 = vunpack.c.0.s8 %v2717
      %v2719 = vlaneseq
      %v2720 = vshrl.u32 %v2719, 7
      %v2721 = vsub.s32 %v2718, %v2720
      %v2722 = vrot.slane %v2715, %v2721
      %v2724 = vunpack.c.l.s4 1966171168
      %v2725 = vunpack.c.0.s8 %v2724
      %v2726 = vlaneseq
      %v2727 = vshrl.u32 %v2726, 7
      %v2728 = vsub.s32 %v2725, %v2727
      %v2729 = vrot.slane %v1932, %v2728
      %v2731 = vunpack.c.l.s4 1966171168
      %v2732 = vunpack.c.0.s8 %v2731
      %v2733 = vlaneseq
      %v2734 = vshrl.u32 %v2733, 7
      %v2735 = vsub.s32 %v2732, %v2734
      %v2736 = vrot.slane %v2729, %v2735
      %v2738 = vunpack.c.l.s4 1966171168
      %v2739 = vunpack.c.0.s8 %v2738
      %v2740 = vlaneseq
      %v2741 = vshrl.u32 %v2740, 7
      %v2742 = vsub.s32 %v2739, %v2741
      %v2743 = vrot.slane %v1933, %v2742
      %v2745 = vunpack.c.l.s4 1966171168
      %v2746 = vunpack.c.0.s8 %v2745
      %v2747 = vlaneseq
      %v2748 = vshrl.u32 %v2747, 7
      %v2749 = vsub.s32 %v2746, %v2748
      %v2750 = vrot.slane %v2743, %v2749
      %v2752 = vunpack.c.l.s4 1966171168
      %v2753 = vunpack.c.0.s8 %v2752
      %v2754 = vlaneseq
      %v2755 = vshrl.u32 %v2754, 7
      %v2756 = vsub.s32 %v2753, %v2755
      %v2757 = vrot.slane %v1934, %v2756
      %v2759 = vunpack.c.l.s4 1966171168
      %v2760 = vunpack.c.0.s8 %v2759
      %v2761 = vlaneseq
      %v2762 = vshrl.u32 %v2761, 7
      %v2763 = vsub.s32 %v2760, %v2762
      %v2764 = vrot.slane %v2757, %v2763
      %v2766 = vunpack.c.l.s4 1966171168
      %v2767 = vunpack.c.0.s8 %v2766
      %v2768 = vlaneseq
      %v2769 = vshrl.u32 %v2768, 7
      %v2770 = vsub.s32 %v2767, %v2769
      %v2771 = vrot.slane %v1935, %v2770
      %v2773 = vunpack.c.l.s4 1966171168
      %v2774 = vunpack.c.0.s8 %v2773
      %v2775 = vlaneseq
      %v2776 = vshrl.u32 %v2775, 7
      %v2777 = vsub.s32 %v2774, %v2776
      %v2778 = vrot.slane %v2771, %v2777
      %v2780 = vunpack.c.l.s4 1966171168
      %v2781 = vunpack.c.0.s8 %v2780
      %v2782 = vlaneseq
      %v2783 = vshrl.u32 %v2782, 7
      %v2784 = vsub.s32 %v2781, %v2783
      %v2785 = vrot.slane %v1936, %v2784
      %v2787 = vunpack.c.l.s4 1966171168
      %v2788 = vunpack.c.0.s8 %v2787
      %v2789 = vlaneseq
      %v2790 = vshrl.u32 %v2789, 7
      %v2791 = vsub.s32 %v2788, %v2790
      %v2792 = vrot.slane %v2785, %v2791
      %v2794 = vunpack.c.l.s4 1966171168
      %v2795 = vunpack.c.0.s8 %v2794
      %v2796 = vlaneseq
      %v2797 = vshrl.u32 %v2796, 7
      %v2798 = vsub.s32 %v2795, %v2797
      %v2799 = vrot.slane %v1937, %v2798
      %v2801 = vunpack.c.l.s4 1966171168
      %v2802 = vunpack.c.0.s8 %v2801
      %v2803 = vlaneseq
      %v2804 = vshrl.u32 %v2803, 7
      %v2805 = vsub.s32 %v2802, %v2804
      %v2806 = vrot.slane %v2799, %v2805
      %v2808 = vunpack.c.l.s4 1966171168
      %v2809 = vunpack.c.0.s8 %v2808
      %v2810 = vlaneseq
      %v2811 = vshrl.u32 %v2810, 7
      %v2812 = vsub.s32 %v2809, %v2811
      %v2813 = vrot.slane %v1938, %v2812
      %v2815 = vunpack.c.l.s4 1966171168
      %v2816 = vunpack.c.0.s8 %v2815
      %v2817 = vlaneseq
      %v2818 = vshrl.u32 %v2817, 7
      %v2819 = vsub.s32 %v2816, %v2818
      %v2820 = vrot.slane %v2813, %v2819
      %v2822 = vunpack.c.l.s4 1966171168
      %v2823 = vunpack.c.0.s8 %v2822
      %v2824 = vlaneseq
      %v2825 = vshrl.u32 %v2824, 7
      %v2826 = vsub.s32 %v2823, %v2825
      %v2827 = vrot.slane %v1939, %v2826
      %v2829 = vunpack.c.l.s4 1966171168
      %v2830 = vunpack.c.0.s8 %v2829
      %v2831 = vlaneseq
      %v2832 = vshrl.u32 %v2831, 7
      %v2833 = vsub.s32 %v2830, %v2832
      %v2834 = vrot.slane %v2827, %v2833
      %v2836 = vunpack.c.l.s4 1966171168
      %v2837 = vunpack.c.0.s8 %v2836
      %v2838 = vlaneseq
      %v2839 = vshrl.u32 %v2838, 7
      %v2840 = vsub.s32 %v2837, %v2839
      %v2841 = vrot.slane %v1940, %v2840
      %v2843 = vunpack.c.l.s4 1966171168
      %v2844 = vunpack.c.0.s8 %v2843
      %v2845 = vlaneseq
      %v2846 = vshrl.u32 %v2845, 7
      %v2847 = vsub.s32 %v2844, %v2846
      %v2848 = vrot.slane %v2841, %v2847
      %v2850 = vunpack.c.l.s4 1966171168
      %v2851 = vunpack.c.0.s8 %v2850
      %v2852 = vlaneseq
      %v2853 = vshrl.u32 %v2852, 7
      %v2854 = vsub.s32 %v2851, %v2853
      %v2855 = vrot.slane %v1941, %v2854
      %v2857 = vunpack.c.l.s4 1966171168
      %v2858 = vunpack.c.0.s8 %v2857
      %v2859 = vlaneseq
      %v2860 = vshrl.u32 %v2859, 7
      %v2861 = vsub.s32 %v2858, %v2860
      %v2862 = vrot.slane %v2855, %v2861
      %v2864 = vunpack.c.l.s4 1966171168
      %v2865 = vunpack.c.0.s8 %v2864
      %v2866 = vlaneseq
      %v2867 = vshrl.u32 %v2866, 7
      %v2868 = vsub.s32 %v2865, %v2867
      %v2869 = vrot.slane %v1942, %v2868
      %v2871 = vunpack.c.l.s4 1966171168
      %v2872 = vunpack.c.0.s8 %v2871
      %v2873 = vlaneseq
      %v2874 = vshrl.u32 %v2873, 7
      %v2875 = vsub.s32 %v2872, %v2874
      %v2876 = vrot.slane %v2869, %v2875
      %v2878 = vunpack.c.l.s4 1966171168
      %v2879 = vunpack.c.0.s8 %v2878
      %v2880 = vlaneseq
      %v2881 = vshrl.u32 %v2880, 7
      %v2882 = vsub.s32 %v2879, %v2881
      %v2883 = vrot.slane %v1943, %v2882
      %v2885 = vunpack.c.l.s4 1966171168
      %v2886 = vunpack.c.0.s8 %v2885
      %v2887 = vlaneseq
      %v2888 = vshrl.u32 %v2887, 7
      %v2889 = vsub.s32 %v2886, %v2888
      %v2890 = vrot.slane %v2883, %v2889
      %v2892 = vunpack.c.l.s4 1966171168
      %v2893 = vunpack.c.0.s8 %v2892
      %v2894 = vlaneseq
      %v2895 = vshrl.u32 %v2894, 7
      %v2896 = vsub.s32 %v2893, %v2895
      %v2897 = vrot.slane %v1944, %v2896
      %v2899 = vunpack.c.l.s4 1966171168
      %v2900 = vunpack.c.0.s8 %v2899
      %v2901 = vlaneseq
      %v2902 = vshrl.u32 %v2901, 7
      %v2903 = vsub.s32 %v2900, %v2902
      %v2904 = vrot.slane %v2897, %v2903
      %v2905 = vunpack.c.l.b16 %v2022
      %v2906 = vunpack.c.l.b16 %v2036
      %v2907 = vunpack.c.l.b16 %v2050
      %v2908 = vunpack.c.l.b16 %v2064
      %v2909 = vunpack.c.l.b16 %v2078
      %v2910 = vunpack.c.l.b16 %v2092
      %v2911 = vunpack.c.l.b16 %v2106
      %v2912 = vunpack.c.l.b16 %v2120
      %v2913 = vunpack.c.l.b16 %v2134
      %v2914 = vunpack.c.l.b16 %v2148
      %v2915 = vunpack.c.l.b16 %v2162
      %v2916 = vunpack.c.l.b16 %v2176
      %v2917 = vunpack.c.l.b16 %v2190
      %v2918 = vunpack.c.l.b16 %v2204
      %v2919 = vunpack.c.l.b16 %v2218
      %v2920 = vunpack.c.l.b16 %v2232
      %v2921 = vunpack.c.l.b16 %v2246
      %v2922 = vunpack.c.l.b16 %v2260
      %v2923 = vunpack.c.l.b16 %v2274
      %v2924 = vunpack.c.l.b16 %v2288
      %v2925 = vunpack.c.l.b16 %v2302
      %v2926 = vunpack.c.l.b16 %v2316
      %v2927 = vunpack.c.l.b16 %v2330
      %v2928 = vunpack.c.l.b16 %v2344
      %v2929 = vunpack.c.l.b16 %v2358
      %v2930 = vunpack.c.l.b16 %v2372
      %v2931 = vunpack.c.l.b16 %v2386
      %v2932 = vunpack.c.l.b16 %v2400
      %v2933 = vunpack.c.l.b16 %v2414
      %v2934 = vunpack.c.l.b16 %v2428
      %v2935 = vunpack.c.l.b16 %v2442
      %v2936 = vunpack.c.l.b16 %v2456
      %v2937 = vunpack.c.l.b16 %v2470
      %v2938 = vunpack.c.l.b16 %v2484
      %v2939 = vunpack.c.l.b16 %v2498
      %v2940 = vunpack.c.l.b16 %v2512
      %v2941 = vunpack.c.l.b16 %v2526
      %v2942 = vunpack.c.l.b16 %v2540
      %v2943 = vunpack.c.l.b16 %v2554
      %v2944 = vunpack.c.l.b16 %v2568
      %v2945 = vunpack.c.l.b16 %v2582
      %v2946 = vunpack.c.l.b16 %v2596
      %v2947 = vunpack.c.l.b16 %v2610
      %v2948 = vunpack.c.l.b16 %v2624
      %v2949 = vunpack.c.l.b16 %v2638
      %v2950 = vunpack.c.l.b16 %v2652
      %v2951 = vunpack.c.l.b16 %v2666
      %v2952 = vunpack.c.l.b16 %v2680
      %v2953 = vunpack.c.l.b16 %v2694
      %v2954 = vunpack.c.l.b16 %v2708
      %v2955 = vunpack.c.l.b16 %v2722
      %v2956 = vunpack.c.l.b16 %v2736
      %v2957 = vunpack.c.l.b16 %v2750
      %v2958 = vunpack.c.l.b16 %v2764
      %v2959 = vunpack.c.l.b16 %v2778
      %v2960 = vunpack.c.l.b16 %v2792
      %v2961 = vunpack.c.l.b16 %v2806
      %v2962 = vunpack.c.l.b16 %v2820
      %v2963 = vunpack.c.l.b16 %v2834
      %v2964 = vunpack.c.l.b16 %v2848
      %v2965 = vunpack.c.l.b16 %v2862
      %v2966 = vunpack.c.l.b16 %v2876
      %v2967 = vunpack.c.l.b16 %v2890
      %v2968 = vunpack.c.l.b16 %v2904
      %v2969 = vrot.slane %v2905, 1
      %v2970 = vsel %vm1478, %v2906, %v2969
      %v2971 = vrot.slane %v2907, 7
      %v2972 = vsel %vm1481, %v2971, %v2970
      %v2973 = vrot.slane %v2908, 6
      %v2974 = vsel %vm1484, %v2973, %v2972
      %v2975 = vrot.slane %v2909, 5
      %v2976 = vsel %vm1487, %v2975, %v2974
      %v2977 = vrot.slane %v2910, 4
      %v2978 = vsel %vm1490, %v2977, %v2976
      %v2979 = vrot.slane %v2911, 3
      %v2980 = vsel %vm1493, %v2979, %v2978
      %v2981 = vrot.slane %v2912, 2
      %v2982 = vsel %vm1496, %v2981, %v2980
      %v2983 = vrot.slane %v2913, 1
      %v2984 = vsel %vm1478, %v2914, %v2983
      %v2985 = vrot.slane %v2915, 7
      %v2986 = vsel %vm1481, %v2985, %v2984
      %v2987 = vrot.slane %v2916, 6
      %v2988 = vsel %vm1484, %v2987, %v2986
      %v2989 = vrot.slane %v2917, 5
      %v2990 = vsel %vm1487, %v2989, %v2988
      %v2991 = vrot.slane %v2918, 4
      %v2992 = vsel %vm1490, %v2991, %v2990
      %v2993 = vrot.slane %v2919, 3
      %v2994 = vsel %vm1493, %v2993, %v2992
      %v2995 = vrot.slane %v2920, 2
      %v2996 = vsel %vm1496, %v2995, %v2994
      %v2997 = vrot.slane %v2921, 1
      %v2998 = vsel %vm1478, %v2922, %v2997
      %v2999 = vrot.slane %v2923, 7
      %v3000 = vsel %vm1481, %v2999, %v2998
      %v3001 = vrot.slane %v2924, 6
      %v3002 = vsel %vm1484, %v3001, %v3000
      %v3003 = vrot.slane %v2925, 5
      %v3004 = vsel %vm1487, %v3003, %v3002
      %v3005 = vrot.slane %v2926, 4
      %v3006 = vsel %vm1490, %v3005, %v3004
      %v3007 = vrot.slane %v2927, 3
      %v3008 = vsel %vm1493, %v3007, %v3006
      %v3009 = vrot.slane %v2928, 2
      %v3010 = vsel %vm1496, %v3009, %v3008
      %v3011 = vrot.slane %v2929, 1
      %v3012 = vsel %vm1478, %v2930, %v3011
      %v3013 = vrot.slane %v2931, 7
      %v3014 = vsel %vm1481, %v3013, %v3012
      %v3015 = vrot.slane %v2932, 6
      %v3016 = vsel %vm1484, %v3015, %v3014
      %v3017 = vrot.slane %v2933, 5
      %v3018 = vsel %vm1487, %v3017, %v3016
      %v3019 = vrot.slane %v2934, 4
      %v3020 = vsel %vm1490, %v3019, %v3018
      %v3021 = vrot.slane %v2935, 3
      %v3022 = vsel %vm1493, %v3021, %v3020
      %v3023 = vrot.slane %v2936, 2
      %v3024 = vsel %vm1496, %v3023, %v3022
      %v3025 = vrot.slane %v2937, 1
      %v3026 = vsel %vm1478, %v2938, %v3025
      %v3027 = vrot.slane %v2939, 7
      %v3028 = vsel %vm1481, %v3027, %v3026
      %v3029 = vrot.slane %v2940, 6
      %v3030 = vsel %vm1484, %v3029, %v3028
      %v3031 = vrot.slane %v2941, 5
      %v3032 = vsel %vm1487, %v3031, %v3030
      %v3033 = vrot.slane %v2942, 4
      %v3034 = vsel %vm1490, %v3033, %v3032
      %v3035 = vrot.slane %v2943, 3
      %v3036 = vsel %vm1493, %v3035, %v3034
      %v3037 = vrot.slane %v2944, 2
      %v3038 = vsel %vm1496, %v3037, %v3036
      %v3039 = vrot.slane %v2945, 1
      %v3040 = vsel %vm1478, %v2946, %v3039
      %v3041 = vrot.slane %v2947, 7
      %v3042 = vsel %vm1481, %v3041, %v3040
      %v3043 = vrot.slane %v2948, 6
      %v3044 = vsel %vm1484, %v3043, %v3042
      %v3045 = vrot.slane %v2949, 5
      %v3046 = vsel %vm1487, %v3045, %v3044
      %v3047 = vrot.slane %v2950, 4
      %v3048 = vsel %vm1490, %v3047, %v3046
      %v3049 = vrot.slane %v2951, 3
      %v3050 = vsel %vm1493, %v3049, %v3048
      %v3051 = vrot.slane %v2952, 2
      %v3052 = vsel %vm1496, %v3051, %v3050
      %v3053 = vrot.slane %v2953, 1
      %v3054 = vsel %vm1478, %v2954, %v3053
      %v3055 = vrot.slane %v2955, 7
      %v3056 = vsel %vm1481, %v3055, %v3054
      %v3057 = vrot.slane %v2956, 6
      %v3058 = vsel %vm1484, %v3057, %v3056
      %v3059 = vrot.slane %v2957, 5
      %v3060 = vsel %vm1487, %v3059, %v3058
      %v3061 = vrot.slane %v2958, 4
      %v3062 = vsel %vm1490, %v3061, %v3060
      %v3063 = vrot.slane %v2959, 3
      %v3064 = vsel %vm1493, %v3063, %v3062
      %v3065 = vrot.slane %v2960, 2
      %v3066 = vsel %vm1496, %v3065, %v3064
      %v3067 = vrot.slane %v2961, 1
      %v3068 = vsel %vm1478, %v2962, %v3067
      %v3069 = vrot.slane %v2963, 7
      %v3070 = vsel %vm1481, %v3069, %v3068
      %v3071 = vrot.slane %v2964, 6
      %v3072 = vsel %vm1484, %v3071, %v3070
      %v3073 = vrot.slane %v2965, 5
      %v3074 = vsel %vm1487, %v3073, %v3072
      %v3075 = vrot.slane %v2966, 4
      %v3076 = vsel %vm1490, %v3075, %v3074
      %v3077 = vrot.slane %v2967, 3
      %v3078 = vsel %vm1493, %v3077, %v3076
      %v3079 = vrot.slane %v2968, 2
      %v3080 = vsel %vm1496, %v3079, %v3078
      %v3081 = vpack.c.b16 %v2996, %v2982
      %v3082 = vpack.c.b16 %v3024, %v3010
      %v3083 = vpack.c.b16 %v3052, %v3038
      %v3084 = vpack.c.b16 %v3080, %v3066
      %v3086 = vsel %vm1600, %v3081, 0
      %v3089 = vsel %vm1600, %v3082, 0
      %v3092 = vsel %vm1600, %v3083, 0
      %v3095 = vsel %vm1600, %v3084, 0
      %3097 = vmatprep.subr.bf16.mxu0 0
      %3098 = vmatpush1.bf16.msra.mxu0 0
      %3099 = vmatprep.subr.bf16.mxu0 0
      %3100 = vmatpush1.bf16.msra.mxu0 0
      %3101 = vmatprep.subr.bf16.mxu0 0
      %3102 = vmatpush1.bf16.msra.mxu0 0
      %3103 = vmatprep.subr.bf16.mxu0 0
      %3104 = vmatpush1.bf16.msra.mxu0 0
      %3105 = vmatprep.subr.bf16.mxu0 0
      %3106 = vmatpush1.bf16.msra.mxu0 0
      %3107 = vmatprep.subr.bf16.mxu0 0
      %3108 = vmatpush1.bf16.msra.mxu0 0
      %3109 = vmatprep.subr.bf16.mxu0 0
      %3110 = vmatpush1.bf16.msra.mxu0 0
      %3111 = vmatprep.subr.bf16.mxu0 0
      %3112 = vmatpush1.bf16.msra.mxu0 %v1615
      %3113 = vmatprep.subr.bf16.mxu0 0
      %3114 = vmatpush2.bf16.msra.mxu0 0
      %3115 = vmatprep.subr.bf16.mxu0 0
      %3116 = vmatpush2.bf16.msra.mxu0 0
      %3117 = vmatprep.subr.bf16.mxu0 0
      %3118 = vmatpush2.bf16.msra.mxu0 0
      %3119 = vmatprep.subr.bf16.mxu0 0
      %3120 = vmatpush2.bf16.msra.mxu0 0
      %3121 = vmatprep.subr.bf16.mxu0 0
      %3122 = vmatpush2.bf16.msra.mxu0 0
      %3123 = vmatprep.subr.bf16.mxu0 0
      %3124 = vmatpush2.bf16.msra.mxu0 0
      %3125 = vmatprep.subr.bf16.mxu0 0
      %3126 = vmatpush2.bf16.msra.mxu0 0
      %3127 = vmatprep.subr.bf16.mxu0 0
      %3128 = vmatpush2.bf16.msra.mxu0 0
      %3129 = vmatprep.mubr.bf16.mxu0 0
      %3130 = vmatmul.mubr.bf16.gmra.mxu0 %v3086
      %v3131 = vpop.f32.mrf.mxu0
      %v3132 = vadd.f32 0.0, %v3131
      %v3133 = vpop.f32.mrf.mxu0
      %v3134 = vpop.f32.mrf.mxu0
      %v3135 = vadd.f32 0.0, %v3134
      %v3136 = vpop.f32.mrf.mxu0
      %3137 = vmatprep.mubr.bf16.mxu0 0
      %3138 = vmatmul.mubr.bf16.gmra.mxu0 %v3089
      %v3139 = vpop.f32.mrf.mxu0
      %v3140 = vadd.f32 0.0, %v3139
      %v3141 = vpop.f32.mrf.mxu0
      %v3142 = vpop.f32.mrf.mxu0
      %v3143 = vadd.f32 0.0, %v3142
      %v3144 = vpop.f32.mrf.mxu0
      %3145 = vmatprep.mubr.bf16.mxu0 0
      %3146 = vmatmul.mubr.bf16.gmra.mxu0 %v3092
      %v3147 = vpop.f32.mrf.mxu0
      %v3148 = vadd.f32 0.0, %v3147
      %v3149 = vpop.f32.mrf.mxu0
      %v3150 = vpop.f32.mrf.mxu0
      %v3151 = vadd.f32 0.0, %v3150
      %v3152 = vpop.f32.mrf.mxu0
      %3153 = vmatprep.mubr.bf16.mxu0 0
      %3154 = vmatmul.mubr.bf16.gmra.mxu0 %v3095
      %v3155 = vpop.f32.mrf.mxu0
      %v3156 = vadd.f32 0.0, %v3155
      %v3157 = vpop.f32.mrf.mxu0
      %v3158 = vpop.f32.mrf.mxu0
      %v3159 = vadd.f32 0.0, %v3158
      %v3160 = vpop.f32.mrf.mxu0
      %3161 = vdwg.mxu0
      %3166 = vrot.lane.b32.xlu0 %v1877, 124
      %v3167 = vpop.permute.xlu0 %3166
      %3168 = vrot.lane.b32.xlu0 %v1878, 124
      %v3169 = vpop.permute.xlu0 %3168
      %3170 = vrot.lane.b32.xlu0 %v1879, 124
      %v3171 = vpop.permute.xlu0 %3170
      %3172 = vrot.lane.b32.xlu0 %v1880, 124
      %v3173 = vpop.permute.xlu0 %3172
      %v3175 = vsel %vm1600, %v3167, 0
      %v3178 = vsel %vm1600, %v3169, 0
      %v3181 = vsel %vm1600, %v3171, 0
      %v3184 = vsel %vm1600, %v3173, 0
      %3186 = vmatprep.subr.bf16.mxu0 0
      %3187 = vmatpush1.bf16.msra.mxu0 0
      %3188 = vmatprep.subr.bf16.mxu0 0
      %3189 = vmatpush1.bf16.msra.mxu0 0
      %3190 = vmatprep.subr.bf16.mxu0 0
      %3191 = vmatpush1.bf16.msra.mxu0 0
      %3192 = vmatprep.subr.bf16.mxu0 0
      %3193 = vmatpush1.bf16.msra.mxu0 0
      %3194 = vmatprep.subr.bf16.mxu0 0
      %3195 = vmatpush1.bf16.msra.mxu0 0
      %3196 = vmatprep.subr.bf16.mxu0 0
      %3197 = vmatpush1.bf16.msra.mxu0 0
      %3198 = vmatprep.subr.bf16.mxu0 0
      %3199 = vmatpush1.bf16.msra.mxu0 0
      %3200 = vmatprep.subr.bf16.mxu0 0
      %3201 = vmatpush1.bf16.msra.mxu0 %v1695
      %3202 = vmatprep.subr.bf16.mxu0 0
      %3203 = vmatpush2.bf16.msra.mxu0 0
      %3204 = vmatprep.subr.bf16.mxu0 0
      %3205 = vmatpush2.bf16.msra.mxu0 0
      %3206 = vmatprep.subr.bf16.mxu0 0
      %3207 = vmatpush2.bf16.msra.mxu0 0
      %3208 = vmatprep.subr.bf16.mxu0 0
      %3209 = vmatpush2.bf16.msra.mxu0 0
      %3210 = vmatprep.subr.bf16.mxu0 0
      %3211 = vmatpush2.bf16.msra.mxu0 0
      %3212 = vmatprep.subr.bf16.mxu0 0
      %3213 = vmatpush2.bf16.msra.mxu0 0
      %3214 = vmatprep.subr.bf16.mxu0 0
      %3215 = vmatpush2.bf16.msra.mxu0 0
      %3216 = vmatprep.subr.bf16.mxu0 0
      %3217 = vmatpush2.bf16.msra.mxu0 0
      %3218 = vmatprep.mubr.bf16.mxu0 0
      %3219 = vmatmul.mubr.bf16.gmra.mxu0 %v3175
      %v3220 = vpop.f32.mrf.mxu0
      %v3221 = vadd.f32 %v3132, %v3220
      %v3222 = vpop.f32.mrf.mxu0
      %v3223 = vpop.f32.mrf.mxu0
      %v3224 = vadd.f32 %v3135, %v3223
      %v3225 = vpop.f32.mrf.mxu0
      %3226 = vmatprep.mubr.bf16.mxu0 0
      %3227 = vmatmul.mubr.bf16.gmra.mxu0 %v3178
      %v3228 = vpop.f32.mrf.mxu0
      %v3229 = vadd.f32 %v3140, %v3228
      %v3230 = vpop.f32.mrf.mxu0
      %v3231 = vpop.f32.mrf.mxu0
      %v3232 = vadd.f32 %v3143, %v3231
      %v3233 = vpop.f32.mrf.mxu0
      %3234 = vmatprep.mubr.bf16.mxu0 0
      %3235 = vmatmul.mubr.bf16.gmra.mxu0 %v3181
      %v3236 = vpop.f32.mrf.mxu0
      %v3237 = vadd.f32 %v3148, %v3236
      %v3238 = vpop.f32.mrf.mxu0
      %v3239 = vpop.f32.mrf.mxu0
      %v3240 = vadd.f32 %v3151, %v3239
      %v3241 = vpop.f32.mrf.mxu0
      %3242 = vmatprep.mubr.bf16.mxu0 0
      %3243 = vmatmul.mubr.bf16.gmra.mxu0 %v3184
      %v3244 = vpop.f32.mrf.mxu0
      %v3245 = vadd.f32 %v3156, %v3244
      %v3246 = vpop.f32.mrf.mxu0
      %v3247 = vpop.f32.mrf.mxu0
      %v3248 = vadd.f32 %v3159, %v3247
      %v3249 = vpop.f32.mrf.mxu0
      %3250 = vdwg.mxu0
      %v3251 = vsel %vm1762, %v3221, 0.0
      %v3252 = vsel %vm1762, %v3224, 0.0
      %v3253 = vadd.f32 %v3251, %v3252
      %v3254 = vsel %vm1762, %v3229, 0.0
      %v3255 = vadd.f32 %v3253, %v3254
      %v3256 = vsel %vm1762, %v3232, 0.0
      %v3257 = vadd.f32 %v3255, %v3256
      %v3258 = vsel %vm1762, %v3237, 0.0
      %v3259 = vadd.f32 %v3257, %v3258
      %v3260 = vsel %vm1762, %v3240, 0.0
      %v3261 = vadd.f32 %v3259, %v3260
      %v3262 = vsel %vm1762, %v3245, 0.0
      %v3263 = vadd.f32 %v3261, %v3262
      %v3264 = vsel %vm1762, %v3248, 0.0
      %v3265 = vadd.f32 %v3263, %v3264
      %v3266 = vrot.slane %v3265, 4
      %v3267 = vadd.f32 %v3265, %v3266
      %v3268 = vrot.slane %v3267, 2
      %v3269 = vadd.f32 %v3267, %v3268
      %v3270 = vrot.slane %v3269, 1
      %v3271 = vadd.f32 %v3269, %v3270
      %v3272 = vadd.f32 %v1784, %v3271
      %v3273 = vmul.f32 %v3221, %v3221
      %v3274 = vmul.f32 %v3224, %v3224
      %v3275 = vmul.f32 %v3229, %v3229
      %v3276 = vmul.f32 %v3232, %v3232
      %v3277 = vmul.f32 %v3237, %v3237
      %v3278 = vmul.f32 %v3240, %v3240
      %v3279 = vmul.f32 %v3245, %v3245
      %v3280 = vmul.f32 %v3248, %v3248
      %v3281 = vsel %vm1762, %v3273, 0.0
      %v3282 = vsel %vm1762, %v3274, 0.0
      %v3283 = vadd.f32 %v3281, %v3282
      %v3284 = vsel %vm1762, %v3275, 0.0
      %v3285 = vadd.f32 %v3283, %v3284
      %v3286 = vsel %vm1762, %v3276, 0.0
      %v3287 = vadd.f32 %v3285, %v3286
      %v3288 = vsel %vm1762, %v3277, 0.0
      %v3289 = vadd.f32 %v3287, %v3288
      %v3290 = vsel %vm1762, %v3278, 0.0
      %v3291 = vadd.f32 %v3289, %v3290
      %v3292 = vsel %vm1762, %v3279, 0.0
      %v3293 = vadd.f32 %v3291, %v3292
      %v3294 = vsel %vm1762, %v3280, 0.0
      %v3295 = vadd.f32 %v3293, %v3294
      %v3296 = vrot.slane %v3295, 4
      %v3297 = vadd.f32 %v3295, %v3296
      %v3298 = vrot.slane %v3297, 2
      %v3299 = vadd.f32 %v3297, %v3298
      %v3300 = vrot.slane %v3299, 1
      %v3301 = vadd.f32 %v3299, %v3300
      %v3302 = vadd.f32 %v1814, %v3301
      %3311 = vrot.lane.b32.xlu0 %v3221, 8
      %v3312 = vpop.permute.xlu0 %3311
      %3313 = vrot.lane.b32.xlu0 %v3224, 8
      %v3314 = vpop.permute.xlu0 %3313
      %3315 = vrot.lane.b32.xlu0 %v3229, 8
      %v3316 = vpop.permute.xlu0 %3315
      %3317 = vrot.lane.b32.xlu0 %v3232, 8
      %v3318 = vpop.permute.xlu0 %3317
      %3319 = vrot.lane.b32.xlu0 %v3237, 8
      %v3320 = vpop.permute.xlu0 %3319
      %3321 = vrot.lane.b32.xlu0 %v3240, 8
      %v3322 = vpop.permute.xlu0 %3321
      %3323 = vrot.lane.b32.xlu0 %v3245, 8
      %v3324 = vpop.permute.xlu0 %3323
      %3325 = vrot.lane.b32.xlu0 %v3248, 8
      %v3326 = vpop.permute.xlu0 %3325
      %vm3335 = vcmask 130112
      %3336 = vst.msk [vmem:[%s314] sm:$0xff] %vm3335, %v3312
      %3337 = vst.msk [vmem:[%s314 + $0x8] sm:$0xff] %vm3335, %v3314
      %3338 = vst.msk [vmem:[%s314 + $0x20] sm:$0xff] %vm3335, %v3316
      %3339 = vst.msk [vmem:[%s314 + $0x28] sm:$0xff] %vm3335, %v3318
      %3340 = vst.msk [vmem:[%s314 + $0x40] sm:$0xff] %vm3335, %v3320
      %3341 = vst.msk [vmem:[%s314 + $0x48] sm:$0xff] %vm3335, %v3322
      %3342 = vst.msk [vmem:[%s314 + $0x60] sm:$0xff] %vm3335, %v3324
      %3343 = vst.msk [vmem:[%s314 + $0x68] sm:$0xff] %vm3335, %v3326
      %v3344 = vld [vmem:[%s301] sm:$0xff]
      %v3345 = vld [vmem:[%s301 + $0x8] sm:$0xff]
      %v3346 = vld [vmem:[%s301 + $0x10] sm:$0xff]
      %v3347 = vld [vmem:[%s301 + $0x18] sm:$0xff]
      %v3348 = vld [vmem:[%s301 + $0x20] sm:$0xff]
      %v3349 = vld [vmem:[%s301 + $0x28] sm:$0xff]
      %v3350 = vld [vmem:[%s301 + $0x30] sm:$0xff]
      %v3351 = vld [vmem:[%s301 + $0x38] sm:$0xff]
      %3352 = vrot.lane.b32.xlu0 %v337, 8
      %v3353 = vpop.permute.xlu0 %3352
      %v3355 = vmul.f32 %v3344, %v3353
      %v3356 = vmul.f32 %v3345, %v3353
      %v3357 = vmul.f32 %v3346, %v3353
      %v3358 = vmul.f32 %v3347, %v3353
      %v3359 = vmul.f32 %v3348, %v3353
      %v3360 = vmul.f32 %v3349, %v3353
      %v3361 = vmul.f32 %v3350, %v3353
      %v3362 = vmul.f32 %v3351, %v3353
      %3363 = vrot.lane.b32.xlu0 %v351, 8
      %v3364 = vpop.permute.xlu0 %3363
      %v3366 = vadd.f32 %v3355, %v3364
      %v3367 = vadd.f32 %v3356, %v3364
      %v3368 = vadd.f32 %v3357, %v3364
      %v3369 = vadd.f32 %v3358, %v3364
      %v3370 = vadd.f32 %v3359, %v3364
      %v3371 = vadd.f32 %v3360, %v3364
      %v3372 = vadd.f32 %v3361, %v3364
      %v3373 = vadd.f32 %v3362, %v3364
      %vm3374 = vcmp.ge.f32.partialorder %v3366, 0.0
      %vm3375 = vcmp.ge.f32.partialorder %v3367, 0.0
      %vm3376 = vcmp.ge.f32.partialorder %v3368, 0.0
      %vm3377 = vcmp.ge.f32.partialorder %v3369, 0.0
      %vm3378 = vcmp.ge.f32.partialorder %v3370, 0.0
      %vm3379 = vcmp.ge.f32.partialorder %v3371, 0.0
      %vm3380 = vcmp.ge.f32.partialorder %v3372, 0.0
      %vm3381 = vcmp.ge.f32.partialorder %v3373, 0.0
      %v3382 = vmul.f32 %v3366, 0.2
      %v3383 = vmul.f32 %v3367, 0.2
      %v3384 = vmul.f32 %v3368, 0.2
      %v3385 = vmul.f32 %v3369, 0.2
      %v3386 = vmul.f32 %v3370, 0.2
      %v3387 = vmul.f32 %v3371, 0.2
      %v3388 = vmul.f32 %v3372, 0.2
      %v3389 = vmul.f32 %v3373, 0.2
      %v3390 = vsel %vm3374, %v3366, %v3382
      %v3391 = vsel %vm3375, %v3367, %v3383
      %v3392 = vsel %vm3376, %v3368, %v3384
      %v3393 = vsel %vm3377, %v3369, %v3385
      %v3394 = vsel %vm3378, %v3370, %v3386
      %v3395 = vsel %vm3379, %v3371, %v3387
      %v3396 = vsel %vm3380, %v3372, %v3388
      %v3397 = vsel %vm3381, %v3373, %v3389
      %v3398 = vpack.c.bf16 %v3391, %v3390
      %v3399 = vpack.c.bf16 %v3393, %v3392
      %v3400 = vpack.c.bf16 %v3395, %v3394
      %v3401 = vpack.c.bf16 %v3397, %v3396
      %s3402 = scalar_lea.vmem %s307, 16
      %v3403 = vld [vmem:[%s3402] sm:$0x1]
      %v3404 = vld [vmem:[%s3402 + $0x1] sm:$0x1]
      %v3405 = vld [vmem:[%s3402 + $0x2] sm:$0x1]
      %v3406 = vld [vmem:[%s3402 + $0x3] sm:$0x1]
      %v3407 = vld [vmem:[%s3402 + $0x4] sm:$0x1]
      %v3408 = vld [vmem:[%s3402 + $0x5] sm:$0x1]
      %v3409 = vld [vmem:[%s3402 + $0x6] sm:$0x1]
      %v3410 = vld [vmem:[%s3402 + $0x7] sm:$0x1]
      %v3411 = vld [vmem:[%s3402 + $0x8] sm:$0x1]
      %v3412 = vld [vmem:[%s3402 + $0x9] sm:$0x1]
      %v3413 = vld [vmem:[%s3402 + $0xa] sm:$0x1]
      %v3414 = vld [vmem:[%s3402 + $0xb] sm:$0x1]
      %v3415 = vld [vmem:[%s3402 + $0xc] sm:$0x1]
      %v3416 = vld [vmem:[%s3402 + $0xd] sm:$0x1]
      %v3417 = vld [vmem:[%s3402 + $0xe] sm:$0x1]
      %v3418 = vld [vmem:[%s3402 + $0xf] sm:$0x1]
      %v3419 = vld [vmem:[%s3402 + $0x20] sm:$0x1]
      %v3420 = vld [vmem:[%s3402 + $0x21] sm:$0x1]
      %v3421 = vld [vmem:[%s3402 + $0x22] sm:$0x1]
      %v3422 = vld [vmem:[%s3402 + $0x23] sm:$0x1]
      %v3423 = vld [vmem:[%s3402 + $0x24] sm:$0x1]
      %v3424 = vld [vmem:[%s3402 + $0x25] sm:$0x1]
      %v3425 = vld [vmem:[%s3402 + $0x26] sm:$0x1]
      %v3426 = vld [vmem:[%s3402 + $0x27] sm:$0x1]
      %v3427 = vld [vmem:[%s3402 + $0x28] sm:$0x1]
      %v3428 = vld [vmem:[%s3402 + $0x29] sm:$0x1]
      %v3429 = vld [vmem:[%s3402 + $0x2a] sm:$0x1]
      %v3430 = vld [vmem:[%s3402 + $0x2b] sm:$0x1]
      %v3431 = vld [vmem:[%s3402 + $0x2c] sm:$0x1]
      %v3432 = vld [vmem:[%s3402 + $0x2d] sm:$0x1]
      %v3433 = vld [vmem:[%s3402 + $0x2e] sm:$0x1]
      %v3434 = vld [vmem:[%s3402 + $0x2f] sm:$0x1]
      %v3435 = vld [vmem:[%s3402 + $0x40] sm:$0x1]
      %v3436 = vld [vmem:[%s3402 + $0x41] sm:$0x1]
      %v3437 = vld [vmem:[%s3402 + $0x42] sm:$0x1]
      %v3438 = vld [vmem:[%s3402 + $0x43] sm:$0x1]
      %v3439 = vld [vmem:[%s3402 + $0x44] sm:$0x1]
      %v3440 = vld [vmem:[%s3402 + $0x45] sm:$0x1]
      %v3441 = vld [vmem:[%s3402 + $0x46] sm:$0x1]
      %v3442 = vld [vmem:[%s3402 + $0x47] sm:$0x1]
      %v3443 = vld [vmem:[%s3402 + $0x48] sm:$0x1]
      %v3444 = vld [vmem:[%s3402 + $0x49] sm:$0x1]
      %v3445 = vld [vmem:[%s3402 + $0x4a] sm:$0x1]
      %v3446 = vld [vmem:[%s3402 + $0x4b] sm:$0x1]
      %v3447 = vld [vmem:[%s3402 + $0x4c] sm:$0x1]
      %v3448 = vld [vmem:[%s3402 + $0x4d] sm:$0x1]
      %v3449 = vld [vmem:[%s3402 + $0x4e] sm:$0x1]
      %v3450 = vld [vmem:[%s3402 + $0x4f] sm:$0x1]
      %v3451 = vld [vmem:[%s3402 + $0x60] sm:$0x1]
      %v3452 = vld [vmem:[%s3402 + $0x61] sm:$0x1]
      %v3453 = vld [vmem:[%s3402 + $0x62] sm:$0x1]
      %v3454 = vld [vmem:[%s3402 + $0x63] sm:$0x1]
      %v3455 = vld [vmem:[%s3402 + $0x64] sm:$0x1]
      %v3456 = vld [vmem:[%s3402 + $0x65] sm:$0x1]
      %v3457 = vld [vmem:[%s3402 + $0x66] sm:$0x1]
      %v3458 = vld [vmem:[%s3402 + $0x67] sm:$0x1]
      %v3459 = vld [vmem:[%s3402 + $0x68] sm:$0x1]
      %v3460 = vld [vmem:[%s3402 + $0x69] sm:$0x1]
      %v3461 = vld [vmem:[%s3402 + $0x6a] sm:$0x1]
      %v3462 = vld [vmem:[%s3402 + $0x6b] sm:$0x1]
      %v3463 = vld [vmem:[%s3402 + $0x6c] sm:$0x1]
      %v3464 = vld [vmem:[%s3402 + $0x6d] sm:$0x1]
      %v3465 = vld [vmem:[%s3402 + $0x6e] sm:$0x1]
      %v3466 = vld [vmem:[%s3402 + $0x6f] sm:$0x1]
      %v3532 = vunpack.c.l.s4 1966171168
      %v3533 = vunpack.c.0.s8 %v3532
      %v3534 = vlaneseq
      %v3535 = vshrl.u32 %v3534, 7
      %v3536 = vsub.s32 %v3533, %v3535
      %v3537 = vrot.slane %v3403, %v3536
      %v3539 = vunpack.c.l.s4 1966171168
      %v3540 = vunpack.c.0.s8 %v3539
      %v3541 = vlaneseq
      %v3542 = vshrl.u32 %v3541, 7
      %v3543 = vsub.s32 %v3540, %v3542
      %v3544 = vrot.slane %v3537, %v3543
      %v3546 = vunpack.c.l.s4 1966171168
      %v3547 = vunpack.c.0.s8 %v3546
      %v3548 = vlaneseq
      %v3549 = vshrl.u32 %v3548, 7
      %v3550 = vsub.s32 %v3547, %v3549
      %v3551 = vrot.slane %v3404, %v3550
      %v3553 = vunpack.c.l.s4 1966171168
      %v3554 = vunpack.c.0.s8 %v3553
      %v3555 = vlaneseq
      %v3556 = vshrl.u32 %v3555, 7
      %v3557 = vsub.s32 %v3554, %v3556
      %v3558 = vrot.slane %v3551, %v3557
      %v3560 = vunpack.c.l.s4 1966171168
      %v3561 = vunpack.c.0.s8 %v3560
      %v3562 = vlaneseq
      %v3563 = vshrl.u32 %v3562, 7
      %v3564 = vsub.s32 %v3561, %v3563
      %v3565 = vrot.slane %v3405, %v3564
      %v3567 = vunpack.c.l.s4 1966171168
      %v3568 = vunpack.c.0.s8 %v3567
      %v3569 = vlaneseq
      %v3570 = vshrl.u32 %v3569, 7
      %v3571 = vsub.s32 %v3568, %v3570
      %v3572 = vrot.slane %v3565, %v3571
      %v3574 = vunpack.c.l.s4 1966171168
      %v3575 = vunpack.c.0.s8 %v3574
      %v3576 = vlaneseq
      %v3577 = vshrl.u32 %v3576, 7
      %v3578 = vsub.s32 %v3575, %v3577
      %v3579 = vrot.slane %v3406, %v3578
      %v3581 = vunpack.c.l.s4 1966171168
      %v3582 = vunpack.c.0.s8 %v3581
      %v3583 = vlaneseq
      %v3584 = vshrl.u32 %v3583, 7
      %v3585 = vsub.s32 %v3582, %v3584
      %v3586 = vrot.slane %v3579, %v3585
      %v3588 = vunpack.c.l.s4 1966171168
      %v3589 = vunpack.c.0.s8 %v3588
      %v3590 = vlaneseq
      %v3591 = vshrl.u32 %v3590, 7
      %v3592 = vsub.s32 %v3589, %v3591
      %v3593 = vrot.slane %v3407, %v3592
      %v3595 = vunpack.c.l.s4 1966171168
      %v3596 = vunpack.c.0.s8 %v3595
      %v3597 = vlaneseq
      %v3598 = vshrl.u32 %v3597, 7
      %v3599 = vsub.s32 %v3596, %v3598
      %v3600 = vrot.slane %v3593, %v3599
      %v3602 = vunpack.c.l.s4 1966171168
      %v3603 = vunpack.c.0.s8 %v3602
      %v3604 = vlaneseq
      %v3605 = vshrl.u32 %v3604, 7
      %v3606 = vsub.s32 %v3603, %v3605
      %v3607 = vrot.slane %v3408, %v3606
      %v3609 = vunpack.c.l.s4 1966171168
      %v3610 = vunpack.c.0.s8 %v3609
      %v3611 = vlaneseq
      %v3612 = vshrl.u32 %v3611, 7
      %v3613 = vsub.s32 %v3610, %v3612
      %v3614 = vrot.slane %v3607, %v3613
      %v3616 = vunpack.c.l.s4 1966171168
      %v3617 = vunpack.c.0.s8 %v3616
      %v3618 = vlaneseq
      %v3619 = vshrl.u32 %v3618, 7
      %v3620 = vsub.s32 %v3617, %v3619
      %v3621 = vrot.slane %v3409, %v3620
      %v3623 = vunpack.c.l.s4 1966171168
      %v3624 = vunpack.c.0.s8 %v3623
      %v3625 = vlaneseq
      %v3626 = vshrl.u32 %v3625, 7
      %v3627 = vsub.s32 %v3624, %v3626
      %v3628 = vrot.slane %v3621, %v3627
      %v3630 = vunpack.c.l.s4 1966171168
      %v3631 = vunpack.c.0.s8 %v3630
      %v3632 = vlaneseq
      %v3633 = vshrl.u32 %v3632, 7
      %v3634 = vsub.s32 %v3631, %v3633
      %v3635 = vrot.slane %v3410, %v3634
      %v3637 = vunpack.c.l.s4 1966171168
      %v3638 = vunpack.c.0.s8 %v3637
      %v3639 = vlaneseq
      %v3640 = vshrl.u32 %v3639, 7
      %v3641 = vsub.s32 %v3638, %v3640
      %v3642 = vrot.slane %v3635, %v3641
      %v3644 = vunpack.c.l.s4 1966171168
      %v3645 = vunpack.c.0.s8 %v3644
      %v3646 = vlaneseq
      %v3647 = vshrl.u32 %v3646, 7
      %v3648 = vsub.s32 %v3645, %v3647
      %v3649 = vrot.slane %v3411, %v3648
      %v3651 = vunpack.c.l.s4 1966171168
      %v3652 = vunpack.c.0.s8 %v3651
      %v3653 = vlaneseq
      %v3654 = vshrl.u32 %v3653, 7
      %v3655 = vsub.s32 %v3652, %v3654
      %v3656 = vrot.slane %v3649, %v3655
      %v3658 = vunpack.c.l.s4 1966171168
      %v3659 = vunpack.c.0.s8 %v3658
      %v3660 = vlaneseq
      %v3661 = vshrl.u32 %v3660, 7
      %v3662 = vsub.s32 %v3659, %v3661
      %v3663 = vrot.slane %v3412, %v3662
      %v3665 = vunpack.c.l.s4 1966171168
      %v3666 = vunpack.c.0.s8 %v3665
      %v3667 = vlaneseq
      %v3668 = vshrl.u32 %v3667, 7
      %v3669 = vsub.s32 %v3666, %v3668
      %v3670 = vrot.slane %v3663, %v3669
      %v3672 = vunpack.c.l.s4 1966171168
      %v3673 = vunpack.c.0.s8 %v3672
      %v3674 = vlaneseq
      %v3675 = vshrl.u32 %v3674, 7
      %v3676 = vsub.s32 %v3673, %v3675
      %v3677 = vrot.slane %v3413, %v3676
      %v3679 = vunpack.c.l.s4 1966171168
      %v3680 = vunpack.c.0.s8 %v3679
      %v3681 = vlaneseq
      %v3682 = vshrl.u32 %v3681, 7
      %v3683 = vsub.s32 %v3680, %v3682
      %v3684 = vrot.slane %v3677, %v3683
      %v3686 = vunpack.c.l.s4 1966171168
      %v3687 = vunpack.c.0.s8 %v3686
      %v3688 = vlaneseq
      %v3689 = vshrl.u32 %v3688, 7
      %v3690 = vsub.s32 %v3687, %v3689
      %v3691 = vrot.slane %v3414, %v3690
      %v3693 = vunpack.c.l.s4 1966171168
      %v3694 = vunpack.c.0.s8 %v3693
      %v3695 = vlaneseq
      %v3696 = vshrl.u32 %v3695, 7
      %v3697 = vsub.s32 %v3694, %v3696
      %v3698 = vrot.slane %v3691, %v3697
      %v3700 = vunpack.c.l.s4 1966171168
      %v3701 = vunpack.c.0.s8 %v3700
      %v3702 = vlaneseq
      %v3703 = vshrl.u32 %v3702, 7
      %v3704 = vsub.s32 %v3701, %v3703
      %v3705 = vrot.slane %v3415, %v3704
      %v3707 = vunpack.c.l.s4 1966171168
      %v3708 = vunpack.c.0.s8 %v3707
      %v3709 = vlaneseq
      %v3710 = vshrl.u32 %v3709, 7
      %v3711 = vsub.s32 %v3708, %v3710
      %v3712 = vrot.slane %v3705, %v3711
      %v3714 = vunpack.c.l.s4 1966171168
      %v3715 = vunpack.c.0.s8 %v3714
      %v3716 = vlaneseq
      %v3717 = vshrl.u32 %v3716, 7
      %v3718 = vsub.s32 %v3715, %v3717
      %v3719 = vrot.slane %v3416, %v3718
      %v3721 = vunpack.c.l.s4 1966171168
      %v3722 = vunpack.c.0.s8 %v3721
      %v3723 = vlaneseq
      %v3724 = vshrl.u32 %v3723, 7
      %v3725 = vsub.s32 %v3722, %v3724
      %v3726 = vrot.slane %v3719, %v3725
      %v3728 = vunpack.c.l.s4 1966171168
      %v3729 = vunpack.c.0.s8 %v3728
      %v3730 = vlaneseq
      %v3731 = vshrl.u32 %v3730, 7
      %v3732 = vsub.s32 %v3729, %v3731
      %v3733 = vrot.slane %v3417, %v3732
      %v3735 = vunpack.c.l.s4 1966171168
      %v3736 = vunpack.c.0.s8 %v3735
      %v3737 = vlaneseq
      %v3738 = vshrl.u32 %v3737, 7
      %v3739 = vsub.s32 %v3736, %v3738
      %v3740 = vrot.slane %v3733, %v3739
      %v3742 = vunpack.c.l.s4 1966171168
      %v3743 = vunpack.c.0.s8 %v3742
      %v3744 = vlaneseq
      %v3745 = vshrl.u32 %v3744, 7
      %v3746 = vsub.s32 %v3743, %v3745
      %v3747 = vrot.slane %v3418, %v3746
      %v3749 = vunpack.c.l.s4 1966171168
      %v3750 = vunpack.c.0.s8 %v3749
      %v3751 = vlaneseq
      %v3752 = vshrl.u32 %v3751, 7
      %v3753 = vsub.s32 %v3750, %v3752
      %v3754 = vrot.slane %v3747, %v3753
      %v3756 = vunpack.c.l.s4 1966171168
      %v3757 = vunpack.c.0.s8 %v3756
      %v3758 = vlaneseq
      %v3759 = vshrl.u32 %v3758, 7
      %v3760 = vsub.s32 %v3757, %v3759
      %v3761 = vrot.slane %v3419, %v3760
      %v3763 = vunpack.c.l.s4 1966171168
      %v3764 = vunpack.c.0.s8 %v3763
      %v3765 = vlaneseq
      %v3766 = vshrl.u32 %v3765, 7
      %v3767 = vsub.s32 %v3764, %v3766
      %v3768 = vrot.slane %v3761, %v3767
      %v3770 = vunpack.c.l.s4 1966171168
      %v3771 = vunpack.c.0.s8 %v3770
      %v3772 = vlaneseq
      %v3773 = vshrl.u32 %v3772, 7
      %v3774 = vsub.s32 %v3771, %v3773
      %v3775 = vrot.slane %v3420, %v3774
      %v3777 = vunpack.c.l.s4 1966171168
      %v3778 = vunpack.c.0.s8 %v3777
      %v3779 = vlaneseq
      %v3780 = vshrl.u32 %v3779, 7
      %v3781 = vsub.s32 %v3778, %v3780
      %v3782 = vrot.slane %v3775, %v3781
      %v3784 = vunpack.c.l.s4 1966171168
      %v3785 = vunpack.c.0.s8 %v3784
      %v3786 = vlaneseq
      %v3787 = vshrl.u32 %v3786, 7
      %v3788 = vsub.s32 %v3785, %v3787
      %v3789 = vrot.slane %v3421, %v3788
      %v3791 = vunpack.c.l.s4 1966171168
      %v3792 = vunpack.c.0.s8 %v3791
      %v3793 = vlaneseq
      %v3794 = vshrl.u32 %v3793, 7
      %v3795 = vsub.s32 %v3792, %v3794
      %v3796 = vrot.slane %v3789, %v3795
      %v3798 = vunpack.c.l.s4 1966171168
      %v3799 = vunpack.c.0.s8 %v3798
      %v3800 = vlaneseq
      %v3801 = vshrl.u32 %v3800, 7
      %v3802 = vsub.s32 %v3799, %v3801
      %v3803 = vrot.slane %v3422, %v3802
      %v3805 = vunpack.c.l.s4 1966171168
      %v3806 = vunpack.c.0.s8 %v3805
      %v3807 = vlaneseq
      %v3808 = vshrl.u32 %v3807, 7
      %v3809 = vsub.s32 %v3806, %v3808
      %v3810 = vrot.slane %v3803, %v3809
      %v3812 = vunpack.c.l.s4 1966171168
      %v3813 = vunpack.c.0.s8 %v3812
      %v3814 = vlaneseq
      %v3815 = vshrl.u32 %v3814, 7
      %v3816 = vsub.s32 %v3813, %v3815
      %v3817 = vrot.slane %v3423, %v3816
      %v3819 = vunpack.c.l.s4 1966171168
      %v3820 = vunpack.c.0.s8 %v3819
      %v3821 = vlaneseq
      %v3822 = vshrl.u32 %v3821, 7
      %v3823 = vsub.s32 %v3820, %v3822
      %v3824 = vrot.slane %v3817, %v3823
      %v3826 = vunpack.c.l.s4 1966171168
      %v3827 = vunpack.c.0.s8 %v3826
      %v3828 = vlaneseq
      %v3829 = vshrl.u32 %v3828, 7
      %v3830 = vsub.s32 %v3827, %v3829
      %v3831 = vrot.slane %v3424, %v3830
      %v3833 = vunpack.c.l.s4 1966171168
      %v3834 = vunpack.c.0.s8 %v3833
      %v3835 = vlaneseq
      %v3836 = vshrl.u32 %v3835, 7
      %v3837 = vsub.s32 %v3834, %v3836
      %v3838 = vrot.slane %v3831, %v3837
      %v3840 = vunpack.c.l.s4 1966171168
      %v3841 = vunpack.c.0.s8 %v3840
      %v3842 = vlaneseq
      %v3843 = vshrl.u32 %v3842, 7
      %v3844 = vsub.s32 %v3841, %v3843
      %v3845 = vrot.slane %v3425, %v3844
      %v3847 = vunpack.c.l.s4 1966171168
      %v3848 = vunpack.c.0.s8 %v3847
      %v3849 = vlaneseq
      %v3850 = vshrl.u32 %v3849, 7
      %v3851 = vsub.s32 %v3848, %v3850
      %v3852 = vrot.slane %v3845, %v3851
      %v3854 = vunpack.c.l.s4 1966171168
      %v3855 = vunpack.c.0.s8 %v3854
      %v3856 = vlaneseq
      %v3857 = vshrl.u32 %v3856, 7
      %v3858 = vsub.s32 %v3855, %v3857
      %v3859 = vrot.slane %v3426, %v3858
      %v3861 = vunpack.c.l.s4 1966171168
      %v3862 = vunpack.c.0.s8 %v3861
      %v3863 = vlaneseq
      %v3864 = vshrl.u32 %v3863, 7
      %v3865 = vsub.s32 %v3862, %v3864
      %v3866 = vrot.slane %v3859, %v3865
      %v3868 = vunpack.c.l.s4 1966171168
      %v3869 = vunpack.c.0.s8 %v3868
      %v3870 = vlaneseq
      %v3871 = vshrl.u32 %v3870, 7
      %v3872 = vsub.s32 %v3869, %v3871
      %v3873 = vrot.slane %v3427, %v3872
      %v3875 = vunpack.c.l.s4 1966171168
      %v3876 = vunpack.c.0.s8 %v3875
      %v3877 = vlaneseq
      %v3878 = vshrl.u32 %v3877, 7
      %v3879 = vsub.s32 %v3876, %v3878
      %v3880 = vrot.slane %v3873, %v3879
      %v3882 = vunpack.c.l.s4 1966171168
      %v3883 = vunpack.c.0.s8 %v3882
      %v3884 = vlaneseq
      %v3885 = vshrl.u32 %v3884, 7
      %v3886 = vsub.s32 %v3883, %v3885
      %v3887 = vrot.slane %v3428, %v3886
      %v3889 = vunpack.c.l.s4 1966171168
      %v3890 = vunpack.c.0.s8 %v3889
      %v3891 = vlaneseq
      %v3892 = vshrl.u32 %v3891, 7
      %v3893 = vsub.s32 %v3890, %v3892
      %v3894 = vrot.slane %v3887, %v3893
      %v3896 = vunpack.c.l.s4 1966171168
      %v3897 = vunpack.c.0.s8 %v3896
      %v3898 = vlaneseq
      %v3899 = vshrl.u32 %v3898, 7
      %v3900 = vsub.s32 %v3897, %v3899
      %v3901 = vrot.slane %v3429, %v3900
      %v3903 = vunpack.c.l.s4 1966171168
      %v3904 = vunpack.c.0.s8 %v3903
      %v3905 = vlaneseq
      %v3906 = vshrl.u32 %v3905, 7
      %v3907 = vsub.s32 %v3904, %v3906
      %v3908 = vrot.slane %v3901, %v3907
      %v3910 = vunpack.c.l.s4 1966171168
      %v3911 = vunpack.c.0.s8 %v3910
      %v3912 = vlaneseq
      %v3913 = vshrl.u32 %v3912, 7
      %v3914 = vsub.s32 %v3911, %v3913
      %v3915 = vrot.slane %v3430, %v3914
      %v3917 = vunpack.c.l.s4 1966171168
      %v3918 = vunpack.c.0.s8 %v3917
      %v3919 = vlaneseq
      %v3920 = vshrl.u32 %v3919, 7
      %v3921 = vsub.s32 %v3918, %v3920
      %v3922 = vrot.slane %v3915, %v3921
      %v3924 = vunpack.c.l.s4 1966171168
      %v3925 = vunpack.c.0.s8 %v3924
      %v3926 = vlaneseq
      %v3927 = vshrl.u32 %v3926, 7
      %v3928 = vsub.s32 %v3925, %v3927
      %v3929 = vrot.slane %v3431, %v3928
      %v3931 = vunpack.c.l.s4 1966171168
      %v3932 = vunpack.c.0.s8 %v3931
      %v3933 = vlaneseq
      %v3934 = vshrl.u32 %v3933, 7
      %v3935 = vsub.s32 %v3932, %v3934
      %v3936 = vrot.slane %v3929, %v3935
      %v3938 = vunpack.c.l.s4 1966171168
      %v3939 = vunpack.c.0.s8 %v3938
      %v3940 = vlaneseq
      %v3941 = vshrl.u32 %v3940, 7
      %v3942 = vsub.s32 %v3939, %v3941
      %v3943 = vrot.slane %v3432, %v3942
      %v3945 = vunpack.c.l.s4 1966171168
      %v3946 = vunpack.c.0.s8 %v3945
      %v3947 = vlaneseq
      %v3948 = vshrl.u32 %v3947, 7
      %v3949 = vsub.s32 %v3946, %v3948
      %v3950 = vrot.slane %v3943, %v3949
      %v3952 = vunpack.c.l.s4 1966171168
      %v3953 = vunpack.c.0.s8 %v3952
      %v3954 = vlaneseq
      %v3955 = vshrl.u32 %v3954, 7
      %v3956 = vsub.s32 %v3953, %v3955
      %v3957 = vrot.slane %v3433, %v3956
      %v3959 = vunpack.c.l.s4 1966171168
      %v3960 = vunpack.c.0.s8 %v3959
      %v3961 = vlaneseq
      %v3962 = vshrl.u32 %v3961, 7
      %v3963 = vsub.s32 %v3960, %v3962
      %v3964 = vrot.slane %v3957, %v3963
      %v3966 = vunpack.c.l.s4 1966171168
      %v3967 = vunpack.c.0.s8 %v3966
      %v3968 = vlaneseq
      %v3969 = vshrl.u32 %v3968, 7
      %v3970 = vsub.s32 %v3967, %v3969
      %v3971 = vrot.slane %v3434, %v3970
      %v3973 = vunpack.c.l.s4 1966171168
      %v3974 = vunpack.c.0.s8 %v3973
      %v3975 = vlaneseq
      %v3976 = vshrl.u32 %v3975, 7
      %v3977 = vsub.s32 %v3974, %v3976
      %v3978 = vrot.slane %v3971, %v3977
      %v3980 = vunpack.c.l.s4 1966171168
      %v3981 = vunpack.c.0.s8 %v3980
      %v3982 = vlaneseq
      %v3983 = vshrl.u32 %v3982, 7
      %v3984 = vsub.s32 %v3981, %v3983
      %v3985 = vrot.slane %v3435, %v3984
      %v3987 = vunpack.c.l.s4 1966171168
      %v3988 = vunpack.c.0.s8 %v3987
      %v3989 = vlaneseq
      %v3990 = vshrl.u32 %v3989, 7
      %v3991 = vsub.s32 %v3988, %v3990
      %v3992 = vrot.slane %v3985, %v3991
      %v3994 = vunpack.c.l.s4 1966171168
      %v3995 = vunpack.c.0.s8 %v3994
      %v3996 = vlaneseq
      %v3997 = vshrl.u32 %v3996, 7
      %v3998 = vsub.s32 %v3995, %v3997
      %v3999 = vrot.slane %v3436, %v3998
      %v4001 = vunpack.c.l.s4 1966171168
      %v4002 = vunpack.c.0.s8 %v4001
      %v4003 = vlaneseq
      %v4004 = vshrl.u32 %v4003, 7
      %v4005 = vsub.s32 %v4002, %v4004
      %v4006 = vrot.slane %v3999, %v4005
      %v4008 = vunpack.c.l.s4 1966171168
      %v4009 = vunpack.c.0.s8 %v4008
      %v4010 = vlaneseq
      %v4011 = vshrl.u32 %v4010, 7
      %v4012 = vsub.s32 %v4009, %v4011
      %v4013 = vrot.slane %v3437, %v4012
      %v4015 = vunpack.c.l.s4 1966171168
      %v4016 = vunpack.c.0.s8 %v4015
      %v4017 = vlaneseq
      %v4018 = vshrl.u32 %v4017, 7
      %v4019 = vsub.s32 %v4016, %v4018
      %v4020 = vrot.slane %v4013, %v4019
      %v4022 = vunpack.c.l.s4 1966171168
      %v4023 = vunpack.c.0.s8 %v4022
      %v4024 = vlaneseq
      %v4025 = vshrl.u32 %v4024, 7
      %v4026 = vsub.s32 %v4023, %v4025
      %v4027 = vrot.slane %v3438, %v4026
      %v4029 = vunpack.c.l.s4 1966171168
      %v4030 = vunpack.c.0.s8 %v4029
      %v4031 = vlaneseq
      %v4032 = vshrl.u32 %v4031, 7
      %v4033 = vsub.s32 %v4030, %v4032
      %v4034 = vrot.slane %v4027, %v4033
      %v4036 = vunpack.c.l.s4 1966171168
      %v4037 = vunpack.c.0.s8 %v4036
      %v4038 = vlaneseq
      %v4039 = vshrl.u32 %v4038, 7
      %v4040 = vsub.s32 %v4037, %v4039
      %v4041 = vrot.slane %v3439, %v4040
      %v4043 = vunpack.c.l.s4 1966171168
      %v4044 = vunpack.c.0.s8 %v4043
      %v4045 = vlaneseq
      %v4046 = vshrl.u32 %v4045, 7
      %v4047 = vsub.s32 %v4044, %v4046
      %v4048 = vrot.slane %v4041, %v4047
      %v4050 = vunpack.c.l.s4 1966171168
      %v4051 = vunpack.c.0.s8 %v4050
      %v4052 = vlaneseq
      %v4053 = vshrl.u32 %v4052, 7
      %v4054 = vsub.s32 %v4051, %v4053
      %v4055 = vrot.slane %v3440, %v4054
      %v4057 = vunpack.c.l.s4 1966171168
      %v4058 = vunpack.c.0.s8 %v4057
      %v4059 = vlaneseq
      %v4060 = vshrl.u32 %v4059, 7
      %v4061 = vsub.s32 %v4058, %v4060
      %v4062 = vrot.slane %v4055, %v4061
      %v4064 = vunpack.c.l.s4 1966171168
      %v4065 = vunpack.c.0.s8 %v4064
      %v4066 = vlaneseq
      %v4067 = vshrl.u32 %v4066, 7
      %v4068 = vsub.s32 %v4065, %v4067
      %v4069 = vrot.slane %v3441, %v4068
      %v4071 = vunpack.c.l.s4 1966171168
      %v4072 = vunpack.c.0.s8 %v4071
      %v4073 = vlaneseq
      %v4074 = vshrl.u32 %v4073, 7
      %v4075 = vsub.s32 %v4072, %v4074
      %v4076 = vrot.slane %v4069, %v4075
      %v4078 = vunpack.c.l.s4 1966171168
      %v4079 = vunpack.c.0.s8 %v4078
      %v4080 = vlaneseq
      %v4081 = vshrl.u32 %v4080, 7
      %v4082 = vsub.s32 %v4079, %v4081
      %v4083 = vrot.slane %v3442, %v4082
      %v4085 = vunpack.c.l.s4 1966171168
      %v4086 = vunpack.c.0.s8 %v4085
      %v4087 = vlaneseq
      %v4088 = vshrl.u32 %v4087, 7
      %v4089 = vsub.s32 %v4086, %v4088
      %v4090 = vrot.slane %v4083, %v4089
      %v4092 = vunpack.c.l.s4 1966171168
      %v4093 = vunpack.c.0.s8 %v4092
      %v4094 = vlaneseq
      %v4095 = vshrl.u32 %v4094, 7
      %v4096 = vsub.s32 %v4093, %v4095
      %v4097 = vrot.slane %v3443, %v4096
      %v4099 = vunpack.c.l.s4 1966171168
      %v4100 = vunpack.c.0.s8 %v4099
      %v4101 = vlaneseq
      %v4102 = vshrl.u32 %v4101, 7
      %v4103 = vsub.s32 %v4100, %v4102
      %v4104 = vrot.slane %v4097, %v4103
      %v4106 = vunpack.c.l.s4 1966171168
      %v4107 = vunpack.c.0.s8 %v4106
      %v4108 = vlaneseq
      %v4109 = vshrl.u32 %v4108, 7
      %v4110 = vsub.s32 %v4107, %v4109
      %v4111 = vrot.slane %v3444, %v4110
      %v4113 = vunpack.c.l.s4 1966171168
      %v4114 = vunpack.c.0.s8 %v4113
      %v4115 = vlaneseq
      %v4116 = vshrl.u32 %v4115, 7
      %v4117 = vsub.s32 %v4114, %v4116
      %v4118 = vrot.slane %v4111, %v4117
      %v4120 = vunpack.c.l.s4 1966171168
      %v4121 = vunpack.c.0.s8 %v4120
      %v4122 = vlaneseq
      %v4123 = vshrl.u32 %v4122, 7
      %v4124 = vsub.s32 %v4121, %v4123
      %v4125 = vrot.slane %v3445, %v4124
      %v4127 = vunpack.c.l.s4 1966171168
      %v4128 = vunpack.c.0.s8 %v4127
      %v4129 = vlaneseq
      %v4130 = vshrl.u32 %v4129, 7
      %v4131 = vsub.s32 %v4128, %v4130
      %v4132 = vrot.slane %v4125, %v4131
      %v4134 = vunpack.c.l.s4 1966171168
      %v4135 = vunpack.c.0.s8 %v4134
      %v4136 = vlaneseq
      %v4137 = vshrl.u32 %v4136, 7
      %v4138 = vsub.s32 %v4135, %v4137
      %v4139 = vrot.slane %v3446, %v4138
      %v4141 = vunpack.c.l.s4 1966171168
      %v4142 = vunpack.c.0.s8 %v4141
      %v4143 = vlaneseq
      %v4144 = vshrl.u32 %v4143, 7
      %v4145 = vsub.s32 %v4142, %v4144
      %v4146 = vrot.slane %v4139, %v4145
      %v4148 = vunpack.c.l.s4 1966171168
      %v4149 = vunpack.c.0.s8 %v4148
      %v4150 = vlaneseq
      %v4151 = vshrl.u32 %v4150, 7
      %v4152 = vsub.s32 %v4149, %v4151
      %v4153 = vrot.slane %v3447, %v4152
      %v4155 = vunpack.c.l.s4 1966171168
      %v4156 = vunpack.c.0.s8 %v4155
      %v4157 = vlaneseq
      %v4158 = vshrl.u32 %v4157, 7
      %v4159 = vsub.s32 %v4156, %v4158
      %v4160 = vrot.slane %v4153, %v4159
      %v4162 = vunpack.c.l.s4 1966171168
      %v4163 = vunpack.c.0.s8 %v4162
      %v4164 = vlaneseq
      %v4165 = vshrl.u32 %v4164, 7
      %v4166 = vsub.s32 %v4163, %v4165
      %v4167 = vrot.slane %v3448, %v4166
      %v4169 = vunpack.c.l.s4 1966171168
      %v4170 = vunpack.c.0.s8 %v4169
      %v4171 = vlaneseq
      %v4172 = vshrl.u32 %v4171, 7
      %v4173 = vsub.s32 %v4170, %v4172
      %v4174 = vrot.slane %v4167, %v4173
      %v4176 = vunpack.c.l.s4 1966171168
      %v4177 = vunpack.c.0.s8 %v4176
      %v4178 = vlaneseq
      %v4179 = vshrl.u32 %v4178, 7
      %v4180 = vsub.s32 %v4177, %v4179
      %v4181 = vrot.slane %v3449, %v4180
      %v4183 = vunpack.c.l.s4 1966171168
      %v4184 = vunpack.c.0.s8 %v4183
      %v4185 = vlaneseq
      %v4186 = vshrl.u32 %v4185, 7
      %v4187 = vsub.s32 %v4184, %v4186
      %v4188 = vrot.slane %v4181, %v4187
      %v4190 = vunpack.c.l.s4 1966171168
      %v4191 = vunpack.c.0.s8 %v4190
      %v4192 = vlaneseq
      %v4193 = vshrl.u32 %v4192, 7
      %v4194 = vsub.s32 %v4191, %v4193
      %v4195 = vrot.slane %v3450, %v4194
      %v4197 = vunpack.c.l.s4 1966171168
      %v4198 = vunpack.c.0.s8 %v4197
      %v4199 = vlaneseq
      %v4200 = vshrl.u32 %v4199, 7
      %v4201 = vsub.s32 %v4198, %v4200
      %v4202 = vrot.slane %v4195, %v4201
      %v4204 = vunpack.c.l.s4 1966171168
      %v4205 = vunpack.c.0.s8 %v4204
      %v4206 = vlaneseq
      %v4207 = vshrl.u32 %v4206, 7
      %v4208 = vsub.s32 %v4205, %v4207
      %v4209 = vrot.slane %v3451, %v4208
      %v4211 = vunpack.c.l.s4 1966171168
      %v4212 = vunpack.c.0.s8 %v4211
      %v4213 = vlaneseq
      %v4214 = vshrl.u32 %v4213, 7
      %v4215 = vsub.s32 %v4212, %v4214
      %v4216 = vrot.slane %v4209, %v4215
      %v4218 = vunpack.c.l.s4 1966171168
      %v4219 = vunpack.c.0.s8 %v4218
      %v4220 = vlaneseq
      %v4221 = vshrl.u32 %v4220, 7
      %v4222 = vsub.s32 %v4219, %v4221
      %v4223 = vrot.slane %v3452, %v4222
      %v4225 = vunpack.c.l.s4 1966171168
      %v4226 = vunpack.c.0.s8 %v4225
      %v4227 = vlaneseq
      %v4228 = vshrl.u32 %v4227, 7
      %v4229 = vsub.s32 %v4226, %v4228
      %v4230 = vrot.slane %v4223, %v4229
      %v4232 = vunpack.c.l.s4 1966171168
      %v4233 = vunpack.c.0.s8 %v4232
      %v4234 = vlaneseq
      %v4235 = vshrl.u32 %v4234, 7
      %v4236 = vsub.s32 %v4233, %v4235
      %v4237 = vrot.slane %v3453, %v4236
      %v4239 = vunpack.c.l.s4 1966171168
      %v4240 = vunpack.c.0.s8 %v4239
      %v4241 = vlaneseq
      %v4242 = vshrl.u32 %v4241, 7
      %v4243 = vsub.s32 %v4240, %v4242
      %v4244 = vrot.slane %v4237, %v4243
      %v4246 = vunpack.c.l.s4 1966171168
      %v4247 = vunpack.c.0.s8 %v4246
      %v4248 = vlaneseq
      %v4249 = vshrl.u32 %v4248, 7
      %v4250 = vsub.s32 %v4247, %v4249
      %v4251 = vrot.slane %v3454, %v4250
      %v4253 = vunpack.c.l.s4 1966171168
      %v4254 = vunpack.c.0.s8 %v4253
      %v4255 = vlaneseq
      %v4256 = vshrl.u32 %v4255, 7
      %v4257 = vsub.s32 %v4254, %v4256
      %v4258 = vrot.slane %v4251, %v4257
      %v4260 = vunpack.c.l.s4 1966171168
      %v4261 = vunpack.c.0.s8 %v4260
      %v4262 = vlaneseq
      %v4263 = vshrl.u32 %v4262, 7
      %v4264 = vsub.s32 %v4261, %v4263
      %v4265 = vrot.slane %v3455, %v4264
      %v4267 = vunpack.c.l.s4 1966171168
      %v4268 = vunpack.c.0.s8 %v4267
      %v4269 = vlaneseq
      %v4270 = vshrl.u32 %v4269, 7
      %v4271 = vsub.s32 %v4268, %v4270
      %v4272 = vrot.slane %v4265, %v4271
      %v4274 = vunpack.c.l.s4 1966171168
      %v4275 = vunpack.c.0.s8 %v4274
      %v4276 = vlaneseq
      %v4277 = vshrl.u32 %v4276, 7
      %v4278 = vsub.s32 %v4275, %v4277
      %v4279 = vrot.slane %v3456, %v4278
      %v4281 = vunpack.c.l.s4 1966171168
      %v4282 = vunpack.c.0.s8 %v4281
      %v4283 = vlaneseq
      %v4284 = vshrl.u32 %v4283, 7
      %v4285 = vsub.s32 %v4282, %v4284
      %v4286 = vrot.slane %v4279, %v4285
      %v4288 = vunpack.c.l.s4 1966171168
      %v4289 = vunpack.c.0.s8 %v4288
      %v4290 = vlaneseq
      %v4291 = vshrl.u32 %v4290, 7
      %v4292 = vsub.s32 %v4289, %v4291
      %v4293 = vrot.slane %v3457, %v4292
      %v4295 = vunpack.c.l.s4 1966171168
      %v4296 = vunpack.c.0.s8 %v4295
      %v4297 = vlaneseq
      %v4298 = vshrl.u32 %v4297, 7
      %v4299 = vsub.s32 %v4296, %v4298
      %v4300 = vrot.slane %v4293, %v4299
      %v4302 = vunpack.c.l.s4 1966171168
      %v4303 = vunpack.c.0.s8 %v4302
      %v4304 = vlaneseq
      %v4305 = vshrl.u32 %v4304, 7
      %v4306 = vsub.s32 %v4303, %v4305
      %v4307 = vrot.slane %v3458, %v4306
      %v4309 = vunpack.c.l.s4 1966171168
      %v4310 = vunpack.c.0.s8 %v4309
      %v4311 = vlaneseq
      %v4312 = vshrl.u32 %v4311, 7
      %v4313 = vsub.s32 %v4310, %v4312
      %v4314 = vrot.slane %v4307, %v4313
      %v4316 = vunpack.c.l.s4 1966171168
      %v4317 = vunpack.c.0.s8 %v4316
      %v4318 = vlaneseq
      %v4319 = vshrl.u32 %v4318, 7
      %v4320 = vsub.s32 %v4317, %v4319
      %v4321 = vrot.slane %v3459, %v4320
      %v4323 = vunpack.c.l.s4 1966171168
      %v4324 = vunpack.c.0.s8 %v4323
      %v4325 = vlaneseq
      %v4326 = vshrl.u32 %v4325, 7
      %v4327 = vsub.s32 %v4324, %v4326
      %v4328 = vrot.slane %v4321, %v4327
      %v4330 = vunpack.c.l.s4 1966171168
      %v4331 = vunpack.c.0.s8 %v4330
      %v4332 = vlaneseq
      %v4333 = vshrl.u32 %v4332, 7
      %v4334 = vsub.s32 %v4331, %v4333
      %v4335 = vrot.slane %v3460, %v4334
      %v4337 = vunpack.c.l.s4 1966171168
      %v4338 = vunpack.c.0.s8 %v4337
      %v4339 = vlaneseq
      %v4340 = vshrl.u32 %v4339, 7
      %v4341 = vsub.s32 %v4338, %v4340
      %v4342 = vrot.slane %v4335, %v4341
      %v4344 = vunpack.c.l.s4 1966171168
      %v4345 = vunpack.c.0.s8 %v4344
      %v4346 = vlaneseq
      %v4347 = vshrl.u32 %v4346, 7
      %v4348 = vsub.s32 %v4345, %v4347
      %v4349 = vrot.slane %v3461, %v4348
      %v4351 = vunpack.c.l.s4 1966171168
      %v4352 = vunpack.c.0.s8 %v4351
      %v4353 = vlaneseq
      %v4354 = vshrl.u32 %v4353, 7
      %v4355 = vsub.s32 %v4352, %v4354
      %v4356 = vrot.slane %v4349, %v4355
      %v4358 = vunpack.c.l.s4 1966171168
      %v4359 = vunpack.c.0.s8 %v4358
      %v4360 = vlaneseq
      %v4361 = vshrl.u32 %v4360, 7
      %v4362 = vsub.s32 %v4359, %v4361
      %v4363 = vrot.slane %v3462, %v4362
      %v4365 = vunpack.c.l.s4 1966171168
      %v4366 = vunpack.c.0.s8 %v4365
      %v4367 = vlaneseq
      %v4368 = vshrl.u32 %v4367, 7
      %v4369 = vsub.s32 %v4366, %v4368
      %v4370 = vrot.slane %v4363, %v4369
      %v4372 = vunpack.c.l.s4 1966171168
      %v4373 = vunpack.c.0.s8 %v4372
      %v4374 = vlaneseq
      %v4375 = vshrl.u32 %v4374, 7
      %v4376 = vsub.s32 %v4373, %v4375
      %v4377 = vrot.slane %v3463, %v4376
      %v4379 = vunpack.c.l.s4 1966171168
      %v4380 = vunpack.c.0.s8 %v4379
      %v4381 = vlaneseq
      %v4382 = vshrl.u32 %v4381, 7
      %v4383 = vsub.s32 %v4380, %v4382
      %v4384 = vrot.slane %v4377, %v4383
      %v4386 = vunpack.c.l.s4 1966171168
      %v4387 = vunpack.c.0.s8 %v4386
      %v4388 = vlaneseq
      %v4389 = vshrl.u32 %v4388, 7
      %v4390 = vsub.s32 %v4387, %v4389
      %v4391 = vrot.slane %v3464, %v4390
      %v4393 = vunpack.c.l.s4 1966171168
      %v4394 = vunpack.c.0.s8 %v4393
      %v4395 = vlaneseq
      %v4396 = vshrl.u32 %v4395, 7
      %v4397 = vsub.s32 %v4394, %v4396
      %v4398 = vrot.slane %v4391, %v4397
      %v4400 = vunpack.c.l.s4 1966171168
      %v4401 = vunpack.c.0.s8 %v4400
      %v4402 = vlaneseq
      %v4403 = vshrl.u32 %v4402, 7
      %v4404 = vsub.s32 %v4401, %v4403
      %v4405 = vrot.slane %v3465, %v4404
      %v4407 = vunpack.c.l.s4 1966171168
      %v4408 = vunpack.c.0.s8 %v4407
      %v4409 = vlaneseq
      %v4410 = vshrl.u32 %v4409, 7
      %v4411 = vsub.s32 %v4408, %v4410
      %v4412 = vrot.slane %v4405, %v4411
      %v4414 = vunpack.c.l.s4 1966171168
      %v4415 = vunpack.c.0.s8 %v4414
      %v4416 = vlaneseq
      %v4417 = vshrl.u32 %v4416, 7
      %v4418 = vsub.s32 %v4415, %v4417
      %v4419 = vrot.slane %v3466, %v4418
      %v4421 = vunpack.c.l.s4 1966171168
      %v4422 = vunpack.c.0.s8 %v4421
      %v4423 = vlaneseq
      %v4424 = vshrl.u32 %v4423, 7
      %v4425 = vsub.s32 %v4422, %v4424
      %v4426 = vrot.slane %v4419, %v4425
      %v4427 = vunpack.c.l.b16 %v3544
      %v4428 = vunpack.c.l.b16 %v3558
      %v4429 = vunpack.c.l.b16 %v3572
      %v4430 = vunpack.c.l.b16 %v3586
      %v4431 = vunpack.c.l.b16 %v3600
      %v4432 = vunpack.c.l.b16 %v3614
      %v4433 = vunpack.c.l.b16 %v3628
      %v4434 = vunpack.c.l.b16 %v3642
      %v4435 = vunpack.c.l.b16 %v3656
      %v4436 = vunpack.c.l.b16 %v3670
      %v4437 = vunpack.c.l.b16 %v3684
      %v4438 = vunpack.c.l.b16 %v3698
      %v4439 = vunpack.c.l.b16 %v3712
      %v4440 = vunpack.c.l.b16 %v3726
      %v4441 = vunpack.c.l.b16 %v3740
      %v4442 = vunpack.c.l.b16 %v3754
      %v4443 = vunpack.c.l.b16 %v3768
      %v4444 = vunpack.c.l.b16 %v3782
      %v4445 = vunpack.c.l.b16 %v3796
      %v4446 = vunpack.c.l.b16 %v3810
      %v4447 = vunpack.c.l.b16 %v3824
      %v4448 = vunpack.c.l.b16 %v3838
      %v4449 = vunpack.c.l.b16 %v3852
      %v4450 = vunpack.c.l.b16 %v3866
      %v4451 = vunpack.c.l.b16 %v3880
      %v4452 = vunpack.c.l.b16 %v3894
      %v4453 = vunpack.c.l.b16 %v3908
      %v4454 = vunpack.c.l.b16 %v3922
      %v4455 = vunpack.c.l.b16 %v3936
      %v4456 = vunpack.c.l.b16 %v3950
      %v4457 = vunpack.c.l.b16 %v3964
      %v4458 = vunpack.c.l.b16 %v3978
      %v4459 = vunpack.c.l.b16 %v3992
      %v4460 = vunpack.c.l.b16 %v4006
      %v4461 = vunpack.c.l.b16 %v4020
      %v4462 = vunpack.c.l.b16 %v4034
      %v4463 = vunpack.c.l.b16 %v4048
      %v4464 = vunpack.c.l.b16 %v4062
      %v4465 = vunpack.c.l.b16 %v4076
      %v4466 = vunpack.c.l.b16 %v4090
      %v4467 = vunpack.c.l.b16 %v4104
      %v4468 = vunpack.c.l.b16 %v4118
      %v4469 = vunpack.c.l.b16 %v4132
      %v4470 = vunpack.c.l.b16 %v4146
      %v4471 = vunpack.c.l.b16 %v4160
      %v4472 = vunpack.c.l.b16 %v4174
      %v4473 = vunpack.c.l.b16 %v4188
      %v4474 = vunpack.c.l.b16 %v4202
      %v4475 = vunpack.c.l.b16 %v4216
      %v4476 = vunpack.c.l.b16 %v4230
      %v4477 = vunpack.c.l.b16 %v4244
      %v4478 = vunpack.c.l.b16 %v4258
      %v4479 = vunpack.c.l.b16 %v4272
      %v4480 = vunpack.c.l.b16 %v4286
      %v4481 = vunpack.c.l.b16 %v4300
      %v4482 = vunpack.c.l.b16 %v4314
      %v4483 = vunpack.c.l.b16 %v4328
      %v4484 = vunpack.c.l.b16 %v4342
      %v4485 = vunpack.c.l.b16 %v4356
      %v4486 = vunpack.c.l.b16 %v4370
      %v4487 = vunpack.c.l.b16 %v4384
      %v4488 = vunpack.c.l.b16 %v4398
      %v4489 = vunpack.c.l.b16 %v4412
      %v4490 = vunpack.c.l.b16 %v4426
      %v4491 = vrot.slane %v4428, 7
      %v4492 = vsel %vm1478, %v4491, %v4427
      %v4493 = vrot.slane %v4429, 6
      %v4494 = vsel %vm1481, %v4493, %v4492
      %v4495 = vrot.slane %v4430, 5
      %v4496 = vsel %vm1484, %v4495, %v4494
      %v4497 = vrot.slane %v4431, 4
      %v4498 = vsel %vm1487, %v4497, %v4496
      %v4499 = vrot.slane %v4432, 3
      %v4500 = vsel %vm1490, %v4499, %v4498
      %v4501 = vrot.slane %v4433, 2
      %v4502 = vsel %vm1493, %v4501, %v4500
      %v4503 = vrot.slane %v4434, 1
      %v4504 = vsel %vm1496, %v4503, %v4502
      %v4505 = vrot.slane %v4436, 7
      %v4506 = vsel %vm1478, %v4505, %v4435
      %v4507 = vrot.slane %v4437, 6
      %v4508 = vsel %vm1481, %v4507, %v4506
      %v4509 = vrot.slane %v4438, 5
      %v4510 = vsel %vm1484, %v4509, %v4508
      %v4511 = vrot.slane %v4439, 4
      %v4512 = vsel %vm1487, %v4511, %v4510
      %v4513 = vrot.slane %v4440, 3
      %v4514 = vsel %vm1490, %v4513, %v4512
      %v4515 = vrot.slane %v4441, 2
      %v4516 = vsel %vm1493, %v4515, %v4514
      %v4517 = vrot.slane %v4442, 1
      %v4518 = vsel %vm1496, %v4517, %v4516
      %v4519 = vrot.slane %v4444, 7
      %v4520 = vsel %vm1478, %v4519, %v4443
      %v4521 = vrot.slane %v4445, 6
      %v4522 = vsel %vm1481, %v4521, %v4520
      %v4523 = vrot.slane %v4446, 5
      %v4524 = vsel %vm1484, %v4523, %v4522
      %v4525 = vrot.slane %v4447, 4
      %v4526 = vsel %vm1487, %v4525, %v4524
      %v4527 = vrot.slane %v4448, 3
      %v4528 = vsel %vm1490, %v4527, %v4526
      %v4529 = vrot.slane %v4449, 2
      %v4530 = vsel %vm1493, %v4529, %v4528
      %v4531 = vrot.slane %v4450, 1
      %v4532 = vsel %vm1496, %v4531, %v4530
      %v4533 = vrot.slane %v4452, 7
      %v4534 = vsel %vm1478, %v4533, %v4451
      %v4535 = vrot.slane %v4453, 6
      %v4536 = vsel %vm1481, %v4535, %v4534
      %v4537 = vrot.slane %v4454, 5
      %v4538 = vsel %vm1484, %v4537, %v4536
      %v4539 = vrot.slane %v4455, 4
      %v4540 = vsel %vm1487, %v4539, %v4538
      %v4541 = vrot.slane %v4456, 3
      %v4542 = vsel %vm1490, %v4541, %v4540
      %v4543 = vrot.slane %v4457, 2
      %v4544 = vsel %vm1493, %v4543, %v4542
      %v4545 = vrot.slane %v4458, 1
      %v4546 = vsel %vm1496, %v4545, %v4544
      %v4547 = vrot.slane %v4460, 7
      %v4548 = vsel %vm1478, %v4547, %v4459
      %v4549 = vrot.slane %v4461, 6
      %v4550 = vsel %vm1481, %v4549, %v4548
      %v4551 = vrot.slane %v4462, 5
      %v4552 = vsel %vm1484, %v4551, %v4550
      %v4553 = vrot.slane %v4463, 4
      %v4554 = vsel %vm1487, %v4553, %v4552
      %v4555 = vrot.slane %v4464, 3
      %v4556 = vsel %vm1490, %v4555, %v4554
      %v4557 = vrot.slane %v4465, 2
      %v4558 = vsel %vm1493, %v4557, %v4556
      %v4559 = vrot.slane %v4466, 1
      %v4560 = vsel %vm1496, %v4559, %v4558
      %v4561 = vrot.slane %v4468, 7
      %v4562 = vsel %vm1478, %v4561, %v4467
      %v4563 = vrot.slane %v4469, 6
      %v4564 = vsel %vm1481, %v4563, %v4562
      %v4565 = vrot.slane %v4470, 5
      %v4566 = vsel %vm1484, %v4565, %v4564
      %v4567 = vrot.slane %v4471, 4
      %v4568 = vsel %vm1487, %v4567, %v4566
      %v4569 = vrot.slane %v4472, 3
      %v4570 = vsel %vm1490, %v4569, %v4568
      %v4571 = vrot.slane %v4473, 2
      %v4572 = vsel %vm1493, %v4571, %v4570
      %v4573 = vrot.slane %v4474, 1
      %v4574 = vsel %vm1496, %v4573, %v4572
      %v4575 = vrot.slane %v4476, 7
      %v4576 = vsel %vm1478, %v4575, %v4475
      %v4577 = vrot.slane %v4477, 6
      %v4578 = vsel %vm1481, %v4577, %v4576
      %v4579 = vrot.slane %v4478, 5
      %v4580 = vsel %vm1484, %v4579, %v4578
      %v4581 = vrot.slane %v4479, 4
      %v4582 = vsel %vm1487, %v4581, %v4580
      %v4583 = vrot.slane %v4480, 3
      %v4584 = vsel %vm1490, %v4583, %v4582
      %v4585 = vrot.slane %v4481, 2
      %v4586 = vsel %vm1493, %v4585, %v4584
      %v4587 = vrot.slane %v4482, 1
      %v4588 = vsel %vm1496, %v4587, %v4586
      %v4589 = vrot.slane %v4484, 7
      %v4590 = vsel %vm1478, %v4589, %v4483
      %v4591 = vrot.slane %v4485, 6
      %v4592 = vsel %vm1481, %v4591, %v4590
      %v4593 = vrot.slane %v4486, 5
      %v4594 = vsel %vm1484, %v4593, %v4592
      %v4595 = vrot.slane %v4487, 4
      %v4596 = vsel %vm1487, %v4595, %v4594
      %v4597 = vrot.slane %v4488, 3
      %v4598 = vsel %vm1490, %v4597, %v4596
      %v4599 = vrot.slane %v4489, 2
      %v4600 = vsel %vm1493, %v4599, %v4598
      %v4601 = vrot.slane %v4490, 1
      %v4602 = vsel %vm1496, %v4601, %v4600
      %v4603 = vpack.c.b16 %v4518, %v4504
      %v4604 = vpack.c.b16 %v4546, %v4532
      %v4605 = vpack.c.b16 %v4574, %v4560
      %v4606 = vpack.c.b16 %v4602, %v4588
      %v4608 = vsel %vm1600, %v4603, 0
      %v4611 = vsel %vm1600, %v4604, 0
      %v4614 = vsel %vm1600, %v4605, 0
      %v4617 = vsel %vm1600, %v4606, 0
      %4619 = vmatprep.subr.bf16.mxu0 0
      %4620 = vmatpush1.bf16.msra.mxu0 0
      %4621 = vmatprep.subr.bf16.mxu0 0
      %4622 = vmatpush1.bf16.msra.mxu0 0
      %4623 = vmatprep.subr.bf16.mxu0 0
      %4624 = vmatpush1.bf16.msra.mxu0 0
      %4625 = vmatprep.subr.bf16.mxu0 0
      %4626 = vmatpush1.bf16.msra.mxu0 0
      %4627 = vmatprep.subr.bf16.mxu0 0
      %4628 = vmatpush1.bf16.msra.mxu0 0
      %4629 = vmatprep.subr.bf16.mxu0 0
      %4630 = vmatpush1.bf16.msra.mxu0 0
      %4631 = vmatprep.subr.bf16.mxu0 0
      %4632 = vmatpush1.bf16.msra.mxu0 0
      %4633 = vmatprep.subr.bf16.mxu0 0
      %4634 = vmatpush1.bf16.msra.mxu0 %v1615
      %4635 = vmatprep.subr.bf16.mxu0 0
      %4636 = vmatpush2.bf16.msra.mxu0 0
      %4637 = vmatprep.subr.bf16.mxu0 0
      %4638 = vmatpush2.bf16.msra.mxu0 0
      %4639 = vmatprep.subr.bf16.mxu0 0
      %4640 = vmatpush2.bf16.msra.mxu0 0
      %4641 = vmatprep.subr.bf16.mxu0 0
      %4642 = vmatpush2.bf16.msra.mxu0 0
      %4643 = vmatprep.subr.bf16.mxu0 0
      %4644 = vmatpush2.bf16.msra.mxu0 0
      %4645 = vmatprep.subr.bf16.mxu0 0
      %4646 = vmatpush2.bf16.msra.mxu0 0
      %4647 = vmatprep.subr.bf16.mxu0 0
      %4648 = vmatpush2.bf16.msra.mxu0 0
      %4649 = vmatprep.subr.bf16.mxu0 0
      %4650 = vmatpush2.bf16.msra.mxu0 0
      %4651 = vmatprep.mubr.bf16.mxu0 0
      %4652 = vmatmul.mubr.bf16.gmra.mxu0 %v4608
      %v4653 = vpop.f32.mrf.mxu0
      %v4654 = vadd.f32 0.0, %v4653
      %v4655 = vpop.f32.mrf.mxu0
      %v4656 = vpop.f32.mrf.mxu0
      %v4657 = vadd.f32 0.0, %v4656
      %v4658 = vpop.f32.mrf.mxu0
      %4659 = vmatprep.mubr.bf16.mxu0 0
      %4660 = vmatmul.mubr.bf16.gmra.mxu0 %v4611
      %v4661 = vpop.f32.mrf.mxu0
      %v4662 = vadd.f32 0.0, %v4661
      %v4663 = vpop.f32.mrf.mxu0
      %v4664 = vpop.f32.mrf.mxu0
      %v4665 = vadd.f32 0.0, %v4664
      %v4666 = vpop.f32.mrf.mxu0
      %4667 = vmatprep.mubr.bf16.mxu0 0
      %4668 = vmatmul.mubr.bf16.gmra.mxu0 %v4614
      %v4669 = vpop.f32.mrf.mxu0
      %v4670 = vadd.f32 0.0, %v4669
      %v4671 = vpop.f32.mrf.mxu0
      %v4672 = vpop.f32.mrf.mxu0
      %v4673 = vadd.f32 0.0, %v4672
      %v4674 = vpop.f32.mrf.mxu0
      %4675 = vmatprep.mubr.bf16.mxu0 0
      %4676 = vmatmul.mubr.bf16.gmra.mxu0 %v4617
      %v4677 = vpop.f32.mrf.mxu0
      %v4678 = vadd.f32 0.0, %v4677
      %v4679 = vpop.f32.mrf.mxu0
      %v4680 = vpop.f32.mrf.mxu0
      %v4681 = vadd.f32 0.0, %v4680
      %v4682 = vpop.f32.mrf.mxu0
      %4683 = vdwg.mxu0
      %4688 = vrot.lane.b32.xlu0 %v3398, 120
      %v4689 = vpop.permute.xlu0 %4688
      %4690 = vrot.lane.b32.xlu0 %v3399, 120
      %v4691 = vpop.permute.xlu0 %4690
      %4692 = vrot.lane.b32.xlu0 %v3400, 120
      %v4693 = vpop.permute.xlu0 %4692
      %4694 = vrot.lane.b32.xlu0 %v3401, 120
      %v4695 = vpop.permute.xlu0 %4694
      %v4697 = vsel %vm1600, %v4689, 0
      %v4700 = vsel %vm1600, %v4691, 0
      %v4703 = vsel %vm1600, %v4693, 0
      %v4706 = vsel %vm1600, %v4695, 0
      %4708 = vmatprep.subr.bf16.mxu0 0
      %4709 = vmatpush1.bf16.msra.mxu0 0
      %4710 = vmatprep.subr.bf16.mxu0 0
      %4711 = vmatpush1.bf16.msra.mxu0 0
      %4712 = vmatprep.subr.bf16.mxu0 0
      %4713 = vmatpush1.bf16.msra.mxu0 0
      %4714 = vmatprep.subr.bf16.mxu0 0
      %4715 = vmatpush1.bf16.msra.mxu0 0
      %4716 = vmatprep.subr.bf16.mxu0 0
      %4717 = vmatpush1.bf16.msra.mxu0 0
      %4718 = vmatprep.subr.bf16.mxu0 0
      %4719 = vmatpush1.bf16.msra.mxu0 0
      %4720 = vmatprep.subr.bf16.mxu0 0
      %4721 = vmatpush1.bf16.msra.mxu0 0
      %4722 = vmatprep.subr.bf16.mxu0 0
      %4723 = vmatpush1.bf16.msra.mxu0 %v1695
      %4724 = vmatprep.subr.bf16.mxu0 0
      %4725 = vmatpush2.bf16.msra.mxu0 0
      %4726 = vmatprep.subr.bf16.mxu0 0
      %4727 = vmatpush2.bf16.msra.mxu0 0
      %4728 = vmatprep.subr.bf16.mxu0 0
      %4729 = vmatpush2.bf16.msra.mxu0 0
      %4730 = vmatprep.subr.bf16.mxu0 0
      %4731 = vmatpush2.bf16.msra.mxu0 0
      %4732 = vmatprep.subr.bf16.mxu0 0
      %4733 = vmatpush2.bf16.msra.mxu0 0
      %4734 = vmatprep.subr.bf16.mxu0 0
      %4735 = vmatpush2.bf16.msra.mxu0 0
      %4736 = vmatprep.subr.bf16.mxu0 0
      %4737 = vmatpush2.bf16.msra.mxu0 0
      %4738 = vmatprep.subr.bf16.mxu0 0
      %4739 = vmatpush2.bf16.msra.mxu0 0
      %4740 = vmatprep.mubr.bf16.mxu0 0
      %4741 = vmatmul.mubr.bf16.gmra.mxu0 %v4697
      %v4742 = vpop.f32.mrf.mxu0
      %v4743 = vadd.f32 %v4654, %v4742
      %v4744 = vpop.f32.mrf.mxu0
      %v4745 = vpop.f32.mrf.mxu0
      %v4746 = vadd.f32 %v4657, %v4745
      %v4747 = vpop.f32.mrf.mxu0
      %4748 = vmatprep.mubr.bf16.mxu0 0
      %4749 = vmatmul.mubr.bf16.gmra.mxu0 %v4700
      %v4750 = vpop.f32.mrf.mxu0
      %v4751 = vadd.f32 %v4662, %v4750
      %v4752 = vpop.f32.mrf.mxu0
      %v4753 = vpop.f32.mrf.mxu0
      %v4754 = vadd.f32 %v4665, %v4753
      %v4755 = vpop.f32.mrf.mxu0
      %4756 = vmatprep.mubr.bf16.mxu0 0
      %4757 = vmatmul.mubr.bf16.gmra.mxu0 %v4703
      %v4758 = vpop.f32.mrf.mxu0
      %v4759 = vadd.f32 %v4670, %v4758
      %v4760 = vpop.f32.mrf.mxu0
      %v4761 = vpop.f32.mrf.mxu0
      %v4762 = vadd.f32 %v4673, %v4761
      %v4763 = vpop.f32.mrf.mxu0
      %4764 = vmatprep.mubr.bf16.mxu0 0
      %4765 = vmatmul.mubr.bf16.gmra.mxu0 %v4706
      %v4766 = vpop.f32.mrf.mxu0
      %v4767 = vadd.f32 %v4678, %v4766
      %v4768 = vpop.f32.mrf.mxu0
      %v4769 = vpop.f32.mrf.mxu0
      %v4770 = vadd.f32 %v4681, %v4769
      %v4771 = vpop.f32.mrf.mxu0
      %4772 = vdwg.mxu0
      %v4773 = vsel %vm1762, %v4743, 0.0
      %v4774 = vsel %vm1762, %v4746, 0.0
      %v4775 = vadd.f32 %v4773, %v4774
      %v4776 = vsel %vm1762, %v4751, 0.0
      %v4777 = vadd.f32 %v4775, %v4776
      %v4778 = vsel %vm1762, %v4754, 0.0
      %v4779 = vadd.f32 %v4777, %v4778
      %v4780 = vsel %vm1762, %v4759, 0.0
      %v4781 = vadd.f32 %v4779, %v4780
      %v4782 = vsel %vm1762, %v4762, 0.0
      %v4783 = vadd.f32 %v4781, %v4782
      %v4784 = vsel %vm1762, %v4767, 0.0
      %v4785 = vadd.f32 %v4783, %v4784
      %v4786 = vsel %vm1762, %v4770, 0.0
      %v4787 = vadd.f32 %v4785, %v4786
      %v4788 = vrot.slane %v4787, 4
      %v4789 = vadd.f32 %v4787, %v4788
      %v4790 = vrot.slane %v4789, 2
      %v4791 = vadd.f32 %v4789, %v4790
      %v4792 = vrot.slane %v4791, 1
      %v4793 = vadd.f32 %v4791, %v4792
      %v4794 = vadd.f32 %v3272, %v4793
      %v4795 = vmul.f32 %v4743, %v4743
      %v4796 = vmul.f32 %v4746, %v4746
      %v4797 = vmul.f32 %v4751, %v4751
      %v4798 = vmul.f32 %v4754, %v4754
      %v4799 = vmul.f32 %v4759, %v4759
      %v4800 = vmul.f32 %v4762, %v4762
      %v4801 = vmul.f32 %v4767, %v4767
      %v4802 = vmul.f32 %v4770, %v4770
      %v4803 = vsel %vm1762, %v4795, 0.0
      %v4804 = vsel %vm1762, %v4796, 0.0
      %v4805 = vadd.f32 %v4803, %v4804
      %v4806 = vsel %vm1762, %v4797, 0.0
      %v4807 = vadd.f32 %v4805, %v4806
      %v4808 = vsel %vm1762, %v4798, 0.0
      %v4809 = vadd.f32 %v4807, %v4808
      %v4810 = vsel %vm1762, %v4799, 0.0
      %v4811 = vadd.f32 %v4809, %v4810
      %v4812 = vsel %vm1762, %v4800, 0.0
      %v4813 = vadd.f32 %v4811, %v4812
      %v4814 = vsel %vm1762, %v4801, 0.0
      %v4815 = vadd.f32 %v4813, %v4814
      %v4816 = vsel %vm1762, %v4802, 0.0
      %v4817 = vadd.f32 %v4815, %v4816
      %v4818 = vrot.slane %v4817, 4
      %v4819 = vadd.f32 %v4817, %v4818
      %v4820 = vrot.slane %v4819, 2
      %v4821 = vadd.f32 %v4819, %v4820
      %v4822 = vrot.slane %v4821, 1
      %v4823 = vadd.f32 %v4821, %v4822
      %v4824 = vadd.f32 %v3302, %v4823
      %s4825 = scalar_lea.vmem %s314, 16
      %4826 = vst.msk [vmem:[%s4825] sm:$0xff] %vm1762, %v4743
      %4827 = vst.msk [vmem:[%s4825 + $0x8] sm:$0xff] %vm1762, %v4746
      %4828 = vst.msk [vmem:[%s4825 + $0x20] sm:$0xff] %vm1762, %v4751
      %4829 = vst.msk [vmem:[%s4825 + $0x28] sm:$0xff] %vm1762, %v4754
      %4830 = vst.msk [vmem:[%s4825 + $0x40] sm:$0xff] %vm1762, %v4759
      %4831 = vst.msk [vmem:[%s4825 + $0x48] sm:$0xff] %vm1762, %v4762
      %4832 = vst.msk [vmem:[%s4825 + $0x60] sm:$0xff] %vm1762, %v4767
      %4833 = vst.msk [vmem:[%s4825 + $0x68] sm:$0xff] %vm1762, %v4770
      %v4834 = vld [vmem:[%s301] sm:$0xff]
      %v4835 = vld [vmem:[%s301 + $0x8] sm:$0xff]
      %v4836 = vld [vmem:[%s301 + $0x10] sm:$0xff]
      %v4837 = vld [vmem:[%s301 + $0x18] sm:$0xff]
      %v4838 = vld [vmem:[%s301 + $0x20] sm:$0xff]
      %v4839 = vld [vmem:[%s301 + $0x28] sm:$0xff]
      %v4840 = vld [vmem:[%s301 + $0x30] sm:$0xff]
      %v4841 = vld [vmem:[%s301 + $0x38] sm:$0xff]
      %4842 = vrot.lane.b32.xlu0 %v337, 12
      %v4843 = vpop.permute.xlu0 %4842
      %v4845 = vmul.f32 %v4834, %v4843
      %v4846 = vmul.f32 %v4835, %v4843
      %v4847 = vmul.f32 %v4836, %v4843
      %v4848 = vmul.f32 %v4837, %v4843
      %v4849 = vmul.f32 %v4838, %v4843
      %v4850 = vmul.f32 %v4839, %v4843
      %v4851 = vmul.f32 %v4840, %v4843
      %v4852 = vmul.f32 %v4841, %v4843
      %4853 = vrot.lane.b32.xlu0 %v351, 12
      %v4854 = vpop.permute.xlu0 %4853
      %v4856 = vadd.f32 %v4845, %v4854
      %v4857 = vadd.f32 %v4846, %v4854
      %v4858 = vadd.f32 %v4847, %v4854
      %v4859 = vadd.f32 %v4848, %v4854
      %v4860 = vadd.f32 %v4849, %v4854
      %v4861 = vadd.f32 %v4850, %v4854
      %v4862 = vadd.f32 %v4851, %v4854
      %v4863 = vadd.f32 %v4852, %v4854
      %vm4864 = vcmp.ge.f32.partialorder %v4856, 0.0
      %vm4865 = vcmp.ge.f32.partialorder %v4857, 0.0
      %vm4866 = vcmp.ge.f32.partialorder %v4858, 0.0
      %vm4867 = vcmp.ge.f32.partialorder %v4859, 0.0
      %vm4868 = vcmp.ge.f32.partialorder %v4860, 0.0
      %vm4869 = vcmp.ge.f32.partialorder %v4861, 0.0
      %vm4870 = vcmp.ge.f32.partialorder %v4862, 0.0
      %vm4871 = vcmp.ge.f32.partialorder %v4863, 0.0
      %v4872 = vmul.f32 %v4856, 0.2
      %v4873 = vmul.f32 %v4857, 0.2
      %v4874 = vmul.f32 %v4858, 0.2
      %v4875 = vmul.f32 %v4859, 0.2
      %v4876 = vmul.f32 %v4860, 0.2
      %v4877 = vmul.f32 %v4861, 0.2
      %v4878 = vmul.f32 %v4862, 0.2
      %v4879 = vmul.f32 %v4863, 0.2
      %v4880 = vsel %vm4864, %v4856, %v4872
      %v4881 = vsel %vm4865, %v4857, %v4873
      %v4882 = vsel %vm4866, %v4858, %v4874
      %v4883 = vsel %vm4867, %v4859, %v4875
      %v4884 = vsel %vm4868, %v4860, %v4876
      %v4885 = vsel %vm4869, %v4861, %v4877
      %v4886 = vsel %vm4870, %v4862, %v4878
      %v4887 = vsel %vm4871, %v4863, %v4879
      %v4888 = vpack.c.bf16 %v4881, %v4880
      %v4889 = vpack.c.bf16 %v4883, %v4882
      %v4890 = vpack.c.bf16 %v4885, %v4884
      %v4891 = vpack.c.bf16 %v4887, %v4886
      %v4892 = vld [vmem:[%s3402] sm:$0x1]
      %v4893 = vld [vmem:[%s3402 + $0x1] sm:$0x1]
      %v4894 = vld [vmem:[%s3402 + $0x2] sm:$0x1]
      %v4895 = vld [vmem:[%s3402 + $0x3] sm:$0x1]
      %v4896 = vld [vmem:[%s3402 + $0x4] sm:$0x1]
      %v4897 = vld [vmem:[%s3402 + $0x5] sm:$0x1]
      %v4898 = vld [vmem:[%s3402 + $0x6] sm:$0x1]
      %v4899 = vld [vmem:[%s3402 + $0x7] sm:$0x1]
      %v4900 = vld [vmem:[%s3402 + $0x8] sm:$0x1]
      %v4901 = vld [vmem:[%s3402 + $0x9] sm:$0x1]
      %v4902 = vld [vmem:[%s3402 + $0xa] sm:$0x1]
      %v4903 = vld [vmem:[%s3402 + $0xb] sm:$0x1]
      %v4904 = vld [vmem:[%s3402 + $0xc] sm:$0x1]
      %v4905 = vld [vmem:[%s3402 + $0xd] sm:$0x1]
      %v4906 = vld [vmem:[%s3402 + $0xe] sm:$0x1]
      %v4907 = vld [vmem:[%s3402 + $0xf] sm:$0x1]
      %v4908 = vld [vmem:[%s3402 + $0x20] sm:$0x1]
      %v4909 = vld [vmem:[%s3402 + $0x21] sm:$0x1]
      %v4910 = vld [vmem:[%s3402 + $0x22] sm:$0x1]
      %v4911 = vld [vmem:[%s3402 + $0x23] sm:$0x1]
      %v4912 = vld [vmem:[%s3402 + $0x24] sm:$0x1]
      %v4913 = vld [vmem:[%s3402 + $0x25] sm:$0x1]
      %v4914 = vld [vmem:[%s3402 + $0x26] sm:$0x1]
      %v4915 = vld [vmem:[%s3402 + $0x27] sm:$0x1]
      %v4916 = vld [vmem:[%s3402 + $0x28] sm:$0x1]
      %v4917 = vld [vmem:[%s3402 + $0x29] sm:$0x1]
      %v4918 = vld [vmem:[%s3402 + $0x2a] sm:$0x1]
      %v4919 = vld [vmem:[%s3402 + $0x2b] sm:$0x1]
      %v4920 = vld [vmem:[%s3402 + $0x2c] sm:$0x1]
      %v4921 = vld [vmem:[%s3402 + $0x2d] sm:$0x1]
      %v4922 = vld [vmem:[%s3402 + $0x2e] sm:$0x1]
      %v4923 = vld [vmem:[%s3402 + $0x2f] sm:$0x1]
      %v4924 = vld [vmem:[%s3402 + $0x40] sm:$0x1]
      %v4925 = vld [vmem:[%s3402 + $0x41] sm:$0x1]
      %v4926 = vld [vmem:[%s3402 + $0x42] sm:$0x1]
      %v4927 = vld [vmem:[%s3402 + $0x43] sm:$0x1]
      %v4928 = vld [vmem:[%s3402 + $0x44] sm:$0x1]
      %v4929 = vld [vmem:[%s3402 + $0x45] sm:$0x1]
      %v4930 = vld [vmem:[%s3402 + $0x46] sm:$0x1]
      %v4931 = vld [vmem:[%s3402 + $0x47] sm:$0x1]
      %v4932 = vld [vmem:[%s3402 + $0x48] sm:$0x1]
      %v4933 = vld [vmem:[%s3402 + $0x49] sm:$0x1]
      %v4934 = vld [vmem:[%s3402 + $0x4a] sm:$0x1]
      %v4935 = vld [vmem:[%s3402 + $0x4b] sm:$0x1]
      %v4936 = vld [vmem:[%s3402 + $0x4c] sm:$0x1]
      %v4937 = vld [vmem:[%s3402 + $0x4d] sm:$0x1]
      %v4938 = vld [vmem:[%s3402 + $0x4e] sm:$0x1]
      %v4939 = vld [vmem:[%s3402 + $0x4f] sm:$0x1]
      %v4940 = vld [vmem:[%s3402 + $0x60] sm:$0x1]
      %v4941 = vld [vmem:[%s3402 + $0x61] sm:$0x1]
      %v4942 = vld [vmem:[%s3402 + $0x62] sm:$0x1]
      %v4943 = vld [vmem:[%s3402 + $0x63] sm:$0x1]
      %v4944 = vld [vmem:[%s3402 + $0x64] sm:$0x1]
      %v4945 = vld [vmem:[%s3402 + $0x65] sm:$0x1]
      %v4946 = vld [vmem:[%s3402 + $0x66] sm:$0x1]
      %v4947 = vld [vmem:[%s3402 + $0x67] sm:$0x1]
      %v4948 = vld [vmem:[%s3402 + $0x68] sm:$0x1]
      %v4949 = vld [vmem:[%s3402 + $0x69] sm:$0x1]
      %v4950 = vld [vmem:[%s3402 + $0x6a] sm:$0x1]
      %v4951 = vld [vmem:[%s3402 + $0x6b] sm:$0x1]
      %v4952 = vld [vmem:[%s3402 + $0x6c] sm:$0x1]
      %v4953 = vld [vmem:[%s3402 + $0x6d] sm:$0x1]
      %v4954 = vld [vmem:[%s3402 + $0x6e] sm:$0x1]
      %v4955 = vld [vmem:[%s3402 + $0x6f] sm:$0x1]
      %v5021 = vunpack.c.l.s4 1966171168
      %v5022 = vunpack.c.0.s8 %v5021
      %v5023 = vlaneseq
      %v5024 = vshrl.u32 %v5023, 7
      %v5025 = vsub.s32 %v5022, %v5024
      %v5026 = vrot.slane %v4892, %v5025
      %v5028 = vunpack.c.l.s4 1966171168
      %v5029 = vunpack.c.0.s8 %v5028
      %v5030 = vlaneseq
      %v5031 = vshrl.u32 %v5030, 7
      %v5032 = vsub.s32 %v5029, %v5031
      %v5033 = vrot.slane %v5026, %v5032
      %v5035 = vunpack.c.l.s4 1966171168
      %v5036 = vunpack.c.0.s8 %v5035
      %v5037 = vlaneseq
      %v5038 = vshrl.u32 %v5037, 7
      %v5039 = vsub.s32 %v5036, %v5038
      %v5040 = vrot.slane %v4893, %v5039
      %v5042 = vunpack.c.l.s4 1966171168
      %v5043 = vunpack.c.0.s8 %v5042
      %v5044 = vlaneseq
      %v5045 = vshrl.u32 %v5044, 7
      %v5046 = vsub.s32 %v5043, %v5045
      %v5047 = vrot.slane %v5040, %v5046
      %v5049 = vunpack.c.l.s4 1966171168
      %v5050 = vunpack.c.0.s8 %v5049
      %v5051 = vlaneseq
      %v5052 = vshrl.u32 %v5051, 7
      %v5053 = vsub.s32 %v5050, %v5052
      %v5054 = vrot.slane %v4894, %v5053
      %v5056 = vunpack.c.l.s4 1966171168
      %v5057 = vunpack.c.0.s8 %v5056
      %v5058 = vlaneseq
      %v5059 = vshrl.u32 %v5058, 7
      %v5060 = vsub.s32 %v5057, %v5059
      %v5061 = vrot.slane %v5054, %v5060
      %v5063 = vunpack.c.l.s4 1966171168
      %v5064 = vunpack.c.0.s8 %v5063
      %v5065 = vlaneseq
      %v5066 = vshrl.u32 %v5065, 7
      %v5067 = vsub.s32 %v5064, %v5066
      %v5068 = vrot.slane %v4895, %v5067
      %v5070 = vunpack.c.l.s4 1966171168
      %v5071 = vunpack.c.0.s8 %v5070
      %v5072 = vlaneseq
      %v5073 = vshrl.u32 %v5072, 7
      %v5074 = vsub.s32 %v5071, %v5073
      %v5075 = vrot.slane %v5068, %v5074
      %v5077 = vunpack.c.l.s4 1966171168
      %v5078 = vunpack.c.0.s8 %v5077
      %v5079 = vlaneseq
      %v5080 = vshrl.u32 %v5079, 7
      %v5081 = vsub.s32 %v5078, %v5080
      %v5082 = vrot.slane %v4896, %v5081
      %v5084 = vunpack.c.l.s4 1966171168
      %v5085 = vunpack.c.0.s8 %v5084
      %v5086 = vlaneseq
      %v5087 = vshrl.u32 %v5086, 7
      %v5088 = vsub.s32 %v5085, %v5087
      %v5089 = vrot.slane %v5082, %v5088
      %v5091 = vunpack.c.l.s4 1966171168
      %v5092 = vunpack.c.0.s8 %v5091
      %v5093 = vlaneseq
      %v5094 = vshrl.u32 %v5093, 7
      %v5095 = vsub.s32 %v5092, %v5094
      %v5096 = vrot.slane %v4897, %v5095
      %v5098 = vunpack.c.l.s4 1966171168
      %v5099 = vunpack.c.0.s8 %v5098
      %v5100 = vlaneseq
      %v5101 = vshrl.u32 %v5100, 7
      %v5102 = vsub.s32 %v5099, %v5101
      %v5103 = vrot.slane %v5096, %v5102
      %v5105 = vunpack.c.l.s4 1966171168
      %v5106 = vunpack.c.0.s8 %v5105
      %v5107 = vlaneseq
      %v5108 = vshrl.u32 %v5107, 7
      %v5109 = vsub.s32 %v5106, %v5108
      %v5110 = vrot.slane %v4898, %v5109
      %v5112 = vunpack.c.l.s4 1966171168
      %v5113 = vunpack.c.0.s8 %v5112
      %v5114 = vlaneseq
      %v5115 = vshrl.u32 %v5114, 7
      %v5116 = vsub.s32 %v5113, %v5115
      %v5117 = vrot.slane %v5110, %v5116
      %v5119 = vunpack.c.l.s4 1966171168
      %v5120 = vunpack.c.0.s8 %v5119
      %v5121 = vlaneseq
      %v5122 = vshrl.u32 %v5121, 7
      %v5123 = vsub.s32 %v5120, %v5122
      %v5124 = vrot.slane %v4899, %v5123
      %v5126 = vunpack.c.l.s4 1966171168
      %v5127 = vunpack.c.0.s8 %v5126
      %v5128 = vlaneseq
      %v5129 = vshrl.u32 %v5128, 7
      %v5130 = vsub.s32 %v5127, %v5129
      %v5131 = vrot.slane %v5124, %v5130
      %v5133 = vunpack.c.l.s4 1966171168
      %v5134 = vunpack.c.0.s8 %v5133
      %v5135 = vlaneseq
      %v5136 = vshrl.u32 %v5135, 7
      %v5137 = vsub.s32 %v5134, %v5136
      %v5138 = vrot.slane %v4900, %v5137
      %v5140 = vunpack.c.l.s4 1966171168
      %v5141 = vunpack.c.0.s8 %v5140
      %v5142 = vlaneseq
      %v5143 = vshrl.u32 %v5142, 7
      %v5144 = vsub.s32 %v5141, %v5143
      %v5145 = vrot.slane %v5138, %v5144
      %v5147 = vunpack.c.l.s4 1966171168
      %v5148 = vunpack.c.0.s8 %v5147
      %v5149 = vlaneseq
      %v5150 = vshrl.u32 %v5149, 7
      %v5151 = vsub.s32 %v5148, %v5150
      %v5152 = vrot.slane %v4901, %v5151
      %v5154 = vunpack.c.l.s4 1966171168
      %v5155 = vunpack.c.0.s8 %v5154
      %v5156 = vlaneseq
      %v5157 = vshrl.u32 %v5156, 7
      %v5158 = vsub.s32 %v5155, %v5157
      %v5159 = vrot.slane %v5152, %v5158
      %v5161 = vunpack.c.l.s4 1966171168
      %v5162 = vunpack.c.0.s8 %v5161
      %v5163 = vlaneseq
      %v5164 = vshrl.u32 %v5163, 7
      %v5165 = vsub.s32 %v5162, %v5164
      %v5166 = vrot.slane %v4902, %v5165
      %v5168 = vunpack.c.l.s4 1966171168
      %v5169 = vunpack.c.0.s8 %v5168
      %v5170 = vlaneseq
      %v5171 = vshrl.u32 %v5170, 7
      %v5172 = vsub.s32 %v5169, %v5171
      %v5173 = vrot.slane %v5166, %v5172
      %v5175 = vunpack.c.l.s4 1966171168
      %v5176 = vunpack.c.0.s8 %v5175
      %v5177 = vlaneseq
      %v5178 = vshrl.u32 %v5177, 7
      %v5179 = vsub.s32 %v5176, %v5178
      %v5180 = vrot.slane %v4903, %v5179
      %v5182 = vunpack.c.l.s4 1966171168
      %v5183 = vunpack.c.0.s8 %v5182
      %v5184 = vlaneseq
      %v5185 = vshrl.u32 %v5184, 7
      %v5186 = vsub.s32 %v5183, %v5185
      %v5187 = vrot.slane %v5180, %v5186
      %v5189 = vunpack.c.l.s4 1966171168
      %v5190 = vunpack.c.0.s8 %v5189
      %v5191 = vlaneseq
      %v5192 = vshrl.u32 %v5191, 7
      %v5193 = vsub.s32 %v5190, %v5192
      %v5194 = vrot.slane %v4904, %v5193
      %v5196 = vunpack.c.l.s4 1966171168
      %v5197 = vunpack.c.0.s8 %v5196
      %v5198 = vlaneseq
      %v5199 = vshrl.u32 %v5198, 7
      %v5200 = vsub.s32 %v5197, %v5199
      %v5201 = vrot.slane %v5194, %v5200
      %v5203 = vunpack.c.l.s4 1966171168
      %v5204 = vunpack.c.0.s8 %v5203
      %v5205 = vlaneseq
      %v5206 = vshrl.u32 %v5205, 7
      %v5207 = vsub.s32 %v5204, %v5206
      %v5208 = vrot.slane %v4905, %v5207
      %v5210 = vunpack.c.l.s4 1966171168
      %v5211 = vunpack.c.0.s8 %v5210
      %v5212 = vlaneseq
      %v5213 = vshrl.u32 %v5212, 7
      %v5214 = vsub.s32 %v5211, %v5213
      %v5215 = vrot.slane %v5208, %v5214
      %v5217 = vunpack.c.l.s4 1966171168
      %v5218 = vunpack.c.0.s8 %v5217
      %v5219 = vlaneseq
      %v5220 = vshrl.u32 %v5219, 7
      %v5221 = vsub.s32 %v5218, %v5220
      %v5222 = vrot.slane %v4906, %v5221
      %v5224 = vunpack.c.l.s4 1966171168
      %v5225 = vunpack.c.0.s8 %v5224
      %v5226 = vlaneseq
      %v5227 = vshrl.u32 %v5226, 7
      %v5228 = vsub.s32 %v5225, %v5227
      %v5229 = vrot.slane %v5222, %v5228
      %v5231 = vunpack.c.l.s4 1966171168
      %v5232 = vunpack.c.0.s8 %v5231
      %v5233 = vlaneseq
      %v5234 = vshrl.u32 %v5233, 7
      %v5235 = vsub.s32 %v5232, %v5234
      %v5236 = vrot.slane %v4907, %v5235
      %v5238 = vunpack.c.l.s4 1966171168
      %v5239 = vunpack.c.0.s8 %v5238
      %v5240 = vlaneseq
      %v5241 = vshrl.u32 %v5240, 7
      %v5242 = vsub.s32 %v5239, %v5241
      %v5243 = vrot.slane %v5236, %v5242
      %v5245 = vunpack.c.l.s4 1966171168
      %v5246 = vunpack.c.0.s8 %v5245
      %v5247 = vlaneseq
      %v5248 = vshrl.u32 %v5247, 7
      %v5249 = vsub.s32 %v5246, %v5248
      %v5250 = vrot.slane %v4908, %v5249
      %v5252 = vunpack.c.l.s4 1966171168
      %v5253 = vunpack.c.0.s8 %v5252
      %v5254 = vlaneseq
      %v5255 = vshrl.u32 %v5254, 7
      %v5256 = vsub.s32 %v5253, %v5255
      %v5257 = vrot.slane %v5250, %v5256
      %v5259 = vunpack.c.l.s4 1966171168
      %v5260 = vunpack.c.0.s8 %v5259
      %v5261 = vlaneseq
      %v5262 = vshrl.u32 %v5261, 7
      %v5263 = vsub.s32 %v5260, %v5262
      %v5264 = vrot.slane %v4909, %v5263
      %v5266 = vunpack.c.l.s4 1966171168
      %v5267 = vunpack.c.0.s8 %v5266
      %v5268 = vlaneseq
      %v5269 = vshrl.u32 %v5268, 7
      %v5270 = vsub.s32 %v5267, %v5269
      %v5271 = vrot.slane %v5264, %v5270
      %v5273 = vunpack.c.l.s4 1966171168
      %v5274 = vunpack.c.0.s8 %v5273
      %v5275 = vlaneseq
      %v5276 = vshrl.u32 %v5275, 7
      %v5277 = vsub.s32 %v5274, %v5276
      %v5278 = vrot.slane %v4910, %v5277
      %v5280 = vunpack.c.l.s4 1966171168
      %v5281 = vunpack.c.0.s8 %v5280
      %v5282 = vlaneseq
      %v5283 = vshrl.u32 %v5282, 7
      %v5284 = vsub.s32 %v5281, %v5283
      %v5285 = vrot.slane %v5278, %v5284
      %v5287 = vunpack.c.l.s4 1966171168
      %v5288 = vunpack.c.0.s8 %v5287
      %v5289 = vlaneseq
      %v5290 = vshrl.u32 %v5289, 7
      %v5291 = vsub.s32 %v5288, %v5290
      %v5292 = vrot.slane %v4911, %v5291
      %v5294 = vunpack.c.l.s4 1966171168
      %v5295 = vunpack.c.0.s8 %v5294
      %v5296 = vlaneseq
      %v5297 = vshrl.u32 %v5296, 7
      %v5298 = vsub.s32 %v5295, %v5297
      %v5299 = vrot.slane %v5292, %v5298
      %v5301 = vunpack.c.l.s4 1966171168
      %v5302 = vunpack.c.0.s8 %v5301
      %v5303 = vlaneseq
      %v5304 = vshrl.u32 %v5303, 7
      %v5305 = vsub.s32 %v5302, %v5304
      %v5306 = vrot.slane %v4912, %v5305
      %v5308 = vunpack.c.l.s4 1966171168
      %v5309 = vunpack.c.0.s8 %v5308
      %v5310 = vlaneseq
      %v5311 = vshrl.u32 %v5310, 7
      %v5312 = vsub.s32 %v5309, %v5311
      %v5313 = vrot.slane %v5306, %v5312
      %v5315 = vunpack.c.l.s4 1966171168
      %v5316 = vunpack.c.0.s8 %v5315
      %v5317 = vlaneseq
      %v5318 = vshrl.u32 %v5317, 7
      %v5319 = vsub.s32 %v5316, %v5318
      %v5320 = vrot.slane %v4913, %v5319
      %v5322 = vunpack.c.l.s4 1966171168
      %v5323 = vunpack.c.0.s8 %v5322
      %v5324 = vlaneseq
      %v5325 = vshrl.u32 %v5324, 7
      %v5326 = vsub.s32 %v5323, %v5325
      %v5327 = vrot.slane %v5320, %v5326
      %v5329 = vunpack.c.l.s4 1966171168
      %v5330 = vunpack.c.0.s8 %v5329
      %v5331 = vlaneseq
      %v5332 = vshrl.u32 %v5331, 7
      %v5333 = vsub.s32 %v5330, %v5332
      %v5334 = vrot.slane %v4914, %v5333
      %v5336 = vunpack.c.l.s4 1966171168
      %v5337 = vunpack.c.0.s8 %v5336
      %v5338 = vlaneseq
      %v5339 = vshrl.u32 %v5338, 7
      %v5340 = vsub.s32 %v5337, %v5339
      %v5341 = vrot.slane %v5334, %v5340
      %v5343 = vunpack.c.l.s4 1966171168
      %v5344 = vunpack.c.0.s8 %v5343
      %v5345 = vlaneseq
      %v5346 = vshrl.u32 %v5345, 7
      %v5347 = vsub.s32 %v5344, %v5346
      %v5348 = vrot.slane %v4915, %v5347
      %v5350 = vunpack.c.l.s4 1966171168
      %v5351 = vunpack.c.0.s8 %v5350
      %v5352 = vlaneseq
      %v5353 = vshrl.u32 %v5352, 7
      %v5354 = vsub.s32 %v5351, %v5353
      %v5355 = vrot.slane %v5348, %v5354
      %v5357 = vunpack.c.l.s4 1966171168
      %v5358 = vunpack.c.0.s8 %v5357
      %v5359 = vlaneseq
      %v5360 = vshrl.u32 %v5359, 7
      %v5361 = vsub.s32 %v5358, %v5360
      %v5362 = vrot.slane %v4916, %v5361
      %v5364 = vunpack.c.l.s4 1966171168
      %v5365 = vunpack.c.0.s8 %v5364
      %v5366 = vlaneseq
      %v5367 = vshrl.u32 %v5366, 7
      %v5368 = vsub.s32 %v5365, %v5367
      %v5369 = vrot.slane %v5362, %v5368
      %v5371 = vunpack.c.l.s4 1966171168
      %v5372 = vunpack.c.0.s8 %v5371
      %v5373 = vlaneseq
      %v5374 = vshrl.u32 %v5373, 7
      %v5375 = vsub.s32 %v5372, %v5374
      %v5376 = vrot.slane %v4917, %v5375
      %v5378 = vunpack.c.l.s4 1966171168
      %v5379 = vunpack.c.0.s8 %v5378
      %v5380 = vlaneseq
      %v5381 = vshrl.u32 %v5380, 7
      %v5382 = vsub.s32 %v5379, %v5381
      %v5383 = vrot.slane %v5376, %v5382
      %v5385 = vunpack.c.l.s4 1966171168
      %v5386 = vunpack.c.0.s8 %v5385
      %v5387 = vlaneseq
      %v5388 = vshrl.u32 %v5387, 7
      %v5389 = vsub.s32 %v5386, %v5388
      %v5390 = vrot.slane %v4918, %v5389
      %v5392 = vunpack.c.l.s4 1966171168
      %v5393 = vunpack.c.0.s8 %v5392
      %v5394 = vlaneseq
      %v5395 = vshrl.u32 %v5394, 7
      %v5396 = vsub.s32 %v5393, %v5395
      %v5397 = vrot.slane %v5390, %v5396
      %v5399 = vunpack.c.l.s4 1966171168
      %v5400 = vunpack.c.0.s8 %v5399
      %v5401 = vlaneseq
      %v5402 = vshrl.u32 %v5401, 7
      %v5403 = vsub.s32 %v5400, %v5402
      %v5404 = vrot.slane %v4919, %v5403
      %v5406 = vunpack.c.l.s4 1966171168
      %v5407 = vunpack.c.0.s8 %v5406
      %v5408 = vlaneseq
      %v5409 = vshrl.u32 %v5408, 7
      %v5410 = vsub.s32 %v5407, %v5409
      %v5411 = vrot.slane %v5404, %v5410
      %v5413 = vunpack.c.l.s4 1966171168
      %v5414 = vunpack.c.0.s8 %v5413
      %v5415 = vlaneseq
      %v5416 = vshrl.u32 %v5415, 7
      %v5417 = vsub.s32 %v5414, %v5416
      %v5418 = vrot.slane %v4920, %v5417
      %v5420 = vunpack.c.l.s4 1966171168
      %v5421 = vunpack.c.0.s8 %v5420
      %v5422 = vlaneseq
      %v5423 = vshrl.u32 %v5422, 7
      %v5424 = vsub.s32 %v5421, %v5423
      %v5425 = vrot.slane %v5418, %v5424
      %v5427 = vunpack.c.l.s4 1966171168
      %v5428 = vunpack.c.0.s8 %v5427
      %v5429 = vlaneseq
      %v5430 = vshrl.u32 %v5429, 7
      %v5431 = vsub.s32 %v5428, %v5430
      %v5432 = vrot.slane %v4921, %v5431
      %v5434 = vunpack.c.l.s4 1966171168
      %v5435 = vunpack.c.0.s8 %v5434
      %v5436 = vlaneseq
      %v5437 = vshrl.u32 %v5436, 7
      %v5438 = vsub.s32 %v5435, %v5437
      %v5439 = vrot.slane %v5432, %v5438
      %v5441 = vunpack.c.l.s4 1966171168
      %v5442 = vunpack.c.0.s8 %v5441
      %v5443 = vlaneseq
      %v5444 = vshrl.u32 %v5443, 7
      %v5445 = vsub.s32 %v5442, %v5444
      %v5446 = vrot.slane %v4922, %v5445
      %v5448 = vunpack.c.l.s4 1966171168
      %v5449 = vunpack.c.0.s8 %v5448
      %v5450 = vlaneseq
      %v5451 = vshrl.u32 %v5450, 7
      %v5452 = vsub.s32 %v5449, %v5451
      %v5453 = vrot.slane %v5446, %v5452
      %v5455 = vunpack.c.l.s4 1966171168
      %v5456 = vunpack.c.0.s8 %v5455
      %v5457 = vlaneseq
      %v5458 = vshrl.u32 %v5457, 7
      %v5459 = vsub.s32 %v5456, %v5458
      %v5460 = vrot.slane %v4923, %v5459
      %v5462 = vunpack.c.l.s4 1966171168
      %v5463 = vunpack.c.0.s8 %v5462
      %v5464 = vlaneseq
      %v5465 = vshrl.u32 %v5464, 7
      %v5466 = vsub.s32 %v5463, %v5465
      %v5467 = vrot.slane %v5460, %v5466
      %v5469 = vunpack.c.l.s4 1966171168
      %v5470 = vunpack.c.0.s8 %v5469
      %v5471 = vlaneseq
      %v5472 = vshrl.u32 %v5471, 7
      %v5473 = vsub.s32 %v5470, %v5472
      %v5474 = vrot.slane %v4924, %v5473
      %v5476 = vunpack.c.l.s4 1966171168
      %v5477 = vunpack.c.0.s8 %v5476
      %v5478 = vlaneseq
      %v5479 = vshrl.u32 %v5478, 7
      %v5480 = vsub.s32 %v5477, %v5479
      %v5481 = vrot.slane %v5474, %v5480
      %v5483 = vunpack.c.l.s4 1966171168
      %v5484 = vunpack.c.0.s8 %v5483
      %v5485 = vlaneseq
      %v5486 = vshrl.u32 %v5485, 7
      %v5487 = vsub.s32 %v5484, %v5486
      %v5488 = vrot.slane %v4925, %v5487
      %v5490 = vunpack.c.l.s4 1966171168
      %v5491 = vunpack.c.0.s8 %v5490
      %v5492 = vlaneseq
      %v5493 = vshrl.u32 %v5492, 7
      %v5494 = vsub.s32 %v5491, %v5493
      %v5495 = vrot.slane %v5488, %v5494
      %v5497 = vunpack.c.l.s4 1966171168
      %v5498 = vunpack.c.0.s8 %v5497
      %v5499 = vlaneseq
      %v5500 = vshrl.u32 %v5499, 7
      %v5501 = vsub.s32 %v5498, %v5500
      %v5502 = vrot.slane %v4926, %v5501
      %v5504 = vunpack.c.l.s4 1966171168
      %v5505 = vunpack.c.0.s8 %v5504
      %v5506 = vlaneseq
      %v5507 = vshrl.u32 %v5506, 7
      %v5508 = vsub.s32 %v5505, %v5507
      %v5509 = vrot.slane %v5502, %v5508
      %v5511 = vunpack.c.l.s4 1966171168
      %v5512 = vunpack.c.0.s8 %v5511
      %v5513 = vlaneseq
      %v5514 = vshrl.u32 %v5513, 7
      %v5515 = vsub.s32 %v5512, %v5514
      %v5516 = vrot.slane %v4927, %v5515
      %v5518 = vunpack.c.l.s4 1966171168
      %v5519 = vunpack.c.0.s8 %v5518
      %v5520 = vlaneseq
      %v5521 = vshrl.u32 %v5520, 7
      %v5522 = vsub.s32 %v5519, %v5521
      %v5523 = vrot.slane %v5516, %v5522
      %v5525 = vunpack.c.l.s4 1966171168
      %v5526 = vunpack.c.0.s8 %v5525
      %v5527 = vlaneseq
      %v5528 = vshrl.u32 %v5527, 7
      %v5529 = vsub.s32 %v5526, %v5528
      %v5530 = vrot.slane %v4928, %v5529
      %v5532 = vunpack.c.l.s4 1966171168
      %v5533 = vunpack.c.0.s8 %v5532
      %v5534 = vlaneseq
      %v5535 = vshrl.u32 %v5534, 7
      %v5536 = vsub.s32 %v5533, %v5535
      %v5537 = vrot.slane %v5530, %v5536
      %v5539 = vunpack.c.l.s4 1966171168
      %v5540 = vunpack.c.0.s8 %v5539
      %v5541 = vlaneseq
      %v5542 = vshrl.u32 %v5541, 7
      %v5543 = vsub.s32 %v5540, %v5542
      %v5544 = vrot.slane %v4929, %v5543
      %v5546 = vunpack.c.l.s4 1966171168
      %v5547 = vunpack.c.0.s8 %v5546
      %v5548 = vlaneseq
      %v5549 = vshrl.u32 %v5548, 7
      %v5550 = vsub.s32 %v5547, %v5549
      %v5551 = vrot.slane %v5544, %v5550
      %v5553 = vunpack.c.l.s4 1966171168
      %v5554 = vunpack.c.0.s8 %v5553
      %v5555 = vlaneseq
      %v5556 = vshrl.u32 %v5555, 7
      %v5557 = vsub.s32 %v5554, %v5556
      %v5558 = vrot.slane %v4930, %v5557
      %v5560 = vunpack.c.l.s4 1966171168
      %v5561 = vunpack.c.0.s8 %v5560
      %v5562 = vlaneseq
      %v5563 = vshrl.u32 %v5562, 7
      %v5564 = vsub.s32 %v5561, %v5563
      %v5565 = vrot.slane %v5558, %v5564
      %v5567 = vunpack.c.l.s4 1966171168
      %v5568 = vunpack.c.0.s8 %v5567
      %v5569 = vlaneseq
      %v5570 = vshrl.u32 %v5569, 7
      %v5571 = vsub.s32 %v5568, %v5570
      %v5572 = vrot.slane %v4931, %v5571
      %v5574 = vunpack.c.l.s4 1966171168
      %v5575 = vunpack.c.0.s8 %v5574
      %v5576 = vlaneseq
      %v5577 = vshrl.u32 %v5576, 7
      %v5578 = vsub.s32 %v5575, %v5577
      %v5579 = vrot.slane %v5572, %v5578
      %v5581 = vunpack.c.l.s4 1966171168
      %v5582 = vunpack.c.0.s8 %v5581
      %v5583 = vlaneseq
      %v5584 = vshrl.u32 %v5583, 7
      %v5585 = vsub.s32 %v5582, %v5584
      %v5586 = vrot.slane %v4932, %v5585
      %v5588 = vunpack.c.l.s4 1966171168
      %v5589 = vunpack.c.0.s8 %v5588
      %v5590 = vlaneseq
      %v5591 = vshrl.u32 %v5590, 7
      %v5592 = vsub.s32 %v5589, %v5591
      %v5593 = vrot.slane %v5586, %v5592
      %v5595 = vunpack.c.l.s4 1966171168
      %v5596 = vunpack.c.0.s8 %v5595
      %v5597 = vlaneseq
      %v5598 = vshrl.u32 %v5597, 7
      %v5599 = vsub.s32 %v5596, %v5598
      %v5600 = vrot.slane %v4933, %v5599
      %v5602 = vunpack.c.l.s4 1966171168
      %v5603 = vunpack.c.0.s8 %v5602
      %v5604 = vlaneseq
      %v5605 = vshrl.u32 %v5604, 7
      %v5606 = vsub.s32 %v5603, %v5605
      %v5607 = vrot.slane %v5600, %v5606
      %v5609 = vunpack.c.l.s4 1966171168
      %v5610 = vunpack.c.0.s8 %v5609
      %v5611 = vlaneseq
      %v5612 = vshrl.u32 %v5611, 7
      %v5613 = vsub.s32 %v5610, %v5612
      %v5614 = vrot.slane %v4934, %v5613
      %v5616 = vunpack.c.l.s4 1966171168
      %v5617 = vunpack.c.0.s8 %v5616
      %v5618 = vlaneseq
      %v5619 = vshrl.u32 %v5618, 7
      %v5620 = vsub.s32 %v5617, %v5619
      %v5621 = vrot.slane %v5614, %v5620
      %v5623 = vunpack.c.l.s4 1966171168
      %v5624 = vunpack.c.0.s8 %v5623
      %v5625 = vlaneseq
      %v5626 = vshrl.u32 %v5625, 7
      %v5627 = vsub.s32 %v5624, %v5626
      %v5628 = vrot.slane %v4935, %v5627
      %v5630 = vunpack.c.l.s4 1966171168
      %v5631 = vunpack.c.0.s8 %v5630
      %v5632 = vlaneseq
      %v5633 = vshrl.u32 %v5632, 7
      %v5634 = vsub.s32 %v5631, %v5633
      %v5635 = vrot.slane %v5628, %v5634
      %v5637 = vunpack.c.l.s4 1966171168
      %v5638 = vunpack.c.0.s8 %v5637
      %v5639 = vlaneseq
      %v5640 = vshrl.u32 %v5639, 7
      %v5641 = vsub.s32 %v5638, %v5640
      %v5642 = vrot.slane %v4936, %v5641
      %v5644 = vunpack.c.l.s4 1966171168
      %v5645 = vunpack.c.0.s8 %v5644
      %v5646 = vlaneseq
      %v5647 = vshrl.u32 %v5646, 7
      %v5648 = vsub.s32 %v5645, %v5647
      %v5649 = vrot.slane %v5642, %v5648
      %v5651 = vunpack.c.l.s4 1966171168
      %v5652 = vunpack.c.0.s8 %v5651
      %v5653 = vlaneseq
      %v5654 = vshrl.u32 %v5653, 7
      %v5655 = vsub.s32 %v5652, %v5654
      %v5656 = vrot.slane %v4937, %v5655
      %v5658 = vunpack.c.l.s4 1966171168
      %v5659 = vunpack.c.0.s8 %v5658
      %v5660 = vlaneseq
      %v5661 = vshrl.u32 %v5660, 7
      %v5662 = vsub.s32 %v5659, %v5661
      %v5663 = vrot.slane %v5656, %v5662
      %v5665 = vunpack.c.l.s4 1966171168
      %v5666 = vunpack.c.0.s8 %v5665
      %v5667 = vlaneseq
      %v5668 = vshrl.u32 %v5667, 7
      %v5669 = vsub.s32 %v5666, %v5668
      %v5670 = vrot.slane %v4938, %v5669
      %v5672 = vunpack.c.l.s4 1966171168
      %v5673 = vunpack.c.0.s8 %v5672
      %v5674 = vlaneseq
      %v5675 = vshrl.u32 %v5674, 7
      %v5676 = vsub.s32 %v5673, %v5675
      %v5677 = vrot.slane %v5670, %v5676
      %v5679 = vunpack.c.l.s4 1966171168
      %v5680 = vunpack.c.0.s8 %v5679
      %v5681 = vlaneseq
      %v5682 = vshrl.u32 %v5681, 7
      %v5683 = vsub.s32 %v5680, %v5682
      %v5684 = vrot.slane %v4939, %v5683
      %v5686 = vunpack.c.l.s4 1966171168
      %v5687 = vunpack.c.0.s8 %v5686
      %v5688 = vlaneseq
      %v5689 = vshrl.u32 %v5688, 7
      %v5690 = vsub.s32 %v5687, %v5689
      %v5691 = vrot.slane %v5684, %v5690
      %v5693 = vunpack.c.l.s4 1966171168
      %v5694 = vunpack.c.0.s8 %v5693
      %v5695 = vlaneseq
      %v5696 = vshrl.u32 %v5695, 7
      %v5697 = vsub.s32 %v5694, %v5696
      %v5698 = vrot.slane %v4940, %v5697
      %v5700 = vunpack.c.l.s4 1966171168
      %v5701 = vunpack.c.0.s8 %v5700
      %v5702 = vlaneseq
      %v5703 = vshrl.u32 %v5702, 7
      %v5704 = vsub.s32 %v5701, %v5703
      %v5705 = vrot.slane %v5698, %v5704
      %v5707 = vunpack.c.l.s4 1966171168
      %v5708 = vunpack.c.0.s8 %v5707
      %v5709 = vlaneseq
      %v5710 = vshrl.u32 %v5709, 7
      %v5711 = vsub.s32 %v5708, %v5710
      %v5712 = vrot.slane %v4941, %v5711
      %v5714 = vunpack.c.l.s4 1966171168
      %v5715 = vunpack.c.0.s8 %v5714
      %v5716 = vlaneseq
      %v5717 = vshrl.u32 %v5716, 7
      %v5718 = vsub.s32 %v5715, %v5717
      %v5719 = vrot.slane %v5712, %v5718
      %v5721 = vunpack.c.l.s4 1966171168
      %v5722 = vunpack.c.0.s8 %v5721
      %v5723 = vlaneseq
      %v5724 = vshrl.u32 %v5723, 7
      %v5725 = vsub.s32 %v5722, %v5724
      %v5726 = vrot.slane %v4942, %v5725
      %v5728 = vunpack.c.l.s4 1966171168
      %v5729 = vunpack.c.0.s8 %v5728
      %v5730 = vlaneseq
      %v5731 = vshrl.u32 %v5730, 7
      %v5732 = vsub.s32 %v5729, %v5731
      %v5733 = vrot.slane %v5726, %v5732
      %v5735 = vunpack.c.l.s4 1966171168
      %v5736 = vunpack.c.0.s8 %v5735
      %v5737 = vlaneseq
      %v5738 = vshrl.u32 %v5737, 7
      %v5739 = vsub.s32 %v5736, %v5738
      %v5740 = vrot.slane %v4943, %v5739
      %v5742 = vunpack.c.l.s4 1966171168
      %v5743 = vunpack.c.0.s8 %v5742
      %v5744 = vlaneseq
      %v5745 = vshrl.u32 %v5744, 7
      %v5746 = vsub.s32 %v5743, %v5745
      %v5747 = vrot.slane %v5740, %v5746
      %v5749 = vunpack.c.l.s4 1966171168
      %v5750 = vunpack.c.0.s8 %v5749
      %v5751 = vlaneseq
      %v5752 = vshrl.u32 %v5751, 7
      %v5753 = vsub.s32 %v5750, %v5752
      %v5754 = vrot.slane %v4944, %v5753
      %v5756 = vunpack.c.l.s4 1966171168
      %v5757 = vunpack.c.0.s8 %v5756
      %v5758 = vlaneseq
      %v5759 = vshrl.u32 %v5758, 7
      %v5760 = vsub.s32 %v5757, %v5759
      %v5761 = vrot.slane %v5754, %v5760
      %v5763 = vunpack.c.l.s4 1966171168
      %v5764 = vunpack.c.0.s8 %v5763
      %v5765 = vlaneseq
      %v5766 = vshrl.u32 %v5765, 7
      %v5767 = vsub.s32 %v5764, %v5766
      %v5768 = vrot.slane %v4945, %v5767
      %v5770 = vunpack.c.l.s4 1966171168
      %v5771 = vunpack.c.0.s8 %v5770
      %v5772 = vlaneseq
      %v5773 = vshrl.u32 %v5772, 7
      %v5774 = vsub.s32 %v5771, %v5773
      %v5775 = vrot.slane %v5768, %v5774
      %v5777 = vunpack.c.l.s4 1966171168
      %v5778 = vunpack.c.0.s8 %v5777
      %v5779 = vlaneseq
      %v5780 = vshrl.u32 %v5779, 7
      %v5781 = vsub.s32 %v5778, %v5780
      %v5782 = vrot.slane %v4946, %v5781
      %v5784 = vunpack.c.l.s4 1966171168
      %v5785 = vunpack.c.0.s8 %v5784
      %v5786 = vlaneseq
      %v5787 = vshrl.u32 %v5786, 7
      %v5788 = vsub.s32 %v5785, %v5787
      %v5789 = vrot.slane %v5782, %v5788
      %v5791 = vunpack.c.l.s4 1966171168
      %v5792 = vunpack.c.0.s8 %v5791
      %v5793 = vlaneseq
      %v5794 = vshrl.u32 %v5793, 7
      %v5795 = vsub.s32 %v5792, %v5794
      %v5796 = vrot.slane %v4947, %v5795
      %v5798 = vunpack.c.l.s4 1966171168
      %v5799 = vunpack.c.0.s8 %v5798
      %v5800 = vlaneseq
      %v5801 = vshrl.u32 %v5800, 7
      %v5802 = vsub.s32 %v5799, %v5801
      %v5803 = vrot.slane %v5796, %v5802
      %v5805 = vunpack.c.l.s4 1966171168
      %v5806 = vunpack.c.0.s8 %v5805
      %v5807 = vlaneseq
      %v5808 = vshrl.u32 %v5807, 7
      %v5809 = vsub.s32 %v5806, %v5808
      %v5810 = vrot.slane %v4948, %v5809
      %v5812 = vunpack.c.l.s4 1966171168
      %v5813 = vunpack.c.0.s8 %v5812
      %v5814 = vlaneseq
      %v5815 = vshrl.u32 %v5814, 7
      %v5816 = vsub.s32 %v5813, %v5815
      %v5817 = vrot.slane %v5810, %v5816
      %v5819 = vunpack.c.l.s4 1966171168
      %v5820 = vunpack.c.0.s8 %v5819
      %v5821 = vlaneseq
      %v5822 = vshrl.u32 %v5821, 7
      %v5823 = vsub.s32 %v5820, %v5822
      %v5824 = vrot.slane %v4949, %v5823
      %v5826 = vunpack.c.l.s4 1966171168
      %v5827 = vunpack.c.0.s8 %v5826
      %v5828 = vlaneseq
      %v5829 = vshrl.u32 %v5828, 7
      %v5830 = vsub.s32 %v5827, %v5829
      %v5831 = vrot.slane %v5824, %v5830
      %v5833 = vunpack.c.l.s4 1966171168
      %v5834 = vunpack.c.0.s8 %v5833
      %v5835 = vlaneseq
      %v5836 = vshrl.u32 %v5835, 7
      %v5837 = vsub.s32 %v5834, %v5836
      %v5838 = vrot.slane %v4950, %v5837
      %v5840 = vunpack.c.l.s4 1966171168
      %v5841 = vunpack.c.0.s8 %v5840
      %v5842 = vlaneseq
      %v5843 = vshrl.u32 %v5842, 7
      %v5844 = vsub.s32 %v5841, %v5843
      %v5845 = vrot.slane %v5838, %v5844
      %v5847 = vunpack.c.l.s4 1966171168
      %v5848 = vunpack.c.0.s8 %v5847
      %v5849 = vlaneseq
      %v5850 = vshrl.u32 %v5849, 7
      %v5851 = vsub.s32 %v5848, %v5850
      %v5852 = vrot.slane %v4951, %v5851
      %v5854 = vunpack.c.l.s4 1966171168
      %v5855 = vunpack.c.0.s8 %v5854
      %v5856 = vlaneseq
      %v5857 = vshrl.u32 %v5856, 7
      %v5858 = vsub.s32 %v5855, %v5857
      %v5859 = vrot.slane %v5852, %v5858
      %v5861 = vunpack.c.l.s4 1966171168
      %v5862 = vunpack.c.0.s8 %v5861
      %v5863 = vlaneseq
      %v5864 = vshrl.u32 %v5863, 7
      %v5865 = vsub.s32 %v5862, %v5864
      %v5866 = vrot.slane %v4952, %v5865
      %v5868 = vunpack.c.l.s4 1966171168
      %v5869 = vunpack.c.0.s8 %v5868
      %v5870 = vlaneseq
      %v5871 = vshrl.u32 %v5870, 7
      %v5872 = vsub.s32 %v5869, %v5871
      %v5873 = vrot.slane %v5866, %v5872
      %v5875 = vunpack.c.l.s4 1966171168
      %v5876 = vunpack.c.0.s8 %v5875
      %v5877 = vlaneseq
      %v5878 = vshrl.u32 %v5877, 7
      %v5879 = vsub.s32 %v5876, %v5878
      %v5880 = vrot.slane %v4953, %v5879
      %v5882 = vunpack.c.l.s4 1966171168
      %v5883 = vunpack.c.0.s8 %v5882
      %v5884 = vlaneseq
      %v5885 = vshrl.u32 %v5884, 7
      %v5886 = vsub.s32 %v5883, %v5885
      %v5887 = vrot.slane %v5880, %v5886
      %v5889 = vunpack.c.l.s4 1966171168
      %v5890 = vunpack.c.0.s8 %v5889
      %v5891 = vlaneseq
      %v5892 = vshrl.u32 %v5891, 7
      %v5893 = vsub.s32 %v5890, %v5892
      %v5894 = vrot.slane %v4954, %v5893
      %v5896 = vunpack.c.l.s4 1966171168
      %v5897 = vunpack.c.0.s8 %v5896
      %v5898 = vlaneseq
      %v5899 = vshrl.u32 %v5898, 7
      %v5900 = vsub.s32 %v5897, %v5899
      %v5901 = vrot.slane %v5894, %v5900
      %v5903 = vunpack.c.l.s4 1966171168
      %v5904 = vunpack.c.0.s8 %v5903
      %v5905 = vlaneseq
      %v5906 = vshrl.u32 %v5905, 7
      %v5907 = vsub.s32 %v5904, %v5906
      %v5908 = vrot.slane %v4955, %v5907
      %v5910 = vunpack.c.l.s4 1966171168
      %v5911 = vunpack.c.0.s8 %v5910
      %v5912 = vlaneseq
      %v5913 = vshrl.u32 %v5912, 7
      %v5914 = vsub.s32 %v5911, %v5913
      %v5915 = vrot.slane %v5908, %v5914
      %v5916 = vunpack.c.l.b16 %v5033
      %v5917 = vunpack.c.l.b16 %v5047
      %v5918 = vunpack.c.l.b16 %v5061
      %v5919 = vunpack.c.l.b16 %v5075
      %v5920 = vunpack.c.l.b16 %v5089
      %v5921 = vunpack.c.l.b16 %v5103
      %v5922 = vunpack.c.l.b16 %v5117
      %v5923 = vunpack.c.l.b16 %v5131
      %v5924 = vunpack.c.l.b16 %v5145
      %v5925 = vunpack.c.l.b16 %v5159
      %v5926 = vunpack.c.l.b16 %v5173
      %v5927 = vunpack.c.l.b16 %v5187
      %v5928 = vunpack.c.l.b16 %v5201
      %v5929 = vunpack.c.l.b16 %v5215
      %v5930 = vunpack.c.l.b16 %v5229
      %v5931 = vunpack.c.l.b16 %v5243
      %v5932 = vunpack.c.l.b16 %v5257
      %v5933 = vunpack.c.l.b16 %v5271
      %v5934 = vunpack.c.l.b16 %v5285
      %v5935 = vunpack.c.l.b16 %v5299
      %v5936 = vunpack.c.l.b16 %v5313
      %v5937 = vunpack.c.l.b16 %v5327
      %v5938 = vunpack.c.l.b16 %v5341
      %v5939 = vunpack.c.l.b16 %v5355
      %v5940 = vunpack.c.l.b16 %v5369
      %v5941 = vunpack.c.l.b16 %v5383
      %v5942 = vunpack.c.l.b16 %v5397
      %v5943 = vunpack.c.l.b16 %v5411
      %v5944 = vunpack.c.l.b16 %v5425
      %v5945 = vunpack.c.l.b16 %v5439
      %v5946 = vunpack.c.l.b16 %v5453
      %v5947 = vunpack.c.l.b16 %v5467
      %v5948 = vunpack.c.l.b16 %v5481
      %v5949 = vunpack.c.l.b16 %v5495
      %v5950 = vunpack.c.l.b16 %v5509
      %v5951 = vunpack.c.l.b16 %v5523
      %v5952 = vunpack.c.l.b16 %v5537
      %v5953 = vunpack.c.l.b16 %v5551
      %v5954 = vunpack.c.l.b16 %v5565
      %v5955 = vunpack.c.l.b16 %v5579
      %v5956 = vunpack.c.l.b16 %v5593
      %v5957 = vunpack.c.l.b16 %v5607
      %v5958 = vunpack.c.l.b16 %v5621
      %v5959 = vunpack.c.l.b16 %v5635
      %v5960 = vunpack.c.l.b16 %v5649
      %v5961 = vunpack.c.l.b16 %v5663
      %v5962 = vunpack.c.l.b16 %v5677
      %v5963 = vunpack.c.l.b16 %v5691
      %v5964 = vunpack.c.l.b16 %v5705
      %v5965 = vunpack.c.l.b16 %v5719
      %v5966 = vunpack.c.l.b16 %v5733
      %v5967 = vunpack.c.l.b16 %v5747
      %v5968 = vunpack.c.l.b16 %v5761
      %v5969 = vunpack.c.l.b16 %v5775
      %v5970 = vunpack.c.l.b16 %v5789
      %v5971 = vunpack.c.l.b16 %v5803
      %v5972 = vunpack.c.l.b16 %v5817
      %v5973 = vunpack.c.l.b16 %v5831
      %v5974 = vunpack.c.l.b16 %v5845
      %v5975 = vunpack.c.l.b16 %v5859
      %v5976 = vunpack.c.l.b16 %v5873
      %v5977 = vunpack.c.l.b16 %v5887
      %v5978 = vunpack.c.l.b16 %v5901
      %v5979 = vunpack.c.l.b16 %v5915
      %v5980 = vrot.slane %v5916, 1
      %v5981 = vsel %vm1478, %v5917, %v5980
      %v5982 = vrot.slane %v5918, 7
      %v5983 = vsel %vm1481, %v5982, %v5981
      %v5984 = vrot.slane %v5919, 6
      %v5985 = vsel %vm1484, %v5984, %v5983
      %v5986 = vrot.slane %v5920, 5
      %v5987 = vsel %vm1487, %v5986, %v5985
      %v5988 = vrot.slane %v5921, 4
      %v5989 = vsel %vm1490, %v5988, %v5987
      %v5990 = vrot.slane %v5922, 3
      %v5991 = vsel %vm1493, %v5990, %v5989
      %v5992 = vrot.slane %v5923, 2
      %v5993 = vsel %vm1496, %v5992, %v5991
      %v5994 = vrot.slane %v5924, 1
      %v5995 = vsel %vm1478, %v5925, %v5994
      %v5996 = vrot.slane %v5926, 7
      %v5997 = vsel %vm1481, %v5996, %v5995
      %v5998 = vrot.slane %v5927, 6
      %v5999 = vsel %vm1484, %v5998, %v5997
      %v6000 = vrot.slane %v5928, 5
      %v6001 = vsel %vm1487, %v6000, %v5999
      %v6002 = vrot.slane %v5929, 4
      %v6003 = vsel %vm1490, %v6002, %v6001
      %v6004 = vrot.slane %v5930, 3
      %v6005 = vsel %vm1493, %v6004, %v6003
      %v6006 = vrot.slane %v5931, 2
      %v6007 = vsel %vm1496, %v6006, %v6005
      %v6008 = vrot.slane %v5932, 1
      %v6009 = vsel %vm1478, %v5933, %v6008
      %v6010 = vrot.slane %v5934, 7
      %v6011 = vsel %vm1481, %v6010, %v6009
      %v6012 = vrot.slane %v5935, 6
      %v6013 = vsel %vm1484, %v6012, %v6011
      %v6014 = vrot.slane %v5936, 5
      %v6015 = vsel %vm1487, %v6014, %v6013
      %v6016 = vrot.slane %v5937, 4
      %v6017 = vsel %vm1490, %v6016, %v6015
      %v6018 = vrot.slane %v5938, 3
      %v6019 = vsel %vm1493, %v6018, %v6017
      %v6020 = vrot.slane %v5939, 2
      %v6021 = vsel %vm1496, %v6020, %v6019
      %v6022 = vrot.slane %v5940, 1
      %v6023 = vsel %vm1478, %v5941, %v6022
      %v6024 = vrot.slane %v5942, 7
      %v6025 = vsel %vm1481, %v6024, %v6023
      %v6026 = vrot.slane %v5943, 6
      %v6027 = vsel %vm1484, %v6026, %v6025
      %v6028 = vrot.slane %v5944, 5
      %v6029 = vsel %vm1487, %v6028, %v6027
      %v6030 = vrot.slane %v5945, 4
      %v6031 = vsel %vm1490, %v6030, %v6029
      %v6032 = vrot.slane %v5946, 3
      %v6033 = vsel %vm1493, %v6032, %v6031
      %v6034 = vrot.slane %v5947, 2
      %v6035 = vsel %vm1496, %v6034, %v6033
      %v6036 = vrot.slane %v5948, 1
      %v6037 = vsel %vm1478, %v5949, %v6036
      %v6038 = vrot.slane %v5950, 7
      %v6039 = vsel %vm1481, %v6038, %v6037
      %v6040 = vrot.slane %v5951, 6
      %v6041 = vsel %vm1484, %v6040, %v6039
      %v6042 = vrot.slane %v5952, 5
      %v6043 = vsel %vm1487, %v6042, %v6041
      %v6044 = vrot.slane %v5953, 4
      %v6045 = vsel %vm1490, %v6044, %v6043
      %v6046 = vrot.slane %v5954, 3
      %v6047 = vsel %vm1493, %v6046, %v6045
      %v6048 = vrot.slane %v5955, 2
      %v6049 = vsel %vm1496, %v6048, %v6047
      %v6050 = vrot.slane %v5956, 1
      %v6051 = vsel %vm1478, %v5957, %v6050
      %v6052 = vrot.slane %v5958, 7
      %v6053 = vsel %vm1481, %v6052, %v6051
      %v6054 = vrot.slane %v5959, 6
      %v6055 = vsel %vm1484, %v6054, %v6053
      %v6056 = vrot.slane %v5960, 5
      %v6057 = vsel %vm1487, %v6056, %v6055
      %v6058 = vrot.slane %v5961, 4
      %v6059 = vsel %vm1490, %v6058, %v6057
      %v6060 = vrot.slane %v5962, 3
      %v6061 = vsel %vm1493, %v6060, %v6059
      %v6062 = vrot.slane %v5963, 2
      %v6063 = vsel %vm1496, %v6062, %v6061
      %v6064 = vrot.slane %v5964, 1
      %v6065 = vsel %vm1478, %v5965, %v6064
      %v6066 = vrot.slane %v5966, 7
      %v6067 = vsel %vm1481, %v6066, %v6065
      %v6068 = vrot.slane %v5967, 6
      %v6069 = vsel %vm1484, %v6068, %v6067
      %v6070 = vrot.slane %v5968, 5
      %v6071 = vsel %vm1487, %v6070, %v6069
      %v6072 = vrot.slane %v5969, 4
      %v6073 = vsel %vm1490, %v6072, %v6071
      %v6074 = vrot.slane %v5970, 3
      %v6075 = vsel %vm1493, %v6074, %v6073
      %v6076 = vrot.slane %v5971, 2
      %v6077 = vsel %vm1496, %v6076, %v6075
      %v6078 = vrot.slane %v5972, 1
      %v6079 = vsel %vm1478, %v5973, %v6078
      %v6080 = vrot.slane %v5974, 7
      %v6081 = vsel %vm1481, %v6080, %v6079
      %v6082 = vrot.slane %v5975, 6
      %v6083 = vsel %vm1484, %v6082, %v6081
      %v6084 = vrot.slane %v5976, 5
      %v6085 = vsel %vm1487, %v6084, %v6083
      %v6086 = vrot.slane %v5977, 4
      %v6087 = vsel %vm1490, %v6086, %v6085
      %v6088 = vrot.slane %v5978, 3
      %v6089 = vsel %vm1493, %v6088, %v6087
      %v6090 = vrot.slane %v5979, 2
      %v6091 = vsel %vm1496, %v6090, %v6089
      %v6092 = vpack.c.b16 %v6007, %v5993
      %v6093 = vpack.c.b16 %v6035, %v6021
      %v6094 = vpack.c.b16 %v6063, %v6049
      %v6095 = vpack.c.b16 %v6091, %v6077
      %v6097 = vsel %vm1600, %v6092, 0
      %v6100 = vsel %vm1600, %v6093, 0
      %v6103 = vsel %vm1600, %v6094, 0
      %v6106 = vsel %vm1600, %v6095, 0
      %6108 = vmatprep.subr.bf16.mxu0 0
      %6109 = vmatpush1.bf16.msra.mxu0 0
      %6110 = vmatprep.subr.bf16.mxu0 0
      %6111 = vmatpush1.bf16.msra.mxu0 0
      %6112 = vmatprep.subr.bf16.mxu0 0
      %6113 = vmatpush1.bf16.msra.mxu0 0
      %6114 = vmatprep.subr.bf16.mxu0 0
      %6115 = vmatpush1.bf16.msra.mxu0 0
      %6116 = vmatprep.subr.bf16.mxu0 0
      %6117 = vmatpush1.bf16.msra.mxu0 0
      %6118 = vmatprep.subr.bf16.mxu0 0
      %6119 = vmatpush1.bf16.msra.mxu0 0
      %6120 = vmatprep.subr.bf16.mxu0 0
      %6121 = vmatpush1.bf16.msra.mxu0 0
      %6122 = vmatprep.subr.bf16.mxu0 0
      %6123 = vmatpush1.bf16.msra.mxu0 %v1615
      %6124 = vmatprep.subr.bf16.mxu0 0
      %6125 = vmatpush2.bf16.msra.mxu0 0
      %6126 = vmatprep.subr.bf16.mxu0 0
      %6127 = vmatpush2.bf16.msra.mxu0 0
      %6128 = vmatprep.subr.bf16.mxu0 0
      %6129 = vmatpush2.bf16.msra.mxu0 0
      %6130 = vmatprep.subr.bf16.mxu0 0
      %6131 = vmatpush2.bf16.msra.mxu0 0
      %6132 = vmatprep.subr.bf16.mxu0 0
      %6133 = vmatpush2.bf16.msra.mxu0 0
      %6134 = vmatprep.subr.bf16.mxu0 0
      %6135 = vmatpush2.bf16.msra.mxu0 0
      %6136 = vmatprep.subr.bf16.mxu0 0
      %6137 = vmatpush2.bf16.msra.mxu0 0
      %6138 = vmatprep.subr.bf16.mxu0 0
      %6139 = vmatpush2.bf16.msra.mxu0 0
      %6140 = vmatprep.mubr.bf16.mxu0 0
      %6141 = vmatmul.mubr.bf16.gmra.mxu0 %v6097
      %v6142 = vpop.f32.mrf.mxu0
      %v6143 = vadd.f32 0.0, %v6142
      %v6144 = vpop.f32.mrf.mxu0
      %v6145 = vpop.f32.mrf.mxu0
      %v6146 = vadd.f32 0.0, %v6145
      %v6147 = vpop.f32.mrf.mxu0
      %6148 = vmatprep.mubr.bf16.mxu0 0
      %6149 = vmatmul.mubr.bf16.gmra.mxu0 %v6100
      %v6150 = vpop.f32.mrf.mxu0
      %v6151 = vadd.f32 0.0, %v6150
      %v6152 = vpop.f32.mrf.mxu0
      %v6153 = vpop.f32.mrf.mxu0
      %v6154 = vadd.f32 0.0, %v6153
      %v6155 = vpop.f32.mrf.mxu0
      %6156 = vmatprep.mubr.bf16.mxu0 0
      %6157 = vmatmul.mubr.bf16.gmra.mxu0 %v6103
      %v6158 = vpop.f32.mrf.mxu0
      %v6159 = vadd.f32 0.0, %v6158
      %v6160 = vpop.f32.mrf.mxu0
      %v6161 = vpop.f32.mrf.mxu0
      %v6162 = vadd.f32 0.0, %v6161
      %v6163 = vpop.f32.mrf.mxu0
      %6164 = vmatprep.mubr.bf16.mxu0 0
      %6165 = vmatmul.mubr.bf16.gmra.mxu0 %v6106
      %v6166 = vpop.f32.mrf.mxu0
      %v6167 = vadd.f32 0.0, %v6166
      %v6168 = vpop.f32.mrf.mxu0
      %v6169 = vpop.f32.mrf.mxu0
      %v6170 = vadd.f32 0.0, %v6169
      %v6171 = vpop.f32.mrf.mxu0
      %6172 = vdwg.mxu0
      %6177 = vrot.lane.b32.xlu0 %v4888, 116
      %v6178 = vpop.permute.xlu0 %6177
      %6179 = vrot.lane.b32.xlu0 %v4889, 116
      %v6180 = vpop.permute.xlu0 %6179
      %6181 = vrot.lane.b32.xlu0 %v4890, 116
      %v6182 = vpop.permute.xlu0 %6181
      %6183 = vrot.lane.b32.xlu0 %v4891, 116
      %v6184 = vpop.permute.xlu0 %6183
      %v6186 = vsel %vm1600, %v6178, 0
      %v6189 = vsel %vm1600, %v6180, 0
      %v6192 = vsel %vm1600, %v6182, 0
      %v6195 = vsel %vm1600, %v6184, 0
      %6197 = vmatprep.subr.bf16.mxu0 0
      %6198 = vmatpush1.bf16.msra.mxu0 0
      %6199 = vmatprep.subr.bf16.mxu0 0
      %6200 = vmatpush1.bf16.msra.mxu0 0
      %6201 = vmatprep.subr.bf16.mxu0 0
      %6202 = vmatpush1.bf16.msra.mxu0 0
      %6203 = vmatprep.subr.bf16.mxu0 0
      %6204 = vmatpush1.bf16.msra.mxu0 0
      %6205 = vmatprep.subr.bf16.mxu0 0
      %6206 = vmatpush1.bf16.msra.mxu0 0
      %6207 = vmatprep.subr.bf16.mxu0 0
      %6208 = vmatpush1.bf16.msra.mxu0 0
      %6209 = vmatprep.subr.bf16.mxu0 0
      %6210 = vmatpush1.bf16.msra.mxu0 0
      %6211 = vmatprep.subr.bf16.mxu0 0
      %6212 = vmatpush1.bf16.msra.mxu0 %v1695
      %6213 = vmatprep.subr.bf16.mxu0 0
      %6214 = vmatpush2.bf16.msra.mxu0 0
      %6215 = vmatprep.subr.bf16.mxu0 0
      %6216 = vmatpush2.bf16.msra.mxu0 0
      %6217 = vmatprep.subr.bf16.mxu0 0
      %6218 = vmatpush2.bf16.msra.mxu0 0
      %6219 = vmatprep.subr.bf16.mxu0 0
      %6220 = vmatpush2.bf16.msra.mxu0 0
      %6221 = vmatprep.subr.bf16.mxu0 0
      %6222 = vmatpush2.bf16.msra.mxu0 0
      %6223 = vmatprep.subr.bf16.mxu0 0
      %6224 = vmatpush2.bf16.msra.mxu0 0
      %6225 = vmatprep.subr.bf16.mxu0 0
      %6226 = vmatpush2.bf16.msra.mxu0 0
      %6227 = vmatprep.subr.bf16.mxu0 0
      %6228 = vmatpush2.bf16.msra.mxu0 0
      %6229 = vmatprep.mubr.bf16.mxu0 0
      %6230 = vmatmul.mubr.bf16.gmra.mxu0 %v6186
      %v6231 = vpop.f32.mrf.mxu0
      %v6232 = vadd.f32 %v6143, %v6231
      %v6233 = vpop.f32.mrf.mxu0
      %v6234 = vpop.f32.mrf.mxu0
      %v6235 = vadd.f32 %v6146, %v6234
      %v6236 = vpop.f32.mrf.mxu0
      %6237 = vmatprep.mubr.bf16.mxu0 0
      %6238 = vmatmul.mubr.bf16.gmra.mxu0 %v6189
      %v6239 = vpop.f32.mrf.mxu0
      %v6240 = vadd.f32 %v6151, %v6239
      %v6241 = vpop.f32.mrf.mxu0
      %v6242 = vpop.f32.mrf.mxu0
      %v6243 = vadd.f32 %v6154, %v6242
      %v6244 = vpop.f32.mrf.mxu0
      %6245 = vmatprep.mubr.bf16.mxu0 0
      %6246 = vmatmul.mubr.bf16.gmra.mxu0 %v6192
      %v6247 = vpop.f32.mrf.mxu0
      %v6248 = vadd.f32 %v6159, %v6247
      %v6249 = vpop.f32.mrf.mxu0
      %v6250 = vpop.f32.mrf.mxu0
      %v6251 = vadd.f32 %v6162, %v6250
      %v6252 = vpop.f32.mrf.mxu0
      %6253 = vmatprep.mubr.bf16.mxu0 0
      %6254 = vmatmul.mubr.bf16.gmra.mxu0 %v6195
      %v6255 = vpop.f32.mrf.mxu0
      %v6256 = vadd.f32 %v6167, %v6255
      %v6257 = vpop.f32.mrf.mxu0
      %v6258 = vpop.f32.mrf.mxu0
      %v6259 = vadd.f32 %v6170, %v6258
      %v6260 = vpop.f32.mrf.mxu0
      %6261 = vdwg.mxu0
      %v6262 = vsel %vm1762, %v6232, 0.0
      %v6263 = vsel %vm1762, %v6235, 0.0
      %v6264 = vadd.f32 %v6262, %v6263
      %v6265 = vsel %vm1762, %v6240, 0.0
      %v6266 = vadd.f32 %v6264, %v6265
      %v6267 = vsel %vm1762, %v6243, 0.0
      %v6268 = vadd.f32 %v6266, %v6267
      %v6269 = vsel %vm1762, %v6248, 0.0
      %v6270 = vadd.f32 %v6268, %v6269
      %v6271 = vsel %vm1762, %v6251, 0.0
      %v6272 = vadd.f32 %v6270, %v6271
      %v6273 = vsel %vm1762, %v6256, 0.0
      %v6274 = vadd.f32 %v6272, %v6273
      %v6275 = vsel %vm1762, %v6259, 0.0
      %v6276 = vadd.f32 %v6274, %v6275
      %v6277 = vrot.slane %v6276, 4
      %v6278 = vadd.f32 %v6276, %v6277
      %v6279 = vrot.slane %v6278, 2
      %v6280 = vadd.f32 %v6278, %v6279
      %v6281 = vrot.slane %v6280, 1
      %v6282 = vadd.f32 %v6280, %v6281
      %v6283 = vadd.f32 %v4794, %v6282
      %v6284 = vmul.f32 %v6232, %v6232
      %v6285 = vmul.f32 %v6235, %v6235
      %v6286 = vmul.f32 %v6240, %v6240
      %v6287 = vmul.f32 %v6243, %v6243
      %v6288 = vmul.f32 %v6248, %v6248
      %v6289 = vmul.f32 %v6251, %v6251
      %v6290 = vmul.f32 %v6256, %v6256
      %v6291 = vmul.f32 %v6259, %v6259
      %v6292 = vsel %vm1762, %v6284, 0.0
      %v6293 = vsel %vm1762, %v6285, 0.0
      %v6294 = vadd.f32 %v6292, %v6293
      %v6295 = vsel %vm1762, %v6286, 0.0
      %v6296 = vadd.f32 %v6294, %v6295
      %v6297 = vsel %vm1762, %v6287, 0.0
      %v6298 = vadd.f32 %v6296, %v6297
      %v6299 = vsel %vm1762, %v6288, 0.0
      %v6300 = vadd.f32 %v6298, %v6299
      %v6301 = vsel %vm1762, %v6289, 0.0
      %v6302 = vadd.f32 %v6300, %v6301
      %v6303 = vsel %vm1762, %v6290, 0.0
      %v6304 = vadd.f32 %v6302, %v6303
      %v6305 = vsel %vm1762, %v6291, 0.0
      %v6306 = vadd.f32 %v6304, %v6305
      %v6307 = vrot.slane %v6306, 4
      %v6308 = vadd.f32 %v6306, %v6307
      %v6309 = vrot.slane %v6308, 2
      %v6310 = vadd.f32 %v6308, %v6309
      %v6311 = vrot.slane %v6310, 1
      %v6312 = vadd.f32 %v6310, %v6311
      %v6313 = vadd.f32 %v4824, %v6312
      %6322 = vrot.lane.b32.xlu0 %v6232, 8
      %v6323 = vpop.permute.xlu0 %6322
      %6324 = vrot.lane.b32.xlu0 %v6235, 8
      %v6325 = vpop.permute.xlu0 %6324
      %6326 = vrot.lane.b32.xlu0 %v6240, 8
      %v6327 = vpop.permute.xlu0 %6326
      %6328 = vrot.lane.b32.xlu0 %v6243, 8
      %v6329 = vpop.permute.xlu0 %6328
      %6330 = vrot.lane.b32.xlu0 %v6248, 8
      %v6331 = vpop.permute.xlu0 %6330
      %6332 = vrot.lane.b32.xlu0 %v6251, 8
      %v6333 = vpop.permute.xlu0 %6332
      %6334 = vrot.lane.b32.xlu0 %v6256, 8
      %v6335 = vpop.permute.xlu0 %6334
      %6336 = vrot.lane.b32.xlu0 %v6259, 8
      %v6337 = vpop.permute.xlu0 %6336
      %6346 = vst.msk [vmem:[%s4825] sm:$0xff] %vm3335, %v6323
      %6347 = vst.msk [vmem:[%s4825 + $0x8] sm:$0xff] %vm3335, %v6325
      %6348 = vst.msk [vmem:[%s4825 + $0x20] sm:$0xff] %vm3335, %v6327
      %6349 = vst.msk [vmem:[%s4825 + $0x28] sm:$0xff] %vm3335, %v6329
      %6350 = vst.msk [vmem:[%s4825 + $0x40] sm:$0xff] %vm3335, %v6331
      %6351 = vst.msk [vmem:[%s4825 + $0x48] sm:$0xff] %vm3335, %v6333
      %6352 = vst.msk [vmem:[%s4825 + $0x60] sm:$0xff] %vm3335, %v6335
      %6353 = vst.msk [vmem:[%s4825 + $0x68] sm:$0xff] %vm3335, %v6337
      %vm6354 = vcmask 57344
      %6355 = vst.msk [vmem:[%s319] sm:$0x1] %vm6354, %v6283
      %6356 = vst.msk [vmem:[%s319 + $0x1] sm:$0x1] %vm6354, %v6313
      %s6357 = smul.u32 4, %s19
      %p6358 = scmp.lt.s32.totalorder %s6357, 31
      %s6359 = scalar_select %p6358, %s6357, 31
      %s6360 = smul.addr %s6359, 4
      %s6361 = smul.addr %s6360, 8
      %s6362 = scalar_lea.vmem %s6, %s6361
      %p6363 = scmp.lt.s32.totalorder %s19, 7
      %s6364 = scalar_select %p6363, %s19, 7
      %s6365 = smul.addr %s6364, 2
      %s6366 = scalar_lea.vmem %s7, %s6365
      // Predicated region
      $region45: #{unet_up_forward.5} parent=43 // pred_check
        %p6367 = pneg %p173
      $region46: #{unet_up_forward.5} parent=43 // pred_check_branch
        %6369 = sbr.rel (%p6367) target = $region48
      $region47: #{unet_up_forward.5} parent=43 // pred_region
        %s6370 = smul.u32 4, %s19
      $region48: #{unet_up_forward.5} parent=43 // pred_fallthru
        _
      // Predicated region
      $region49: #{unet_up_forward.5} parent=43 // pred_check
        %p6371 = pneg %p199
      $region50: #{unet_up_forward.5} parent=43 // pred_check_branch
        %6373 = sbr.rel (%p6371) target = $region52
      $region51: #{unet_up_forward.5} parent=43 // pred_region
        _
      $region52: #{unet_up_forward.5} parent=43 // pred_fallthru
        _
    $region44: #{unet_up_forward.5} parent=5 // pred_fallthru
      _
    %p6374 = scmp.le.s32.totalorder 2, %s14
    // Predicated region
    $region53: #{unet_up_forward.5} parent=5 // pred_check
      %p6375 = pneg %p6374
    $region54: #{unet_up_forward.5} parent=5 // pred_check_branch
      %6377 = sbr.rel (%p6375) target = $region56
    $region55: #{unet_up_forward.5} parent=5 // pred_region
      %s6378 = ssub.s32 %s14, 2
      // Predicated region
      $region57: #{unet_up_forward.5} parent=55 // pred_check
        %p6379 = pneg %p179
      $region58: #{unet_up_forward.5} parent=55 // pred_check_branch
        %6381 = sbr.rel (%p6379) target = $region60
      $region59: #{unet_up_forward.5} parent=55 // pred_region
        %s6382 = smul.u32 4, %s20
        %p6383 = scmp.lt.s32.totalorder %s6382, 31
        %s6384 = scalar_select %p6383, %s6382, 31
        %s6385 = smul.addr %s6384, 4
        %s6386 = smul.addr %s6385, 8
        %s6387 = scalar_lea.vmem %s6, %s6386
      $region60: #{unet_up_forward.5} parent=55 // pred_fallthru
        _
      // Predicated region
      $region61: #{unet_up_forward.5} parent=55 // pred_check
        %p6388 = pneg %p205
      $region62: #{unet_up_forward.5} parent=55 // pred_check_branch
        %6390 = sbr.rel (%p6388) target = $region64
      $region63: #{unet_up_forward.5} parent=55 // pred_region
        %p6391 = scmp.lt.s32.totalorder %s20, 7
        %s6392 = scalar_select %p6391, %s20, 7
        %s6393 = smul.addr %s6392, 2
        %s6394 = scalar_lea.vmem %s7, %s6393
      $region64: #{unet_up_forward.5} parent=55 // pred_fallthru
        _
    $region56: #{unet_up_forward.5} parent=5 // pred_fallthru
      _
  $region6: #{unet_up_forward.5} parent=0 // loop_footer
    %s18 = sadd.s32 1, %s14
  $region7: #{unet_up_forward.5} parent=0 // loop_footer_branch
    %13 = sbr.rel target = $region3
  $region8: #{unet_up_forward.5} parent=0 // loop_exit
    _

// kernel: unet_up_forward.6
$region0: #{unet_up_forward.6}
  #allocation0 [shape = 'u32[]', space=smem, size = 0x4, offset = 0x4, fixed_abs, tag = 'smem constant byte address 0x4 - core index']
  #allocation1 [shape = 'u32[144,128]{1,0:T(1,128)}', space=vmem, size = 0x12000, scoped, tag = 'internal scratch']
  #allocation2 [shape = 'bf16[10,34,8]{2,1,0:T(8,128)(2,1)}', space=vmem, size = 0x19000, scoped, tag = 'scratch operand']
  #allocation3 [shape = 'bf16[256,72]{1,0:T(8,128)(2,1)}', space=vmem, size = 0x10000, scoped, tag = 'scratch operand']
  %s0 = inlined_call_operand.vmem [shape: f32[2,32,32,8], index: 0, kind: input, shape index: {}, may-alias: {0,1,2}]
  %s1 = inlined_call_operand.vmem [shape: f32[2,32,32,8], index: 1, kind: input, shape index: {}, may-alias: {0,1,2}]
  %s2 = inlined_call_operand.vmem [shape: f32[2,32,32,8], index: 2, kind: input, shape index: {}, may-alias: {0,1,2}]
  %s3 = inlined_call_operand.vmem [shape: f32[1,1,8], index: 3, kind: input, shape index: {}]
  %s4 = inlined_call_operand.vmem [shape: f32[1,1,8], index: 4, kind: input, shape index: {}]
  %s5 = inlined_call_operand.vmem [shape: bf16[72,8], index: 5, kind: input, shape index: {}]
  %s6 = inlined_call_operand.vmem [shape: f32[2,32,32,8], index: 6, kind: output, shape index: {0}]
  %s7 = inlined_call_operand.vmem [shape: f32[2,4,2,8], index: 7, kind: output, shape index: {1}]
  %8 = xla_tuple %s6, %s7
  %s9 = sld [smem:[#allocation0]]
  $region73: #{unet_up_forward.6} parent=0
    _
  %s11 = ssub.s32 1, %s9
  %s12 = scalar_select 0, %s11, %s9
  loop: start=0, step=1, limit=10
  $region2: #{unet_up_forward.6} parent=0 // loop_pre_header
    _
  $region3: #{unet_up_forward.6} parent=0 // loop_header
    %s14 = sphi 0, %s18
    %p15 = scmp.ge.s32.totalorder %s14, 10
    %s21 = sphi 0, %s33
    %s22 = sphi 0, %s29
    %s23 = sphi 0, %s21
    %s24 = sphi 0, %s22
    %s25 = sphi 0, %s23
    %s26 = sphi 0, %s24
    %s44 = sphi 0, %s46
    %s47 = sphi 0, %s44
    %s48 = sphi 0, %s47
    %s64 = sphi 0, %s48
    %s72 = sphi 0, %s74
    %s75 = sphi 0, %s72
    %s76 = sphi 0, %s75
    %s92 = sphi 0, %s76
    %s106 = sphi 0, %s108
    %s109 = sphi 0, %s106
    %s110 = sphi 0, %s109
    %s126 = sphi 0, %s110
    %s130 = sphi 0, %s130
    %s132 = sphi 0, %s130
    %s133 = sphi 0, %s132
    %s147 = sphi 0, %s133
    %s151 = sphi 0, %s151
    %s153 = sphi 0, %s151
    %s154 = sphi 0, %s153
    %s168 = sphi 0, %s154
    %s172 = sphi 0, %s172
    %s174 = sphi 0, %s172
    %s175 = sphi 0, %s174
    %s189 = sphi 0, %s175
    %s197 = sphi 0, %s199
    %s200 = sphi 0, %s197
    %s201 = sphi 0, %s200
    %s217 = sphi 0, %s201
    %s225 = sphi 0, %s227
    %s228 = sphi 0, %s225
    %s229 = sphi 0, %s228
    %s245 = sphi 0, %s229
  $region4: #{unet_up_forward.6} parent=0 // loop_header_branch
    %17 = sbr.rel (%p15) target = $region8
  $region5: #{unet_up_forward.6} parent=0 // loop_body
    %s19 = ssub.s32 %s14, 1
    %s20 = ssub.s32 %s14, 2
    %s27 = sadd.s32 1, %s22
    %p28 = scmp.ge.s32.totalorder %s27, 4
    %s29 = scalar_select %p28, 0, %s27
    %s30 = sadd.s32 1, %s21
    %s31 = scalar_select %p28, %s30, %s21
    %p32 = scmp.ge.s32.totalorder %s31, 2
    %s33 = scalar_select %p32, 0, %s31
    %s34 = ssub.s32 %s22, 1
    %p35 = scmp.gt.s32.totalorder %s34, 0
    %s36 = scalar_select %p35, %s34, 0
    %s37 = ssub.s32 %s29, 1
    %p38 = scmp.gt.s32.totalorder %s37, 0
    %s39 = scalar_select %p38, %s37, 0
    %s40 = ssub.s32 %s21, %s33
    %s41 = ssub.s32 %s36, %s39
    %s42 = sor.u32 %s40, %s41
    %p43 = scmp.eq.s32.totalorder %s42, 0
    %s45 = sadd.s32 %s44, 1
    %s46 = scalar_select %p43, %s44, %s45
    %p49 = pneg %p43
    %p50 = scmp.eq.s32.totalorder %s14, 7
    %p51 = por %p49, %p50
    %p52 = scmp.ne.s32.totalorder %s44, %s47
    %p53 = scmp.eq.s32.totalorder %s14, 0
    %p54 = por %p52, %p53
    %p55 = scmp.ne.s32.totalorder %s44, %s47
    %p56 = scmp.eq.s32.totalorder %s19, 7
    %p57 = por %p55, %p56
    %p58 = scmp.ne.s32.totalorder %s47, %s48
    %p59 = scmp.eq.s32.totalorder %s19, 0
    %p60 = por %p58, %p59
    %p61 = scmp.ne.s32.totalorder %s47, %s48
    %p62 = scmp.eq.s32.totalorder %s20, 7
    %p63 = por %p61, %p62
    %p65 = scmp.ne.s32.totalorder %s48, %s64
    %p66 = scmp.eq.s32.totalorder %s20, 0
    %p67 = por %p65, %p66
    %s68 = ssub.s32 %s21, %s33
    %s69 = ssub.s32 %s22, %s29
    %s70 = sor.u32 %s68, %s69
    %p71 = scmp.eq.s32.totalorder %s70, 0
    %s73 = sadd.s32 %s72, 1
    %s74 = scalar_select %p71, %s72, %s73
    %p77 = pneg %p71
    %p78 = scmp.eq.s32.totalorder %s14, 7
    %p79 = por %p77, %p78
    %p80 = scmp.ne.s32.totalorder %s72, %s75
    %p81 = scmp.eq.s32.totalorder %s14, 0
    %p82 = por %p80, %p81
    %p83 = scmp.ne.s32.totalorder %s72, %s75
    %p84 = scmp.eq.s32.totalorder %s19, 7
    %p85 = por %p83, %p84
    %p86 = scmp.ne.s32.totalorder %s75, %s76
    %p87 = scmp.eq.s32.totalorder %s19, 0
    %p88 = por %p86, %p87
    %p89 = scmp.ne.s32.totalorder %s75, %s76
    %p90 = scmp.eq.s32.totalorder %s20, 7
    %p91 = por %p89, %p90
    %p93 = scmp.ne.s32.totalorder %s76, %s92
    %p94 = scmp.eq.s32.totalorder %s20, 0
    %p95 = por %p93, %p94
    %s96 = sadd.s32 %s22, 1
    %p97 = scmp.lt.s32.totalorder %s96, 3
    %s98 = scalar_select %p97, %s96, 3
    %s99 = sadd.s32 %s29, 1
    %p100 = scmp.lt.s32.totalorder %s99, 3
    %s101 = scalar_select %p100, %s99, 3
    %s102 = ssub.s32 %s21, %s33
    %s103 = ssub.s32 %s98, %s101
    %s104 = sor.u32 %s102, %s103
    %p105 = scmp.eq.s32.totalorder %s104, 0
    %s107 = sadd.s32 %s106, 1
    %s108 = scalar_select %p105, %s106, %s107
    %p111 = pneg %p105
    %p112 = scmp.eq.s32.totalorder %s14, 7
    %p113 = por %p111, %p112
    %p114 = scmp.ne.s32.totalorder %s106, %s109
    %p115 = scmp.eq.s32.totalorder %s14, 0
    %p116 = por %p114, %p115
    %p117 = scmp.ne.s32.totalorder %s106, %s109
    %p118 = scmp.eq.s32.totalorder %s19, 7
    %p119 = por %p117, %p118
    %p120 = scmp.ne.s32.totalorder %s109, %s110
    %p121 = scmp.eq.s32.totalorder %s19, 0
    %p122 = por %p120, %p121
    %p123 = scmp.ne.s32.totalorder %s109, %s110
    %p124 = scmp.eq.s32.totalorder %s20, 7
    %p125 = por %p123, %p124
    %p127 = scmp.ne.s32.totalorder %s110, %s126
    %p128 = scmp.eq.s32.totalorder %s20, 0
    %p129 = por %p127, %p128
    %s131 = sadd.s32 %s130, 1
    %p134 = scmp.eq.s32.totalorder %s14, 7
    %p135 = scmp.ne.s32.totalorder %s130, %s132
    %p136 = scmp.eq.s32.totalorder %s14, 0
    %p137 = por %p135, %p136
    %p138 = scmp.ne.s32.totalorder %s130, %s132
    %p139 = scmp.eq.s32.totalorder %s19, 7
    %p140 = por %p138, %p139
    %p141 = scmp.ne.s32.totalorder %s132, %s133
    %p142 = scmp.eq.s32.totalorder %s19, 0
    %p143 = por %p141, %p142
    %p144 = scmp.ne.s32.totalorder %s132, %s133
    %p145 = scmp.eq.s32.totalorder %s20, 7
    %p146 = por %p144, %p145
    %p148 = scmp.ne.s32.totalorder %s133, %s147
    %p149 = scmp.eq.s32.totalorder %s20, 0
    %p150 = por %p148, %p149
    %s152 = sadd.s32 %s151, 1
    %p155 = scmp.eq.s32.totalorder %s14, 7
    %p156 = scmp.ne.s32.totalorder %s151, %s153
    %p157 = scmp.eq.s32.totalorder %s14, 0
    %p158 = por %p156, %p157
    %p159 = scmp.ne.s32.totalorder %s151, %s153
    %p160 = scmp.eq.s32.totalorder %s19, 7
    %p161 = por %p159, %p160
    %p162 = scmp.ne.s32.totalorder %s153, %s154
    %p163 = scmp.eq.s32.totalorder %s19, 0
    %p164 = por %p162, %p163
    %p165 = scmp.ne.s32.totalorder %s153, %s154
    %p166 = scmp.eq.s32.totalorder %s20, 7
    %p167 = por %p165, %p166
    %p169 = scmp.ne.s32.totalorder %s154, %s168
    %p170 = scmp.eq.s32.totalorder %s20, 0
    %p171 = por %p169, %p170
    %s173 = sadd.s32 %s172, 1
    %p176 = scmp.eq.s32.totalorder %s14, 7
    %p177 = scmp.ne.s32.totalorder %s172, %s174
    %p178 = scmp.eq.s32.totalorder %s14, 0
    %p179 = por %p177, %p178
    %p180 = scmp.ne.s32.totalorder %s172, %s174
    %p181 = scmp.eq.s32.totalorder %s19, 7
    %p182 = por %p180, %p181
    %p183 = scmp.ne.s32.totalorder %s174, %s175
    %p184 = scmp.eq.s32.totalorder %s19, 0
    %p185 = por %p183, %p184
    %p186 = scmp.ne.s32.totalorder %s174, %s175
    %p187 = scmp.eq.s32.totalorder %s20, 7
    %p188 = por %p186, %p187
    %p190 = scmp.ne.s32.totalorder %s175, %s189
    %p191 = scmp.eq.s32.totalorder %s20, 0
    %p192 = por %p190, %p191
    %s193 = ssub.s32 %s21, %s33
    %s194 = ssub.s32 %s22, %s29
    %s195 = sor.u32 %s193, %s194
    %p196 = scmp.eq.s32.totalorder %s195, 0
    %s198 = sadd.s32 %s197, 1
    %s199 = scalar_select %p196, %s197, %s198
    %p202 = pneg %p196
    %p203 = scmp.eq.s32.totalorder %s14, 7
    %p204 = por %p202, %p203
    %p205 = scmp.ne.s32.totalorder %s197, %s200
    %p206 = scmp.eq.s32.totalorder %s14, 0
    %p207 = por %p205, %p206
    %p208 = scmp.ne.s32.totalorder %s197, %s200
    %p209 = scmp.eq.s32.totalorder %s19, 7
    %p210 = por %p208, %p209
    %p211 = scmp.ne.s32.totalorder %s200, %s201
    %p212 = scmp.eq.s32.totalorder %s19, 0
    %p213 = por %p211, %p212
    %p214 = scmp.ne.s32.totalorder %s200, %s201
    %p215 = scmp.eq.s32.totalorder %s20, 7
    %p216 = por %p214, %p215
    %p218 = scmp.ne.s32.totalorder %s201, %s217
    %p219 = scmp.eq.s32.totalorder %s20, 0
    %p220 = por %p218, %p219
    %s221 = ssub.s32 %s21, %s33
    %s222 = ssub.s32 %s22, %s29
    %s223 = sor.u32 %s221, %s222
    %p224 = scmp.eq.s32.totalorder %s223, 0
    %s226 = sadd.s32 %s225, 1
    %s227 = scalar_select %p224, %s225, %s226
    %p230 = pneg %p224
    %p231 = scmp.eq.s32.totalorder %s14, 7
    %p232 = por %p230, %p231
    %p233 = scmp.ne.s32.totalorder %s225, %s228
    %p234 = scmp.eq.s32.totalorder %s14, 0
    %p235 = por %p233, %p234
    %p236 = scmp.ne.s32.totalorder %s225, %s228
    %p237 = scmp.eq.s32.totalorder %s19, 7
    %p238 = por %p236, %p237
    %p239 = scmp.ne.s32.totalorder %s228, %s229
    %p240 = scmp.eq.s32.totalorder %s19, 0
    %p241 = por %p239, %p240
    %p242 = scmp.ne.s32.totalorder %s228, %s229
    %p243 = scmp.eq.s32.totalorder %s20, 7
    %p244 = por %p242, %p243
    %p246 = scmp.ne.s32.totalorder %s229, %s245
    %p247 = scmp.eq.s32.totalorder %s20, 0
    %p248 = por %p246, %p247
    %p249 = scmp.le.s32.totalorder 1, %s14
    %p250 = scmp.lt.s32.totalorder %s14, 9
    %p251 = pnand %p249, %p250
    %p252 = pneg %p251
    // Predicated region
    $region9: #{unet_up_forward.6} parent=5 // pred_check
      _
    $region10: #{unet_up_forward.6} parent=5 // pred_check_branch
      %254 = sbr.rel (%p251) target = $region12
    $region11: #{unet_up_forward.6} parent=5 // pred_region
      %s255 = ssub.s32 %s14, 1
      // Predicated region
      $region13: #{unet_up_forward.6} parent=11 // pred_check
        %p256 = pneg %p143
      $region14: #{unet_up_forward.6} parent=11 // pred_check_branch
        %258 = sbr.rel (%p256) target = $region16
      $region15: #{unet_up_forward.6} parent=11 // pred_region
        _
      $region16: #{unet_up_forward.6} parent=11 // pred_fallthru
        _
      // Predicated region
      $region17: #{unet_up_forward.6} parent=11 // pred_check
        %p259 = pneg %p164
      $region18: #{unet_up_forward.6} parent=11 // pred_check_branch
        %261 = sbr.rel (%p259) target = $region20
      $region19: #{unet_up_forward.6} parent=11 // pred_region
        _
      $region20: #{unet_up_forward.6} parent=11 // pred_fallthru
        _
      // Predicated region
      $region21: #{unet_up_forward.6} parent=11 // pred_check
        %p262 = pneg %p185
      $region22: #{unet_up_forward.6} parent=11 // pred_check_branch
        %264 = sbr.rel (%p262) target = $region24
      $region23: #{unet_up_forward.6} parent=11 // pred_region
        _
      $region24: #{unet_up_forward.6} parent=11 // pred_fallthru
        _
    $region12: #{unet_up_forward.6} parent=5 // pred_fallthru
      _
    %p265 = scmp.lt.s32.totalorder %s14, 8
    // Predicated region
    $region25: #{unet_up_forward.6} parent=5 // pred_check
      %p266 = pneg %p265
    $region26: #{unet_up_forward.6} parent=5 // pred_check_branch
      %268 = sbr.rel (%p266) target = $region28
    $region27: #{unet_up_forward.6} parent=5 // pred_region
      // Predicated region
      $region29: #{unet_up_forward.6} parent=27 // pred_check
        %p269 = pneg %p54
      $region30: #{unet_up_forward.6} parent=27 // pred_check_branch
        %271 = sbr.rel (%p269) target = $region32
      $region31: #{unet_up_forward.6} parent=27 // pred_region
        %s272 = ssub.s32 %s22, 1
        %p273 = scmp.gt.s32.totalorder %s272, 0
        %s274 = scalar_select %p273, %s272, 0
        %s275 = smul.u32 8, %s274
        %p276 = scmp.lt.s32.totalorder %s21, 1
        %s277 = scalar_select %p276, %s21, 1
        %p278 = scmp.lt.s32.totalorder %s275, 31
        %s279 = scalar_select %p278, %s275, 31
        %s280 = smul.addr %s279, 4
        %s281 = smul.addr %s277, 128
        %s282 = sadd.s32 %s280, %s281
        %s283 = smul.addr %s282, 8
        %s284 = scalar_lea.vmem %s0, %s283
        %s285 = ssub.s32 %s22, 1
        %p286 = scmp.gt.s32.totalorder %s285, 0
        %s287 = scalar_select %p286, %s285, 0
        %s288 = smul.u32 8, %s287
      $region32: #{unet_up_forward.6} parent=27 // pred_fallthru
        _
      // Predicated region
      $region33: #{unet_up_forward.6} parent=27 // pred_check
        %p289 = pneg %p82
      $region34: #{unet_up_forward.6} parent=27 // pred_check_branch
        %291 = sbr.rel (%p289) target = $region36
      $region35: #{unet_up_forward.6} parent=27 // pred_region
        %s292 = smul.u32 8, %s22
        %p293 = scmp.lt.s32.totalorder %s21, 1
        %s294 = scalar_select %p293, %s21, 1
        %p295 = scmp.lt.s32.totalorder %s292, 31
        %s296 = scalar_select %p295, %s292, 31
        %s297 = smul.addr %s296, 4
        %s298 = smul.addr %s294, 128
        %s299 = sadd.s32 %s297, %s298
        %s300 = smul.addr %s299, 8
        %s301 = scalar_lea.vmem %s1, %s300
        %s302 = smul.u32 8, %s22
      $region36: #{unet_up_forward.6} parent=27 // pred_fallthru
        _
      // Predicated region
      $region37: #{unet_up_forward.6} parent=27 // pred_check
        %p303 = pneg %p116
      $region38: #{unet_up_forward.6} parent=27 // pred_check_branch
        %305 = sbr.rel (%p303) target = $region40
      $region39: #{unet_up_forward.6} parent=27 // pred_region
        %s306 = sadd.s32 %s22, 1
        %p307 = scmp.lt.s32.totalorder %s306, 3
        %s308 = scalar_select %p307, %s306, 3
        %s309 = smul.u32 8, %s308
        %p310 = scmp.lt.s32.totalorder %s21, 1
        %s311 = scalar_select %p310, %s21, 1
        %p312 = scmp.lt.s32.totalorder %s309, 31
        %s313 = scalar_select %p312, %s309, 31
        %s314 = smul.addr %s313, 4
        %s315 = smul.addr %s311, 128
        %s316 = sadd.s32 %s314, %s315
        %s317 = smul.addr %s316, 8
        %s318 = scalar_lea.vmem %s2, %s317
        %s319 = sadd.s32 %s22, 1
        %p320 = scmp.lt.s32.totalorder %s319, 3
        %s321 = scalar_select %p320, %s319, 3
        %s322 = smul.u32 8, %s321
      $region40: #{unet_up_forward.6} parent=27 // pred_fallthru
        _
    $region28: #{unet_up_forward.6} parent=5 // pred_fallthru
      _
    %p323 = scmp.le.s32.totalorder 1, %s14
    %p324 = scmp.lt.s32.totalorder %s14, 9
    %p325 = pnand %p323, %p324
    %p326 = pneg %p325
    // Predicated region
    $region41: #{unet_up_forward.6} parent=5 // pred_check
      _
    $region42: #{unet_up_forward.6} parent=5 // pred_check_branch
      %328 = sbr.rel (%p325) target = $region44
    $region43: #{unet_up_forward.6} parent=5 // pred_region
      %s329 = ssub.s32 %s14, 1
      %s330 = ssub.s32 %s24, 1
      %p331 = scmp.gt.s32.totalorder %s330, 0
      %s332 = scalar_select %p331, %s330, 0
      %s333 = smul.u32 8, %s332
      %p334 = scmp.lt.s32.totalorder %s23, 1
      %s335 = scalar_select %p334, %s23, 1
      %p336 = scmp.lt.s32.totalorder %s333, 31
      %s337 = scalar_select %p336, %s333, 31
      %s338 = smul.addr %s337, 4
      %s339 = smul.addr %s335, 128
      %s340 = sadd.s32 %s338, %s339
      %s341 = smul.addr %s340, 8
      %s342 = scalar_lea.vmem %s0, %s341
      %p343 = pneg %p60
      %p344 = pneg %p57
      %s345 = smul.u32 8, %s24
      %p346 = scmp.lt.s32.totalorder %s23, 1
      %s347 = scalar_select %p346, %s23, 1
      %p348 = scmp.lt.s32.totalorder %s345, 31
      %s349 = scalar_select %p348, %s345, 31
      %s350 = smul.addr %s349, 4
      %s351 = smul.addr %s347, 128
      %s352 = sadd.s32 %s350, %s351
      %s353 = smul.addr %s352, 8
      %s354 = scalar_lea.vmem %s1, %s353
      %p355 = pneg %p88
      %p356 = pneg %p85
      %s357 = sadd.s32 %s24, 1
      %p358 = scmp.lt.s32.totalorder %s357, 3
      %s359 = scalar_select %p358, %s357, 3
      %s360 = smul.u32 8, %s359
      %p361 = scmp.lt.s32.totalorder %s23, 1
      %s362 = scalar_select %p361, %s23, 1
      %p363 = scmp.lt.s32.totalorder %s360, 31
      %s364 = scalar_select %p363, %s360, 31
      %s365 = smul.addr %s364, 4
      %s366 = smul.addr %s362, 128
      %s367 = sadd.s32 %s365, %s366
      %s368 = smul.addr %s367, 8
      %s369 = scalar_lea.vmem %s2, %s368
      %p370 = pneg %p122
      %p371 = pneg %p119
      %p372 = pneg %p143
      %p373 = pneg %p140
      %p374 = pneg %p164
      %p375 = pneg %p161
      %p376 = pneg %p185
      %p377 = pneg %p182
      %p378 = pneg %p213
      %p379 = pneg %p210
      %s380 = smul.u32 8, %s24
      %p381 = scmp.lt.s32.totalorder %s23, 1
      %s382 = scalar_select %p381, %s23, 1
      %p383 = scmp.lt.s32.totalorder %s380, 31
      %s384 = scalar_select %p383, %s380, 31
      %s385 = smul.addr %s384, 4
      %s386 = smul.addr %s382, 128
      %s387 = sadd.s32 %s385, %s386
      %s388 = smul.addr %s387, 8
      %s389 = scalar_lea.vmem %s6, %s388
      %p390 = pneg %p241
      %p391 = pneg %p238
      %p392 = scmp.lt.s32.totalorder %s23, 1
      %s393 = scalar_select %p392, %s23, 1
      %p394 = scmp.lt.s32.totalorder %s24, 3
      %s395 = scalar_select %p394, %s24, 3
      %s396 = smul.addr %s393, 4
      %s397 = sadd.s32 %s395, %s396
      %s398 = smul.addr %s397, 2
      %s399 = scalar_lea.vmem %s7, %s398
      %s400 = ssub.s32 %s24, 1
      %p401 = scmp.gt.s32.totalorder %s400, 0
      %s402 = scalar_select %p401, %s400, 0
      %s403 = smul.u32 8, %s402
      %p404 = scmp.lt.s32.totalorder %s23, 1
      %s405 = scalar_select %p404, %s23, 1
      %p406 = scmp.lt.s32.totalorder %s403, 31
      %s407 = scalar_select %p406, %s403, 31
      %s408 = smul.addr %s407, 4
      %s409 = smul.addr %s405, 128
      %s410 = sadd.s32 %s408, %s409
      %s411 = smul.addr %s410, 8
      %s412 = scalar_lea.vmem %s0, %s411
      %s413 = ssub.s32 %s24, 1
      %p414 = scmp.gt.s32.totalorder %s413, 0
      %s415 = scalar_select %p414, %s413, 0
      %s416 = smul.u32 8, %s415
      %s417 = smul.u32 8, %s24
      %p418 = scmp.lt.s32.totalorder %s23, 1
      %s419 = scalar_select %p418, %s23, 1
      %p420 = scmp.lt.s32.totalorder %s417, 31
      %s421 = scalar_select %p420, %s417, 31
      %s422 = smul.addr %s421, 4
      %s423 = smul.addr %s419, 128
      %s424 = sadd.s32 %s422, %s423
      %s425 = smul.addr %s424, 8
      %s426 = scalar_lea.vmem %s1, %s425
      %s427 = smul.u32 8, %s24
      %s428 = sadd.s32 %s24, 1
      %p429 = scmp.lt.s32.totalorder %s428, 3
      %s430 = scalar_select %p429, %s428, 3
      %s431 = smul.u32 8, %s430
      %p432 = scmp.lt.s32.totalorder %s23, 1
      %s433 = scalar_select %p432, %s23, 1
      %p434 = scmp.lt.s32.totalorder %s431, 31
      %s435 = scalar_select %p434, %s431, 31
      %s436 = smul.addr %s435, 4
      %s437 = smul.addr %s433, 128
      %s438 = sadd.s32 %s436, %s437
      %s439 = smul.addr %s438, 8
      %s440 = scalar_lea.vmem %s2, %s439
      %s441 = sadd.s32 %s24, 1
      %p442 = scmp.lt.s32.totalorder %s441, 3
      %s443 = scalar_select %p442, %s441, 3
      %s444 = smul.u32 8, %s443
      %s445 = smul.u32 8, %s24
      %p446 = scmp.lt.s32.totalorder %s23, 1
      %s447 = scalar_select %p446, %s23, 1
      %p448 = scmp.lt.s32.totalorder %s445, 31
      %s449 = scalar_select %p448, %s445, 31
      %s450 = smul.addr %s449, 4
      %s451 = smul.addr %s447, 128
      %s452 = sadd.s32 %s450, %s451
      %s453 = smul.addr %s452, 8
      %s454 = scalar_lea.vmem %s6, %s453
      %s455 = smul.u32 8, %s24
      %p456 = scmp.lt.s32.totalorder %s23, 1
      %s457 = scalar_select %p456, %s23, 1
      %p458 = scmp.lt.s32.totalorder %s24, 3
      %s459 = scalar_select %p458, %s24, 3
      %s460 = smul.addr %s457, 4
      %s461 = sadd.s32 %s459, %s460
      %s462 = smul.addr %s461, 2
      %s463 = scalar_lea.vmem %s7, %s462
      %v465 = vld [vmem:[%s3] sm:$0x1]
      %v466 = vld [vmem:[%s4] sm:$0x1]
      %vm467 = vcmask 60416
      %468 = vst.msk [vmem:[#allocation2] sm:$0xf] %vm467, 0
      %469 = vst.msk [vmem:[#allocation2 + $0x4] sm:$0xf] %vm467, 0
      %470 = vst.msk [vmem:[#allocation2 + $0x8] sm:$0xf] %vm467, 0
      %471 = vst.msk [vmem:[#allocation2 + $0xc] sm:$0xf] %vm467, 0
      %vm472 = vcmask 57344
      %473 = vst.msk [vmem:[#allocation2 + $0x10] sm:$0x1] %vm472, 0
      %474 = vst.msk [vmem:[#allocation2 + $0x14] sm:$0xf] %vm467, 0
      %475 = vst.msk [vmem:[#allocation2 + $0x18] sm:$0xf] %vm467, 0
      %476 = vst.msk [vmem:[#allocation2 + $0x1c] sm:$0xf] %vm467, 0
      %477 = vst.msk [vmem:[#allocation2 + $0x20] sm:$0xf] %vm467, 0
      %478 = vst.msk [vmem:[#allocation2 + $0x24] sm:$0x1] %vm472, 0
      %479 = vst.msk [vmem:[#allocation2 + $0x28] sm:$0xf] %vm467, 0
      %480 = vst.msk [vmem:[#allocation2 + $0x2c] sm:$0xf] %vm467, 0
      %481 = vst.msk [vmem:[#allocation2 + $0x30] sm:$0xf] %vm467, 0
      %482 = vst.msk [vmem:[#allocation2 + $0x34] sm:$0xf] %vm467, 0
      %483 = vst.msk [vmem:[#allocation2 + $0x38] sm:$0x1] %vm472, 0
      %484 = vst.msk [vmem:[#allocation2 + $0x3c] sm:$0xf] %vm467, 0
      %485 = vst.msk [vmem:[#allocation2 + $0x40] sm:$0xf] %vm467, 0
      %486 = vst.msk [vmem:[#allocation2 + $0x44] sm:$0xf] %vm467, 0
      %487 = vst.msk [vmem:[#allocation2 + $0x48] sm:$0xf] %vm467, 0
      %488 = vst.msk [vmem:[#allocation2 + $0x4c] sm:$0x1] %vm472, 0
      %489 = vst.msk [vmem:[#allocation2 + $0x50] sm:$0xf] %vm467, 0
      %490 = vst.msk [vmem:[#allocation2 + $0x54] sm:$0xf] %vm467, 0
      %491 = vst.msk [vmem:[#allocation2 + $0x58] sm:$0xf] %vm467, 0
      %492 = vst.msk [vmem:[#allocation2 + $0x5c] sm:$0xf] %vm467, 0
      %493 = vst.msk [vmem:[#allocation2 + $0x60] sm:$0x1] %vm472, 0
      %494 = vst.msk [vmem:[#allocation2 + $0x64] sm:$0xf] %vm467, 0
      %495 = vst.msk [vmem:[#allocation2 + $0x68] sm:$0xf] %vm467, 0
      %496 = vst.msk [vmem:[#allocation2 + $0x6c] sm:$0xf] %vm467, 0
      %497 = vst.msk [vmem:[#allocation2 + $0x70] sm:$0xf] %vm467, 0
      %498 = vst.msk [vmem:[#allocation2 + $0x74] sm:$0x1] %vm472, 0
      %499 = vst.msk [vmem:[#allocation2 + $0x78] sm:$0xf] %vm467, 0
      %500 = vst.msk [vmem:[#allocation2 + $0x7c] sm:$0xf] %vm467, 0
      %501 = vst.msk [vmem:[#allocation2 + $0x80] sm:$0xf] %vm467, 0
      %502 = vst.msk [vmem:[#allocation2 + $0x84] sm:$0xf] %vm467, 0
      %503 = vst.msk [vmem:[#allocation2 + $0x88] sm:$0x1] %vm472, 0
      %504 = vst.msk [vmem:[#allocation2 + $0x8c] sm:$0xf] %vm467, 0
      %505 = vst.msk [vmem:[#allocation2 + $0x90] sm:$0xf] %vm467, 0
      %506 = vst.msk [vmem:[#allocation2 + $0x94] sm:$0xf] %vm467, 0
      %507 = vst.msk [vmem:[#allocation2 + $0x98] sm:$0xf] %vm467, 0
      %508 = vst.msk [vmem:[#allocation2 + $0x9c] sm:$0x1] %vm472, 0
      %509 = vst.msk [vmem:[#allocation2 + $0xa0] sm:$0xf] %vm467, 0
      %510 = vst.msk [vmem:[#allocation2 + $0xa4] sm:$0xf] %vm467, 0
      %511 = vst.msk [vmem:[#allocation2 + $0xa8] sm:$0xf] %vm467, 0
      %512 = vst.msk [vmem:[#allocation2 + $0xac] sm:$0xf] %vm467, 0
      %513 = vst.msk [vmem:[#allocation2 + $0xb0] sm:$0x1] %vm472, 0
      %514 = vst.msk [vmem:[#allocation2 + $0xb4] sm:$0xf] %vm467, 0
      %515 = vst.msk [vmem:[#allocation2 + $0xb8] sm:$0xf] %vm467, 0
      %516 = vst.msk [vmem:[#allocation2 + $0xbc] sm:$0xf] %vm467, 0
      %517 = vst.msk [vmem:[#allocation2 + $0xc0] sm:$0xf] %vm467, 0
      %518 = vst.msk [vmem:[#allocation2 + $0xc4] sm:$0x1] %vm472, 0
      %v519 = vld [vmem:[%s426] sm:$0xff]
      %v520 = vld [vmem:[%s426 + $0x8] sm:$0xff]
      %v521 = vld [vmem:[%s426 + $0x10] sm:$0xff]
      %v522 = vld [vmem:[%s426 + $0x18] sm:$0xff]
      %v523 = vld [vmem:[%s426 + $0x20] sm:$0xff]
      %v524 = vld [vmem:[%s426 + $0x28] sm:$0xff]
      %v525 = vld [vmem:[%s426 + $0x30] sm:$0xff]
      %v526 = vld [vmem:[%s426 + $0x38] sm:$0xff]
      %v527 = vld [vmem:[%s426 + $0x40] sm:$0xff]
      %v528 = vld [vmem:[%s426 + $0x48] sm:$0xff]
      %v529 = vld [vmem:[%s426 + $0x50] sm:$0xff]
      %v530 = vld [vmem:[%s426 + $0x58] sm:$0xff]
      %v531 = vld [vmem:[%s426 + $0x60] sm:$0xff]
      %v532 = vld [vmem:[%s426 + $0x68] sm:$0xff]
      %v533 = vld [vmem:[%s426 + $0x70] sm:$0xff]
      %v534 = vld [vmem:[%s426 + $0x78] sm:$0xff]
      %v535 = vld [vmem:[%s426 + $0x80] sm:$0xff]
      %v536 = vld [vmem:[%s426 + $0x88] sm:$0xff]
      %v537 = vld [vmem:[%s426 + $0x90] sm:$0xff]
      %v538 = vld [vmem:[%s426 + $0x98] sm:$0xff]
      %v539 = vld [vmem:[%s426 + $0xa0] sm:$0xff]
      %v540 = vld [vmem:[%s426 + $0xa8] sm:$0xff]
      %v541 = vld [vmem:[%s426 + $0xb0] sm:$0xff]
      %v542 = vld [vmem:[%s426 + $0xb8] sm:$0xff]
      %v543 = vld [vmem:[%s426 + $0xc0] sm:$0xff]
      %v544 = vld [vmem:[%s426 + $0xc8] sm:$0xff]
      %v545 = vld [vmem:[%s426 + $0xd0] sm:$0xff]
      %v546 = vld [vmem:[%s426 + $0xd8] sm:$0xff]
      %v547 = vld [vmem:[%s426 + $0xe0] sm:$0xff]
      %v548 = vld [vmem:[%s426 + $0xe8] sm:$0xff]
      %v549 = vld [vmem:[%s426 + $0xf0] sm:$0xff]
      %v550 = vld [vmem:[%s426 + $0xf8] sm:$0xff]
      %v552 = vlaneseq
      %v553 = vshrl.u32 %v552, 7
      %v554 = vsub.s32 0, %v553
      %v555 = vrot.slane %v465, %v554
      %v557 = vmul.f32 %v519, %v555
      %v558 = vmul.f32 %v520, %v555
      %v559 = vmul.f32 %v521, %v555
      %v560 = vmul.f32 %v522, %v555
      %v561 = vmul.f32 %v523, %v555
      %v562 = vmul.f32 %v524, %v555
      %v563 = vmul.f32 %v525, %v555
      %v564 = vmul.f32 %v526, %v555
      %v565 = vmul.f32 %v527, %v555
      %v566 = vmul.f32 %v528, %v555
      %v567 = vmul.f32 %v529, %v555
      %v568 = vmul.f32 %v530, %v555
      %v569 = vmul.f32 %v531, %v555
      %v570 = vmul.f32 %v532, %v555
      %v571 = vmul.f32 %v533, %v555
      %v572 = vmul.f32 %v534, %v555
      %v573 = vmul.f32 %v535, %v555
      %v574 = vmul.f32 %v536, %v555
      %v575 = vmul.f32 %v537, %v555
      %v576 = vmul.f32 %v538, %v555
      %v577 = vmul.f32 %v539, %v555
      %v578 = vmul.f32 %v540, %v555
      %v579 = vmul.f32 %v541, %v555
      %v580 = vmul.f32 %v542, %v555
      %v581 = vmul.f32 %v543, %v555
      %v582 = vmul.f32 %v544, %v555
      %v583 = vmul.f32 %v545, %v555
      %v584 = vmul.f32 %v546, %v555
      %v585 = vmul.f32 %v547, %v555
      %v586 = vmul.f32 %v548, %v555
      %v587 = vmul.f32 %v549, %v555
      %v588 = vmul.f32 %v550, %v555
      %v590 = vlaneseq
      %v591 = vshrl.u32 %v590, 7
      %v592 = vsub.s32 0, %v591
      %v593 = vrot.slane %v466, %v592
      %v595 = vadd.f32 %v557, %v593
      %v596 = vadd.f32 %v558, %v593
      %v597 = vadd.f32 %v559, %v593
      %v598 = vadd.f32 %v560, %v593
      %v599 = vadd.f32 %v561, %v593
      %v600 = vadd.f32 %v562, %v593
      %v601 = vadd.f32 %v563, %v593
      %v602 = vadd.f32 %v564, %v593
      %v603 = vadd.f32 %v565, %v593
      %v604 = vadd.f32 %v566, %v593
      %v605 = vadd.f32 %v567, %v593
      %v606 = vadd.f32 %v568, %v593
      %v607 = vadd.f32 %v569, %v593
      %v608 = vadd.f32 %v570, %v593
      %v609 = vadd.f32 %v571, %v593
      %v610 = vadd.f32 %v572, %v593
      %v611 = vadd.f32 %v573, %v593
      %v612 = vadd.f32 %v574, %v593
      %v613 = vadd.f32 %v575, %v593
      %v614 = vadd.f32 %v576, %v593
      %v615 = vadd.f32 %v577, %v593
      %v616 = vadd.f32 %v578, %v593
      %v617 = vadd.f32 %v579, %v593
      %v618 = vadd.f32 %v580, %v593
      %v619 = vadd.f32 %v581, %v593
      %v620 = vadd.f32 %v582, %v593
      %v621 = vadd.f32 %v583, %v593
      %v622 = vadd.f32 %v584, %v593
      %v623 = vadd.f32 %v585, %v593
      %v624 = vadd.f32 %v586, %v593
      %v625 = vadd.f32 %v587, %v593
      %v626 = vadd.f32 %v588, %v593
      %vm627 = vcmp.ge.f32.partialorder %v595, 0.0
      %vm628 = vcmp.ge.f32.partialorder %v596, 0.0
      %vm629 = vcmp.ge.f32.partialorder %v597, 0.0
      %vm630 = vcmp.ge.f32.partialorder %v598, 0.0
      %vm631 = vcmp.ge.f32.partialorder %v599, 0.0
      %vm632 = vcmp.ge.f32.partialorder %v600, 0.0
      %vm633 = vcmp.ge.f32.partialorder %v601, 0.0
      %vm634 = vcmp.ge.f32.partialorder %v602, 0.0
      %vm635 = vcmp.ge.f32.partialorder %v603, 0.0
      %vm636 = vcmp.ge.f32.partialorder %v604, 0.0
      %vm637 = vcmp.ge.f32.partialorder %v605, 0.0
      %vm638 = vcmp.ge.f32.partialorder %v606, 0.0
      %vm639 = vcmp.ge.f32.partialorder %v607, 0.0
      %vm640 = vcmp.ge.f32.partialorder %v608, 0.0
      %vm641 = vcmp.ge.f32.partialorder %v609, 0.0
      %vm642 = vcmp.ge.f32.partialorder %v610, 0.0
      %vm643 = vcmp.ge.f32.partialorder %v611, 0.0
      %vm644 = vcmp.ge.f32.partialorder %v612, 0.0
      %vm645 = vcmp.ge.f32.partialorder %v613, 0.0
      %vm646 = vcmp.ge.f32.partialorder %v614, 0.0
      %vm647 = vcmp.ge.f32.partialorder %v615, 0.0
      %vm648 = vcmp.ge.f32.partialorder %v616, 0.0
      %vm649 = vcmp.ge.f32.partialorder %v617, 0.0
      %vm650 = vcmp.ge.f32.partialorder %v618, 0.0
      %vm651 = vcmp.ge.f32.partialorder %v619, 0.0
      %vm652 = vcmp.ge.f32.partialorder %v620, 0.0
      %vm653 = vcmp.ge.f32.partialorder %v621, 0.0
      %vm654 = vcmp.ge.f32.partialorder %v622, 0.0
      %vm655 = vcmp.ge.f32.partialorder %v623, 0.0
      %vm656 = vcmp.ge.f32.partialorder %v624, 0.0
      %vm657 = vcmp.ge.f32.partialorder %v625, 0.0
      %vm658 = vcmp.ge.f32.partialorder %v626, 0.0
      %v659 = vmul.f32 %v595, 0.2
      %v660 = vmul.f32 %v596, 0.2
      %v661 = vmul.f32 %v597, 0.2
      %v662 = vmul.f32 %v598, 0.2
      %v663 = vmul.f32 %v599, 0.2
      %v664 = vmul.f32 %v600, 0.2
      %v665 = vmul.f32 %v601, 0.2
      %v666 = vmul.f32 %v602, 0.2
      %v667 = vmul.f32 %v603, 0.2
      %v668 = vmul.f32 %v604, 0.2
      %v669 = vmul.f32 %v605, 0.2
      %v670 = vmul.f32 %v606, 0.2
      %v671 = vmul.f32 %v607, 0.2
      %v672 = vmul.f32 %v608, 0.2
      %v673 = vmul.f32 %v609, 0.2
      %v674 = vmul.f32 %v610, 0.2
      %v675 = vmul.f32 %v611, 0.2
      %v676 = vmul.f32 %v612, 0.2
      %v677 = vmul.f32 %v613, 0.2
      %v678 = vmul.f32 %v614, 0.2
      %v679 = vmul.f32 %v615, 0.2
      %v680 = vmul.f32 %v616, 0.2
      %v681 = vmul.f32 %v617, 0.2
      %v682 = vmul.f32 %v618, 0.2
      %v683 = vmul.f32 %v619, 0.2
      %v684 = vmul.f32 %v620, 0.2
      %v685 = vmul.f32 %v621, 0.2
      %v686 = vmul.f32 %v622, 0.2
      %v687 = vmul.f32 %v623, 0.2
      %v688 = vmul.f32 %v624, 0.2
      %v689 = vmul.f32 %v625, 0.2
      %v690 = vmul.f32 %v626, 0.2
      %v691 = vsel %vm627, %v595, %v659
      %v692 = vsel %vm628, %v596, %v660
      %v693 = vsel %vm629, %v597, %v661
      %v694 = vsel %vm630, %v598, %v662
      %v695 = vsel %vm631, %v599, %v663
      %v696 = vsel %vm632, %v600, %v664
      %v697 = vsel %vm633, %v601, %v665
      %v698 = vsel %vm634, %v602, %v666
      %v699 = vsel %vm635, %v603, %v667
      %v700 = vsel %vm636, %v604, %v668
      %v701 = vsel %vm637, %v605, %v669
      %v702 = vsel %vm638, %v606, %v670
      %v703 = vsel %vm639, %v607, %v671
      %v704 = vsel %vm640, %v608, %v672
      %v705 = vsel %vm641, %v609, %v673
      %v706 = vsel %vm642, %v610, %v674
      %v707 = vsel %vm643, %v611, %v675
      %v708 = vsel %vm644, %v612, %v676
      %v709 = vsel %vm645, %v613, %v677
      %v710 = vsel %vm646, %v614, %v678
      %v711 = vsel %vm647, %v615, %v679
      %v712 = vsel %vm648, %v616, %v680
      %v713 = vsel %vm649, %v617, %v681
      %v714 = vsel %vm650, %v618, %v682
      %v715 = vsel %vm651, %v619, %v683
      %v716 = vsel %vm652, %v620, %v684
      %v717 = vsel %vm653, %v621, %v685
      %v718 = vsel %vm654, %v622, %v686
      %v719 = vsel %vm655, %v623, %v687
      %v720 = vsel %vm656, %v624, %v688
      %v721 = vsel %vm657, %v625, %v689
      %v722 = vsel %vm658, %v626, %v690
      %v723 = vpack.c.bf16 %v692, %v691
      %v724 = vpack.c.bf16 %v694, %v693
      %v725 = vpack.c.bf16 %v696, %v695
      %v726 = vpack.c.bf16 %v698, %v697
      %v727 = vpack.c.bf16 %v700, %v699
      %v728 = vpack.c.bf16 %v702, %v701
      %v729 = vpack.c.bf16 %v704, %v703
      %v730 = vpack.c.bf16 %v706, %v705
      %v731 = vpack.c.bf16 %v708, %v707
      %v732 = vpack.c.bf16 %v710, %v709
      %v733 = vpack.c.bf16 %v712, %v711
      %v734 = vpack.c.bf16 %v714, %v713
      %v735 = vpack.c.bf16 %v716, %v715
      %v736 = vpack.c.bf16 %v718, %v717
      %v737 = vpack.c.bf16 %v720, %v719
      %v738 = vpack.c.bf16 %v722, %v721
      %v755 = vunpack.c.l.b16 %v723
      %v756 = vunpack.c.h.b16 %v723
      %v757 = vunpack.c.l.b16 %v724
      %v758 = vunpack.c.h.b16 %v724
      %v759 = vunpack.c.l.b16 %v725
      %v760 = vunpack.c.h.b16 %v725
      %v761 = vunpack.c.l.b16 %v726
      %v762 = vunpack.c.h.b16 %v726
      %v763 = vunpack.c.l.b16 %v727
      %v764 = vunpack.c.h.b16 %v727
      %v765 = vunpack.c.l.b16 %v728
      %v766 = vunpack.c.h.b16 %v728
      %v767 = vunpack.c.l.b16 %v729
      %v768 = vunpack.c.h.b16 %v729
      %v769 = vunpack.c.l.b16 %v730
      %v770 = vunpack.c.h.b16 %v730
      %v771 = vunpack.c.l.b16 %v731
      %v772 = vunpack.c.h.b16 %v731
      %v773 = vunpack.c.l.b16 %v732
      %v774 = vunpack.c.h.b16 %v732
      %v775 = vunpack.c.l.b16 %v733
      %v776 = vunpack.c.h.b16 %v733
      %v777 = vunpack.c.l.b16 %v734
      %v778 = vunpack.c.h.b16 %v734
      %v779 = vunpack.c.l.b16 %v735
      %v780 = vunpack.c.h.b16 %v735
      %v781 = vunpack.c.l.b16 %v736
      %v782 = vunpack.c.h.b16 %v736
      %v783 = vunpack.c.l.b16 %v737
      %v784 = vunpack.c.h.b16 %v737
      %v785 = vunpack.c.l.b16 %v738
      %v786 = vunpack.c.h.b16 %v738
      %v787 = vpack.c.b16 %v755, %v755
      %v788 = vpack.c.b16 %v756, %v756
      %v789 = vpack.c.b16 %v757, %v757
      %v790 = vpack.c.b16 %v758, %v758
      %v791 = vpack.c.b16 %v759, %v759
      %v792 = vpack.c.b16 %v760, %v760
      %v793 = vpack.c.b16 %v761, %v761
      %v794 = vpack.c.b16 %v762, %v762
      %v795 = vpack.c.b16 %v763, %v763
      %v796 = vpack.c.b16 %v764, %v764
      %v797 = vpack.c.b16 %v765, %v765
      %v798 = vpack.c.b16 %v766, %v766
      %v799 = vpack.c.b16 %v767, %v767
      %v800 = vpack.c.b16 %v768, %v768
      %v801 = vpack.c.b16 %v769, %v769
      %v802 = vpack.c.b16 %v770, %v770
      %v803 = vpack.c.b16 %v771, %v771
      %v804 = vpack.c.b16 %v772, %v772
      %v805 = vpack.c.b16 %v773, %v773
      %v806 = vpack.c.b16 %v774, %v774
      %v807 = vpack.c.b16 %v775, %v775
      %v808 = vpack.c.b16 %v776, %v776
      %v809 = vpack.c.b16 %v777, %v777
      %v810 = vpack.c.b16 %v778, %v778
      %v811 = vpack.c.b16 %v779, %v779
      %v812 = vpack.c.b16 %v780, %v780
      %v813 = vpack.c.b16 %v781, %v781
      %v814 = vpack.c.b16 %v782, %v782
      %v815 = vpack.c.b16 %v783, %v783
      %v816 = vpack.c.b16 %v784, %v784
      %v817 = vpack.c.b16 %v785, %v785
      %v818 = vpack.c.b16 %v786, %v786
      %vm819 = vsmask.f32 256
      %vm820 = vsmask.f32 4368
      %vm821 = vmor %vm819, %vm820
      %v823 = vshrl.u32 %v787, 16
      %v825 = vrot.slane %v823, 7
      %v826 = vshll.u32 %v787, 16
      %v828 = vor.u32 %v825, %v826
      %v829 = vrot.slane %v825, 4
      %v831 = vshrl.u32 %v788, 16
      %v833 = vrot.slane %v831, 7
      %v834 = vshll.u32 %v788, 16
      %v836 = vor.u32 %v833, %v834
      %v837 = vsel %vm821, %v829, %v836
      %v838 = vrot.slane %v833, 4
      %v840 = vshrl.u32 %v789, 16
      %v842 = vrot.slane %v840, 7
      %v843 = vshll.u32 %v789, 16
      %v845 = vor.u32 %v842, %v843
      %v846 = vsel %vm821, %v838, %v845
      %v847 = vrot.slane %v842, 4
      %v849 = vshrl.u32 %v790, 16
      %v851 = vrot.slane %v849, 7
      %v852 = vshll.u32 %v790, 16
      %v854 = vor.u32 %v851, %v852
      %v855 = vsel %vm821, %v847, %v854
      %v856 = vrot.slane %v851, 4
      %v858 = vshrl.u32 %v791, 16
      %v860 = vrot.slane %v858, 7
      %v861 = vshll.u32 %v791, 16
      %v863 = vor.u32 %v860, %v861
      %v864 = vrot.slane %v860, 4
      %v866 = vshrl.u32 %v792, 16
      %v868 = vrot.slane %v866, 7
      %v869 = vshll.u32 %v792, 16
      %v871 = vor.u32 %v868, %v869
      %v872 = vsel %vm821, %v864, %v871
      %v873 = vrot.slane %v868, 4
      %v875 = vshrl.u32 %v793, 16
      %v877 = vrot.slane %v875, 7
      %v878 = vshll.u32 %v793, 16
      %v880 = vor.u32 %v877, %v878
      %v881 = vsel %vm821, %v873, %v880
      %v882 = vrot.slane %v877, 4
      %v884 = vshrl.u32 %v794, 16
      %v886 = vrot.slane %v884, 7
      %v887 = vshll.u32 %v794, 16
      %v889 = vor.u32 %v886, %v887
      %v890 = vsel %vm821, %v882, %v889
      %v891 = vrot.slane %v886, 4
      %v893 = vshrl.u32 %v795, 16
      %v895 = vrot.slane %v893, 7
      %v896 = vshll.u32 %v795, 16
      %v898 = vor.u32 %v895, %v896
      %v899 = vrot.slane %v895, 4
      %v901 = vshrl.u32 %v796, 16
      %v903 = vrot.slane %v901, 7
      %v904 = vshll.u32 %v796, 16
      %v906 = vor.u32 %v903, %v904
      %v907 = vsel %vm821, %v899, %v906
      %v908 = vrot.slane %v903, 4
      %v910 = vshrl.u32 %v797, 16
      %v912 = vrot.slane %v910, 7
      %v913 = vshll.u32 %v797, 16
      %v915 = vor.u32 %v912, %v913
      %v916 = vsel %vm821, %v908, %v915
      %v917 = vrot.slane %v912, 4
      %v919 = vshrl.u32 %v798, 16
      %v921 = vrot.slane %v919, 7
      %v922 = vshll.u32 %v798, 16
      %v924 = vor.u32 %v921, %v922
      %v925 = vsel %vm821, %v917, %v924
      %v926 = vrot.slane %v921, 4
      %v928 = vshrl.u32 %v799, 16
      %v930 = vrot.slane %v928, 7
      %v931 = vshll.u32 %v799, 16
      %v933 = vor.u32 %v930, %v931
      %v934 = vrot.slane %v930, 4
      %v936 = vshrl.u32 %v800, 16
      %v938 = vrot.slane %v936, 7
      %v939 = vshll.u32 %v800, 16
      %v941 = vor.u32 %v938, %v939
      %v942 = vsel %vm821, %v934, %v941
      %v943 = vrot.slane %v938, 4
      %v945 = vshrl.u32 %v801, 16
      %v947 = vrot.slane %v945, 7
      %v948 = vshll.u32 %v801, 16
      %v950 = vor.u32 %v947, %v948
      %v951 = vsel %vm821, %v943, %v950
      %v952 = vrot.slane %v947, 4
      %v954 = vshrl.u32 %v802, 16
      %v956 = vrot.slane %v954, 7
      %v957 = vshll.u32 %v802, 16
      %v959 = vor.u32 %v956, %v957
      %v960 = vsel %vm821, %v952, %v959
      %v961 = vrot.slane %v956, 4
      %v963 = vshrl.u32 %v803, 16
      %v965 = vrot.slane %v963, 7
      %v966 = vshll.u32 %v803, 16
      %v968 = vor.u32 %v965, %v966
      %v969 = vrot.slane %v965, 4
      %v971 = vshrl.u32 %v804, 16
      %v973 = vrot.slane %v971, 7
      %v974 = vshll.u32 %v804, 16
      %v976 = vor.u32 %v973, %v974
      %v977 = vsel %vm821, %v969, %v976
      %v978 = vrot.slane %v973, 4
      %v980 = vshrl.u32 %v805, 16
      %v982 = vrot.slane %v980, 7
      %v983 = vshll.u32 %v805, 16
      %v985 = vor.u32 %v982, %v983
      %v986 = vsel %vm821, %v978, %v985
      %v987 = vrot.slane %v982, 4
      %v989 = vshrl.u32 %v806, 16
      %v991 = vrot.slane %v989, 7
      %v992 = vshll.u32 %v806, 16
      %v994 = vor.u32 %v991, %v992
      %v995 = vsel %vm821, %v987, %v994
      %v996 = vrot.slane %v991, 4
      %v998 = vshrl.u32 %v807, 16
      %v1000 = vrot.slane %v998, 7
      %v1001 = vshll.u32 %v807, 16
      %v1003 = vor.u32 %v1000, %v1001
      %v1004 = vrot.slane %v1000, 4
      %v1006 = vshrl.u32 %v808, 16
      %v1008 = vrot.slane %v1006, 7
      %v1009 = vshll.u32 %v808, 16
      %v1011 = vor.u32 %v1008, %v1009
      %v1012 = vsel %vm821, %v1004, %v1011
      %v1013 = vrot.slane %v1008, 4
      %v1015 = vshrl.u32 %v809, 16
      %v1017 = vrot.slane %v1015, 7
      %v1018 = vshll.u32 %v809, 16
      %v1020 = vor.u32 %v1017, %v1018
      %v1021 = vsel %vm821, %v1013, %v1020
      %v1022 = vrot.slane %v1017, 4
      %v1024 = vshrl.u32 %v810, 16
      %v1026 = vrot.slane %v1024, 7
      %v1027 = vshll.u32 %v810, 16
      %v1029 = vor.u32 %v1026, %v1027
      %v1030 = vsel %vm821, %v1022, %v1029
      %v1031 = vrot.slane %v1026, 4
      %v1033 = vshrl.u32 %v811, 16
      %v1035 = vrot.slane %v1033, 7
      %v1036 = vshll.u32 %v811, 16
      %v1038 = vor.u32 %v1035, %v1036
      %v1039 = vrot.slane %v1035, 4
      %v1041 = vshrl.u32 %v812, 16
      %v1043 = vrot.slane %v1041, 7
      %v1044 = vshll.u32 %v812, 16
      %v1046 = vor.u32 %v1043, %v1044
      %v1047 = vsel %vm821, %v1039, %v1046
      %v1048 = vrot.slane %v1043, 4
      %v1050 = vshrl.u32 %v813, 16
      %v1052 = vrot.slane %v1050, 7
      %v1053 = vshll.u32 %v813, 16
      %v1055 = vor.u32 %v1052, %v1053
      %v1056 = vsel %vm821, %v1048, %v1055
      %v1057 = vrot.slane %v1052, 4
      %v1059 = vshrl.u32 %v814, 16
      %v1061 = vrot.slane %v1059, 7
      %v1062 = vshll.u32 %v814, 16
      %v1064 = vor.u32 %v1061, %v1062
      %v1065 = vsel %vm821, %v1057, %v1064
      %v1066 = vrot.slane %v1061, 4
      %v1068 = vshrl.u32 %v815, 16
      %v1070 = vrot.slane %v1068, 7
      %v1071 = vshll.u32 %v815, 16
      %v1073 = vor.u32 %v1070, %v1071
      %v1074 = vrot.slane %v1070, 4
      %v1076 = vshrl.u32 %v816, 16
      %v1078 = vrot.slane %v1076, 7
      %v1079 = vshll.u32 %v816, 16
      %v1081 = vor.u32 %v1078, %v1079
      %v1082 = vsel %vm821, %v1074, %v1081
      %v1083 = vrot.slane %v1078, 4
      %v1085 = vshrl.u32 %v817, 16
      %v1087 = vrot.slane %v1085, 7
      %v1088 = vshll.u32 %v817, 16
      %v1090 = vor.u32 %v1087, %v1088
      %v1091 = vsel %vm821, %v1083, %v1090
      %v1092 = vrot.slane %v1087, 4
      %v1094 = vshrl.u32 %v818, 16
      %v1096 = vrot.slane %v1094, 7
      %v1097 = vshll.u32 %v818, 16
      %v1099 = vor.u32 %v1096, %v1097
      %v1100 = vsel %vm821, %v1092, %v1099
      %v1101 = vrot.slane %v1096, 4
      %s1142 = scalar_lea.vmem [#allocation2], 20
      %vm1143 = vcmask 60416
      %vm1144 = vsmask.f32 7938
      %vm1145 = vmand %vm1143, %vm1144
      %v1146 = vld [vmem:[%s1142] sm:$0xf]
      %v1147 = vsel %vm1145, %v828, %v1146
      %1148 = vst [vmem:[%s1142] sm:$0xf] %v1147
      %1149 = vst.msk [vmem:[%s1142 + $0x4] sm:$0xf] %vm467, %v837
      %1150 = vst.msk [vmem:[%s1142 + $0x8] sm:$0xf] %vm467, %v846
      %1151 = vst.msk [vmem:[%s1142 + $0xc] sm:$0xf] %vm467, %v855
      %vm1152 = vcmask 57344
      %vm1153 = vmand %vm1152, %vm819
      %v1154 = vld [vmem:[%s1142 + $0x10] sm:$0x1]
      %v1155 = vsel %vm1153, %v856, %v1154
      %1156 = vst [vmem:[%s1142 + $0x10] sm:$0x1] %v1155
      %v1157 = vld [vmem:[%s1142 + $0x14] sm:$0xf]
      %v1158 = vsel %vm1145, %v863, %v1157
      %1159 = vst [vmem:[%s1142 + $0x14] sm:$0xf] %v1158
      %1160 = vst.msk [vmem:[%s1142 + $0x18] sm:$0xf] %vm467, %v872
      %1161 = vst.msk [vmem:[%s1142 + $0x1c] sm:$0xf] %vm467, %v881
      %1162 = vst.msk [vmem:[%s1142 + $0x20] sm:$0xf] %vm467, %v890
      %v1163 = vld [vmem:[%s1142 + $0x24] sm:$0x1]
      %v1164 = vsel %vm1153, %v891, %v1163
      %1165 = vst [vmem:[%s1142 + $0x24] sm:$0x1] %v1164
      %v1166 = vld [vmem:[%s1142 + $0x28] sm:$0xf]
      %v1167 = vsel %vm1145, %v898, %v1166
      %1168 = vst [vmem:[%s1142 + $0x28] sm:$0xf] %v1167
      %1169 = vst.msk [vmem:[%s1142 + $0x2c] sm:$0xf] %vm467, %v907
      %1170 = vst.msk [vmem:[%s1142 + $0x30] sm:$0xf] %vm467, %v916
      %1171 = vst.msk [vmem:[%s1142 + $0x34] sm:$0xf] %vm467, %v925
      %v1172 = vld [vmem:[%s1142 + $0x38] sm:$0x1]
      %v1173 = vsel %vm1153, %v926, %v1172
      %1174 = vst [vmem:[%s1142 + $0x38] sm:$0x1] %v1173
      %v1175 = vld [vmem:[%s1142 + $0x3c] sm:$0xf]
      %v1176 = vsel %vm1145, %v933, %v1175
      %1177 = vst [vmem:[%s1142 + $0x3c] sm:$0xf] %v1176
      %1178 = vst.msk [vmem:[%s1142 + $0x40] sm:$0xf] %vm467, %v942
      %1179 = vst.msk [vmem:[%s1142 + $0x44] sm:$0xf] %vm467, %v951
      %1180 = vst.msk [vmem:[%s1142 + $0x48] sm:$0xf] %vm467, %v960
      %v1181 = vld [vmem:[%s1142 + $0x4c] sm:$0x1]
      %v1182 = vsel %vm1153, %v961, %v1181
      %1183 = vst [vmem:[%s1142 + $0x4c] sm:$0x1] %v1182
      %v1184 = vld [vmem:[%s1142 + $0x50] sm:$0xf]
      %v1185 = vsel %vm1145, %v968, %v1184
      %1186 = vst [vmem:[%s1142 + $0x50] sm:$0xf] %v1185
      %1187 = vst.msk [vmem:[%s1142 + $0x54] sm:$0xf] %vm467, %v977
      %1188 = vst.msk [vmem:[%s1142 + $0x58] sm:$0xf] %vm467, %v986
      %1189 = vst.msk [vmem:[%s1142 + $0x5c] sm:$0xf] %vm467, %v995
      %v1190 = vld [vmem:[%s1142 + $0x60] sm:$0x1]
      %v1191 = vsel %vm1153, %v996, %v1190
      %1192 = vst [vmem:[%s1142 + $0x60] sm:$0x1] %v1191
      %v1193 = vld [vmem:[%s1142 + $0x64] sm:$0xf]
      %v1194 = vsel %vm1145, %v1003, %v1193
      %1195 = vst [vmem:[%s1142 + $0x64] sm:$0xf] %v1194
      %1196 = vst.msk [vmem:[%s1142 + $0x68] sm:$0xf] %vm467, %v1012
      %1197 = vst.msk [vmem:[%s1142 + $0x6c] sm:$0xf] %vm467, %v1021
      %1198 = vst.msk [vmem:[%s1142 + $0x70] sm:$0xf] %vm467, %v1030
      %v1199 = vld [vmem:[%s1142 + $0x74] sm:$0x1]
      %v1200 = vsel %vm1153, %v1031, %v1199
      %1201 = vst [vmem:[%s1142 + $0x74] sm:$0x1] %v1200
      %v1202 = vld [vmem:[%s1142 + $0x78] sm:$0xf]
      %v1203 = vsel %vm1145, %v1038, %v1202
      %1204 = vst [vmem:[%s1142 + $0x78] sm:$0xf] %v1203
      %1205 = vst.msk [vmem:[%s1142 + $0x7c] sm:$0xf] %vm467, %v1047
      %1206 = vst.msk [vmem:[%s1142 + $0x80] sm:$0xf] %vm467, %v1056
      %1207 = vst.msk [vmem:[%s1142 + $0x84] sm:$0xf] %vm467, %v1065
      %v1208 = vld [vmem:[%s1142 + $0x88] sm:$0x1]
      %v1209 = vsel %vm1153, %v1066, %v1208
      %1210 = vst [vmem:[%s1142 + $0x88] sm:$0x1] %v1209
      %v1211 = vld [vmem:[%s1142 + $0x8c] sm:$0xf]
      %v1212 = vsel %vm1145, %v1073, %v1211
      %1213 = vst [vmem:[%s1142 + $0x8c] sm:$0xf] %v1212
      %1214 = vst.msk [vmem:[%s1142 + $0x90] sm:$0xf] %vm467, %v1082
      %1215 = vst.msk [vmem:[%s1142 + $0x94] sm:$0xf] %vm467, %v1091
      %1216 = vst.msk [vmem:[%s1142 + $0x98] sm:$0xf] %vm467, %v1100
      %v1217 = vld [vmem:[%s1142 + $0x9c] sm:$0x1]
      %v1218 = vsel %vm1153, %v1101, %v1217
      %1219 = vst [vmem:[%s1142 + $0x9c] sm:$0x1] %v1218
      %p1220 = scmp.gt.s32.totalorder %s24, 0
      // Predicated region
      $region45: #{unet_up_forward.6} parent=43 // pred_check
        %p1221 = pneg %p1220
      $region46: #{unet_up_forward.6} parent=43 // pred_check_branch
        %1223 = sbr.rel (%p1221) target = $region48
      $region47: #{unet_up_forward.6} parent=43 // pred_region
        %s1224 = scalar_lea.vmem %s412, 224
        %v1225 = vld [vmem:[%s1224] sm:$0xff]
        %v1226 = vld [vmem:[%s1224 + $0x8] sm:$0xff]
        %v1227 = vld [vmem:[%s1224 + $0x10] sm:$0xff]
        %v1228 = vld [vmem:[%s1224 + $0x18] sm:$0xff]
        %v1229 = vmul.f32 %v1225, %v555
        %v1230 = vmul.f32 %v1226, %v555
        %v1231 = vmul.f32 %v1227, %v555
        %v1232 = vmul.f32 %v1228, %v555
        %v1233 = vadd.f32 %v1229, %v593
        %v1234 = vadd.f32 %v1230, %v593
        %v1235 = vadd.f32 %v1231, %v593
        %v1236 = vadd.f32 %v1232, %v593
        %vm1237 = vcmp.ge.f32.partialorder %v1233, 0.0
        %vm1238 = vcmp.ge.f32.partialorder %v1234, 0.0
        %vm1239 = vcmp.ge.f32.partialorder %v1235, 0.0
        %vm1240 = vcmp.ge.f32.partialorder %v1236, 0.0
        %v1241 = vmul.f32 %v1233, 0.2
        %v1242 = vmul.f32 %v1234, 0.2
        %v1243 = vmul.f32 %v1235, 0.2
        %v1244 = vmul.f32 %v1236, 0.2
        %v1245 = vsel %vm1237, %v1233, %v1241
        %v1246 = vsel %vm1238, %v1234, %v1242
        %v1247 = vsel %vm1239, %v1235, %v1243
        %v1248 = vsel %vm1240, %v1236, %v1244
        %v1249 = vpack.c.bf16 %v1246, %v1245
        %v1250 = vpack.c.bf16 %v1248, %v1247
        %v1253 = vunpack.c.l.b16 %v1249
        %v1254 = vunpack.c.h.b16 %v1249
        %v1255 = vunpack.c.l.b16 %v1250
        %v1256 = vunpack.c.h.b16 %v1250
        %v1257 = vpack.c.b16 %v1253, %v1253
        %v1258 = vpack.c.b16 %v1254, %v1254
        %v1259 = vpack.c.b16 %v1255, %v1255
        %v1260 = vpack.c.b16 %v1256, %v1256
        %v1262 = vshrl.u32 %v1257, 16
        %v1264 = vrot.slane %v1262, 7
        %v1265 = vshll.u32 %v1257, 16
        %v1267 = vor.u32 %v1264, %v1265
        %v1268 = vrot.slane %v1264, 4
        %v1270 = vshrl.u32 %v1258, 16
        %v1272 = vrot.slane %v1270, 7
        %v1273 = vshll.u32 %v1258, 16
        %v1275 = vor.u32 %v1272, %v1273
        %v1276 = vsel %vm821, %v1268, %v1275
        %v1277 = vrot.slane %v1272, 4
        %v1279 = vshrl.u32 %v1259, 16
        %v1281 = vrot.slane %v1279, 7
        %v1282 = vshll.u32 %v1259, 16
        %v1284 = vor.u32 %v1281, %v1282
        %v1285 = vsel %vm821, %v1277, %v1284
        %v1286 = vrot.slane %v1281, 4
        %v1288 = vshrl.u32 %v1260, 16
        %v1290 = vrot.slane %v1288, 7
        %v1291 = vshll.u32 %v1260, 16
        %v1293 = vor.u32 %v1290, %v1291
        %v1294 = vsel %vm821, %v1286, %v1293
        %v1295 = vrot.slane %v1290, 4
        %v1301 = vld [vmem:[#allocation2] sm:$0xf]
        %v1302 = vsel %vm1145, %v1267, %v1301
        %1303 = vst [vmem:[#allocation2] sm:$0xf] %v1302
        %1304 = vst.msk [vmem:[#allocation2 + $0x4] sm:$0xf] %vm467, %v1276
        %1305 = vst.msk [vmem:[#allocation2 + $0x8] sm:$0xf] %vm467, %v1285
        %1306 = vst.msk [vmem:[#allocation2 + $0xc] sm:$0xf] %vm467, %v1294
        %v1307 = vld [vmem:[#allocation2 + $0x10] sm:$0x1]
        %v1308 = vsel %vm1153, %v1295, %v1307
        %1309 = vst [vmem:[#allocation2 + $0x10] sm:$0x1] %v1308
      $region48: #{unet_up_forward.6} parent=43 // pred_fallthru
        _
      %p1310 = scmp.lt.s32.totalorder %s24, 3
      // Predicated region
      $region49: #{unet_up_forward.6} parent=43 // pred_check
        %p1311 = pneg %p1310
      $region50: #{unet_up_forward.6} parent=43 // pred_check_branch
        %1313 = sbr.rel (%p1311) target = $region52
      $region51: #{unet_up_forward.6} parent=43 // pred_region
        %v1314 = vld [vmem:[%s440] sm:$0xff]
        %v1315 = vld [vmem:[%s440 + $0x8] sm:$0xff]
        %v1316 = vld [vmem:[%s440 + $0x10] sm:$0xff]
        %v1317 = vld [vmem:[%s440 + $0x18] sm:$0xff]
        %v1318 = vmul.f32 %v1314, %v555
        %v1319 = vmul.f32 %v1315, %v555
        %v1320 = vmul.f32 %v1316, %v555
        %v1321 = vmul.f32 %v1317, %v555
        %v1322 = vadd.f32 %v1318, %v593
        %v1323 = vadd.f32 %v1319, %v593
        %v1324 = vadd.f32 %v1320, %v593
        %v1325 = vadd.f32 %v1321, %v593
        %vm1326 = vcmp.ge.f32.partialorder %v1322, 0.0
        %vm1327 = vcmp.ge.f32.partialorder %v1323, 0.0
        %vm1328 = vcmp.ge.f32.partialorder %v1324, 0.0
        %vm1329 = vcmp.ge.f32.partialorder %v1325, 0.0
        %v1330 = vmul.f32 %v1322, 0.2
        %v1331 = vmul.f32 %v1323, 0.2
        %v1332 = vmul.f32 %v1324, 0.2
        %v1333 = vmul.f32 %v1325, 0.2
        %v1334 = vsel %vm1326, %v1322, %v1330
        %v1335 = vsel %vm1327, %v1323, %v1331
        %v1336 = vsel %vm1328, %v1324, %v1332
        %v1337 = vsel %vm1329, %v1325, %v1333
        %v1338 = vpack.c.bf16 %v1335, %v1334
        %v1339 = vpack.c.bf16 %v1337, %v1336
        %v1342 = vunpack.c.l.b16 %v1338
        %v1343 = vunpack.c.h.b16 %v1338
        %v1344 = vunpack.c.l.b16 %v1339
        %v1345 = vunpack.c.h.b16 %v1339
        %v1346 = vpack.c.b16 %v1342, %v1342
        %v1347 = vpack.c.b16 %v1343, %v1343
        %v1348 = vpack.c.b16 %v1344, %v1344
        %v1349 = vpack.c.b16 %v1345, %v1345
        %v1351 = vshrl.u32 %v1346, 16
        %v1353 = vrot.slane %v1351, 7
        %v1354 = vshll.u32 %v1346, 16
        %v1356 = vor.u32 %v1353, %v1354
        %v1357 = vrot.slane %v1353, 4
        %v1359 = vshrl.u32 %v1347, 16
        %v1361 = vrot.slane %v1359, 7
        %v1362 = vshll.u32 %v1347, 16
        %v1364 = vor.u32 %v1361, %v1362
        %v1365 = vsel %vm821, %v1357, %v1364
        %v1366 = vrot.slane %v1361, 4
        %v1368 = vshrl.u32 %v1348, 16
        %v1370 = vrot.slane %v1368, 7
        %v1371 = vshll.u32 %v1348, 16
        %v1373 = vor.u32 %v1370, %v1371
        %v1374 = vsel %vm821, %v1366, %v1373
        %v1375 = vrot.slane %v1370, 4
        %v1377 = vshrl.u32 %v1349, 16
        %v1379 = vrot.slane %v1377, 7
        %v1380 = vshll.u32 %v1349, 16
        %v1382 = vor.u32 %v1379, %v1380
        %v1383 = vsel %vm821, %v1375, %v1382
        %v1384 = vrot.slane %v1379, 4
        %s1390 = scalar_lea.vmem [#allocation2], 180
        %v1391 = vld [vmem:[%s1390] sm:$0xf]
        %v1392 = vsel %vm1145, %v1356, %v1391
        %1393 = vst [vmem:[%s1390] sm:$0xf] %v1392
        %1394 = vst.msk [vmem:[%s1390 + $0x4] sm:$0xf] %vm467, %v1365
        %1395 = vst.msk [vmem:[%s1390 + $0x8] sm:$0xf] %vm467, %v1374
        %1396 = vst.msk [vmem:[%s1390 + $0xc] sm:$0xf] %vm467, %v1383
        %v1397 = vld [vmem:[%s1390 + $0x10] sm:$0x1]
        %v1398 = vsel %vm1153, %v1384, %v1397
        %1399 = vst [vmem:[%s1390 + $0x10] sm:$0x1] %v1398
      $region52: #{unet_up_forward.6} parent=43 // pred_fallthru
        _
      %v1400 = vld [vmem:[#allocation2] sm:$0xf]
      %v1401 = vld [vmem:[#allocation2 + $0x4] sm:$0xf]
      %v1402 = vld [vmem:[#allocation2 + $0x8] sm:$0xf]
      %v1403 = vld [vmem:[#allocation2 + $0xc] sm:$0xf]
      %v1404 = vld [vmem:[#allocation2 + $0x14] sm:$0xf]
      %v1405 = vld [vmem:[#allocation2 + $0x18] sm:$0xf]
      %v1406 = vld [vmem:[#allocation2 + $0x1c] sm:$0xf]
      %v1407 = vld [vmem:[#allocation2 + $0x20] sm:$0xf]
      %v1408 = vld [vmem:[#allocation2 + $0x28] sm:$0xf]
      %v1409 = vld [vmem:[#allocation2 + $0x2c] sm:$0xf]
      %v1410 = vld [vmem:[#allocation2 + $0x30] sm:$0xf]
      %v1411 = vld [vmem:[#allocation2 + $0x34] sm:$0xf]
      %v1412 = vld [vmem:[#allocation2 + $0x3c] sm:$0xf]
      %v1413 = vld [vmem:[#allocation2 + $0x40] sm:$0xf]
      %v1414 = vld [vmem:[#allocation2 + $0x44] sm:$0xf]
      %v1415 = vld [vmem:[#allocation2 + $0x48] sm:$0xf]
      %v1416 = vld [vmem:[#allocation2 + $0x50] sm:$0xf]
      %v1417 = vld [vmem:[#allocation2 + $0x54] sm:$0xf]
      %v1418 = vld [vmem:[#allocation2 + $0x58] sm:$0xf]
      %v1419 = vld [vmem:[#allocation2 + $0x5c] sm:$0xf]
      %v1420 = vld [vmem:[#allocation2 + $0x64] sm:$0xf]
      %v1421 = vld [vmem:[#allocation2 + $0x68] sm:$0xf]
      %v1422 = vld [vmem:[#allocation2 + $0x6c] sm:$0xf]
      %v1423 = vld [vmem:[#allocation2 + $0x70] sm:$0xf]
      %v1424 = vld [vmem:[#allocation2 + $0x78] sm:$0xf]
      %v1425 = vld [vmem:[#allocation2 + $0x7c] sm:$0xf]
      %v1426 = vld [vmem:[#allocation2 + $0x80] sm:$0xf]
      %v1427 = vld [vmem:[#allocation2 + $0x84] sm:$0xf]
      %v1428 = vld [vmem:[#allocation2 + $0x8c] sm:$0xf]
      %v1429 = vld [vmem:[#allocation2 + $0x90] sm:$0xf]
      %v1430 = vld [vmem:[#allocation2 + $0x94] sm:$0xf]
      %v1431 = vld [vmem:[#allocation2 + $0x98] sm:$0xf]
      %1432 = vst.msk [vmem:[#allocation3] sm:$0xf] %vm467, %v1400
      %1433 = vst.msk [vmem:[#allocation3 + $0x4] sm:$0xf] %vm467, %v1401
      %1434 = vst.msk [vmem:[#allocation3 + $0x8] sm:$0xf] %vm467, %v1402
      %1435 = vst.msk [vmem:[#allocation3 + $0xc] sm:$0xf] %vm467, %v1403
      %1436 = vst.msk [vmem:[#allocation3 + $0x10] sm:$0xf] %vm467, %v1404
      %1437 = vst.msk [vmem:[#allocation3 + $0x14] sm:$0xf] %vm467, %v1405
      %1438 = vst.msk [vmem:[#allocation3 + $0x18] sm:$0xf] %vm467, %v1406
      %1439 = vst.msk [vmem:[#allocation3 + $0x1c] sm:$0xf] %vm467, %v1407
      %1440 = vst.msk [vmem:[#allocation3 + $0x20] sm:$0xf] %vm467, %v1408
      %1441 = vst.msk [vmem:[#allocation3 + $0x24] sm:$0xf] %vm467, %v1409
      %1442 = vst.msk [vmem:[#allocation3 + $0x28] sm:$0xf] %vm467, %v1410
      %1443 = vst.msk [vmem:[#allocation3 + $0x2c] sm:$0xf] %vm467, %v1411
      %1444 = vst.msk [vmem:[#allocation3 + $0x30] sm:$0xf] %vm467, %v1412
      %1445 = vst.msk [vmem:[#allocation3 + $0x34] sm:$0xf] %vm467, %v1413
      %1446 = vst.msk [vmem:[#allocation3 + $0x38] sm:$0xf] %vm467, %v1414
      %1447 = vst.msk [vmem:[#allocation3 + $0x3c] sm:$0xf] %vm467, %v1415
      %1448 = vst.msk [vmem:[#allocation3 + $0x40] sm:$0xf] %vm467, %v1416
      %1449 = vst.msk [vmem:[#allocation3 + $0x44] sm:$0xf] %vm467, %v1417
      %1450 = vst.msk [vmem:[#allocation3 + $0x48] sm:$0xf] %vm467, %v1418
      %1451 = vst.msk [vmem:[#allocation3 + $0x4c] sm:$0xf] %vm467, %v1419
      %1452 = vst.msk [vmem:[#allocation3 + $0x50] sm:$0xf] %vm467, %v1420
      %1453 = vst.msk [vmem:[#allocation3 + $0x54] sm:$0xf] %vm467, %v1421
      %1454 = vst.msk [vmem:[#allocation3 + $0x58] sm:$0xf] %vm467, %v1422
      %1455 = vst.msk [vmem:[#allocation3 + $0x5c] sm:$0xf] %vm467, %v1423
      %1456 = vst.msk [vmem:[#allocation3 + $0x60] sm:$0xf] %vm467, %v1424
      %1457 = vst.msk [vmem:[#allocation3 + $0x64] sm:$0xf] %vm467, %v1425
      %1458 = vst.msk [vmem:[#allocation3 + $0x68] sm:$0xf] %vm467, %v1426
      %1459 = vst.msk [vmem:[#allocation3 + $0x6c] sm:$0xf] %vm467, %v1427
      %1460 = vst.msk [vmem:[#allocation3 + $0x70] sm:$0xf] %vm467, %v1428
      %1461 = vst.msk [vmem:[#allocation3 + $0x74] sm:$0xf] %vm467, %v1429
      %1462 = vst.msk [vmem:[#allocation3 + $0x78] sm:$0xf] %vm467, %v1430
      %1463 = vst.msk [vmem:[#allocation3 + $0x7c] sm:$0xf] %vm467, %v1431
      %v1464 = vld [vmem:[#allocation2] sm:$0xf]
      %v1465 = vld [vmem:[#allocation2 + $0x4] sm:$0xf]
      %v1466 = vld [vmem:[#allocation2 + $0x8] sm:$0xf]
      %v1467 = vld [vmem:[#allocation2 + $0xc] sm:$0xf]
      %v1468 = vld [vmem:[#allocation2 + $0x10] sm:$0x1]
      %v1469 = vld [vmem:[#allocation2 + $0x14] sm:$0xf]
      %v1470 = vld [vmem:[#allocation2 + $0x18] sm:$0xf]
      %v1471 = vld [vmem:[#allocation2 + $0x1c] sm:$0xf]
      %v1472 = vld [vmem:[#allocation2 + $0x20] sm:$0xf]
      %v1473 = vld [vmem:[#allocation2 + $0x24] sm:$0x1]
      %v1474 = vld [vmem:[#allocation2 + $0x28] sm:$0xf]
      %v1475 = vld [vmem:[#allocation2 + $0x2c] sm:$0xf]
      %v1476 = vld [vmem:[#allocation2 + $0x30] sm:$0xf]
      %v1477 = vld [vmem:[#allocation2 + $0x34] sm:$0xf]
      %v1478 = vld [vmem:[#allocation2 + $0x38] sm:$0x1]
      %v1479 = vld [vmem:[#allocation2 + $0x3c] sm:$0xf]
      %v1480 = vld [vmem:[#allocation2 + $0x40] sm:$0xf]
      %v1481 = vld [vmem:[#allocation2 + $0x44] sm:$0xf]
      %v1482 = vld [vmem:[#allocation2 + $0x48] sm:$0xf]
      %v1483 = vld [vmem:[#allocation2 + $0x4c] sm:$0x1]
      %v1484 = vld [vmem:[#allocation2 + $0x50] sm:$0xf]
      %v1485 = vld [vmem:[#allocation2 + $0x54] sm:$0xf]
      %v1486 = vld [vmem:[#allocation2 + $0x58] sm:$0xf]
      %v1487 = vld [vmem:[#allocation2 + $0x5c] sm:$0xf]
      %v1488 = vld [vmem:[#allocation2 + $0x60] sm:$0x1]
      %v1489 = vld [vmem:[#allocation2 + $0x64] sm:$0xf]
      %v1490 = vld [vmem:[#allocation2 + $0x68] sm:$0xf]
      %v1491 = vld [vmem:[#allocation2 + $0x6c] sm:$0xf]
      %v1492 = vld [vmem:[#allocation2 + $0x70] sm:$0xf]
      %v1493 = vld [vmem:[#allocation2 + $0x74] sm:$0x1]
      %v1494 = vld [vmem:[#allocation2 + $0x78] sm:$0xf]
      %v1495 = vld [vmem:[#allocation2 + $0x7c] sm:$0xf]
      %v1496 = vld [vmem:[#allocation2 + $0x80] sm:$0xf]
      %v1497 = vld [vmem:[#allocation2 + $0x84] sm:$0xf]
      %v1498 = vld [vmem:[#allocation2 + $0x88] sm:$0x1]
      %v1499 = vld [vmem:[#allocation2 + $0x8c] sm:$0xf]
      %v1500 = vld [vmem:[#allocation2 + $0x90] sm:$0xf]
      %v1501 = vld [vmem:[#allocation2 + $0x94] sm:$0xf]
      %v1502 = vld [vmem:[#allocation2 + $0x98] sm:$0xf]
      %v1503 = vld [vmem:[#allocation2 + $0x9c] sm:$0x1]
      %vm1504 = vsmask.f32 3328
      %vm1505 = vsmask.f32 7440
      %vm1506 = vmor %vm1504, %vm1505
      %v1508 = vshrl.u32 %v1464, 16
      %v1510 = vrot.slane %v1508, 4
      %v1511 = vshll.u32 %v1464, 16
      %v1513 = vrot.slane %v1511, 5
      %v1514 = vor.u32 %v1510, %v1513
      %v1515 = vrot.slane %v1514, 4
      %v1517 = vshll.u32 %v1465, 16
      %v1519 = vrot.slane %v1517, 5
      %v1520 = vsel %vm1506, %v1515, %v1519
      %v1521 = vshrl.u32 %v1465, 16
      %v1523 = vrot.slane %v1521, 4
      %v1524 = vor.u32 %v1523, %v1519
      %v1525 = vrot.slane %v1524, 4
      %v1527 = vshll.u32 %v1466, 16
      %v1529 = vrot.slane %v1527, 5
      %v1530 = vsel %vm1506, %v1525, %v1529
      %v1531 = vshrl.u32 %v1466, 16
      %v1533 = vrot.slane %v1531, 4
      %v1534 = vor.u32 %v1533, %v1529
      %v1535 = vrot.slane %v1534, 4
      %v1537 = vshll.u32 %v1467, 16
      %v1539 = vrot.slane %v1537, 5
      %v1540 = vsel %vm1506, %v1535, %v1539
      %v1541 = vshrl.u32 %v1467, 16
      %v1543 = vrot.slane %v1541, 4
      %v1544 = vor.u32 %v1543, %v1539
      %v1545 = vrot.slane %v1544, 4
      %v1547 = vshll.u32 %v1468, 16
      %v1549 = vrot.slane %v1547, 5
      %v1550 = vsel %vm1506, %v1545, %v1549
      %v1552 = vshrl.u32 %v1469, 16
      %v1554 = vrot.slane %v1552, 4
      %v1555 = vshll.u32 %v1469, 16
      %v1557 = vrot.slane %v1555, 5
      %v1558 = vor.u32 %v1554, %v1557
      %v1559 = vrot.slane %v1558, 4
      %v1561 = vshll.u32 %v1470, 16
      %v1563 = vrot.slane %v1561, 5
      %v1564 = vsel %vm1506, %v1559, %v1563
      %v1565 = vshrl.u32 %v1470, 16
      %v1567 = vrot.slane %v1565, 4
      %v1568 = vor.u32 %v1567, %v1563
      %v1569 = vrot.slane %v1568, 4
      %v1571 = vshll.u32 %v1471, 16
      %v1573 = vrot.slane %v1571, 5
      %v1574 = vsel %vm1506, %v1569, %v1573
      %v1575 = vshrl.u32 %v1471, 16
      %v1577 = vrot.slane %v1575, 4
      %v1578 = vor.u32 %v1577, %v1573
      %v1579 = vrot.slane %v1578, 4
      %v1581 = vshll.u32 %v1472, 16
      %v1583 = vrot.slane %v1581, 5
      %v1584 = vsel %vm1506, %v1579, %v1583
      %v1585 = vshrl.u32 %v1472, 16
      %v1587 = vrot.slane %v1585, 4
      %v1588 = vor.u32 %v1587, %v1583
      %v1589 = vrot.slane %v1588, 4
      %v1591 = vshll.u32 %v1473, 16
      %v1593 = vrot.slane %v1591, 5
      %v1594 = vsel %vm1506, %v1589, %v1593
      %v1596 = vshrl.u32 %v1474, 16
      %v1598 = vrot.slane %v1596, 4
      %v1599 = vshll.u32 %v1474, 16
      %v1601 = vrot.slane %v1599, 5
      %v1602 = vor.u32 %v1598, %v1601
      %v1603 = vrot.slane %v1602, 4
      %v1605 = vshll.u32 %v1475, 16
      %v1607 = vrot.slane %v1605, 5
      %v1608 = vsel %vm1506, %v1603, %v1607
      %v1609 = vshrl.u32 %v1475, 16
      %v1611 = vrot.slane %v1609, 4
      %v1612 = vor.u32 %v1611, %v1607
      %v1613 = vrot.slane %v1612, 4
      %v1615 = vshll.u32 %v1476, 16
      %v1617 = vrot.slane %v1615, 5
      %v1618 = vsel %vm1506, %v1613, %v1617
      %v1619 = vshrl.u32 %v1476, 16
      %v1621 = vrot.slane %v1619, 4
      %v1622 = vor.u32 %v1621, %v1617
      %v1623 = vrot.slane %v1622, 4
      %v1625 = vshll.u32 %v1477, 16
      %v1627 = vrot.slane %v1625, 5
      %v1628 = vsel %vm1506, %v1623, %v1627
      %v1629 = vshrl.u32 %v1477, 16
      %v1631 = vrot.slane %v1629, 4
      %v1632 = vor.u32 %v1631, %v1627
      %v1633 = vrot.slane %v1632, 4
      %v1635 = vshll.u32 %v1478, 16
      %v1637 = vrot.slane %v1635, 5
      %v1638 = vsel %vm1506, %v1633, %v1637
      %v1640 = vshrl.u32 %v1479, 16
      %v1642 = vrot.slane %v1640, 4
      %v1643 = vshll.u32 %v1479, 16
      %v1645 = vrot.slane %v1643, 5
      %v1646 = vor.u32 %v1642, %v1645
      %v1647 = vrot.slane %v1646, 4
      %v1649 = vshll.u32 %v1480, 16
      %v1651 = vrot.slane %v1649, 5
      %v1652 = vsel %vm1506, %v1647, %v1651
      %v1653 = vshrl.u32 %v1480, 16
      %v1655 = vrot.slane %v1653, 4
      %v1656 = vor.u32 %v1655, %v1651
      %v1657 = vrot.slane %v1656, 4
      %v1659 = vshll.u32 %v1481, 16
      %v1661 = vrot.slane %v1659, 5
      %v1662 = vsel %vm1506, %v1657, %v1661
      %v1663 = vshrl.u32 %v1481, 16
      %v1665 = vrot.slane %v1663, 4
      %v1666 = vor.u32 %v1665, %v1661
      %v1667 = vrot.slane %v1666, 4
      %v1669 = vshll.u32 %v1482, 16
      %v1671 = vrot.slane %v1669, 5
      %v1672 = vsel %vm1506, %v1667, %v1671
      %v1673 = vshrl.u32 %v1482, 16
      %v1675 = vrot.slane %v1673, 4
      %v1676 = vor.u32 %v1675, %v1671
      %v1677 = vrot.slane %v1676, 4
      %v1679 = vshll.u32 %v1483, 16
      %v1681 = vrot.slane %v1679, 5
      %v1682 = vsel %vm1506, %v1677, %v1681
      %v1684 = vshrl.u32 %v1484, 16
      %v1686 = vrot.slane %v1684, 4
      %v1687 = vshll.u32 %v1484, 16
      %v1689 = vrot.slane %v1687, 5
      %v1690 = vor.u32 %v1686, %v1689
      %v1691 = vrot.slane %v1690, 4
      %v1693 = vshll.u32 %v1485, 16
      %v1695 = vrot.slane %v1693, 5
      %v1696 = vsel %vm1506, %v1691, %v1695
      %v1697 = vshrl.u32 %v1485, 16
      %v1699 = vrot.slane %v1697, 4
      %v1700 = vor.u32 %v1699, %v1695
      %v1701 = vrot.slane %v1700, 4
      %v1703 = vshll.u32 %v1486, 16
      %v1705 = vrot.slane %v1703, 5
      %v1706 = vsel %vm1506, %v1701, %v1705
      %v1707 = vshrl.u32 %v1486, 16
      %v1709 = vrot.slane %v1707, 4
      %v1710 = vor.u32 %v1709, %v1705
      %v1711 = vrot.slane %v1710, 4
      %v1713 = vshll.u32 %v1487, 16
      %v1715 = vrot.slane %v1713, 5
      %v1716 = vsel %vm1506, %v1711, %v1715
      %v1717 = vshrl.u32 %v1487, 16
      %v1719 = vrot.slane %v1717, 4
      %v1720 = vor.u32 %v1719, %v1715
      %v1721 = vrot.slane %v1720, 4
      %v1723 = vshll.u32 %v1488, 16
      %v1725 = vrot.slane %v1723, 5
      %v1726 = vsel %vm1506, %v1721, %v1725
      %v1728 = vshrl.u32 %v1489, 16
      %v1730 = vrot.slane %v1728, 4
      %v1731 = vshll.u32 %v1489, 16
      %v1733 = vrot.slane %v1731, 5
      %v1734 = vor.u32 %v1730, %v1733
      %v1735 = vrot.slane %v1734, 4
      %v1737 = vshll.u32 %v1490, 16
      %v1739 = vrot.slane %v1737, 5
      %v1740 = vsel %vm1506, %v1735, %v1739
      %v1741 = vshrl.u32 %v1490, 16
      %v1743 = vrot.slane %v1741, 4
      %v1744 = vor.u32 %v1743, %v1739
      %v1745 = vrot.slane %v1744, 4
      %v1747 = vshll.u32 %v1491, 16
      %v1749 = vrot.slane %v1747, 5
      %v1750 = vsel %vm1506, %v1745, %v1749
      %v1751 = vshrl.u32 %v1491, 16
      %v1753 = vrot.slane %v1751, 4
      %v1754 = vor.u32 %v1753, %v1749
      %v1755 = vrot.slane %v1754, 4
      %v1757 = vshll.u32 %v1492, 16
      %v1759 = vrot.slane %v1757, 5
      %v1760 = vsel %vm1506, %v1755, %v1759
      %v1761 = vshrl.u32 %v1492, 16
      %v1763 = vrot.slane %v1761, 4
      %v1764 = vor.u32 %v1763, %v1759
      %v1765 = vrot.slane %v1764, 4
      %v1767 = vshll.u32 %v1493, 16
      %v1769 = vrot.slane %v1767, 5
      %v1770 = vsel %vm1506, %v1765, %v1769
      %v1772 = vshrl.u32 %v1494, 16
      %v1774 = vrot.slane %v1772, 4
      %v1775 = vshll.u32 %v1494, 16
      %v1777 = vrot.slane %v1775, 5
      %v1778 = vor.u32 %v1774, %v1777
      %v1779 = vrot.slane %v1778, 4
      %v1781 = vshll.u32 %v1495, 16
      %v1783 = vrot.slane %v1781, 5
      %v1784 = vsel %vm1506, %v1779, %v1783
      %v1785 = vshrl.u32 %v1495, 16
      %v1787 = vrot.slane %v1785, 4
      %v1788 = vor.u32 %v1787, %v1783
      %v1789 = vrot.slane %v1788, 4
      %v1791 = vshll.u32 %v1496, 16
      %v1793 = vrot.slane %v1791, 5
      %v1794 = vsel %vm1506, %v1789, %v1793
      %v1795 = vshrl.u32 %v1496, 16
      %v1797 = vrot.slane %v1795, 4
      %v1798 = vor.u32 %v1797, %v1793
      %v1799 = vrot.slane %v1798, 4
      %v1801 = vshll.u32 %v1497, 16
      %v1803 = vrot.slane %v1801, 5
      %v1804 = vsel %vm1506, %v1799, %v1803
      %v1805 = vshrl.u32 %v1497, 16
      %v1807 = vrot.slane %v1805, 4
      %v1808 = vor.u32 %v1807, %v1803
      %v1809 = vrot.slane %v1808, 4
      %v1811 = vshll.u32 %v1498, 16
      %v1813 = vrot.slane %v1811, 5
      %v1814 = vsel %vm1506, %v1809, %v1813
      %v1816 = vshrl.u32 %v1499, 16
      %v1818 = vrot.slane %v1816, 4
      %v1819 = vshll.u32 %v1499, 16
      %v1821 = vrot.slane %v1819, 5
      %v1822 = vor.u32 %v1818, %v1821
      %v1823 = vrot.slane %v1822, 4
      %v1825 = vshll.u32 %v1500, 16
      %v1827 = vrot.slane %v1825, 5
      %v1828 = vsel %vm1506, %v1823, %v1827
      %v1829 = vshrl.u32 %v1500, 16
      %v1831 = vrot.slane %v1829, 4
      %v1832 = vor.u32 %v1831, %v1827
      %v1833 = vrot.slane %v1832, 4
      %v1835 = vshll.u32 %v1501, 16
      %v1837 = vrot.slane %v1835, 5
      %v1838 = vsel %vm1506, %v1833, %v1837
      %v1839 = vshrl.u32 %v1501, 16
      %v1841 = vrot.slane %v1839, 4
      %v1842 = vor.u32 %v1841, %v1837
      %v1843 = vrot.slane %v1842, 4
      %v1845 = vshll.u32 %v1502, 16
      %v1847 = vrot.slane %v1845, 5
      %v1848 = vsel %vm1506, %v1843, %v1847
      %v1849 = vshrl.u32 %v1502, 16
      %v1851 = vrot.slane %v1849, 4
      %v1852 = vor.u32 %v1851, %v1847
      %v1853 = vrot.slane %v1852, 4
      %v1855 = vshll.u32 %v1503, 16
      %v1857 = vrot.slane %v1855, 5
      %v1858 = vsel %vm1506, %v1853, %v1857
      %1859 = vrot.lane.b32.xlu0 %v1520, 8
      %v1860 = vpop.permute.xlu0 %1859
      %1861 = vrot.lane.b32.xlu0 %v1530, 8
      %v1862 = vpop.permute.xlu0 %1861
      %1863 = vrot.lane.b32.xlu0 %v1540, 8
      %v1864 = vpop.permute.xlu0 %1863
      %1865 = vrot.lane.b32.xlu0 %v1550, 8
      %v1866 = vpop.permute.xlu0 %1865
      %1867 = vrot.lane.b32.xlu0 %v1564, 8
      %v1868 = vpop.permute.xlu0 %1867
      %1869 = vrot.lane.b32.xlu0 %v1574, 8
      %v1870 = vpop.permute.xlu0 %1869
      %1871 = vrot.lane.b32.xlu0 %v1584, 8
      %v1872 = vpop.permute.xlu0 %1871
      %1873 = vrot.lane.b32.xlu0 %v1594, 8
      %v1874 = vpop.permute.xlu0 %1873
      %1875 = vrot.lane.b32.xlu0 %v1608, 8
      %v1876 = vpop.permute.xlu0 %1875
      %1877 = vrot.lane.b32.xlu0 %v1618, 8
      %v1878 = vpop.permute.xlu0 %1877
      %1879 = vrot.lane.b32.xlu0 %v1628, 8
      %v1880 = vpop.permute.xlu0 %1879
      %1881 = vrot.lane.b32.xlu0 %v1638, 8
      %v1882 = vpop.permute.xlu0 %1881
      %1883 = vrot.lane.b32.xlu0 %v1652, 8
      %v1884 = vpop.permute.xlu0 %1883
      %1885 = vrot.lane.b32.xlu0 %v1662, 8
      %v1886 = vpop.permute.xlu0 %1885
      %1887 = vrot.lane.b32.xlu0 %v1672, 8
      %v1888 = vpop.permute.xlu0 %1887
      %1889 = vrot.lane.b32.xlu0 %v1682, 8
      %v1890 = vpop.permute.xlu0 %1889
      %1891 = vrot.lane.b32.xlu0 %v1696, 8
      %v1892 = vpop.permute.xlu0 %1891
      %1893 = vrot.lane.b32.xlu0 %v1706, 8
      %v1894 = vpop.permute.xlu0 %1893
      %1895 = vrot.lane.b32.xlu0 %v1716, 8
      %v1896 = vpop.permute.xlu0 %1895
      %1897 = vrot.lane.b32.xlu0 %v1726, 8
      %v1898 = vpop.permute.xlu0 %1897
      %1899 = vrot.lane.b32.xlu0 %v1740, 8
      %v1900 = vpop.permute.xlu0 %1899
      %1901 = vrot.lane.b32.xlu0 %v1750, 8
      %v1902 = vpop.permute.xlu0 %1901
      %1903 = vrot.lane.b32.xlu0 %v1760, 8
      %v1904 = vpop.permute.xlu0 %1903
      %1905 = vrot.lane.b32.xlu0 %v1770, 8
      %v1906 = vpop.permute.xlu0 %1905
      %1907 = vrot.lane.b32.xlu0 %v1784, 8
      %v1908 = vpop.permute.xlu0 %1907
      %1909 = vrot.lane.b32.xlu0 %v1794, 8
      %v1910 = vpop.permute.xlu0 %1909
      %1911 = vrot.lane.b32.xlu0 %v1804, 8
      %v1912 = vpop.permute.xlu0 %1911
      %1913 = vrot.lane.b32.xlu0 %v1814, 8
      %v1914 = vpop.permute.xlu0 %1913
      %1915 = vrot.lane.b32.xlu0 %v1828, 8
      %v1916 = vpop.permute.xlu0 %1915
      %1917 = vrot.lane.b32.xlu0 %v1838, 8
      %v1918 = vpop.permute.xlu0 %1917
      %1919 = vrot.lane.b32.xlu0 %v1848, 8
      %v1920 = vpop.permute.xlu0 %1919
      %1921 = vrot.lane.b32.xlu0 %v1858, 8
      %v1922 = vpop.permute.xlu0 %1921
      %vm1955 = vcmask 126016
      %1956 = vst.msk [vmem:[#allocation3] sm:$0xf] %vm1955, %v1860
      %1957 = vst.msk [vmem:[#allocation3 + $0x4] sm:$0xf] %vm1955, %v1862
      %1958 = vst.msk [vmem:[#allocation3 + $0x8] sm:$0xf] %vm1955, %v1864
      %1959 = vst.msk [vmem:[#allocation3 + $0xc] sm:$0xf] %vm1955, %v1866
      %1960 = vst.msk [vmem:[#allocation3 + $0x10] sm:$0xf] %vm1955, %v1868
      %1961 = vst.msk [vmem:[#allocation3 + $0x14] sm:$0xf] %vm1955, %v1870
      %1962 = vst.msk [vmem:[#allocation3 + $0x18] sm:$0xf] %vm1955, %v1872
      %1963 = vst.msk [vmem:[#allocation3 + $0x1c] sm:$0xf] %vm1955, %v1874
      %1964 = vst.msk [vmem:[#allocation3 + $0x20] sm:$0xf] %vm1955, %v1876
      %1965 = vst.msk [vmem:[#allocation3 + $0x24] sm:$0xf] %vm1955, %v1878
      %1966 = vst.msk [vmem:[#allocation3 + $0x28] sm:$0xf] %vm1955, %v1880
      %1967 = vst.msk [vmem:[#allocation3 + $0x2c] sm:$0xf] %vm1955, %v1882
      %1968 = vst.msk [vmem:[#allocation3 + $0x30] sm:$0xf] %vm1955, %v1884
      %1969 = vst.msk [vmem:[#allocation3 + $0x34] sm:$0xf] %vm1955, %v1886
      %1970 = vst.msk [vmem:[#allocation3 + $0x38] sm:$0xf] %vm1955, %v1888
      %1971 = vst.msk [vmem:[#allocation3 + $0x3c] sm:$0xf] %vm1955, %v1890
      %1972 = vst.msk [vmem:[#allocation3 + $0x40] sm:$0xf] %vm1955, %v1892
      %1973 = vst.msk [vmem:[#allocation3 + $0x44] sm:$0xf] %vm1955, %v1894
      %1974 = vst.msk [vmem:[#allocation3 + $0x48] sm:$0xf] %vm1955, %v1896
      %1975 = vst.msk [vmem:[#allocation3 + $0x4c] sm:$0xf] %vm1955, %v1898
      %1976 = vst.msk [vmem:[#allocation3 + $0x50] sm:$0xf] %vm1955, %v1900
      %1977 = vst.msk [vmem:[#allocation3 + $0x54] sm:$0xf] %vm1955, %v1902
      %1978 = vst.msk [vmem:[#allocation3 + $0x58] sm:$0xf] %vm1955, %v1904
      %1979 = vst.msk [vmem:[#allocation3 + $0x5c] sm:$0xf] %vm1955, %v1906
      %1980 = vst.msk [vmem:[#allocation3 + $0x60] sm:$0xf] %vm1955, %v1908
      %1981 = vst.msk [vmem:[#allocation3 + $0x64] sm:$0xf] %vm1955, %v1910
      %1982 = vst.msk [vmem:[#allocation3 + $0x68] sm:$0xf] %vm1955, %v1912
      %1983 = vst.msk [vmem:[#allocation3 + $0x6c] sm:$0xf] %vm1955, %v1914
      %1984 = vst.msk [vmem:[#allocation3 + $0x70] sm:$0xf] %vm1955, %v1916
      %1985 = vst.msk [vmem:[#allocation3 + $0x74] sm:$0xf] %vm1955, %v1918
      %1986 = vst.msk [vmem:[#allocation3 + $0x78] sm:$0xf] %vm1955, %v1920
      %1987 = vst.msk [vmem:[#allocation3 + $0x7c] sm:$0xf] %vm1955, %v1922
      %v1988 = vld [vmem:[#allocation2] sm:$0xe]
      %v1989 = vld [vmem:[#allocation2 + $0x4] sm:$0xf]
      %v1990 = vld [vmem:[#allocation2 + $0x8] sm:$0xf]
      %v1991 = vld [vmem:[#allocation2 + $0xc] sm:$0xf]
      %v1992 = vld [vmem:[#allocation2 + $0x10] sm:$0x1]
      %v1993 = vld [vmem:[#allocation2 + $0x14] sm:$0xe]
      %v1994 = vld [vmem:[#allocation2 + $0x18] sm:$0xf]
      %v1995 = vld [vmem:[#allocation2 + $0x1c] sm:$0xf]
      %v1996 = vld [vmem:[#allocation2 + $0x20] sm:$0xf]
      %v1997 = vld [vmem:[#allocation2 + $0x24] sm:$0x1]
      %v1998 = vld [vmem:[#allocation2 + $0x28] sm:$0xe]
      %v1999 = vld [vmem:[#allocation2 + $0x2c] sm:$0xf]
      %v2000 = vld [vmem:[#allocation2 + $0x30] sm:$0xf]
      %v2001 = vld [vmem:[#allocation2 + $0x34] sm:$0xf]
      %v2002 = vld [vmem:[#allocation2 + $0x38] sm:$0x1]
      %v2003 = vld [vmem:[#allocation2 + $0x3c] sm:$0xe]
      %v2004 = vld [vmem:[#allocation2 + $0x40] sm:$0xf]
      %v2005 = vld [vmem:[#allocation2 + $0x44] sm:$0xf]
      %v2006 = vld [vmem:[#allocation2 + $0x48] sm:$0xf]
      %v2007 = vld [vmem:[#allocation2 + $0x4c] sm:$0x1]
      %v2008 = vld [vmem:[#allocation2 + $0x50] sm:$0xe]
      %v2009 = vld [vmem:[#allocation2 + $0x54] sm:$0xf]
      %v2010 = vld [vmem:[#allocation2 + $0x58] sm:$0xf]
      %v2011 = vld [vmem:[#allocation2 + $0x5c] sm:$0xf]
      %v2012 = vld [vmem:[#allocation2 + $0x60] sm:$0x1]
      %v2013 = vld [vmem:[#allocation2 + $0x64] sm:$0xe]
      %v2014 = vld [vmem:[#allocation2 + $0x68] sm:$0xf]
      %v2015 = vld [vmem:[#allocation2 + $0x6c] sm:$0xf]
      %v2016 = vld [vmem:[#allocation2 + $0x70] sm:$0xf]
      %v2017 = vld [vmem:[#allocation2 + $0x74] sm:$0x1]
      %v2018 = vld [vmem:[#allocation2 + $0x78] sm:$0xe]
      %v2019 = vld [vmem:[#allocation2 + $0x7c] sm:$0xf]
      %v2020 = vld [vmem:[#allocation2 + $0x80] sm:$0xf]
      %v2021 = vld [vmem:[#allocation2 + $0x84] sm:$0xf]
      %v2022 = vld [vmem:[#allocation2 + $0x88] sm:$0x1]
      %v2023 = vld [vmem:[#allocation2 + $0x8c] sm:$0xe]
      %v2024 = vld [vmem:[#allocation2 + $0x90] sm:$0xf]
      %v2025 = vld [vmem:[#allocation2 + $0x94] sm:$0xf]
      %v2026 = vld [vmem:[#allocation2 + $0x98] sm:$0xf]
      %v2027 = vld [vmem:[#allocation2 + $0x9c] sm:$0x1]
      %vm2068 = vcmask 1042432
      %vm2069 = vcmask 1046532
      %vm2070 = vmor %vm2068, %vm2069
      %v2071 = vrot.slane %v1988, 5
      %v2072 = vrot.slane %v2071, 4
      %v2073 = vrot.slane %v1989, 5
      %v2074 = vsel %vm2070, %v2072, %v2073
      %v2075 = vrot.slane %v2073, 4
      %v2076 = vrot.slane %v1990, 5
      %v2077 = vsel %vm2070, %v2075, %v2076
      %v2078 = vrot.slane %v2076, 4
      %v2079 = vrot.slane %v1991, 5
      %v2080 = vsel %vm2070, %v2078, %v2079
      %v2081 = vrot.slane %v2079, 4
      %v2082 = vrot.slane %v1992, 5
      %v2083 = vsel %vm2070, %v2081, %v2082
      %v2084 = vrot.slane %v1993, 5
      %v2085 = vrot.slane %v2084, 4
      %v2086 = vrot.slane %v1994, 5
      %v2087 = vsel %vm2070, %v2085, %v2086
      %v2088 = vrot.slane %v2086, 4
      %v2089 = vrot.slane %v1995, 5
      %v2090 = vsel %vm2070, %v2088, %v2089
      %v2091 = vrot.slane %v2089, 4
      %v2092 = vrot.slane %v1996, 5
      %v2093 = vsel %vm2070, %v2091, %v2092
      %v2094 = vrot.slane %v2092, 4
      %v2095 = vrot.slane %v1997, 5
      %v2096 = vsel %vm2070, %v2094, %v2095
      %v2097 = vrot.slane %v1998, 5
      %v2098 = vrot.slane %v2097, 4
      %v2099 = vrot.slane %v1999, 5
      %v2100 = vsel %vm2070, %v2098, %v2099
      %v2101 = vrot.slane %v2099, 4
      %v2102 = vrot.slane %v2000, 5
      %v2103 = vsel %vm2070, %v2101, %v2102
      %v2104 = vrot.slane %v2102, 4
      %v2105 = vrot.slane %v2001, 5
      %v2106 = vsel %vm2070, %v2104, %v2105
      %v2107 = vrot.slane %v2105, 4
      %v2108 = vrot.slane %v2002, 5
      %v2109 = vsel %vm2070, %v2107, %v2108
      %v2110 = vrot.slane %v2003, 5
      %v2111 = vrot.slane %v2110, 4
      %v2112 = vrot.slane %v2004, 5
      %v2113 = vsel %vm2070, %v2111, %v2112
      %v2114 = vrot.slane %v2112, 4
      %v2115 = vrot.slane %v2005, 5
      %v2116 = vsel %vm2070, %v2114, %v2115
      %v2117 = vrot.slane %v2115, 4
      %v2118 = vrot.slane %v2006, 5
      %v2119 = vsel %vm2070, %v2117, %v2118
      %v2120 = vrot.slane %v2118, 4
      %v2121 = vrot.slane %v2007, 5
      %v2122 = vsel %vm2070, %v2120, %v2121
      %v2123 = vrot.slane %v2008, 5
      %v2124 = vrot.slane %v2123, 4
      %v2125 = vrot.slane %v2009, 5
      %v2126 = vsel %vm2070, %v2124, %v2125
      %v2127 = vrot.slane %v2125, 4
      %v2128 = vrot.slane %v2010, 5
      %v2129 = vsel %vm2070, %v2127, %v2128
      %v2130 = vrot.slane %v2128, 4
      %v2131 = vrot.slane %v2011, 5
      %v2132 = vsel %vm2070, %v2130, %v2131
      %v2133 = vrot.slane %v2131, 4
      %v2134 = vrot.slane %v2012, 5
      %v2135 = vsel %vm2070, %v2133, %v2134
      %v2136 = vrot.slane %v2013, 5
      %v2137 = vrot.slane %v2136, 4
      %v2138 = vrot.slane %v2014, 5
      %v2139 = vsel %vm2070, %v2137, %v2138
      %v2140 = vrot.slane %v2138, 4
      %v2141 = vrot.slane %v2015, 5
      %v2142 = vsel %vm2070, %v2140, %v2141
      %v2143 = vrot.slane %v2141, 4
      %v2144 = vrot.slane %v2016, 5
      %v2145 = vsel %vm2070, %v2143, %v2144
      %v2146 = vrot.slane %v2144, 4
      %v2147 = vrot.slane %v2017, 5
      %v2148 = vsel %vm2070, %v2146, %v2147
      %v2149 = vrot.slane %v2018, 5
      %v2150 = vrot.slane %v2149, 4
      %v2151 = vrot.slane %v2019, 5
      %v2152 = vsel %vm2070, %v2150, %v2151
      %v2153 = vrot.slane %v2151, 4
      %v2154 = vrot.slane %v2020, 5
      %v2155 = vsel %vm2070, %v2153, %v2154
      %v2156 = vrot.slane %v2154, 4
      %v2157 = vrot.slane %v2021, 5
      %v2158 = vsel %vm2070, %v2156, %v2157
      %v2159 = vrot.slane %v2157, 4
      %v2160 = vrot.slane %v2022, 5
      %v2161 = vsel %vm2070, %v2159, %v2160
      %v2162 = vrot.slane %v2023, 5
      %v2163 = vrot.slane %v2162, 4
      %v2164 = vrot.slane %v2024, 5
      %v2165 = vsel %vm2070, %v2163, %v2164
      %v2166 = vrot.slane %v2164, 4
      %v2167 = vrot.slane %v2025, 5
      %v2168 = vsel %vm2070, %v2166, %v2167
      %v2169 = vrot.slane %v2167, 4
      %v2170 = vrot.slane %v2026, 5
      %v2171 = vsel %vm2070, %v2169, %v2170
      %v2172 = vrot.slane %v2170, 4
      %v2173 = vrot.slane %v2027, 5
      %v2174 = vsel %vm2070, %v2172, %v2173
      %2175 = vrot.lane.b32.xlu0 %v2074, 16
      %v2176 = vpop.permute.xlu0 %2175
      %2177 = vrot.lane.b32.xlu0 %v2077, 16
      %v2178 = vpop.permute.xlu0 %2177
      %2179 = vrot.lane.b32.xlu0 %v2080, 16
      %v2180 = vpop.permute.xlu0 %2179
      %2181 = vrot.lane.b32.xlu0 %v2083, 16
      %v2182 = vpop.permute.xlu0 %2181
      %2183 = vrot.lane.b32.xlu0 %v2087, 16
      %v2184 = vpop.permute.xlu0 %2183
      %2185 = vrot.lane.b32.xlu0 %v2090, 16
      %v2186 = vpop.permute.xlu0 %2185
      %2187 = vrot.lane.b32.xlu0 %v2093, 16
      %v2188 = vpop.permute.xlu0 %2187
      %2189 = vrot.lane.b32.xlu0 %v2096, 16
      %v2190 = vpop.permute.xlu0 %2189
      %2191 = vrot.lane.b32.xlu0 %v2100, 16
      %v2192 = vpop.permute.xlu0 %2191
      %2193 = vrot.lane.b32.xlu0 %v2103, 16
      %v2194 = vpop.permute.xlu0 %2193
      %2195 = vrot.lane.b32.xlu0 %v2106, 16
      %v2196 = vpop.permute.xlu0 %2195
      %2197 = vrot.lane.b32.xlu0 %v2109, 16
      %v2198 = vpop.permute.xlu0 %2197
      %2199 = vrot.lane.b32.xlu0 %v2113, 16
      %v2200 = vpop.permute.xlu0 %2199
      %2201 = vrot.lane.b32.xlu0 %v2116, 16
      %v2202 = vpop.permute.xlu0 %2201
      %2203 = vrot.lane.b32.xlu0 %v2119, 16
      %v2204 = vpop.permute.xlu0 %2203
      %2205 = vrot.lane.b32.xlu0 %v2122, 16
      %v2206 = vpop.permute.xlu0 %2205
      %2207 = vrot.lane.b32.xlu0 %v2126, 16
      %v2208 = vpop.permute.xlu0 %2207
      %2209 = vrot.lane.b32.xlu0 %v2129, 16
      %v2210 = vpop.permute.xlu0 %2209
      %2211 = vrot.lane.b32.xlu0 %v2132, 16
      %v2212 = vpop.permute.xlu0 %2211
      %2213 = vrot.lane.b32.xlu0 %v2135, 16
      %v2214 = vpop.permute.xlu0 %2213
      %2215 = vrot.lane.b32.xlu0 %v2139, 16
      %v2216 = vpop.permute.xlu0 %2215
      %2217 = vrot.lane.b32.xlu0 %v2142, 16
      %v2218 = vpop.permute.xlu0 %2217
      %2219 = vrot.lane.b32.xlu0 %v2145, 16
      %v2220 = vpop.permute.xlu0 %2219
      %2221 = vrot.lane.b32.xlu0 %v2148, 16
      %v2222 = vpop.permute.xlu0 %2221
      %2223 = vrot.lane.b32.xlu0 %v2152, 16
      %v2224 = vpop.permute.xlu0 %2223
      %2225 = vrot.lane.b32.xlu0 %v2155, 16
      %v2226 = vpop.permute.xlu0 %2225
      %2227 = vrot.lane.b32.xlu0 %v2158, 16
      %v2228 = vpop.permute.xlu0 %2227
      %2229 = vrot.lane.b32.xlu0 %v2161, 16
      %v2230 = vpop.permute.xlu0 %2229
      %2231 = vrot.lane.b32.xlu0 %v2165, 16
      %v2232 = vpop.permute.xlu0 %2231
      %2233 = vrot.lane.b32.xlu0 %v2168, 16
      %v2234 = vpop.permute.xlu0 %2233
      %2235 = vrot.lane.b32.xlu0 %v2171, 16
      %v2236 = vpop.permute.xlu0 %2235
      %2237 = vrot.lane.b32.xlu0 %v2174, 16
      %v2238 = vpop.permute.xlu0 %2237
      %vm2271 = vcmask 191616
      %2272 = vst.msk [vmem:[#allocation3] sm:$0xf] %vm2271, %v2176
      %2273 = vst.msk [vmem:[#allocation3 + $0x4] sm:$0xf] %vm2271, %v2178
      %2274 = vst.msk [vmem:[#allocation3 + $0x8] sm:$0xf] %vm2271, %v2180
      %2275 = vst.msk [vmem:[#allocation3 + $0xc] sm:$0xf] %vm2271, %v2182
      %2276 = vst.msk [vmem:[#allocation3 + $0x10] sm:$0xf] %vm2271, %v2184
      %2277 = vst.msk [vmem:[#allocation3 + $0x14] sm:$0xf] %vm2271, %v2186
      %2278 = vst.msk [vmem:[#allocation3 + $0x18] sm:$0xf] %vm2271, %v2188
      %2279 = vst.msk [vmem:[#allocation3 + $0x1c] sm:$0xf] %vm2271, %v2190
      %2280 = vst.msk [vmem:[#allocation3 + $0x20] sm:$0xf] %vm2271, %v2192
      %2281 = vst.msk [vmem:[#allocation3 + $0x24] sm:$0xf] %vm2271, %v2194
      %2282 = vst.msk [vmem:[#allocation3 + $0x28] sm:$0xf] %vm2271, %v2196
      %2283 = vst.msk [vmem:[#allocation3 + $0x2c] sm:$0xf] %vm2271, %v2198
      %2284 = vst.msk [vmem:[#allocation3 + $0x30] sm:$0xf] %vm2271, %v2200
      %2285 = vst.msk [vmem:[#allocation3 + $0x34] sm:$0xf] %vm2271, %v2202
      %2286 = vst.msk [vmem:[#allocation3 + $0x38] sm:$0xf] %vm2271, %v2204
      %2287 = vst.msk [vmem:[#allocation3 + $0x3c] sm:$0xf] %vm2271, %v2206
      %2288 = vst.msk [vmem:[#allocation3 + $0x40] sm:$0xf] %vm2271, %v2208
      %2289 = vst.msk [vmem:[#allocation3 + $0x44] sm:$0xf] %vm2271, %v2210
      %2290 = vst.msk [vmem:[#allocation3 + $0x48] sm:$0xf] %vm2271, %v2212
      %2291 = vst.msk [vmem:[#allocation3 + $0x4c] sm:$0xf] %vm2271, %v2214
      %2292 = vst.msk [vmem:[#allocation3 + $0x50] sm:$0xf] %vm2271, %v2216
      %2293 = vst.msk [vmem:[#allocation3 + $0x54] sm:$0xf] %vm2271, %v2218
      %2294 = vst.msk [vmem:[#allocation3 + $0x58] sm:$0xf] %vm2271, %v2220
      %2295 = vst.msk [vmem:[#allocation3 + $0x5c] sm:$0xf] %vm2271, %v2222
      %2296 = vst.msk [vmem:[#allocation3 + $0x60] sm:$0xf] %vm2271, %v2224
      %2297 = vst.msk [vmem:[#allocation3 + $0x64] sm:$0xf] %vm2271, %v2226
      %2298 = vst.msk [vmem:[#allocation3 + $0x68] sm:$0xf] %vm2271, %v2228
      %2299 = vst.msk [vmem:[#allocation3 + $0x6c] sm:$0xf] %vm2271, %v2230
      %2300 = vst.msk [vmem:[#allocation3 + $0x70] sm:$0xf] %vm2271, %v2232
      %2301 = vst.msk [vmem:[#allocation3 + $0x74] sm:$0xf] %vm2271, %v2234
      %2302 = vst.msk [vmem:[#allocation3 + $0x78] sm:$0xf] %vm2271, %v2236
      %2303 = vst.msk [vmem:[#allocation3 + $0x7c] sm:$0xf] %vm2271, %v2238
      %v2304 = vld [vmem:[%s1142] sm:$0xf]
      %v2305 = vld [vmem:[%s1142 + $0x4] sm:$0xf]
      %v2306 = vld [vmem:[%s1142 + $0x8] sm:$0xf]
      %v2307 = vld [vmem:[%s1142 + $0xc] sm:$0xf]
      %v2308 = vld [vmem:[%s1142 + $0x14] sm:$0xf]
      %v2309 = vld [vmem:[%s1142 + $0x18] sm:$0xf]
      %v2310 = vld [vmem:[%s1142 + $0x1c] sm:$0xf]
      %v2311 = vld [vmem:[%s1142 + $0x20] sm:$0xf]
      %v2312 = vld [vmem:[%s1142 + $0x28] sm:$0xf]
      %v2313 = vld [vmem:[%s1142 + $0x2c] sm:$0xf]
      %v2314 = vld [vmem:[%s1142 + $0x30] sm:$0xf]
      %v2315 = vld [vmem:[%s1142 + $0x34] sm:$0xf]
      %v2316 = vld [vmem:[%s1142 + $0x3c] sm:$0xf]
      %v2317 = vld [vmem:[%s1142 + $0x40] sm:$0xf]
      %v2318 = vld [vmem:[%s1142 + $0x44] sm:$0xf]
      %v2319 = vld [vmem:[%s1142 + $0x48] sm:$0xf]
      %v2320 = vld [vmem:[%s1142 + $0x50] sm:$0xf]
      %v2321 = vld [vmem:[%s1142 + $0x54] sm:$0xf]
      %v2322 = vld [vmem:[%s1142 + $0x58] sm:$0xf]
      %v2323 = vld [vmem:[%s1142 + $0x5c] sm:$0xf]
      %v2324 = vld [vmem:[%s1142 + $0x64] sm:$0xf]
      %v2325 = vld [vmem:[%s1142 + $0x68] sm:$0xf]
      %v2326 = vld [vmem:[%s1142 + $0x6c] sm:$0xf]
      %v2327 = vld [vmem:[%s1142 + $0x70] sm:$0xf]
      %v2328 = vld [vmem:[%s1142 + $0x78] sm:$0xf]
      %v2329 = vld [vmem:[%s1142 + $0x7c] sm:$0xf]
      %v2330 = vld [vmem:[%s1142 + $0x80] sm:$0xf]
      %v2331 = vld [vmem:[%s1142 + $0x84] sm:$0xf]
      %v2332 = vld [vmem:[%s1142 + $0x8c] sm:$0xf]
      %v2333 = vld [vmem:[%s1142 + $0x90] sm:$0xf]
      %v2334 = vld [vmem:[%s1142 + $0x94] sm:$0xf]
      %v2335 = vld [vmem:[%s1142 + $0x98] sm:$0xf]
      %2368 = vrot.lane.b32.xlu0 %v2304, 24
      %v2369 = vpop.permute.xlu0 %2368
      %2370 = vrot.lane.b32.xlu0 %v2305, 24
      %v2371 = vpop.permute.xlu0 %2370
      %2372 = vrot.lane.b32.xlu0 %v2306, 24
      %v2373 = vpop.permute.xlu0 %2372
      %2374 = vrot.lane.b32.xlu0 %v2307, 24
      %v2375 = vpop.permute.xlu0 %2374
      %2376 = vrot.lane.b32.xlu0 %v2308, 24
      %v2377 = vpop.permute.xlu0 %2376
      %2378 = vrot.lane.b32.xlu0 %v2309, 24
      %v2379 = vpop.permute.xlu0 %2378
      %2380 = vrot.lane.b32.xlu0 %v2310, 24
      %v2381 = vpop.permute.xlu0 %2380
      %2382 = vrot.lane.b32.xlu0 %v2311, 24
      %v2383 = vpop.permute.xlu0 %2382
      %2384 = vrot.lane.b32.xlu0 %v2312, 24
      %v2385 = vpop.permute.xlu0 %2384
      %2386 = vrot.lane.b32.xlu0 %v2313, 24
      %v2387 = vpop.permute.xlu0 %2386
      %2388 = vrot.lane.b32.xlu0 %v2314, 24
      %v2389 = vpop.permute.xlu0 %2388
      %2390 = vrot.lane.b32.xlu0 %v2315, 24
      %v2391 = vpop.permute.xlu0 %2390
      %2392 = vrot.lane.b32.xlu0 %v2316, 24
      %v2393 = vpop.permute.xlu0 %2392
      %2394 = vrot.lane.b32.xlu0 %v2317, 24
      %v2395 = vpop.permute.xlu0 %2394
      %2396 = vrot.lane.b32.xlu0 %v2318, 24
      %v2397 = vpop.permute.xlu0 %2396
      %2398 = vrot.lane.b32.xlu0 %v2319, 24
      %v2399 = vpop.permute.xlu0 %2398
      %2400 = vrot.lane.b32.xlu0 %v2320, 24
      %v2401 = vpop.permute.xlu0 %2400
      %2402 = vrot.lane.b32.xlu0 %v2321, 24
      %v2403 = vpop.permute.xlu0 %2402
      %2404 = vrot.lane.b32.xlu0 %v2322, 24
      %v2405 = vpop.permute.xlu0 %2404
      %2406 = vrot.lane.b32.xlu0 %v2323, 24
      %v2407 = vpop.permute.xlu0 %2406
      %2408 = vrot.lane.b32.xlu0 %v2324, 24
      %v2409 = vpop.permute.xlu0 %2408
      %2410 = vrot.lane.b32.xlu0 %v2325, 24
      %v2411 = vpop.permute.xlu0 %2410
      %2412 = vrot.lane.b32.xlu0 %v2326, 24
      %v2413 = vpop.permute.xlu0 %2412
      %2414 = vrot.lane.b32.xlu0 %v2327, 24
      %v2415 = vpop.permute.xlu0 %2414
      %2416 = vrot.lane.b32.xlu0 %v2328, 24
      %v2417 = vpop.permute.xlu0 %2416
      %2418 = vrot.lane.b32.xlu0 %v2329, 24
      %v2419 = vpop.permute.xlu0 %2418
      %2420 = vrot.lane.b32.xlu0 %v2330, 24
      %v2421 = vpop.permute.xlu0 %2420
      %2422 = vrot.lane.b32.xlu0 %v2331, 24
      %v2423 = vpop.permute.xlu0 %2422
      %2424 = vrot.lane.b32.xlu0 %v2332, 24
      %v2425 = vpop.permute.xlu0 %2424
      %2426 = vrot.lane.b32.xlu0 %v2333, 24
      %v2427 = vpop.permute.xlu0 %2426
      %2428 = vrot.lane.b32.xlu0 %v2334, 24
      %v2429 = vpop.permute.xlu0 %2428
      %2430 = vrot.lane.b32.xlu0 %v2335, 24
      %v2431 = vpop.permute.xlu0 %2430
      %vm2464 = vcmask 257216
      %2465 = vst.msk [vmem:[#allocation3] sm:$0xf] %vm2464, %v2369
      %2466 = vst.msk [vmem:[#allocation3 + $0x4] sm:$0xf] %vm2464, %v2371
      %2467 = vst.msk [vmem:[#allocation3 + $0x8] sm:$0xf] %vm2464, %v2373
      %2468 = vst.msk [vmem:[#allocation3 + $0xc] sm:$0xf] %vm2464, %v2375
      %2469 = vst.msk [vmem:[#allocation3 + $0x10] sm:$0xf] %vm2464, %v2377
      %2470 = vst.msk [vmem:[#allocation3 + $0x14] sm:$0xf] %vm2464, %v2379
      %2471 = vst.msk [vmem:[#allocation3 + $0x18] sm:$0xf] %vm2464, %v2381
      %2472 = vst.msk [vmem:[#allocation3 + $0x1c] sm:$0xf] %vm2464, %v2383
      %2473 = vst.msk [vmem:[#allocation3 + $0x20] sm:$0xf] %vm2464, %v2385
      %2474 = vst.msk [vmem:[#allocation3 + $0x24] sm:$0xf] %vm2464, %v2387
      %2475 = vst.msk [vmem:[#allocation3 + $0x28] sm:$0xf] %vm2464, %v2389
      %2476 = vst.msk [vmem:[#allocation3 + $0x2c] sm:$0xf] %vm2464, %v2391
      %2477 = vst.msk [vmem:[#allocation3 + $0x30] sm:$0xf] %vm2464, %v2393
      %2478 = vst.msk [vmem:[#allocation3 + $0x34] sm:$0xf] %vm2464, %v2395
      %2479 = vst.msk [vmem:[#allocation3 + $0x38] sm:$0xf] %vm2464, %v2397
      %2480 = vst.msk [vmem:[#allocation3 + $0x3c] sm:$0xf] %vm2464, %v2399
      %2481 = vst.msk [vmem:[#allocation3 + $0x40] sm:$0xf] %vm2464, %v2401
      %2482 = vst.msk [vmem:[#allocation3 + $0x44] sm:$0xf] %vm2464, %v2403
      %2483 = vst.msk [vmem:[#allocation3 + $0x48] sm:$0xf] %vm2464, %v2405
      %2484 = vst.msk [vmem:[#allocation3 + $0x4c] sm:$0xf] %vm2464, %v2407
      %2485 = vst.msk [vmem:[#allocation3 + $0x50] sm:$0xf] %vm2464, %v2409
      %2486 = vst.msk [vmem:[#allocation3 + $0x54] sm:$0xf] %vm2464, %v2411
      %2487 = vst.msk [vmem:[#allocation3 + $0x58] sm:$0xf] %vm2464, %v2413
      %2488 = vst.msk [vmem:[#allocation3 + $0x5c] sm:$0xf] %vm2464, %v2415
      %2489 = vst.msk [vmem:[#allocation3 + $0x60] sm:$0xf] %vm2464, %v2417
      %2490 = vst.msk [vmem:[#allocation3 + $0x64] sm:$0xf] %vm2464, %v2419
      %2491 = vst.msk [vmem:[#allocation3 + $0x68] sm:$0xf] %vm2464, %v2421
      %2492 = vst.msk [vmem:[#allocation3 + $0x6c] sm:$0xf] %vm2464, %v2423
      %2493 = vst.msk [vmem:[#allocation3 + $0x70] sm:$0xf] %vm2464, %v2425
      %2494 = vst.msk [vmem:[#allocation3 + $0x74] sm:$0xf] %vm2464, %v2427
      %2495 = vst.msk [vmem:[#allocation3 + $0x78] sm:$0xf] %vm2464, %v2429
      %2496 = vst.msk [vmem:[#allocation3 + $0x7c] sm:$0xf] %vm2464, %v2431
      %v2497 = vld [vmem:[%s1142] sm:$0xf]
      %v2498 = vld [vmem:[%s1142 + $0x4] sm:$0xf]
      %v2499 = vld [vmem:[%s1142 + $0x8] sm:$0xf]
      %v2500 = vld [vmem:[%s1142 + $0xc] sm:$0xf]
      %v2501 = vld [vmem:[%s1142 + $0x10] sm:$0x1]
      %v2502 = vld [vmem:[%s1142 + $0x14] sm:$0xf]
      %v2503 = vld [vmem:[%s1142 + $0x18] sm:$0xf]
      %v2504 = vld [vmem:[%s1142 + $0x1c] sm:$0xf]
      %v2505 = vld [vmem:[%s1142 + $0x20] sm:$0xf]
      %v2506 = vld [vmem:[%s1142 + $0x24] sm:$0x1]
      %v2507 = vld [vmem:[%s1142 + $0x28] sm:$0xf]
      %v2508 = vld [vmem:[%s1142 + $0x2c] sm:$0xf]
      %v2509 = vld [vmem:[%s1142 + $0x30] sm:$0xf]
      %v2510 = vld [vmem:[%s1142 + $0x34] sm:$0xf]
      %v2511 = vld [vmem:[%s1142 + $0x38] sm:$0x1]
      %v2512 = vld [vmem:[%s1142 + $0x3c] sm:$0xf]
      %v2513 = vld [vmem:[%s1142 + $0x40] sm:$0xf]
      %v2514 = vld [vmem:[%s1142 + $0x44] sm:$0xf]
      %v2515 = vld [vmem:[%s1142 + $0x48] sm:$0xf]
      %v2516 = vld [vmem:[%s1142 + $0x4c] sm:$0x1]
      %v2517 = vld [vmem:[%s1142 + $0x50] sm:$0xf]
      %v2518 = vld [vmem:[%s1142 + $0x54] sm:$0xf]
      %v2519 = vld [vmem:[%s1142 + $0x58] sm:$0xf]
      %v2520 = vld [vmem:[%s1142 + $0x5c] sm:$0xf]
      %v2521 = vld [vmem:[%s1142 + $0x60] sm:$0x1]
      %v2522 = vld [vmem:[%s1142 + $0x64] sm:$0xf]
      %v2523 = vld [vmem:[%s1142 + $0x68] sm:$0xf]
      %v2524 = vld [vmem:[%s1142 + $0x6c] sm:$0xf]
      %v2525 = vld [vmem:[%s1142 + $0x70] sm:$0xf]
      %v2526 = vld [vmem:[%s1142 + $0x74] sm:$0x1]
      %v2527 = vld [vmem:[%s1142 + $0x78] sm:$0xf]
      %v2528 = vld [vmem:[%s1142 + $0x7c] sm:$0xf]
      %v2529 = vld [vmem:[%s1142 + $0x80] sm:$0xf]
      %v2530 = vld [vmem:[%s1142 + $0x84] sm:$0xf]
      %v2531 = vld [vmem:[%s1142 + $0x88] sm:$0x1]
      %v2532 = vld [vmem:[%s1142 + $0x8c] sm:$0xf]
      %v2533 = vld [vmem:[%s1142 + $0x90] sm:$0xf]
      %v2534 = vld [vmem:[%s1142 + $0x94] sm:$0xf]
      %v2535 = vld [vmem:[%s1142 + $0x98] sm:$0xf]
      %v2536 = vld [vmem:[%s1142 + $0x9c] sm:$0x1]
      %v2538 = vshrl.u32 %v2497, 16
      %v2540 = vrot.slane %v2538, 4
      %v2541 = vshll.u32 %v2497, 16
      %v2543 = vrot.slane %v2541, 5
      %v2544 = vor.u32 %v2540, %v2543
      %v2545 = vrot.slane %v2544, 4
      %v2547 = vshll.u32 %v2498, 16
      %v2549 = vrot.slane %v2547, 5
      %v2550 = vsel %vm1506, %v2545, %v2549
      %v2551 = vshrl.u32 %v2498, 16
      %v2553 = vrot.slane %v2551, 4
      %v2554 = vor.u32 %v2553, %v2549
      %v2555 = vrot.slane %v2554, 4
      %v2557 = vshll.u32 %v2499, 16
      %v2559 = vrot.slane %v2557, 5
      %v2560 = vsel %vm1506, %v2555, %v2559
      %v2561 = vshrl.u32 %v2499, 16
      %v2563 = vrot.slane %v2561, 4
      %v2564 = vor.u32 %v2563, %v2559
      %v2565 = vrot.slane %v2564, 4
      %v2567 = vshll.u32 %v2500, 16
      %v2569 = vrot.slane %v2567, 5
      %v2570 = vsel %vm1506, %v2565, %v2569
      %v2571 = vshrl.u32 %v2500, 16
      %v2573 = vrot.slane %v2571, 4
      %v2574 = vor.u32 %v2573, %v2569
      %v2575 = vrot.slane %v2574, 4
      %v2577 = vshll.u32 %v2501, 16
      %v2579 = vrot.slane %v2577, 5
      %v2580 = vsel %vm1506, %v2575, %v2579
      %v2582 = vshrl.u32 %v2502, 16
      %v2584 = vrot.slane %v2582, 4
      %v2585 = vshll.u32 %v2502, 16
      %v2587 = vrot.slane %v2585, 5
      %v2588 = vor.u32 %v2584, %v2587
      %v2589 = vrot.slane %v2588, 4
      %v2591 = vshll.u32 %v2503, 16
      %v2593 = vrot.slane %v2591, 5
      %v2594 = vsel %vm1506, %v2589, %v2593
      %v2595 = vshrl.u32 %v2503, 16
      %v2597 = vrot.slane %v2595, 4
      %v2598 = vor.u32 %v2597, %v2593
      %v2599 = vrot.slane %v2598, 4
      %v2601 = vshll.u32 %v2504, 16
      %v2603 = vrot.slane %v2601, 5
      %v2604 = vsel %vm1506, %v2599, %v2603
      %v2605 = vshrl.u32 %v2504, 16
      %v2607 = vrot.slane %v2605, 4
      %v2608 = vor.u32 %v2607, %v2603
      %v2609 = vrot.slane %v2608, 4
      %v2611 = vshll.u32 %v2505, 16
      %v2613 = vrot.slane %v2611, 5
      %v2614 = vsel %vm1506, %v2609, %v2613
      %v2615 = vshrl.u32 %v2505, 16
      %v2617 = vrot.slane %v2615, 4
      %v2618 = vor.u32 %v2617, %v2613
      %v2619 = vrot.slane %v2618, 4
      %v2621 = vshll.u32 %v2506, 16
      %v2623 = vrot.slane %v2621, 5
      %v2624 = vsel %vm1506, %v2619, %v2623
      %v2626 = vshrl.u32 %v2507, 16
      %v2628 = vrot.slane %v2626, 4
      %v2629 = vshll.u32 %v2507, 16
      %v2631 = vrot.slane %v2629, 5
      %v2632 = vor.u32 %v2628, %v2631
      %v2633 = vrot.slane %v2632, 4
      %v2635 = vshll.u32 %v2508, 16
      %v2637 = vrot.slane %v2635, 5
      %v2638 = vsel %vm1506, %v2633, %v2637
      %v2639 = vshrl.u32 %v2508, 16
      %v2641 = vrot.slane %v2639, 4
      %v2642 = vor.u32 %v2641, %v2637
      %v2643 = vrot.slane %v2642, 4
      %v2645 = vshll.u32 %v2509, 16
      %v2647 = vrot.slane %v2645, 5
      %v2648 = vsel %vm1506, %v2643, %v2647
      %v2649 = vshrl.u32 %v2509, 16
      %v2651 = vrot.slane %v2649, 4
      %v2652 = vor.u32 %v2651, %v2647
      %v2653 = vrot.slane %v2652, 4
      %v2655 = vshll.u32 %v2510, 16
      %v2657 = vrot.slane %v2655, 5
      %v2658 = vsel %vm1506, %v2653, %v2657
      %v2659 = vshrl.u32 %v2510, 16
      %v2661 = vrot.slane %v2659, 4
      %v2662 = vor.u32 %v2661, %v2657
      %v2663 = vrot.slane %v2662, 4
      %v2665 = vshll.u32 %v2511, 16
      %v2667 = vrot.slane %v2665, 5
      %v2668 = vsel %vm1506, %v2663, %v2667
      %v2670 = vshrl.u32 %v2512, 16
      %v2672 = vrot.slane %v2670, 4
      %v2673 = vshll.u32 %v2512, 16
      %v2675 = vrot.slane %v2673, 5
      %v2676 = vor.u32 %v2672, %v2675
      %v2677 = vrot.slane %v2676, 4
      %v2679 = vshll.u32 %v2513, 16
      %v2681 = vrot.slane %v2679, 5
      %v2682 = vsel %vm1506, %v2677, %v2681
      %v2683 = vshrl.u32 %v2513, 16
      %v2685 = vrot.slane %v2683, 4
      %v2686 = vor.u32 %v2685, %v2681
      %v2687 = vrot.slane %v2686, 4
      %v2689 = vshll.u32 %v2514, 16
      %v2691 = vrot.slane %v2689, 5
      %v2692 = vsel %vm1506, %v2687, %v2691
      %v2693 = vshrl.u32 %v2514, 16
      %v2695 = vrot.slane %v2693, 4
      %v2696 = vor.u32 %v2695, %v2691
      %v2697 = vrot.slane %v2696, 4
      %v2699 = vshll.u32 %v2515, 16
      %v2701 = vrot.slane %v2699, 5
      %v2702 = vsel %vm1506, %v2697, %v2701
      %v2703 = vshrl.u32 %v2515, 16
      %v2705 = vrot.slane %v2703, 4
      %v2706 = vor.u32 %v2705, %v2701
      %v2707 = vrot.slane %v2706, 4
      %v2709 = vshll.u32 %v2516, 16
      %v2711 = vrot.slane %v2709, 5
      %v2712 = vsel %vm1506, %v2707, %v2711
      %v2714 = vshrl.u32 %v2517, 16
      %v2716 = vrot.slane %v2714, 4
      %v2717 = vshll.u32 %v2517, 16
      %v2719 = vrot.slane %v2717, 5
      %v2720 = vor.u32 %v2716, %v2719
      %v2721 = vrot.slane %v2720, 4
      %v2723 = vshll.u32 %v2518, 16
      %v2725 = vrot.slane %v2723, 5
      %v2726 = vsel %vm1506, %v2721, %v2725
      %v2727 = vshrl.u32 %v2518, 16
      %v2729 = vrot.slane %v2727, 4
      %v2730 = vor.u32 %v2729, %v2725
      %v2731 = vrot.slane %v2730, 4
      %v2733 = vshll.u32 %v2519, 16
      %v2735 = vrot.slane %v2733, 5
      %v2736 = vsel %vm1506, %v2731, %v2735
      %v2737 = vshrl.u32 %v2519, 16
      %v2739 = vrot.slane %v2737, 4
      %v2740 = vor.u32 %v2739, %v2735
      %v2741 = vrot.slane %v2740, 4
      %v2743 = vshll.u32 %v2520, 16
      %v2745 = vrot.slane %v2743, 5
      %v2746 = vsel %vm1506, %v2741, %v2745
      %v2747 = vshrl.u32 %v2520, 16
      %v2749 = vrot.slane %v2747, 4
      %v2750 = vor.u32 %v2749, %v2745
      %v2751 = vrot.slane %v2750, 4
      %v2753 = vshll.u32 %v2521, 16
      %v2755 = vrot.slane %v2753, 5
      %v2756 = vsel %vm1506, %v2751, %v2755
      %v2758 = vshrl.u32 %v2522, 16
      %v2760 = vrot.slane %v2758, 4
      %v2761 = vshll.u32 %v2522, 16
      %v2763 = vrot.slane %v2761, 5
      %v2764 = vor.u32 %v2760, %v2763
      %v2765 = vrot.slane %v2764, 4
      %v2767 = vshll.u32 %v2523, 16
      %v2769 = vrot.slane %v2767, 5
      %v2770 = vsel %vm1506, %v2765, %v2769
      %v2771 = vshrl.u32 %v2523, 16
      %v2773 = vrot.slane %v2771, 4
      %v2774 = vor.u32 %v2773, %v2769
      %v2775 = vrot.slane %v2774, 4
      %v2777 = vshll.u32 %v2524, 16
      %v2779 = vrot.slane %v2777, 5
      %v2780 = vsel %vm1506, %v2775, %v2779
      %v2781 = vshrl.u32 %v2524, 16
      %v2783 = vrot.slane %v2781, 4
      %v2784 = vor.u32 %v2783, %v2779
      %v2785 = vrot.slane %v2784, 4
      %v2787 = vshll.u32 %v2525, 16
      %v2789 = vrot.slane %v2787, 5
      %v2790 = vsel %vm1506, %v2785, %v2789
      %v2791 = vshrl.u32 %v2525, 16
      %v2793 = vrot.slane %v2791, 4
      %v2794 = vor.u32 %v2793, %v2789
      %v2795 = vrot.slane %v2794, 4
      %v2797 = vshll.u32 %v2526, 16
      %v2799 = vrot.slane %v2797, 5
      %v2800 = vsel %vm1506, %v2795, %v2799
      %v2802 = vshrl.u32 %v2527, 16
      %v2804 = vrot.slane %v2802, 4
      %v2805 = vshll.u32 %v2527, 16
      %v2807 = vrot.slane %v2805, 5
      %v2808 = vor.u32 %v2804, %v2807
      %v2809 = vrot.slane %v2808, 4
      %v2811 = vshll.u32 %v2528, 16
      %v2813 = vrot.slane %v2811, 5
      %v2814 = vsel %vm1506, %v2809, %v2813
      %v2815 = vshrl.u32 %v2528, 16
      %v2817 = vrot.slane %v2815, 4
      %v2818 = vor.u32 %v2817, %v2813
      %v2819 = vrot.slane %v2818, 4
      %v2821 = vshll.u32 %v2529, 16
      %v2823 = vrot.slane %v2821, 5
      %v2824 = vsel %vm1506, %v2819, %v2823
      %v2825 = vshrl.u32 %v2529, 16
      %v2827 = vrot.slane %v2825, 4
      %v2828 = vor.u32 %v2827, %v2823
      %v2829 = vrot.slane %v2828, 4
      %v2831 = vshll.u32 %v2530, 16
      %v2833 = vrot.slane %v2831, 5
      %v2834 = vsel %vm1506, %v2829, %v2833
      %v2835 = vshrl.u32 %v2530, 16
      %v2837 = vrot.slane %v2835, 4
      %v2838 = vor.u32 %v2837, %v2833
      %v2839 = vrot.slane %v2838, 4
      %v2841 = vshll.u32 %v2531, 16
      %v2843 = vrot.slane %v2841, 5
      %v2844 = vsel %vm1506, %v2839, %v2843
      %v2846 = vshrl.u32 %v2532, 16
      %v2848 = vrot.slane %v2846, 4
      %v2849 = vshll.u32 %v2532, 16
      %v2851 = vrot.slane %v2849, 5
      %v2852 = vor.u32 %v2848, %v2851
      %v2853 = vrot.slane %v2852, 4
      %v2855 = vshll.u32 %v2533, 16
      %v2857 = vrot.slane %v2855, 5
      %v2858 = vsel %vm1506, %v2853, %v2857
      %v2859 = vshrl.u32 %v2533, 16
      %v2861 = vrot.slane %v2859, 4
      %v2862 = vor.u32 %v2861, %v2857
      %v2863 = vrot.slane %v2862, 4
      %v2865 = vshll.u32 %v2534, 16
      %v2867 = vrot.slane %v2865, 5
      %v2868 = vsel %vm1506, %v2863, %v2867
      %v2869 = vshrl.u32 %v2534, 16
      %v2871 = vrot.slane %v2869, 4
      %v2872 = vor.u32 %v2871, %v2867
      %v2873 = vrot.slane %v2872, 4
      %v2875 = vshll.u32 %v2535, 16
      %v2877 = vrot.slane %v2875, 5
      %v2878 = vsel %vm1506, %v2873, %v2877
      %v2879 = vshrl.u32 %v2535, 16
      %v2881 = vrot.slane %v2879, 4
      %v2882 = vor.u32 %v2881, %v2877
      %v2883 = vrot.slane %v2882, 4
      %v2885 = vshll.u32 %v2536, 16
      %v2887 = vrot.slane %v2885, 5
      %v2888 = vsel %vm1506, %v2883, %v2887
      %2889 = vrot.lane.b32.xlu0 %v2550, 32
      %v2890 = vpop.permute.xlu0 %2889
      %2891 = vrot.lane.b32.xlu0 %v2560, 32
      %v2892 = vpop.permute.xlu0 %2891
      %2893 = vrot.lane.b32.xlu0 %v2570, 32
      %v2894 = vpop.permute.xlu0 %2893
      %2895 = vrot.lane.b32.xlu0 %v2580, 32
      %v2896 = vpop.permute.xlu0 %2895
      %2897 = vrot.lane.b32.xlu0 %v2594, 32
      %v2898 = vpop.permute.xlu0 %2897
      %2899 = vrot.lane.b32.xlu0 %v2604, 32
      %v2900 = vpop.permute.xlu0 %2899
      %2901 = vrot.lane.b32.xlu0 %v2614, 32
      %v2902 = vpop.permute.xlu0 %2901
      %2903 = vrot.lane.b32.xlu0 %v2624, 32
      %v2904 = vpop.permute.xlu0 %2903
      %2905 = vrot.lane.b32.xlu0 %v2638, 32
      %v2906 = vpop.permute.xlu0 %2905
      %2907 = vrot.lane.b32.xlu0 %v2648, 32
      %v2908 = vpop.permute.xlu0 %2907
      %2909 = vrot.lane.b32.xlu0 %v2658, 32
      %v2910 = vpop.permute.xlu0 %2909
      %2911 = vrot.lane.b32.xlu0 %v2668, 32
      %v2912 = vpop.permute.xlu0 %2911
      %2913 = vrot.lane.b32.xlu0 %v2682, 32
      %v2914 = vpop.permute.xlu0 %2913
      %2915 = vrot.lane.b32.xlu0 %v2692, 32
      %v2916 = vpop.permute.xlu0 %2915
      %2917 = vrot.lane.b32.xlu0 %v2702, 32
      %v2918 = vpop.permute.xlu0 %2917
      %2919 = vrot.lane.b32.xlu0 %v2712, 32
      %v2920 = vpop.permute.xlu0 %2919
      %2921 = vrot.lane.b32.xlu0 %v2726, 32
      %v2922 = vpop.permute.xlu0 %2921
      %2923 = vrot.lane.b32.xlu0 %v2736, 32
      %v2924 = vpop.permute.xlu0 %2923
      %2925 = vrot.lane.b32.xlu0 %v2746, 32
      %v2926 = vpop.permute.xlu0 %2925
      %2927 = vrot.lane.b32.xlu0 %v2756, 32
      %v2928 = vpop.permute.xlu0 %2927
      %2929 = vrot.lane.b32.xlu0 %v2770, 32
      %v2930 = vpop.permute.xlu0 %2929
      %2931 = vrot.lane.b32.xlu0 %v2780, 32
      %v2932 = vpop.permute.xlu0 %2931
      %2933 = vrot.lane.b32.xlu0 %v2790, 32
      %v2934 = vpop.permute.xlu0 %2933
      %2935 = vrot.lane.b32.xlu0 %v2800, 32
      %v2936 = vpop.permute.xlu0 %2935
      %2937 = vrot.lane.b32.xlu0 %v2814, 32
      %v2938 = vpop.permute.xlu0 %2937
      %2939 = vrot.lane.b32.xlu0 %v2824, 32
      %v2940 = vpop.permute.xlu0 %2939
      %2941 = vrot.lane.b32.xlu0 %v2834, 32
      %v2942 = vpop.permute.xlu0 %2941
      %2943 = vrot.lane.b32.xlu0 %v2844, 32
      %v2944 = vpop.permute.xlu0 %2943
      %2945 = vrot.lane.b32.xlu0 %v2858, 32
      %v2946 = vpop.permute.xlu0 %2945
      %2947 = vrot.lane.b32.xlu0 %v2868, 32
      %v2948 = vpop.permute.xlu0 %2947
      %2949 = vrot.lane.b32.xlu0 %v2878, 32
      %v2950 = vpop.permute.xlu0 %2949
      %2951 = vrot.lane.b32.xlu0 %v2888, 32
      %v2952 = vpop.permute.xlu0 %2951
      %vm2985 = vcmask 322816
      %2986 = vst.msk [vmem:[#allocation3] sm:$0xf] %vm2985, %v2890
      %2987 = vst.msk [vmem:[#allocation3 + $0x4] sm:$0xf] %vm2985, %v2892
      %2988 = vst.msk [vmem:[#allocation3 + $0x8] sm:$0xf] %vm2985, %v2894
      %2989 = vst.msk [vmem:[#allocation3 + $0xc] sm:$0xf] %vm2985, %v2896
      %2990 = vst.msk [vmem:[#allocation3 + $0x10] sm:$0xf] %vm2985, %v2898
      %2991 = vst.msk [vmem:[#allocation3 + $0x14] sm:$0xf] %vm2985, %v2900
      %2992 = vst.msk [vmem:[#allocation3 + $0x18] sm:$0xf] %vm2985, %v2902
      %2993 = vst.msk [vmem:[#allocation3 + $0x1c] sm:$0xf] %vm2985, %v2904
      %2994 = vst.msk [vmem:[#allocation3 + $0x20] sm:$0xf] %vm2985, %v2906
      %2995 = vst.msk [vmem:[#allocation3 + $0x24] sm:$0xf] %vm2985, %v2908
      %2996 = vst.msk [vmem:[#allocation3 + $0x28] sm:$0xf] %vm2985, %v2910
      %2997 = vst.msk [vmem:[#allocation3 + $0x2c] sm:$0xf] %vm2985, %v2912
      %2998 = vst.msk [vmem:[#allocation3 + $0x30] sm:$0xf] %vm2985, %v2914
      %2999 = vst.msk [vmem:[#allocation3 + $0x34] sm:$0xf] %vm2985, %v2916
      %3000 = vst.msk [vmem:[#allocation3 + $0x38] sm:$0xf] %vm2985, %v2918
      %3001 = vst.msk [vmem:[#allocation3 + $0x3c] sm:$0xf] %vm2985, %v2920
      %3002 = vst.msk [vmem:[#allocation3 + $0x40] sm:$0xf] %vm2985, %v2922
      %3003 = vst.msk [vmem:[#allocation3 + $0x44] sm:$0xf] %vm2985, %v2924
      %3004 = vst.msk [vmem:[#allocation3 + $0x48] sm:$0xf] %vm2985, %v2926
      %3005 = vst.msk [vmem:[#allocation3 + $0x4c] sm:$0xf] %vm2985, %v2928
      %3006 = vst.msk [vmem:[#allocation3 + $0x50] sm:$0xf] %vm2985, %v2930
      %3007 = vst.msk [vmem:[#allocation3 + $0x54] sm:$0xf] %vm2985, %v2932
      %3008 = vst.msk [vmem:[#allocation3 + $0x58] sm:$0xf] %vm2985, %v2934
      %3009 = vst.msk [vmem:[#allocation3 + $0x5c] sm:$0xf] %vm2985, %v2936
      %3010 = vst.msk [vmem:[#allocation3 + $0x60] sm:$0xf] %vm2985, %v2938
      %3011 = vst.msk [vmem:[#allocation3 + $0x64] sm:$0xf] %vm2985, %v2940
      %3012 = vst.msk [vmem:[#allocation3 + $0x68] sm:$0xf] %vm2985, %v2942
      %3013 = vst.msk [vmem:[#allocation3 + $0x6c] sm:$0xf] %vm2985, %v2944
      %3014 = vst.msk [vmem:[#allocation3 + $0x70] sm:$0xf] %vm2985, %v2946
      %3015 = vst.msk [vmem:[#allocation3 + $0x74] sm:$0xf] %vm2985, %v2948
      %3016 = vst.msk [vmem:[#allocation3 + $0x78] sm:$0xf] %vm2985, %v2950
      %3017 = vst.msk [vmem:[#allocation3 + $0x7c] sm:$0xf] %vm2985, %v2952
      %v3018 = vld [vmem:[%s1142] sm:$0xe]
      %v3019 = vld [vmem:[%s1142 + $0x4] sm:$0xf]
      %v3020 = vld [vmem:[%s1142 + $0x8] sm:$0xf]
      %v3021 = vld [vmem:[%s1142 + $0xc] sm:$0xf]
      %v3022 = vld [vmem:[%s1142 + $0x10] sm:$0x1]
      %v3023 = vld [vmem:[%s1142 + $0x14] sm:$0xe]
      %v3024 = vld [vmem:[%s1142 + $0x18] sm:$0xf]
      %v3025 = vld [vmem:[%s1142 + $0x1c] sm:$0xf]
      %v3026 = vld [vmem:[%s1142 + $0x20] sm:$0xf]
      %v3027 = vld [vmem:[%s1142 + $0x24] sm:$0x1]
      %v3028 = vld [vmem:[%s1142 + $0x28] sm:$0xe]
      %v3029 = vld [vmem:[%s1142 + $0x2c] sm:$0xf]
      %v3030 = vld [vmem:[%s1142 + $0x30] sm:$0xf]
      %v3031 = vld [vmem:[%s1142 + $0x34] sm:$0xf]
      %v3032 = vld [vmem:[%s1142 + $0x38] sm:$0x1]
      %v3033 = vld [vmem:[%s1142 + $0x3c] sm:$0xe]
      %v3034 = vld [vmem:[%s1142 + $0x40] sm:$0xf]
      %v3035 = vld [vmem:[%s1142 + $0x44] sm:$0xf]
      %v3036 = vld [vmem:[%s1142 + $0x48] sm:$0xf]
      %v3037 = vld [vmem:[%s1142 + $0x4c] sm:$0x1]
      %v3038 = vld [vmem:[%s1142 + $0x50] sm:$0xe]
      %v3039 = vld [vmem:[%s1142 + $0x54] sm:$0xf]
      %v3040 = vld [vmem:[%s1142 + $0x58] sm:$0xf]
      %v3041 = vld [vmem:[%s1142 + $0x5c] sm:$0xf]
      %v3042 = vld [vmem:[%s1142 + $0x60] sm:$0x1]
      %v3043 = vld [vmem:[%s1142 + $0x64] sm:$0xe]
      %v3044 = vld [vmem:[%s1142 + $0x68] sm:$0xf]
      %v3045 = vld [vmem:[%s1142 + $0x6c] sm:$0xf]
      %v3046 = vld [vmem:[%s1142 + $0x70] sm:$0xf]
      %v3047 = vld [vmem:[%s1142 + $0x74] sm:$0x1]
      %v3048 = vld [vmem:[%s1142 + $0x78] sm:$0xe]
      %v3049 = vld [vmem:[%s1142 + $0x7c] sm:$0xf]
      %v3050 = vld [vmem:[%s1142 + $0x80] sm:$0xf]
      %v3051 = vld [vmem:[%s1142 + $0x84] sm:$0xf]
      %v3052 = vld [vmem:[%s1142 + $0x88] sm:$0x1]
      %v3053 = vld [vmem:[%s1142 + $0x8c] sm:$0xe]
      %v3054 = vld [vmem:[%s1142 + $0x90] sm:$0xf]
      %v3055 = vld [vmem:[%s1142 + $0x94] sm:$0xf]
      %v3056 = vld [vmem:[%s1142 + $0x98] sm:$0xf]
      %v3057 = vld [vmem:[%s1142 + $0x9c] sm:$0x1]
      %v3098 = vrot.slane %v3018, 5
      %v3099 = vrot.slane %v3098, 4
      %v3100 = vrot.slane %v3019, 5
      %v3101 = vsel %vm2070, %v3099, %v3100
      %v3102 = vrot.slane %v3100, 4
      %v3103 = vrot.slane %v3020, 5
      %v3104 = vsel %vm2070, %v3102, %v3103
      %v3105 = vrot.slane %v3103, 4
      %v3106 = vrot.slane %v3021, 5
      %v3107 = vsel %vm2070, %v3105, %v3106
      %v3108 = vrot.slane %v3106, 4
      %v3109 = vrot.slane %v3022, 5
      %v3110 = vsel %vm2070, %v3108, %v3109
      %v3111 = vrot.slane %v3023, 5
      %v3112 = vrot.slane %v3111, 4
      %v3113 = vrot.slane %v3024, 5
      %v3114 = vsel %vm2070, %v3112, %v3113
      %v3115 = vrot.slane %v3113, 4
      %v3116 = vrot.slane %v3025, 5
      %v3117 = vsel %vm2070, %v3115, %v3116
      %v3118 = vrot.slane %v3116, 4
      %v3119 = vrot.slane %v3026, 5
      %v3120 = vsel %vm2070, %v3118, %v3119
      %v3121 = vrot.slane %v3119, 4
      %v3122 = vrot.slane %v3027, 5
      %v3123 = vsel %vm2070, %v3121, %v3122
      %v3124 = vrot.slane %v3028, 5
      %v3125 = vrot.slane %v3124, 4
      %v3126 = vrot.slane %v3029, 5
      %v3127 = vsel %vm2070, %v3125, %v3126
      %v3128 = vrot.slane %v3126, 4
      %v3129 = vrot.slane %v3030, 5
      %v3130 = vsel %vm2070, %v3128, %v3129
      %v3131 = vrot.slane %v3129, 4
      %v3132 = vrot.slane %v3031, 5
      %v3133 = vsel %vm2070, %v3131, %v3132
      %v3134 = vrot.slane %v3132, 4
      %v3135 = vrot.slane %v3032, 5
      %v3136 = vsel %vm2070, %v3134, %v3135
      %v3137 = vrot.slane %v3033, 5
      %v3138 = vrot.slane %v3137, 4
      %v3139 = vrot.slane %v3034, 5
      %v3140 = vsel %vm2070, %v3138, %v3139
      %v3141 = vrot.slane %v3139, 4
      %v3142 = vrot.slane %v3035, 5
      %v3143 = vsel %vm2070, %v3141, %v3142
      %v3144 = vrot.slane %v3142, 4
      %v3145 = vrot.slane %v3036, 5
      %v3146 = vsel %vm2070, %v3144, %v3145
      %v3147 = vrot.slane %v3145, 4
      %v3148 = vrot.slane %v3037, 5
      %v3149 = vsel %vm2070, %v3147, %v3148
      %v3150 = vrot.slane %v3038, 5
      %v3151 = vrot.slane %v3150, 4
      %v3152 = vrot.slane %v3039, 5
      %v3153 = vsel %vm2070, %v3151, %v3152
      %v3154 = vrot.slane %v3152, 4
      %v3155 = vrot.slane %v3040, 5
      %v3156 = vsel %vm2070, %v3154, %v3155
      %v3157 = vrot.slane %v3155, 4
      %v3158 = vrot.slane %v3041, 5
      %v3159 = vsel %vm2070, %v3157, %v3158
      %v3160 = vrot.slane %v3158, 4
      %v3161 = vrot.slane %v3042, 5
      %v3162 = vsel %vm2070, %v3160, %v3161
      %v3163 = vrot.slane %v3043, 5
      %v3164 = vrot.slane %v3163, 4
      %v3165 = vrot.slane %v3044, 5
      %v3166 = vsel %vm2070, %v3164, %v3165
      %v3167 = vrot.slane %v3165, 4
      %v3168 = vrot.slane %v3045, 5
      %v3169 = vsel %vm2070, %v3167, %v3168
      %v3170 = vrot.slane %v3168, 4
      %v3171 = vrot.slane %v3046, 5
      %v3172 = vsel %vm2070, %v3170, %v3171
      %v3173 = vrot.slane %v3171, 4
      %v3174 = vrot.slane %v3047, 5
      %v3175 = vsel %vm2070, %v3173, %v3174
      %v3176 = vrot.slane %v3048, 5
      %v3177 = vrot.slane %v3176, 4
      %v3178 = vrot.slane %v3049, 5
      %v3179 = vsel %vm2070, %v3177, %v3178
      %v3180 = vrot.slane %v3178, 4
      %v3181 = vrot.slane %v3050, 5
      %v3182 = vsel %vm2070, %v3180, %v3181
      %v3183 = vrot.slane %v3181, 4
      %v3184 = vrot.slane %v3051, 5
      %v3185 = vsel %vm2070, %v3183, %v3184
      %v3186 = vrot.slane %v3184, 4
      %v3187 = vrot.slane %v3052, 5
      %v3188 = vsel %vm2070, %v3186, %v3187
      %v3189 = vrot.slane %v3053, 5
      %v3190 = vrot.slane %v3189, 4
      %v3191 = vrot.slane %v3054, 5
      %v3192 = vsel %vm2070, %v3190, %v3191
      %v3193 = vrot.slane %v3191, 4
      %v3194 = vrot.slane %v3055, 5
      %v3195 = vsel %vm2070, %v3193, %v3194
      %v3196 = vrot.slane %v3194, 4
      %v3197 = vrot.slane %v3056, 5
      %v3198 = vsel %vm2070, %v3196, %v3197
      %v3199 = vrot.slane %v3197, 4
      %v3200 = vrot.slane %v3057, 5
      %v3201 = vsel %vm2070, %v3199, %v3200
      %3202 = vrot.lane.b32.xlu0 %v3101, 40
      %v3203 = vpop.permute.xlu0 %3202
      %3204 = vrot.lane.b32.xlu0 %v3104, 40
      %v3205 = vpop.permute.xlu0 %3204
      %3206 = vrot.lane.b32.xlu0 %v3107, 40
      %v3207 = vpop.permute.xlu0 %3206
      %3208 = vrot.lane.b32.xlu0 %v3110, 40
      %v3209 = vpop.permute.xlu0 %3208
      %3210 = vrot.lane.b32.xlu0 %v3114, 40
      %v3211 = vpop.permute.xlu0 %3210
      %3212 = vrot.lane.b32.xlu0 %v3117, 40
      %v3213 = vpop.permute.xlu0 %3212
      %3214 = vrot.lane.b32.xlu0 %v3120, 40
      %v3215 = vpop.permute.xlu0 %3214
      %3216 = vrot.lane.b32.xlu0 %v3123, 40
      %v3217 = vpop.permute.xlu0 %3216
      %3218 = vrot.lane.b32.xlu0 %v3127, 40
      %v3219 = vpop.permute.xlu0 %3218
      %3220 = vrot.lane.b32.xlu0 %v3130, 40
      %v3221 = vpop.permute.xlu0 %3220
      %3222 = vrot.lane.b32.xlu0 %v3133, 40
      %v3223 = vpop.permute.xlu0 %3222
      %3224 = vrot.lane.b32.xlu0 %v3136, 40
      %v3225 = vpop.permute.xlu0 %3224
      %3226 = vrot.lane.b32.xlu0 %v3140, 40
      %v3227 = vpop.permute.xlu0 %3226
      %3228 = vrot.lane.b32.xlu0 %v3143, 40
      %v3229 = vpop.permute.xlu0 %3228
      %3230 = vrot.lane.b32.xlu0 %v3146, 40
      %v3231 = vpop.permute.xlu0 %3230
      %3232 = vrot.lane.b32.xlu0 %v3149, 40
      %v3233 = vpop.permute.xlu0 %3232
      %3234 = vrot.lane.b32.xlu0 %v3153, 40
      %v3235 = vpop.permute.xlu0 %3234
      %3236 = vrot.lane.b32.xlu0 %v3156, 40
      %v3237 = vpop.permute.xlu0 %3236
      %3238 = vrot.lane.b32.xlu0 %v3159, 40
      %v3239 = vpop.permute.xlu0 %3238
      %3240 = vrot.lane.b32.xlu0 %v3162, 40
      %v3241 = vpop.permute.xlu0 %3240
      %3242 = vrot.lane.b32.xlu0 %v3166, 40
      %v3243 = vpop.permute.xlu0 %3242
      %3244 = vrot.lane.b32.xlu0 %v3169, 40
      %v3245 = vpop.permute.xlu0 %3244
      %3246 = vrot.lane.b32.xlu0 %v3172, 40
      %v3247 = vpop.permute.xlu0 %3246
      %3248 = vrot.lane.b32.xlu0 %v3175, 40
      %v3249 = vpop.permute.xlu0 %3248
      %3250 = vrot.lane.b32.xlu0 %v3179, 40
      %v3251 = vpop.permute.xlu0 %3250
      %3252 = vrot.lane.b32.xlu0 %v3182, 40
      %v3253 = vpop.permute.xlu0 %3252
      %3254 = vrot.lane.b32.xlu0 %v3185, 40
      %v3255 = vpop.permute.xlu0 %3254
      %3256 = vrot.lane.b32.xlu0 %v3188, 40
      %v3257 = vpop.permute.xlu0 %3256
      %3258 = vrot.lane.b32.xlu0 %v3192, 40
      %v3259 = vpop.permute.xlu0 %3258
      %3260 = vrot.lane.b32.xlu0 %v3195, 40
      %v3261 = vpop.permute.xlu0 %3260
      %3262 = vrot.lane.b32.xlu0 %v3198, 40
      %v3263 = vpop.permute.xlu0 %3262
      %3264 = vrot.lane.b32.xlu0 %v3201, 40
      %v3265 = vpop.permute.xlu0 %3264
      %vm3298 = vcmask 388416
      %3299 = vst.msk [vmem:[#allocation3] sm:$0xf] %vm3298, %v3203
      %3300 = vst.msk [vmem:[#allocation3 + $0x4] sm:$0xf] %vm3298, %v3205
      %3301 = vst.msk [vmem:[#allocation3 + $0x8] sm:$0xf] %vm3298, %v3207
      %3302 = vst.msk [vmem:[#allocation3 + $0xc] sm:$0xf] %vm3298, %v3209
      %3303 = vst.msk [vmem:[#allocation3 + $0x10] sm:$0xf] %vm3298, %v3211
      %3304 = vst.msk [vmem:[#allocation3 + $0x14] sm:$0xf] %vm3298, %v3213
      %3305 = vst.msk [vmem:[#allocation3 + $0x18] sm:$0xf] %vm3298, %v3215
      %3306 = vst.msk [vmem:[#allocation3 + $0x1c] sm:$0xf] %vm3298, %v3217
      %3307 = vst.msk [vmem:[#allocation3 + $0x20] sm:$0xf] %vm3298, %v3219
      %3308 = vst.msk [vmem:[#allocation3 + $0x24] sm:$0xf] %vm3298, %v3221
      %3309 = vst.msk [vmem:[#allocation3 + $0x28] sm:$0xf] %vm3298, %v3223
      %3310 = vst.msk [vmem:[#allocation3 + $0x2c] sm:$0xf] %vm3298, %v3225
      %3311 = vst.msk [vmem:[#allocation3 + $0x30] sm:$0xf] %vm3298, %v3227
      %3312 = vst.msk [vmem:[#allocation3 + $0x34] sm:$0xf] %vm3298, %v3229
      %3313 = vst.msk [vmem:[#allocation3 + $0x38] sm:$0xf] %vm3298, %v3231
      %3314 = vst.msk [vmem:[#allocation3 + $0x3c] sm:$0xf] %vm3298, %v3233
      %3315 = vst.msk [vmem:[#allocation3 + $0x40] sm:$0xf] %vm3298, %v3235
      %3316 = vst.msk [vmem:[#allocation3 + $0x44] sm:$0xf] %vm3298, %v3237
      %3317 = vst.msk [vmem:[#allocation3 + $0x48] sm:$0xf] %vm3298, %v3239
      %3318 = vst.msk [vmem:[#allocation3 + $0x4c] sm:$0xf] %vm3298, %v3241
      %3319 = vst.msk [vmem:[#allocation3 + $0x50] sm:$0xf] %vm3298, %v3243
      %3320 = vst.msk [vmem:[#allocation3 + $0x54] sm:$0xf] %vm3298, %v3245
      %3321 = vst.msk [vmem:[#allocation3 + $0x58] sm:$0xf] %vm3298, %v3247
      %3322 = vst.msk [vmem:[#allocation3 + $0x5c] sm:$0xf] %vm3298, %v3249
      %3323 = vst.msk [vmem:[#allocation3 + $0x60] sm:$0xf] %vm3298, %v3251
      %3324 = vst.msk [vmem:[#allocation3 + $0x64] sm:$0xf] %vm3298, %v3253
      %3325 = vst.msk [vmem:[#allocation3 + $0x68] sm:$0xf] %vm3298, %v3255
      %3326 = vst.msk [vmem:[#allocation3 + $0x6c] sm:$0xf] %vm3298, %v3257
      %3327 = vst.msk [vmem:[#allocation3 + $0x70] sm:$0xf] %vm3298, %v3259
      %3328 = vst.msk [vmem:[#allocation3 + $0x74] sm:$0xf] %vm3298, %v3261
      %3329 = vst.msk [vmem:[#allocation3 + $0x78] sm:$0xf] %vm3298, %v3263
      %3330 = vst.msk [vmem:[#allocation3 + $0x7c] sm:$0xf] %vm3298, %v3265
      %s3331 = scalar_lea.vmem [#allocation2], 40
      %v3332 = vld [vmem:[%s3331] sm:$0xf]
      %v3333 = vld [vmem:[%s3331 + $0x4] sm:$0xf]
      %v3334 = vld [vmem:[%s3331 + $0x8] sm:$0xf]
      %v3335 = vld [vmem:[%s3331 + $0xc] sm:$0xf]
      %v3336 = vld [vmem:[%s3331 + $0x14] sm:$0xf]
      %v3337 = vld [vmem:[%s3331 + $0x18] sm:$0xf]
      %v3338 = vld [vmem:[%s3331 + $0x1c] sm:$0xf]
      %v3339 = vld [vmem:[%s3331 + $0x20] sm:$0xf]
      %v3340 = vld [vmem:[%s3331 + $0x28] sm:$0xf]
      %v3341 = vld [vmem:[%s3331 + $0x2c] sm:$0xf]
      %v3342 = vld [vmem:[%s3331 + $0x30] sm:$0xf]
      %v3343 = vld [vmem:[%s3331 + $0x34] sm:$0xf]
      %v3344 = vld [vmem:[%s3331 + $0x3c] sm:$0xf]
      %v3345 = vld [vmem:[%s3331 + $0x40] sm:$0xf]
      %v3346 = vld [vmem:[%s3331 + $0x44] sm:$0xf]
      %v3347 = vld [vmem:[%s3331 + $0x48] sm:$0xf]
      %v3348 = vld [vmem:[%s3331 + $0x50] sm:$0xf]
      %v3349 = vld [vmem:[%s3331 + $0x54] sm:$0xf]
      %v3350 = vld [vmem:[%s3331 + $0x58] sm:$0xf]
      %v3351 = vld [vmem:[%s3331 + $0x5c] sm:$0xf]
      %v3352 = vld [vmem:[%s3331 + $0x64] sm:$0xf]
      %v3353 = vld [vmem:[%s3331 + $0x68] sm:$0xf]
      %v3354 = vld [vmem:[%s3331 + $0x6c] sm:$0xf]
      %v3355 = vld [vmem:[%s3331 + $0x70] sm:$0xf]
      %v3356 = vld [vmem:[%s3331 + $0x78] sm:$0xf]
      %v3357 = vld [vmem:[%s3331 + $0x7c] sm:$0xf]
      %v3358 = vld [vmem:[%s3331 + $0x80] sm:$0xf]
      %v3359 = vld [vmem:[%s3331 + $0x84] sm:$0xf]
      %v3360 = vld [vmem:[%s3331 + $0x8c] sm:$0xf]
      %v3361 = vld [vmem:[%s3331 + $0x90] sm:$0xf]
      %v3362 = vld [vmem:[%s3331 + $0x94] sm:$0xf]
      %v3363 = vld [vmem:[%s3331 + $0x98] sm:$0xf]
      %3396 = vrot.lane.b32.xlu0 %v3332, 48
      %v3397 = vpop.permute.xlu0 %3396
      %3398 = vrot.lane.b32.xlu0 %v3333, 48
      %v3399 = vpop.permute.xlu0 %3398
      %3400 = vrot.lane.b32.xlu0 %v3334, 48
      %v3401 = vpop.permute.xlu0 %3400
      %3402 = vrot.lane.b32.xlu0 %v3335, 48
      %v3403 = vpop.permute.xlu0 %3402
      %3404 = vrot.lane.b32.xlu0 %v3336, 48
      %v3405 = vpop.permute.xlu0 %3404
      %3406 = vrot.lane.b32.xlu0 %v3337, 48
      %v3407 = vpop.permute.xlu0 %3406
      %3408 = vrot.lane.b32.xlu0 %v3338, 48
      %v3409 = vpop.permute.xlu0 %3408
      %3410 = vrot.lane.b32.xlu0 %v3339, 48
      %v3411 = vpop.permute.xlu0 %3410
      %3412 = vrot.lane.b32.xlu0 %v3340, 48
      %v3413 = vpop.permute.xlu0 %3412
      %3414 = vrot.lane.b32.xlu0 %v3341, 48
      %v3415 = vpop.permute.xlu0 %3414
      %3416 = vrot.lane.b32.xlu0 %v3342, 48
      %v3417 = vpop.permute.xlu0 %3416
      %3418 = vrot.lane.b32.xlu0 %v3343, 48
      %v3419 = vpop.permute.xlu0 %3418
      %3420 = vrot.lane.b32.xlu0 %v3344, 48
      %v3421 = vpop.permute.xlu0 %3420
      %3422 = vrot.lane.b32.xlu0 %v3345, 48
      %v3423 = vpop.permute.xlu0 %3422
      %3424 = vrot.lane.b32.xlu0 %v3346, 48
      %v3425 = vpop.permute.xlu0 %3424
      %3426 = vrot.lane.b32.xlu0 %v3347, 48
      %v3427 = vpop.permute.xlu0 %3426
      %3428 = vrot.lane.b32.xlu0 %v3348, 48
      %v3429 = vpop.permute.xlu0 %3428
      %3430 = vrot.lane.b32.xlu0 %v3349, 48
      %v3431 = vpop.permute.xlu0 %3430
      %3432 = vrot.lane.b32.xlu0 %v3350, 48
      %v3433 = vpop.permute.xlu0 %3432
      %3434 = vrot.lane.b32.xlu0 %v3351, 48
      %v3435 = vpop.permute.xlu0 %3434
      %3436 = vrot.lane.b32.xlu0 %v3352, 48
      %v3437 = vpop.permute.xlu0 %3436
      %3438 = vrot.lane.b32.xlu0 %v3353, 48
      %v3439 = vpop.permute.xlu0 %3438
      %3440 = vrot.lane.b32.xlu0 %v3354, 48
      %v3441 = vpop.permute.xlu0 %3440
      %3442 = vrot.lane.b32.xlu0 %v3355, 48
      %v3443 = vpop.permute.xlu0 %3442
      %3444 = vrot.lane.b32.xlu0 %v3356, 48
      %v3445 = vpop.permute.xlu0 %3444
      %3446 = vrot.lane.b32.xlu0 %v3357, 48
      %v3447 = vpop.permute.xlu0 %3446
      %3448 = vrot.lane.b32.xlu0 %v3358, 48
      %v3449 = vpop.permute.xlu0 %3448
      %3450 = vrot.lane.b32.xlu0 %v3359, 48
      %v3451 = vpop.permute.xlu0 %3450
      %3452 = vrot.lane.b32.xlu0 %v3360, 48
      %v3453 = vpop.permute.xlu0 %3452
      %3454 = vrot.lane.b32.xlu0 %v3361, 48
      %v3455 = vpop.permute.xlu0 %3454
      %3456 = vrot.lane.b32.xlu0 %v3362, 48
      %v3457 = vpop.permute.xlu0 %3456
      %3458 = vrot.lane.b32.xlu0 %v3363, 48
      %v3459 = vpop.permute.xlu0 %3458
      %vm3492 = vcmask 454016
      %3493 = vst.msk [vmem:[#allocation3] sm:$0xf] %vm3492, %v3397
      %3494 = vst.msk [vmem:[#allocation3 + $0x4] sm:$0xf] %vm3492, %v3399
      %3495 = vst.msk [vmem:[#allocation3 + $0x8] sm:$0xf] %vm3492, %v3401
      %3496 = vst.msk [vmem:[#allocation3 + $0xc] sm:$0xf] %vm3492, %v3403
      %3497 = vst.msk [vmem:[#allocation3 + $0x10] sm:$0xf] %vm3492, %v3405
      %3498 = vst.msk [vmem:[#allocation3 + $0x14] sm:$0xf] %vm3492, %v3407
      %3499 = vst.msk [vmem:[#allocation3 + $0x18] sm:$0xf] %vm3492, %v3409
      %3500 = vst.msk [vmem:[#allocation3 + $0x1c] sm:$0xf] %vm3492, %v3411
      %3501 = vst.msk [vmem:[#allocation3 + $0x20] sm:$0xf] %vm3492, %v3413
      %3502 = vst.msk [vmem:[#allocation3 + $0x24] sm:$0xf] %vm3492, %v3415
      %3503 = vst.msk [vmem:[#allocation3 + $0x28] sm:$0xf] %vm3492, %v3417
      %3504 = vst.msk [vmem:[#allocation3 + $0x2c] sm:$0xf] %vm3492, %v3419
      %3505 = vst.msk [vmem:[#allocation3 + $0x30] sm:$0xf] %vm3492, %v3421
      %3506 = vst.msk [vmem:[#allocation3 + $0x34] sm:$0xf] %vm3492, %v3423
      %3507 = vst.msk [vmem:[#allocation3 + $0x38] sm:$0xf] %vm3492, %v3425
      %3508 = vst.msk [vmem:[#allocation3 + $0x3c] sm:$0xf] %vm3492, %v3427
      %3509 = vst.msk [vmem:[#allocation3 + $0x40] sm:$0xf] %vm3492, %v3429
      %3510 = vst.msk [vmem:[#allocation3 + $0x44] sm:$0xf] %vm3492, %v3431
      %3511 = vst.msk [vmem:[#allocation3 + $0x48] sm:$0xf] %vm3492, %v3433
      %3512 = vst.msk [vmem:[#allocation3 + $0x4c] sm:$0xf] %vm3492, %v3435
      %3513 = vst.msk [vmem:[#allocation3 + $0x50] sm:$0xf] %vm3492, %v3437
      %3514 = vst.msk [vmem:[#allocation3 + $0x54] sm:$0xf] %vm3492, %v3439
      %3515 = vst.msk [vmem:[#allocation3 + $0x58] sm:$0xf] %vm3492, %v3441
      %3516 = vst.msk [vmem:[#allocation3 + $0x5c] sm:$0xf] %vm3492, %v3443
      %3517 = vst.msk [vmem:[#allocation3 + $0x60] sm:$0xf] %vm3492, %v3445
      %3518 = vst.msk [vmem:[#allocation3 + $0x64] sm:$0xf] %vm3492, %v3447
      %3519 = vst.msk [vmem:[#allocation3 + $0x68] sm:$0xf] %vm3492, %v3449
      %3520 = vst.msk [vmem:[#allocation3 + $0x6c] sm:$0xf] %vm3492, %v3451
      %3521 = vst.msk [vmem:[#allocation3 + $0x70] sm:$0xf] %vm3492, %v3453
      %3522 = vst.msk [vmem:[#allocation3 + $0x74] sm:$0xf] %vm3492, %v3455
      %3523 = vst.msk [vmem:[#allocation3 + $0x78] sm:$0xf] %vm3492, %v3457
      %3524 = vst.msk [vmem:[#allocation3 + $0x7c] sm:$0xf] %vm3492, %v3459
      %v3525 = vld [vmem:[%s3331] sm:$0xf]
      %v3526 = vld [vmem:[%s3331 + $0x4] sm:$0xf]
      %v3527 = vld [vmem:[%s3331 + $0x8] sm:$0xf]
      %v3528 = vld [vmem:[%s3331 + $0xc] sm:$0xf]
      %v3529 = vld [vmem:[%s3331 + $0x10] sm:$0x1]
      %v3530 = vld [vmem:[%s3331 + $0x14] sm:$0xf]
      %v3531 = vld [vmem:[%s3331 + $0x18] sm:$0xf]
      %v3532 = vld [vmem:[%s3331 + $0x1c] sm:$0xf]
      %v3533 = vld [vmem:[%s3331 + $0x20] sm:$0xf]
      %v3534 = vld [vmem:[%s3331 + $0x24] sm:$0x1]
      %v3535 = vld [vmem:[%s3331 + $0x28] sm:$0xf]
      %v3536 = vld [vmem:[%s3331 + $0x2c] sm:$0xf]
      %v3537 = vld [vmem:[%s3331 + $0x30] sm:$0xf]
      %v3538 = vld [vmem:[%s3331 + $0x34] sm:$0xf]
      %v3539 = vld [vmem:[%s3331 + $0x38] sm:$0x1]
      %v3540 = vld [vmem:[%s3331 + $0x3c] sm:$0xf]
      %v3541 = vld [vmem:[%s3331 + $0x40] sm:$0xf]
      %v3542 = vld [vmem:[%s3331 + $0x44] sm:$0xf]
      %v3543 = vld [vmem:[%s3331 + $0x48] sm:$0xf]
      %v3544 = vld [vmem:[%s3331 + $0x4c] sm:$0x1]
      %v3545 = vld [vmem:[%s3331 + $0x50] sm:$0xf]
      %v3546 = vld [vmem:[%s3331 + $0x54] sm:$0xf]
      %v3547 = vld [vmem:[%s3331 + $0x58] sm:$0xf]
      %v3548 = vld [vmem:[%s3331 + $0x5c] sm:$0xf]
      %v3549 = vld [vmem:[%s3331 + $0x60] sm:$0x1]
      %v3550 = vld [vmem:[%s3331 + $0x64] sm:$0xf]
      %v3551 = vld [vmem:[%s3331 + $0x68] sm:$0xf]
      %v3552 = vld [vmem:[%s3331 + $0x6c] sm:$0xf]
      %v3553 = vld [vmem:[%s3331 + $0x70] sm:$0xf]
      %v3554 = vld [vmem:[%s3331 + $0x74] sm:$0x1]
      %v3555 = vld [vmem:[%s3331 + $0x78] sm:$0xf]
      %v3556 = vld [vmem:[%s3331 + $0x7c] sm:$0xf]
      %v3557 = vld [vmem:[%s3331 + $0x80] sm:$0xf]
      %v3558 = vld [vmem:[%s3331 + $0x84] sm:$0xf]
      %v3559 = vld [vmem:[%s3331 + $0x88] sm:$0x1]
      %v3560 = vld [vmem:[%s3331 + $0x8c] sm:$0xf]
      %v3561 = vld [vmem:[%s3331 + $0x90] sm:$0xf]
      %v3562 = vld [vmem:[%s3331 + $0x94] sm:$0xf]
      %v3563 = vld [vmem:[%s3331 + $0x98] sm:$0xf]
      %v3564 = vld [vmem:[%s3331 + $0x9c] sm:$0x1]
      %v3566 = vshrl.u32 %v3525, 16
      %v3568 = vrot.slane %v3566, 4
      %v3569 = vshll.u32 %v3525, 16
      %v3571 = vrot.slane %v3569, 5
      %v3572 = vor.u32 %v3568, %v3571
      %v3573 = vrot.slane %v3572, 4
      %v3575 = vshll.u32 %v3526, 16
      %v3577 = vrot.slane %v3575, 5
      %v3578 = vsel %vm1506, %v3573, %v3577
      %v3579 = vshrl.u32 %v3526, 16
      %v3581 = vrot.slane %v3579, 4
      %v3582 = vor.u32 %v3581, %v3577
      %v3583 = vrot.slane %v3582, 4
      %v3585 = vshll.u32 %v3527, 16
      %v3587 = vrot.slane %v3585, 5
      %v3588 = vsel %vm1506, %v3583, %v3587
      %v3589 = vshrl.u32 %v3527, 16
      %v3591 = vrot.slane %v3589, 4
      %v3592 = vor.u32 %v3591, %v3587
      %v3593 = vrot.slane %v3592, 4
      %v3595 = vshll.u32 %v3528, 16
      %v3597 = vrot.slane %v3595, 5
      %v3598 = vsel %vm1506, %v3593, %v3597
      %v3599 = vshrl.u32 %v3528, 16
      %v3601 = vrot.slane %v3599, 4
      %v3602 = vor.u32 %v3601, %v3597
      %v3603 = vrot.slane %v3602, 4
      %v3605 = vshll.u32 %v3529, 16
      %v3607 = vrot.slane %v3605, 5
      %v3608 = vsel %vm1506, %v3603, %v3607
      %v3610 = vshrl.u32 %v3530, 16
      %v3612 = vrot.slane %v3610, 4
      %v3613 = vshll.u32 %v3530, 16
      %v3615 = vrot.slane %v3613, 5
      %v3616 = vor.u32 %v3612, %v3615
      %v3617 = vrot.slane %v3616, 4
      %v3619 = vshll.u32 %v3531, 16
      %v3621 = vrot.slane %v3619, 5
      %v3622 = vsel %vm1506, %v3617, %v3621
      %v3623 = vshrl.u32 %v3531, 16
      %v3625 = vrot.slane %v3623, 4
      %v3626 = vor.u32 %v3625, %v3621
      %v3627 = vrot.slane %v3626, 4
      %v3629 = vshll.u32 %v3532, 16
      %v3631 = vrot.slane %v3629, 5
      %v3632 = vsel %vm1506, %v3627, %v3631
      %v3633 = vshrl.u32 %v3532, 16
      %v3635 = vrot.slane %v3633, 4
      %v3636 = vor.u32 %v3635, %v3631
      %v3637 = vrot.slane %v3636, 4
      %v3639 = vshll.u32 %v3533, 16
      %v3641 = vrot.slane %v3639, 5
      %v3642 = vsel %vm1506, %v3637, %v3641
      %v3643 = vshrl.u32 %v3533, 16
      %v3645 = vrot.slane %v3643, 4
      %v3646 = vor.u32 %v3645, %v3641
      %v3647 = vrot.slane %v3646, 4
      %v3649 = vshll.u32 %v3534, 16
      %v3651 = vrot.slane %v3649, 5
      %v3652 = vsel %vm1506, %v3647, %v3651
      %v3654 = vshrl.u32 %v3535, 16
      %v3656 = vrot.slane %v3654, 4
      %v3657 = vshll.u32 %v3535, 16
      %v3659 = vrot.slane %v3657, 5
      %v3660 = vor.u32 %v3656, %v3659
      %v3661 = vrot.slane %v3660, 4
      %v3663 = vshll.u32 %v3536, 16
      %v3665 = vrot.slane %v3663, 5
      %v3666 = vsel %vm1506, %v3661, %v3665
      %v3667 = vshrl.u32 %v3536, 16
      %v3669 = vrot.slane %v3667, 4
      %v3670 = vor.u32 %v3669, %v3665
      %v3671 = vrot.slane %v3670, 4
      %v3673 = vshll.u32 %v3537, 16
      %v3675 = vrot.slane %v3673, 5
      %v3676 = vsel %vm1506, %v3671, %v3675
      %v3677 = vshrl.u32 %v3537, 16
      %v3679 = vrot.slane %v3677, 4
      %v3680 = vor.u32 %v3679, %v3675
      %v3681 = vrot.slane %v3680, 4
      %v3683 = vshll.u32 %v3538, 16
      %v3685 = vrot.slane %v3683, 5
      %v3686 = vsel %vm1506, %v3681, %v3685
      %v3687 = vshrl.u32 %v3538, 16
      %v3689 = vrot.slane %v3687, 4
      %v3690 = vor.u32 %v3689, %v3685
      %v3691 = vrot.slane %v3690, 4
      %v3693 = vshll.u32 %v3539, 16
      %v3695 = vrot.slane %v3693, 5
      %v3696 = vsel %vm1506, %v3691, %v3695
      %v3698 = vshrl.u32 %v3540, 16
      %v3700 = vrot.slane %v3698, 4
      %v3701 = vshll.u32 %v3540, 16
      %v3703 = vrot.slane %v3701, 5
      %v3704 = vor.u32 %v3700, %v3703
      %v3705 = vrot.slane %v3704, 4
      %v3707 = vshll.u32 %v3541, 16
      %v3709 = vrot.slane %v3707, 5
      %v3710 = vsel %vm1506, %v3705, %v3709
      %v3711 = vshrl.u32 %v3541, 16
      %v3713 = vrot.slane %v3711, 4
      %v3714 = vor.u32 %v3713, %v3709
      %v3715 = vrot.slane %v3714, 4
      %v3717 = vshll.u32 %v3542, 16
      %v3719 = vrot.slane %v3717, 5
      %v3720 = vsel %vm1506, %v3715, %v3719
      %v3721 = vshrl.u32 %v3542, 16
      %v3723 = vrot.slane %v3721, 4
      %v3724 = vor.u32 %v3723, %v3719
      %v3725 = vrot.slane %v3724, 4
      %v3727 = vshll.u32 %v3543, 16
      %v3729 = vrot.slane %v3727, 5
      %v3730 = vsel %vm1506, %v3725, %v3729
      %v3731 = vshrl.u32 %v3543, 16
      %v3733 = vrot.slane %v3731, 4
      %v3734 = vor.u32 %v3733, %v3729
      %v3735 = vrot.slane %v3734, 4
      %v3737 = vshll.u32 %v3544, 16
      %v3739 = vrot.slane %v3737, 5
      %v3740 = vsel %vm1506, %v3735, %v3739
      %v3742 = vshrl.u32 %v3545, 16
      %v3744 = vrot.slane %v3742, 4
      %v3745 = vshll.u32 %v3545, 16
      %v3747 = vrot.slane %v3745, 5
      %v3748 = vor.u32 %v3744, %v3747
      %v3749 = vrot.slane %v3748, 4
      %v3751 = vshll.u32 %v3546, 16
      %v3753 = vrot.slane %v3751, 5
      %v3754 = vsel %vm1506, %v3749, %v3753
      %v3755 = vshrl.u32 %v3546, 16
      %v3757 = vrot.slane %v3755, 4
      %v3758 = vor.u32 %v3757, %v3753
      %v3759 = vrot.slane %v3758, 4
      %v3761 = vshll.u32 %v3547, 16
      %v3763 = vrot.slane %v3761, 5
      %v3764 = vsel %vm1506, %v3759, %v3763
      %v3765 = vshrl.u32 %v3547, 16
      %v3767 = vrot.slane %v3765, 4
      %v3768 = vor.u32 %v3767, %v3763
      %v3769 = vrot.slane %v3768, 4
      %v3771 = vshll.u32 %v3548, 16
      %v3773 = vrot.slane %v3771, 5
      %v3774 = vsel %vm1506, %v3769, %v3773
      %v3775 = vshrl.u32 %v3548, 16
      %v3777 = vrot.slane %v3775, 4
      %v3778 = vor.u32 %v3777, %v3773
      %v3779 = vrot.slane %v3778, 4
      %v3781 = vshll.u32 %v3549, 16
      %v3783 = vrot.slane %v3781, 5
      %v3784 = vsel %vm1506, %v3779, %v3783
      %v3786 = vshrl.u32 %v3550, 16
      %v3788 = vrot.slane %v3786, 4
      %v3789 = vshll.u32 %v3550, 16
      %v3791 = vrot.slane %v3789, 5
      %v3792 = vor.u32 %v3788, %v3791
      %v3793 = vrot.slane %v3792, 4
      %v3795 = vshll.u32 %v3551, 16
      %v3797 = vrot.slane %v3795, 5
      %v3798 = vsel %vm1506, %v3793, %v3797
      %v3799 = vshrl.u32 %v3551, 16
      %v3801 = vrot.slane %v3799, 4
      %v3802 = vor.u32 %v3801, %v3797
      %v3803 = vrot.slane %v3802, 4
      %v3805 = vshll.u32 %v3552, 16
      %v3807 = vrot.slane %v3805, 5
      %v3808 = vsel %vm1506, %v3803, %v3807
      %v3809 = vshrl.u32 %v3552, 16
      %v3811 = vrot.slane %v3809, 4
      %v3812 = vor.u32 %v3811, %v3807
      %v3813 = vrot.slane %v3812, 4
      %v3815 = vshll.u32 %v3553, 16
      %v3817 = vrot.slane %v3815, 5
      %v3818 = vsel %vm1506, %v3813, %v3817
      %v3819 = vshrl.u32 %v3553, 16
      %v3821 = vrot.slane %v3819, 4
      %v3822 = vor.u32 %v3821, %v3817
      %v3823 = vrot.slane %v3822, 4
      %v3825 = vshll.u32 %v3554, 16
      %v3827 = vrot.slane %v3825, 5
      %v3828 = vsel %vm1506, %v3823, %v3827
      %v3830 = vshrl.u32 %v3555, 16
      %v3832 = vrot.slane %v3830, 4
      %v3833 = vshll.u32 %v3555, 16
      %v3835 = vrot.slane %v3833, 5
      %v3836 = vor.u32 %v3832, %v3835
      %v3837 = vrot.slane %v3836, 4
      %v3839 = vshll.u32 %v3556, 16
      %v3841 = vrot.slane %v3839, 5
      %v3842 = vsel %vm1506, %v3837, %v3841
      %v3843 = vshrl.u32 %v3556, 16
      %v3845 = vrot.slane %v3843, 4
      %v3846 = vor.u32 %v3845, %v3841
      %v3847 = vrot.slane %v3846, 4
      %v3849 = vshll.u32 %v3557, 16
      %v3851 = vrot.slane %v3849, 5
      %v3852 = vsel %vm1506, %v3847, %v3851
      %v3853 = vshrl.u32 %v3557, 16
      %v3855 = vrot.slane %v3853, 4
      %v3856 = vor.u32 %v3855, %v3851
      %v3857 = vrot.slane %v3856, 4
      %v3859 = vshll.u32 %v3558, 16
      %v3861 = vrot.slane %v3859, 5
      %v3862 = vsel %vm1506, %v3857, %v3861
      %v3863 = vshrl.u32 %v3558, 16
      %v3865 = vrot.slane %v3863, 4
      %v3866 = vor.u32 %v3865, %v3861
      %v3867 = vrot.slane %v3866, 4
      %v3869 = vshll.u32 %v3559, 16
      %v3871 = vrot.slane %v3869, 5
      %v3872 = vsel %vm1506, %v3867, %v3871
      %v3874 = vshrl.u32 %v3560, 16
      %v3876 = vrot.slane %v3874, 4
      %v3877 = vshll.u32 %v3560, 16
      %v3879 = vrot.slane %v3877, 5
      %v3880 = vor.u32 %v3876, %v3879
      %v3881 = vrot.slane %v3880, 4
      %v3883 = vshll.u32 %v3561, 16
      %v3885 = vrot.slane %v3883, 5
      %v3886 = vsel %vm1506, %v3881, %v3885
      %v3887 = vshrl.u32 %v3561, 16
      %v3889 = vrot.slane %v3887, 4
      %v3890 = vor.u32 %v3889, %v3885
      %v3891 = vrot.slane %v3890, 4
      %v3893 = vshll.u32 %v3562, 16
      %v3895 = vrot.slane %v3893, 5
      %v3896 = vsel %vm1506, %v3891, %v3895
      %v3897 = vshrl.u32 %v3562, 16
      %v3899 = vrot.slane %v3897, 4
      %v3900 = vor.u32 %v3899, %v3895
      %v3901 = vrot.slane %v3900, 4
      %v3903 = vshll.u32 %v3563, 16
      %v3905 = vrot.slane %v3903, 5
      %v3906 = vsel %vm1506, %v3901, %v3905
      %v3907 = vshrl.u32 %v3563, 16
      %v3909 = vrot.slane %v3907, 4
      %v3910 = vor.u32 %v3909, %v3905
      %v3911 = vrot.slane %v3910, 4
      %v3913 = vshll.u32 %v3564, 16
      %v3915 = vrot.slane %v3913, 5
      %v3916 = vsel %vm1506, %v3911, %v3915
      %3917 = vrot.lane.b32.xlu0 %v3578, 56
      %v3918 = vpop.permute.xlu0 %3917
      %3919 = vrot.lane.b32.xlu0 %v3588, 56
      %v3920 = vpop.permute.xlu0 %3919
      %3921 = vrot.lane.b32.xlu0 %v3598, 56
      %v3922 = vpop.permute.xlu0 %3921
      %3923 = vrot.lane.b32.xlu0 %v3608, 56
      %v3924 = vpop.permute.xlu0 %3923
      %3925 = vrot.lane.b32.xlu0 %v3622, 56
      %v3926 = vpop.permute.xlu0 %3925
      %3927 = vrot.lane.b32.xlu0 %v3632, 56
      %v3928 = vpop.permute.xlu0 %3927
      %3929 = vrot.lane.b32.xlu0 %v3642, 56
      %v3930 = vpop.permute.xlu0 %3929
      %3931 = vrot.lane.b32.xlu0 %v3652, 56
      %v3932 = vpop.permute.xlu0 %3931
      %3933 = vrot.lane.b32.xlu0 %v3666, 56
      %v3934 = vpop.permute.xlu0 %3933
      %3935 = vrot.lane.b32.xlu0 %v3676, 56
      %v3936 = vpop.permute.xlu0 %3935
      %3937 = vrot.lane.b32.xlu0 %v3686, 56
      %v3938 = vpop.permute.xlu0 %3937
      %3939 = vrot.lane.b32.xlu0 %v3696, 56
      %v3940 = vpop.permute.xlu0 %3939
      %3941 = vrot.lane.b32.xlu0 %v3710, 56
      %v3942 = vpop.permute.xlu0 %3941
      %3943 = vrot.lane.b32.xlu0 %v3720, 56
      %v3944 = vpop.permute.xlu0 %3943
      %3945 = vrot.lane.b32.xlu0 %v3730, 56
      %v3946 = vpop.permute.xlu0 %3945
      %3947 = vrot.lane.b32.xlu0 %v3740, 56
      %v3948 = vpop.permute.xlu0 %3947
      %3949 = vrot.lane.b32.xlu0 %v3754, 56
      %v3950 = vpop.permute.xlu0 %3949
      %3951 = vrot.lane.b32.xlu0 %v3764, 56
      %v3952 = vpop.permute.xlu0 %3951
      %3953 = vrot.lane.b32.xlu0 %v3774, 56
      %v3954 = vpop.permute.xlu0 %3953
      %3955 = vrot.lane.b32.xlu0 %v3784, 56
      %v3956 = vpop.permute.xlu0 %3955
      %3957 = vrot.lane.b32.xlu0 %v3798, 56
      %v3958 = vpop.permute.xlu0 %3957
      %3959 = vrot.lane.b32.xlu0 %v3808, 56
      %v3960 = vpop.permute.xlu0 %3959
      %3961 = vrot.lane.b32.xlu0 %v3818, 56
      %v3962 = vpop.permute.xlu0 %3961
      %3963 = vrot.lane.b32.xlu0 %v3828, 56
      %v3964 = vpop.permute.xlu0 %3963
      %3965 = vrot.lane.b32.xlu0 %v3842, 56
      %v3966 = vpop.permute.xlu0 %3965
      %3967 = vrot.lane.b32.xlu0 %v3852, 56
      %v3968 = vpop.permute.xlu0 %3967
      %3969 = vrot.lane.b32.xlu0 %v3862, 56
      %v3970 = vpop.permute.xlu0 %3969
      %3971 = vrot.lane.b32.xlu0 %v3872, 56
      %v3972 = vpop.permute.xlu0 %3971
      %3973 = vrot.lane.b32.xlu0 %v3886, 56
      %v3974 = vpop.permute.xlu0 %3973
      %3975 = vrot.lane.b32.xlu0 %v3896, 56
      %v3976 = vpop.permute.xlu0 %3975
      %3977 = vrot.lane.b32.xlu0 %v3906, 56
      %v3978 = vpop.permute.xlu0 %3977
      %3979 = vrot.lane.b32.xlu0 %v3916, 56
      %v3980 = vpop.permute.xlu0 %3979
      %vm4013 = vcmask 519616
      %4014 = vst.msk [vmem:[#allocation3] sm:$0xf] %vm4013, %v3918
      %4015 = vst.msk [vmem:[#allocation3 + $0x4] sm:$0xf] %vm4013, %v3920
      %4016 = vst.msk [vmem:[#allocation3 + $0x8] sm:$0xf] %vm4013, %v3922
      %4017 = vst.msk [vmem:[#allocation3 + $0xc] sm:$0xf] %vm4013, %v3924
      %4018 = vst.msk [vmem:[#allocation3 + $0x10] sm:$0xf] %vm4013, %v3926
      %4019 = vst.msk [vmem:[#allocation3 + $0x14] sm:$0xf] %vm4013, %v3928
      %4020 = vst.msk [vmem:[#allocation3 + $0x18] sm:$0xf] %vm4013, %v3930
      %4021 = vst.msk [vmem:[#allocation3 + $0x1c] sm:$0xf] %vm4013, %v3932
      %4022 = vst.msk [vmem:[#allocation3 + $0x20] sm:$0xf] %vm4013, %v3934
      %4023 = vst.msk [vmem:[#allocation3 + $0x24] sm:$0xf] %vm4013, %v3936
      %4024 = vst.msk [vmem:[#allocation3 + $0x28] sm:$0xf] %vm4013, %v3938
      %4025 = vst.msk [vmem:[#allocation3 + $0x2c] sm:$0xf] %vm4013, %v3940
      %4026 = vst.msk [vmem:[#allocation3 + $0x30] sm:$0xf] %vm4013, %v3942
      %4027 = vst.msk [vmem:[#allocation3 + $0x34] sm:$0xf] %vm4013, %v3944
      %4028 = vst.msk [vmem:[#allocation3 + $0x38] sm:$0xf] %vm4013, %v3946
      %4029 = vst.msk [vmem:[#allocation3 + $0x3c] sm:$0xf] %vm4013, %v3948
      %4030 = vst.msk [vmem:[#allocation3 + $0x40] sm:$0xf] %vm4013, %v3950
      %4031 = vst.msk [vmem:[#allocation3 + $0x44] sm:$0xf] %vm4013, %v3952
      %4032 = vst.msk [vmem:[#allocation3 + $0x48] sm:$0xf] %vm4013, %v3954
      %4033 = vst.msk [vmem:[#allocation3 + $0x4c] sm:$0xf] %vm4013, %v3956
      %4034 = vst.msk [vmem:[#allocation3 + $0x50] sm:$0xf] %vm4013, %v3958
      %4035 = vst.msk [vmem:[#allocation3 + $0x54] sm:$0xf] %vm4013, %v3960
      %4036 = vst.msk [vmem:[#allocation3 + $0x58] sm:$0xf] %vm4013, %v3962
      %4037 = vst.msk [vmem:[#allocation3 + $0x5c] sm:$0xf] %vm4013, %v3964
      %4038 = vst.msk [vmem:[#allocation3 + $0x60] sm:$0xf] %vm4013, %v3966
      %4039 = vst.msk [vmem:[#allocation3 + $0x64] sm:$0xf] %vm4013, %v3968
      %4040 = vst.msk [vmem:[#allocation3 + $0x68] sm:$0xf] %vm4013, %v3970
      %4041 = vst.msk [vmem:[#allocation3 + $0x6c] sm:$0xf] %vm4013, %v3972
      %4042 = vst.msk [vmem:[#allocation3 + $0x70] sm:$0xf] %vm4013, %v3974
      %4043 = vst.msk [vmem:[#allocation3 + $0x74] sm:$0xf] %vm4013, %v3976
      %4044 = vst.msk [vmem:[#allocation3 + $0x78] sm:$0xf] %vm4013, %v3978
      %4045 = vst.msk [vmem:[#allocation3 + $0x7c] sm:$0xf] %vm4013, %v3980
      %v4046 = vld [vmem:[%s3331] sm:$0xe]
      %v4047 = vld [vmem:[%s3331 + $0x4] sm:$0xf]
      %v4048 = vld [vmem:[%s3331 + $0x8] sm:$0xf]
      %v4049 = vld [vmem:[%s3331 + $0xc] sm:$0xf]
      %v4050 = vld [vmem:[%s3331 + $0x10] sm:$0x1]
      %v4051 = vld [vmem:[%s3331 + $0x14] sm:$0xe]
      %v4052 = vld [vmem:[%s3331 + $0x18] sm:$0xf]
      %v4053 = vld [vmem:[%s3331 + $0x1c] sm:$0xf]
      %v4054 = vld [vmem:[%s3331 + $0x20] sm:$0xf]
      %v4055 = vld [vmem:[%s3331 + $0x24] sm:$0x1]
      %v4056 = vld [vmem:[%s3331 + $0x28] sm:$0xe]
      %v4057 = vld [vmem:[%s3331 + $0x2c] sm:$0xf]
      %v4058 = vld [vmem:[%s3331 + $0x30] sm:$0xf]
      %v4059 = vld [vmem:[%s3331 + $0x34] sm:$0xf]
      %v4060 = vld [vmem:[%s3331 + $0x38] sm:$0x1]
      %v4061 = vld [vmem:[%s3331 + $0x3c] sm:$0xe]
      %v4062 = vld [vmem:[%s3331 + $0x40] sm:$0xf]
      %v4063 = vld [vmem:[%s3331 + $0x44] sm:$0xf]
      %v4064 = vld [vmem:[%s3331 + $0x48] sm:$0xf]
      %v4065 = vld [vmem:[%s3331 + $0x4c] sm:$0x1]
      %v4066 = vld [vmem:[%s3331 + $0x50] sm:$0xe]
      %v4067 = vld [vmem:[%s3331 + $0x54] sm:$0xf]
      %v4068 = vld [vmem:[%s3331 + $0x58] sm:$0xf]
      %v4069 = vld [vmem:[%s3331 + $0x5c] sm:$0xf]
      %v4070 = vld [vmem:[%s3331 + $0x60] sm:$0x1]
      %v4071 = vld [vmem:[%s3331 + $0x64] sm:$0xe]
      %v4072 = vld [vmem:[%s3331 + $0x68] sm:$0xf]
      %v4073 = vld [vmem:[%s3331 + $0x6c] sm:$0xf]
      %v4074 = vld [vmem:[%s3331 + $0x70] sm:$0xf]
      %v4075 = vld [vmem:[%s3331 + $0x74] sm:$0x1]
      %v4076 = vld [vmem:[%s3331 + $0x78] sm:$0xe]
      %v4077 = vld [vmem:[%s3331 + $0x7c] sm:$0xf]
      %v4078 = vld [vmem:[%s3331 + $0x80] sm:$0xf]
      %v4079 = vld [vmem:[%s3331 + $0x84] sm:$0xf]
      %v4080 = vld [vmem:[%s3331 + $0x88] sm:$0x1]
      %v4081 = vld [vmem:[%s3331 + $0x8c] sm:$0xe]
      %v4082 = vld [vmem:[%s3331 + $0x90] sm:$0xf]
      %v4083 = vld [vmem:[%s3331 + $0x94] sm:$0xf]
      %v4084 = vld [vmem:[%s3331 + $0x98] sm:$0xf]
      %v4085 = vld [vmem:[%s3331 + $0x9c] sm:$0x1]
      %v4126 = vrot.slane %v4046, 5
      %v4127 = vrot.slane %v4126, 4
      %v4128 = vrot.slane %v4047, 5
      %v4129 = vsel %vm2070, %v4127, %v4128
      %v4130 = vrot.slane %v4128, 4
      %v4131 = vrot.slane %v4048, 5
      %v4132 = vsel %vm2070, %v4130, %v4131
      %v4133 = vrot.slane %v4131, 4
      %v4134 = vrot.slane %v4049, 5
      %v4135 = vsel %vm2070, %v4133, %v4134
      %v4136 = vrot.slane %v4134, 4
      %v4137 = vrot.slane %v4050, 5
      %v4138 = vsel %vm2070, %v4136, %v4137
      %v4139 = vrot.slane %v4051, 5
      %v4140 = vrot.slane %v4139, 4
      %v4141 = vrot.slane %v4052, 5
      %v4142 = vsel %vm2070, %v4140, %v4141
      %v4143 = vrot.slane %v4141, 4
      %v4144 = vrot.slane %v4053, 5
      %v4145 = vsel %vm2070, %v4143, %v4144
      %v4146 = vrot.slane %v4144, 4
      %v4147 = vrot.slane %v4054, 5
      %v4148 = vsel %vm2070, %v4146, %v4147
      %v4149 = vrot.slane %v4147, 4
      %v4150 = vrot.slane %v4055, 5
      %v4151 = vsel %vm2070, %v4149, %v4150
      %v4152 = vrot.slane %v4056, 5
      %v4153 = vrot.slane %v4152, 4
      %v4154 = vrot.slane %v4057, 5
      %v4155 = vsel %vm2070, %v4153, %v4154
      %v4156 = vrot.slane %v4154, 4
      %v4157 = vrot.slane %v4058, 5
      %v4158 = vsel %vm2070, %v4156, %v4157
      %v4159 = vrot.slane %v4157, 4
      %v4160 = vrot.slane %v4059, 5
      %v4161 = vsel %vm2070, %v4159, %v4160
      %v4162 = vrot.slane %v4160, 4
      %v4163 = vrot.slane %v4060, 5
      %v4164 = vsel %vm2070, %v4162, %v4163
      %v4165 = vrot.slane %v4061, 5
      %v4166 = vrot.slane %v4165, 4
      %v4167 = vrot.slane %v4062, 5
      %v4168 = vsel %vm2070, %v4166, %v4167
      %v4169 = vrot.slane %v4167, 4
      %v4170 = vrot.slane %v4063, 5
      %v4171 = vsel %vm2070, %v4169, %v4170
      %v4172 = vrot.slane %v4170, 4
      %v4173 = vrot.slane %v4064, 5
      %v4174 = vsel %vm2070, %v4172, %v4173
      %v4175 = vrot.slane %v4173, 4
      %v4176 = vrot.slane %v4065, 5
      %v4177 = vsel %vm2070, %v4175, %v4176
      %v4178 = vrot.slane %v4066, 5
      %v4179 = vrot.slane %v4178, 4
      %v4180 = vrot.slane %v4067, 5
      %v4181 = vsel %vm2070, %v4179, %v4180
      %v4182 = vrot.slane %v4180, 4
      %v4183 = vrot.slane %v4068, 5
      %v4184 = vsel %vm2070, %v4182, %v4183
      %v4185 = vrot.slane %v4183, 4
      %v4186 = vrot.slane %v4069, 5
      %v4187 = vsel %vm2070, %v4185, %v4186
      %v4188 = vrot.slane %v4186, 4
      %v4189 = vrot.slane %v4070, 5
      %v4190 = vsel %vm2070, %v4188, %v4189
      %v4191 = vrot.slane %v4071, 5
      %v4192 = vrot.slane %v4191, 4
      %v4193 = vrot.slane %v4072, 5
      %v4194 = vsel %vm2070, %v4192, %v4193
      %v4195 = vrot.slane %v4193, 4
      %v4196 = vrot.slane %v4073, 5
      %v4197 = vsel %vm2070, %v4195, %v4196
      %v4198 = vrot.slane %v4196, 4
      %v4199 = vrot.slane %v4074, 5
      %v4200 = vsel %vm2070, %v4198, %v4199
      %v4201 = vrot.slane %v4199, 4
      %v4202 = vrot.slane %v4075, 5
      %v4203 = vsel %vm2070, %v4201, %v4202
      %v4204 = vrot.slane %v4076, 5
      %v4205 = vrot.slane %v4204, 4
      %v4206 = vrot.slane %v4077, 5
      %v4207 = vsel %vm2070, %v4205, %v4206
      %v4208 = vrot.slane %v4206, 4
      %v4209 = vrot.slane %v4078, 5
      %v4210 = vsel %vm2070, %v4208, %v4209
      %v4211 = vrot.slane %v4209, 4
      %v4212 = vrot.slane %v4079, 5
      %v4213 = vsel %vm2070, %v4211, %v4212
      %v4214 = vrot.slane %v4212, 4
      %v4215 = vrot.slane %v4080, 5
      %v4216 = vsel %vm2070, %v4214, %v4215
      %v4217 = vrot.slane %v4081, 5
      %v4218 = vrot.slane %v4217, 4
      %v4219 = vrot.slane %v4082, 5
      %v4220 = vsel %vm2070, %v4218, %v4219
      %v4221 = vrot.slane %v4219, 4
      %v4222 = vrot.slane %v4083, 5
      %v4223 = vsel %vm2070, %v4221, %v4222
      %v4224 = vrot.slane %v4222, 4
      %v4225 = vrot.slane %v4084, 5
      %v4226 = vsel %vm2070, %v4224, %v4225
      %v4227 = vrot.slane %v4225, 4
      %v4228 = vrot.slane %v4085, 5
      %v4229 = vsel %vm2070, %v4227, %v4228
      %4230 = vrot.lane.b32.xlu0 %v4129, 64
      %v4231 = vpop.permute.xlu0 %4230
      %4232 = vrot.lane.b32.xlu0 %v4132, 64
      %v4233 = vpop.permute.xlu0 %4232
      %4234 = vrot.lane.b32.xlu0 %v4135, 64
      %v4235 = vpop.permute.xlu0 %4234
      %4236 = vrot.lane.b32.xlu0 %v4138, 64
      %v4237 = vpop.permute.xlu0 %4236
      %4238 = vrot.lane.b32.xlu0 %v4142, 64
      %v4239 = vpop.permute.xlu0 %4238
      %4240 = vrot.lane.b32.xlu0 %v4145, 64
      %v4241 = vpop.permute.xlu0 %4240
      %4242 = vrot.lane.b32.xlu0 %v4148, 64
      %v4243 = vpop.permute.xlu0 %4242
      %4244 = vrot.lane.b32.xlu0 %v4151, 64
      %v4245 = vpop.permute.xlu0 %4244
      %4246 = vrot.lane.b32.xlu0 %v4155, 64
      %v4247 = vpop.permute.xlu0 %4246
      %4248 = vrot.lane.b32.xlu0 %v4158, 64
      %v4249 = vpop.permute.xlu0 %4248
      %4250 = vrot.lane.b32.xlu0 %v4161, 64
      %v4251 = vpop.permute.xlu0 %4250
      %4252 = vrot.lane.b32.xlu0 %v4164, 64
      %v4253 = vpop.permute.xlu0 %4252
      %4254 = vrot.lane.b32.xlu0 %v4168, 64
      %v4255 = vpop.permute.xlu0 %4254
      %4256 = vrot.lane.b32.xlu0 %v4171, 64
      %v4257 = vpop.permute.xlu0 %4256
      %4258 = vrot.lane.b32.xlu0 %v4174, 64
      %v4259 = vpop.permute.xlu0 %4258
      %4260 = vrot.lane.b32.xlu0 %v4177, 64
      %v4261 = vpop.permute.xlu0 %4260
      %4262 = vrot.lane.b32.xlu0 %v4181, 64
      %v4263 = vpop.permute.xlu0 %4262
      %4264 = vrot.lane.b32.xlu0 %v4184, 64
      %v4265 = vpop.permute.xlu0 %4264
      %4266 = vrot.lane.b32.xlu0 %v4187, 64
      %v4267 = vpop.permute.xlu0 %4266
      %4268 = vrot.lane.b32.xlu0 %v4190, 64
      %v4269 = vpop.permute.xlu0 %4268
      %4270 = vrot.lane.b32.xlu0 %v4194, 64
      %v4271 = vpop.permute.xlu0 %4270
      %4272 = vrot.lane.b32.xlu0 %v4197, 64
      %v4273 = vpop.permute.xlu0 %4272
      %4274 = vrot.lane.b32.xlu0 %v4200, 64
      %v4275 = vpop.permute.xlu0 %4274
      %4276 = vrot.lane.b32.xlu0 %v4203, 64
      %v4277 = vpop.permute.xlu0 %4276
      %4278 = vrot.lane.b32.xlu0 %v4207, 64
      %v4279 = vpop.permute.xlu0 %4278
      %4280 = vrot.lane.b32.xlu0 %v4210, 64
      %v4281 = vpop.permute.xlu0 %4280
      %4282 = vrot.lane.b32.xlu0 %v4213, 64
      %v4283 = vpop.permute.xlu0 %4282
      %4284 = vrot.lane.b32.xlu0 %v4216, 64
      %v4285 = vpop.permute.xlu0 %4284
      %4286 = vrot.lane.b32.xlu0 %v4220, 64
      %v4287 = vpop.permute.xlu0 %4286
      %4288 = vrot.lane.b32.xlu0 %v4223, 64
      %v4289 = vpop.permute.xlu0 %4288
      %4290 = vrot.lane.b32.xlu0 %v4226, 64
      %v4291 = vpop.permute.xlu0 %4290
      %4292 = vrot.lane.b32.xlu0 %v4229, 64
      %v4293 = vpop.permute.xlu0 %4292
      %vm4326 = vcmask 585216
      %4327 = vst.msk [vmem:[#allocation3] sm:$0xf] %vm4326, %v4231
      %4328 = vst.msk [vmem:[#allocation3 + $0x4] sm:$0xf] %vm4326, %v4233
      %4329 = vst.msk [vmem:[#allocation3 + $0x8] sm:$0xf] %vm4326, %v4235
      %4330 = vst.msk [vmem:[#allocation3 + $0xc] sm:$0xf] %vm4326, %v4237
      %4331 = vst.msk [vmem:[#allocation3 + $0x10] sm:$0xf] %vm4326, %v4239
      %4332 = vst.msk [vmem:[#allocation3 + $0x14] sm:$0xf] %vm4326, %v4241
      %4333 = vst.msk [vmem:[#allocation3 + $0x18] sm:$0xf] %vm4326, %v4243
      %4334 = vst.msk [vmem:[#allocation3 + $0x1c] sm:$0xf] %vm4326, %v4245
      %4335 = vst.msk [vmem:[#allocation3 + $0x20] sm:$0xf] %vm4326, %v4247
      %4336 = vst.msk [vmem:[#allocation3 + $0x24] sm:$0xf] %vm4326, %v4249
      %4337 = vst.msk [vmem:[#allocation3 + $0x28] sm:$0xf] %vm4326, %v4251
      %4338 = vst.msk [vmem:[#allocation3 + $0x2c] sm:$0xf] %vm4326, %v4253
      %4339 = vst.msk [vmem:[#allocation3 + $0x30] sm:$0xf] %vm4326, %v4255
      %4340 = vst.msk [vmem:[#allocation3 + $0x34] sm:$0xf] %vm4326, %v4257
      %4341 = vst.msk [vmem:[#allocation3 + $0x38] sm:$0xf] %vm4326, %v4259
      %4342 = vst.msk [vmem:[#allocation3 + $0x3c] sm:$0xf] %vm4326, %v4261
      %4343 = vst.msk [vmem:[#allocation3 + $0x40] sm:$0xf] %vm4326, %v4263
      %4344 = vst.msk [vmem:[#allocation3 + $0x44] sm:$0xf] %vm4326, %v4265
      %4345 = vst.msk [vmem:[#allocation3 + $0x48] sm:$0xf] %vm4326, %v4267
      %4346 = vst.msk [vmem:[#allocation3 + $0x4c] sm:$0xf] %vm4326, %v4269
      %4347 = vst.msk [vmem:[#allocation3 + $0x50] sm:$0xf] %vm4326, %v4271
      %4348 = vst.msk [vmem:[#allocation3 + $0x54] sm:$0xf] %vm4326, %v4273
      %4349 = vst.msk [vmem:[#allocation3 + $0x58] sm:$0xf] %vm4326, %v4275
      %4350 = vst.msk [vmem:[#allocation3 + $0x5c] sm:$0xf] %vm4326, %v4277
      %4351 = vst.msk [vmem:[#allocation3 + $0x60] sm:$0xf] %vm4326, %v4279
      %4352 = vst.msk [vmem:[#allocation3 + $0x64] sm:$0xf] %vm4326, %v4281
      %4353 = vst.msk [vmem:[#allocation3 + $0x68] sm:$0xf] %vm4326, %v4283
      %4354 = vst.msk [vmem:[#allocation3 + $0x6c] sm:$0xf] %vm4326, %v4285
      %4355 = vst.msk [vmem:[#allocation3 + $0x70] sm:$0xf] %vm4326, %v4287
      %4356 = vst.msk [vmem:[#allocation3 + $0x74] sm:$0xf] %vm4326, %v4289
      %4357 = vst.msk [vmem:[#allocation3 + $0x78] sm:$0xf] %vm4326, %v4291
      %4358 = vst.msk [vmem:[#allocation3 + $0x7c] sm:$0xf] %vm4326, %v4293
      %v4359 = vld [vmem:[#allocation3] sm:$0xf]
      %v4360 = vld [vmem:[#allocation3 + $0x4] sm:$0xf]
      %v4361 = vld [vmem:[#allocation3 + $0x8] sm:$0xf]
      %v4362 = vld [vmem:[#allocation3 + $0xc] sm:$0xf]
      %v4363 = vld [vmem:[#allocation3 + $0x10] sm:$0xf]
      %v4364 = vld [vmem:[#allocation3 + $0x14] sm:$0xf]
      %v4365 = vld [vmem:[#allocation3 + $0x18] sm:$0xf]
      %v4366 = vld [vmem:[#allocation3 + $0x1c] sm:$0xf]
      %v4367 = vld [vmem:[#allocation3 + $0x20] sm:$0xf]
      %v4368 = vld [vmem:[#allocation3 + $0x24] sm:$0xf]
      %v4369 = vld [vmem:[#allocation3 + $0x28] sm:$0xf]
      %v4370 = vld [vmem:[#allocation3 + $0x2c] sm:$0xf]
      %v4371 = vld [vmem:[#allocation3 + $0x30] sm:$0xf]
      %v4372 = vld [vmem:[#allocation3 + $0x34] sm:$0xf]
      %v4373 = vld [vmem:[#allocation3 + $0x38] sm:$0xf]
      %v4374 = vld [vmem:[#allocation3 + $0x3c] sm:$0xf]
      %v4375 = vld [vmem:[#allocation3 + $0x40] sm:$0xf]
      %v4376 = vld [vmem:[#allocation3 + $0x44] sm:$0xf]
      %v4377 = vld [vmem:[#allocation3 + $0x48] sm:$0xf]
      %v4378 = vld [vmem:[#allocation3 + $0x4c] sm:$0xf]
      %v4379 = vld [vmem:[#allocation3 + $0x50] sm:$0xf]
      %v4380 = vld [vmem:[#allocation3 + $0x54] sm:$0xf]
      %v4381 = vld [vmem:[#allocation3 + $0x58] sm:$0xf]
      %v4382 = vld [vmem:[#allocation3 + $0x5c] sm:$0xf]
      %v4383 = vld [vmem:[#allocation3 + $0x60] sm:$0xf]
      %v4384 = vld [vmem:[#allocation3 + $0x64] sm:$0xf]
      %v4385 = vld [vmem:[#allocation3 + $0x68] sm:$0xf]
      %v4386 = vld [vmem:[#allocation3 + $0x6c] sm:$0xf]
      %v4387 = vld [vmem:[#allocation3 + $0x70] sm:$0xf]
      %v4388 = vld [vmem:[#allocation3 + $0x74] sm:$0xf]
      %v4389 = vld [vmem:[#allocation3 + $0x78] sm:$0xf]
      %v4390 = vld [vmem:[#allocation3 + $0x7c] sm:$0xf]
      %v4391 = vld [vmem:[%s5] sm:$0xf]
      %v4392 = vld [vmem:[%s5 + $0x4] sm:$0xf]
      %v4393 = vld [vmem:[%s5 + $0x8] sm:$0xf]
      %v4394 = vld [vmem:[%s5 + $0xc] sm:$0xf]
      %v4395 = vld [vmem:[%s5 + $0x10] sm:$0xf]
      %v4396 = vld [vmem:[%s5 + $0x14] sm:$0xf]
      %v4397 = vld [vmem:[%s5 + $0x18] sm:$0xf]
      %v4398 = vld [vmem:[%s5 + $0x1c] sm:$0xf]
      %v4399 = vld [vmem:[%s5 + $0x20] sm:$0xf]
      %v4432 = vunpack.c.l.b16 %v4359
      %v4433 = vunpack.c.l.b16 %v4360
      %v4434 = vunpack.c.l.b16 %v4361
      %v4435 = vunpack.c.l.b16 %v4362
      %v4436 = vunpack.c.l.b16 %v4363
      %v4437 = vunpack.c.l.b16 %v4364
      %v4438 = vunpack.c.l.b16 %v4365
      %v4439 = vunpack.c.l.b16 %v4366
      %v4440 = vunpack.c.l.b16 %v4367
      %v4441 = vunpack.c.l.b16 %v4368
      %v4442 = vunpack.c.l.b16 %v4369
      %v4443 = vunpack.c.l.b16 %v4370
      %v4444 = vunpack.c.l.b16 %v4371
      %v4445 = vunpack.c.l.b16 %v4372
      %v4446 = vunpack.c.l.b16 %v4373
      %v4447 = vunpack.c.l.b16 %v4374
      %v4448 = vunpack.c.l.b16 %v4375
      %v4449 = vunpack.c.l.b16 %v4376
      %v4450 = vunpack.c.l.b16 %v4377
      %v4451 = vunpack.c.l.b16 %v4378
      %v4452 = vunpack.c.l.b16 %v4379
      %v4453 = vunpack.c.l.b16 %v4380
      %v4454 = vunpack.c.l.b16 %v4381
      %v4455 = vunpack.c.l.b16 %v4382
      %v4456 = vunpack.c.l.b16 %v4383
      %v4457 = vunpack.c.l.b16 %v4384
      %v4458 = vunpack.c.l.b16 %v4385
      %v4459 = vunpack.c.l.b16 %v4386
      %v4460 = vunpack.c.l.b16 %v4387
      %v4461 = vunpack.c.l.b16 %v4388
      %v4462 = vunpack.c.l.b16 %v4389
      %v4463 = vunpack.c.l.b16 %v4390
      %v4464 = vpack.c.b16 %v4433, %v4432
      %v4465 = vpack.c.b16 %v4435, %v4434
      %v4466 = vpack.c.b16 %v4437, %v4436
      %v4467 = vpack.c.b16 %v4439, %v4438
      %v4468 = vpack.c.b16 %v4441, %v4440
      %v4469 = vpack.c.b16 %v4443, %v4442
      %v4470 = vpack.c.b16 %v4445, %v4444
      %v4471 = vpack.c.b16 %v4447, %v4446
      %v4472 = vpack.c.b16 %v4449, %v4448
      %v4473 = vpack.c.b16 %v4451, %v4450
      %v4474 = vpack.c.b16 %v4453, %v4452
      %v4475 = vpack.c.b16 %v4455, %v4454
      %v4476 = vpack.c.b16 %v4457, %v4456
      %v4477 = vpack.c.b16 %v4459, %v4458
      %v4478 = vpack.c.b16 %v4461, %v4460
      %v4479 = vpack.c.b16 %v4463, %v4462
      %v4489 = vunpack.c.l.b16 %v4391
      %v4490 = vunpack.c.l.b16 %v4392
      %v4491 = vunpack.c.l.b16 %v4393
      %v4492 = vunpack.c.l.b16 %v4394
      %v4493 = vunpack.c.l.b16 %v4395
      %v4494 = vunpack.c.l.b16 %v4396
      %v4495 = vunpack.c.l.b16 %v4397
      %v4496 = vunpack.c.l.b16 %v4398
      %v4497 = vunpack.c.l.b16 %v4399
      %v4498 = vpack.c.b16 %v4490, %v4489
      %v4499 = vpack.c.b16 %v4492, %v4491
      %v4500 = vpack.c.b16 %v4494, %v4493
      %v4501 = vpack.c.b16 %v4496, %v4495
      %v4502 = vpack.c.b16 %v4497, %v4497
      %vm4507 = vcmask 588800
      %v4509 = vsel %vm4507, %v4464, 0
      %v4512 = vsel %vm4507, %v4465, 0
      %v4515 = vsel %vm4507, %v4466, 0
      %v4518 = vsel %vm4507, %v4467, 0
      %v4521 = vsel %vm4507, %v4468, 0
      %v4524 = vsel %vm4507, %v4469, 0
      %v4527 = vsel %vm4507, %v4470, 0
      %v4530 = vsel %vm4507, %v4471, 0
      %v4533 = vsel %vm4507, %v4472, 0
      %v4536 = vsel %vm4507, %v4473, 0
      %v4539 = vsel %vm4507, %v4474, 0
      %v4542 = vsel %vm4507, %v4475, 0
      %v4545 = vsel %vm4507, %v4476, 0
      %v4548 = vsel %vm4507, %v4477, 0
      %v4551 = vsel %vm4507, %v4478, 0
      %v4554 = vsel %vm4507, %v4479, 0
      %vm4556 = vcmask 1043456
      %v4558 = vsel %vm4556, %v4502, 0
      %4560 = vmatprep.subr.bf16.mxu0 0
      %4561 = vmatpush1.bf16.msra.mxu0 0
      %4562 = vmatprep.subr.bf16.mxu0 0
      %4563 = vmatpush1.bf16.msra.mxu0 0
      %4564 = vmatprep.subr.bf16.mxu0 0
      %4565 = vmatpush1.bf16.msra.mxu0 0
      %4566 = vmatprep.subr.bf16.mxu0 0
      %4567 = vmatpush1.bf16.msra.mxu0 %v4558
      %4568 = vmatprep.subr.bf16.mxu0 0
      %4569 = vmatpush1.bf16.msra.mxu0 %v4501
      %4570 = vmatprep.subr.bf16.mxu0 0
      %4571 = vmatpush1.bf16.msra.mxu0 %v4500
      %4572 = vmatprep.subr.bf16.mxu0 0
      %4573 = vmatpush1.bf16.msra.mxu0 %v4499
      %4574 = vmatprep.subr.bf16.mxu0 0
      %4575 = vmatpush1.bf16.msra.mxu0 %v4498
      %4576 = vmatprep.subr.bf16.mxu0 0
      %4577 = vmatpush2.bf16.msra.mxu0 0
      %4578 = vmatprep.subr.bf16.mxu0 0
      %4579 = vmatpush2.bf16.msra.mxu0 0
      %4580 = vmatprep.subr.bf16.mxu0 0
      %4581 = vmatpush2.bf16.msra.mxu0 0
      %4582 = vmatprep.subr.bf16.mxu0 0
      %4583 = vmatpush2.bf16.msra.mxu0 0
      %4584 = vmatprep.subr.bf16.mxu0 0
      %4585 = vmatpush2.bf16.msra.mxu0 0
      %4586 = vmatprep.subr.bf16.mxu0 0
      %4587 = vmatpush2.bf16.msra.mxu0 0
      %4588 = vmatprep.subr.bf16.mxu0 0
      %4589 = vmatpush2.bf16.msra.mxu0 0
      %4590 = vmatprep.subr.bf16.mxu0 0
      %4591 = vmatpush2.bf16.msra.mxu0 0
      %4592 = vmatprep.mubr.bf16.mxu0 0
      %4593 = vmatmul.mubr.bf16.gmra.mxu0 %v4509
      %v4594 = vpop.f32.mrf.mxu0
      %v4595 = vadd.f32 0.0, %v4594
      %v4596 = vpop.f32.mrf.mxu0
      %v4597 = vpop.f32.mrf.mxu0
      %v4598 = vadd.f32 0.0, %v4597
      %v4599 = vpop.f32.mrf.mxu0
      %4600 = vmatprep.mubr.bf16.mxu0 0
      %4601 = vmatmul.mubr.bf16.gmra.mxu0 %v4512
      %v4602 = vpop.f32.mrf.mxu0
      %v4603 = vadd.f32 0.0, %v4602
      %v4604 = vpop.f32.mrf.mxu0
      %v4605 = vpop.f32.mrf.mxu0
      %v4606 = vadd.f32 0.0, %v4605
      %v4607 = vpop.f32.mrf.mxu0
      %4608 = vmatprep.mubr.bf16.mxu0 0
      %4609 = vmatmul.mubr.bf16.gmra.mxu0 %v4515
      %v4610 = vpop.f32.mrf.mxu0
      %v4611 = vadd.f32 0.0, %v4610
      %v4612 = vpop.f32.mrf.mxu0
      %v4613 = vpop.f32.mrf.mxu0
      %v4614 = vadd.f32 0.0, %v4613
      %v4615 = vpop.f32.mrf.mxu0
      %4616 = vmatprep.mubr.bf16.mxu0 0
      %4617 = vmatmul.mubr.bf16.gmra.mxu0 %v4518
      %v4618 = vpop.f32.mrf.mxu0
      %v4619 = vadd.f32 0.0, %v4618
      %v4620 = vpop.f32.mrf.mxu0
      %v4621 = vpop.f32.mrf.mxu0
      %v4622 = vadd.f32 0.0, %v4621
      %v4623 = vpop.f32.mrf.mxu0
      %4624 = vmatprep.mubr.bf16.mxu0 0
      %4625 = vmatmul.mubr.bf16.gmra.mxu0 %v4521
      %v4626 = vpop.f32.mrf.mxu0
      %v4627 = vadd.f32 0.0, %v4626
      %v4628 = vpop.f32.mrf.mxu0
      %v4629 = vpop.f32.mrf.mxu0
      %v4630 = vadd.f32 0.0, %v4629
      %v4631 = vpop.f32.mrf.mxu0
      %4632 = vmatprep.mubr.bf16.mxu0 0
      %4633 = vmatmul.mubr.bf16.gmra.mxu0 %v4524
      %v4634 = vpop.f32.mrf.mxu0
      %v4635 = vadd.f32 0.0, %v4634
      %v4636 = vpop.f32.mrf.mxu0
      %v4637 = vpop.f32.mrf.mxu0
      %v4638 = vadd.f32 0.0, %v4637
      %v4639 = vpop.f32.mrf.mxu0
      %4640 = vmatprep.mubr.bf16.mxu0 0
      %4641 = vmatmul.mubr.bf16.gmra.mxu0 %v4527
      %v4642 = vpop.f32.mrf.mxu0
      %v4643 = vadd.f32 0.0, %v4642
      %v4644 = vpop.f32.mrf.mxu0
      %v4645 = vpop.f32.mrf.mxu0
      %v4646 = vadd.f32 0.0, %v4645
      %v4647 = vpop.f32.mrf.mxu0
      %4648 = vmatprep.mubr.bf16.mxu0 0
      %4649 = vmatmul.mubr.bf16.gmra.mxu0 %v4530
      %v4650 = vpop.f32.mrf.mxu0
      %v4651 = vadd.f32 0.0, %v4650
      %v4652 = vpop.f32.mrf.mxu0
      %v4653 = vpop.f32.mrf.mxu0
      %v4654 = vadd.f32 0.0, %v4653
      %v4655 = vpop.f32.mrf.mxu0
      %4656 = vmatprep.mubr.bf16.mxu0 0
      %4657 = vmatmul.mubr.bf16.gmra.mxu0 %v4533
      %v4658 = vpop.f32.mrf.mxu0
      %v4659 = vadd.f32 0.0, %v4658
      %v4660 = vpop.f32.mrf.mxu0
      %v4661 = vpop.f32.mrf.mxu0
      %v4662 = vadd.f32 0.0, %v4661
      %v4663 = vpop.f32.mrf.mxu0
      %4664 = vmatprep.mubr.bf16.mxu0 0
      %4665 = vmatmul.mubr.bf16.gmra.mxu0 %v4536
      %v4666 = vpop.f32.mrf.mxu0
      %v4667 = vadd.f32 0.0, %v4666
      %v4668 = vpop.f32.mrf.mxu0
      %v4669 = vpop.f32.mrf.mxu0
      %v4670 = vadd.f32 0.0, %v4669
      %v4671 = vpop.f32.mrf.mxu0
      %4672 = vmatprep.mubr.bf16.mxu0 0
      %4673 = vmatmul.mubr.bf16.gmra.mxu0 %v4539
      %v4674 = vpop.f32.mrf.mxu0
      %v4675 = vadd.f32 0.0, %v4674
      %v4676 = vpop.f32.mrf.mxu0
      %v4677 = vpop.f32.mrf.mxu0
      %v4678 = vadd.f32 0.0, %v4677
      %v4679 = vpop.f32.mrf.mxu0
      %4680 = vmatprep.mubr.bf16.mxu0 0
      %4681 = vmatmul.mubr.bf16.gmra.mxu0 %v4542
      %v4682 = vpop.f32.mrf.mxu0
      %v4683 = vadd.f32 0.0, %v4682
      %v4684 = vpop.f32.mrf.mxu0
      %v4685 = vpop.f32.mrf.mxu0
      %v4686 = vadd.f32 0.0, %v4685
      %v4687 = vpop.f32.mrf.mxu0
      %4688 = vmatprep.mubr.bf16.mxu0 0
      %4689 = vmatmul.mubr.bf16.gmra.mxu0 %v4545
      %v4690 = vpop.f32.mrf.mxu0
      %v4691 = vadd.f32 0.0, %v4690
      %v4692 = vpop.f32.mrf.mxu0
      %v4693 = vpop.f32.mrf.mxu0
      %v4694 = vadd.f32 0.0, %v4693
      %v4695 = vpop.f32.mrf.mxu0
      %4696 = vmatprep.mubr.bf16.mxu0 0
      %4697 = vmatmul.mubr.bf16.gmra.mxu0 %v4548
      %v4698 = vpop.f32.mrf.mxu0
      %v4699 = vadd.f32 0.0, %v4698
      %v4700 = vpop.f32.mrf.mxu0
      %v4701 = vpop.f32.mrf.mxu0
      %v4702 = vadd.f32 0.0, %v4701
      %v4703 = vpop.f32.mrf.mxu0
      %4704 = vmatprep.mubr.bf16.mxu0 0
      %4705 = vmatmul.mubr.bf16.gmra.mxu0 %v4551
      %v4706 = vpop.f32.mrf.mxu0
      %v4707 = vadd.f32 0.0, %v4706
      %v4708 = vpop.f32.mrf.mxu0
      %v4709 = vpop.f32.mrf.mxu0
      %v4710 = vadd.f32 0.0, %v4709
      %v4711 = vpop.f32.mrf.mxu0
      %4712 = vmatprep.mubr.bf16.mxu0 0
      %4713 = vmatmul.mubr.bf16.gmra.mxu0 %v4554
      %v4714 = vpop.f32.mrf.mxu0
      %v4715 = vadd.f32 0.0, %v4714
      %v4716 = vpop.f32.mrf.mxu0
      %v4717 = vpop.f32.mrf.mxu0
      %v4718 = vadd.f32 0.0, %v4717
      %v4719 = vpop.f32.mrf.mxu0
      %4720 = vdwg.mxu0
      %vm4721 = vcmask 64512
      %4722 = vst.msk [vmem:[%s454] sm:$0xff] %vm4721, %v4595
      %4723 = vst.msk [vmem:[%s454 + $0x8] sm:$0xff] %vm4721, %v4598
      %4724 = vst.msk [vmem:[%s454 + $0x10] sm:$0xff] %vm4721, %v4603
      %4725 = vst.msk [vmem:[%s454 + $0x18] sm:$0xff] %vm4721, %v4606
      %4726 = vst.msk [vmem:[%s454 + $0x20] sm:$0xff] %vm4721, %v4611
      %4727 = vst.msk [vmem:[%s454 + $0x28] sm:$0xff] %vm4721, %v4614
      %4728 = vst.msk [vmem:[%s454 + $0x30] sm:$0xff] %vm4721, %v4619
      %4729 = vst.msk [vmem:[%s454 + $0x38] sm:$0xff] %vm4721, %v4622
      %4730 = vst.msk [vmem:[%s454 + $0x40] sm:$0xff] %vm4721, %v4627
      %4731 = vst.msk [vmem:[%s454 + $0x48] sm:$0xff] %vm4721, %v4630
      %4732 = vst.msk [vmem:[%s454 + $0x50] sm:$0xff] %vm4721, %v4635
      %4733 = vst.msk [vmem:[%s454 + $0x58] sm:$0xff] %vm4721, %v4638
      %4734 = vst.msk [vmem:[%s454 + $0x60] sm:$0xff] %vm4721, %v4643
      %4735 = vst.msk [vmem:[%s454 + $0x68] sm:$0xff] %vm4721, %v4646
      %4736 = vst.msk [vmem:[%s454 + $0x70] sm:$0xff] %vm4721, %v4651
      %4737 = vst.msk [vmem:[%s454 + $0x78] sm:$0xff] %vm4721, %v4654
      %4738 = vst.msk [vmem:[%s454 + $0x80] sm:$0xff] %vm4721, %v4659
      %4739 = vst.msk [vmem:[%s454 + $0x88] sm:$0xff] %vm4721, %v4662
      %4740 = vst.msk [vmem:[%s454 + $0x90] sm:$0xff] %vm4721, %v4667
      %4741 = vst.msk [vmem:[%s454 + $0x98] sm:$0xff] %vm4721, %v4670
      %4742 = vst.msk [vmem:[%s454 + $0xa0] sm:$0xff] %vm4721, %v4675
      %4743 = vst.msk [vmem:[%s454 + $0xa8] sm:$0xff] %vm4721, %v4678
      %4744 = vst.msk [vmem:[%s454 + $0xb0] sm:$0xff] %vm4721, %v4683
      %4745 = vst.msk [vmem:[%s454 + $0xb8] sm:$0xff] %vm4721, %v4686
      %4746 = vst.msk [vmem:[%s454 + $0xc0] sm:$0xff] %vm4721, %v4691
      %4747 = vst.msk [vmem:[%s454 + $0xc8] sm:$0xff] %vm4721, %v4694
      %4748 = vst.msk [vmem:[%s454 + $0xd0] sm:$0xff] %vm4721, %v4699
      %4749 = vst.msk [vmem:[%s454 + $0xd8] sm:$0xff] %vm4721, %v4702
      %4750 = vst.msk [vmem:[%s454 + $0xe0] sm:$0xff] %vm4721, %v4707
      %4751 = vst.msk [vmem:[%s454 + $0xe8] sm:$0xff] %vm4721, %v4710
      %4752 = vst.msk [vmem:[%s454 + $0xf0] sm:$0xff] %vm4721, %v4715
      %4753 = vst.msk [vmem:[%s454 + $0xf8] sm:$0xff] %vm4721, %v4718
      %v4754 = vsel %vm4721, %v4595, 0.0
      %v4755 = vsel %vm4721, %v4598, 0.0
      %v4756 = vadd.f32 %v4754, %v4755
      %v4757 = vsel %vm4721, %v4603, 0.0
      %v4758 = vadd.f32 %v4756, %v4757
      %v4759 = vsel %vm4721, %v4606, 0.0
      %v4760 = vadd.f32 %v4758, %v4759
      %v4761 = vsel %vm4721, %v4611, 0.0
      %v4762 = vadd.f32 %v4760, %v4761
      %v4763 = vsel %vm4721, %v4614, 0.0
      %v4764 = vadd.f32 %v4762, %v4763
      %v4765 = vsel %vm4721, %v4619, 0.0
      %v4766 = vadd.f32 %v4764, %v4765
      %v4767 = vsel %vm4721, %v4622, 0.0
      %v4768 = vadd.f32 %v4766, %v4767
      %v4769 = vsel %vm4721, %v4627, 0.0
      %v4770 = vadd.f32 %v4768, %v4769
      %v4771 = vsel %vm4721, %v4630, 0.0
      %v4772 = vadd.f32 %v4770, %v4771
      %v4773 = vsel %vm4721, %v4635, 0.0
      %v4774 = vadd.f32 %v4772, %v4773
      %v4775 = vsel %vm4721, %v4638, 0.0
      %v4776 = vadd.f32 %v4774, %v4775
      %v4777 = vsel %vm4721, %v4643, 0.0
      %v4778 = vadd.f32 %v4776, %v4777
      %v4779 = vsel %vm4721, %v4646, 0.0
      %v4780 = vadd.f32 %v4778, %v4779
      %v4781 = vsel %vm4721, %v4651, 0.0
      %v4782 = vadd.f32 %v4780, %v4781
      %v4783 = vsel %vm4721, %v4654, 0.0
      %v4784 = vadd.f32 %v4782, %v4783
      %v4785 = vsel %vm4721, %v4659, 0.0
      %v4786 = vadd.f32 %v4784, %v4785
      %v4787 = vsel %vm4721, %v4662, 0.0
      %v4788 = vadd.f32 %v4786, %v4787
      %v4789 = vsel %vm4721, %v4667, 0.0
      %v4790 = vadd.f32 %v4788, %v4789
      %v4791 = vsel %vm4721, %v4670, 0.0
      %v4792 = vadd.f32 %v4790, %v4791
      %v4793 = vsel %vm4721, %v4675, 0.0
      %v4794 = vadd.f32 %v4792, %v4793
      %v4795 = vsel %vm4721, %v4678, 0.0
      %v4796 = vadd.f32 %v4794, %v4795
      %v4797 = vsel %vm4721, %v4683, 0.0
      %v4798 = vadd.f32 %v4796, %v4797
      %v4799 = vsel %vm4721, %v4686, 0.0
      %v4800 = vadd.f32 %v4798, %v4799
      %v4801 = vsel %vm4721, %v4691, 0.0
      %v4802 = vadd.f32 %v4800, %v4801
      %v4803 = vsel %vm4721, %v4694, 0.0
      %v4804 = vadd.f32 %v4802, %v4803
      %v4805 = vsel %vm4721, %v4699, 0.0
      %v4806 = vadd.f32 %v4804, %v4805
      %v4807 = vsel %vm4721, %v4702, 0.0
      %v4808 = vadd.f32 %v4806, %v4807
      %v4809 = vsel %vm4721, %v4707, 0.0
      %v4810 = vadd.f32 %v4808, %v4809
      %v4811 = vsel %vm4721, %v4710, 0.0
      %v4812 = vadd.f32 %v4810, %v4811
      %v4813 = vsel %vm4721, %v4715, 0.0
      %v4814 = vadd.f32 %v4812, %v4813
      %v4815 = vsel %vm4721, %v4718, 0.0
      %v4816 = vadd.f32 %v4814, %v4815
      %v4817 = vrot.slane %v4816, 4
      %v4818 = vadd.f32 %v4816, %v4817
      %v4819 = vrot.slane %v4818, 2
      %v4820 = vadd.f32 %v4818, %v4819
      %v4821 = vrot.slane %v4820, 1
      %v4822 = vadd.f32 %v4820, %v4821
      %4823 = vst.msk [vmem:[%s463] sm:$0x1] %vm472, %v4822
      %v4824 = vmul.f32 %v4595, %v4595
      %v4825 = vmul.f32 %v4598, %v4598
      %v4826 = vmul.f32 %v4603, %v4603
      %v4827 = vmul.f32 %v4606, %v4606
      %v4828 = vmul.f32 %v4611, %v4611
      %v4829 = vmul.f32 %v4614, %v4614
      %v4830 = vmul.f32 %v4619, %v4619
      %v4831 = vmul.f32 %v4622, %v4622
      %v4832 = vmul.f32 %v4627, %v4627
      %v4833 = vmul.f32 %v4630, %v4630
      %v4834 = vmul.f32 %v4635, %v4635
      %v4835 = vmul.f32 %v4638, %v4638
      %v4836 = vmul.f32 %v4643, %v4643
      %v4837 = vmul.f32 %v4646, %v4646
      %v4838 = vmul.f32 %v4651, %v4651
      %v4839 = vmul.f32 %v4654, %v4654
      %v4840 = vmul.f32 %v4659, %v4659
      %v4841 = vmul.f32 %v4662, %v4662
      %v4842 = vmul.f32 %v4667, %v4667
      %v4843 = vmul.f32 %v4670, %v4670
      %v4844 = vmul.f32 %v4675, %v4675
      %v4845 = vmul.f32 %v4678, %v4678
      %v4846 = vmul.f32 %v4683, %v4683
      %v4847 = vmul.f32 %v4686, %v4686
      %v4848 = vmul.f32 %v4691, %v4691
      %v4849 = vmul.f32 %v4694, %v4694
      %v4850 = vmul.f32 %v4699, %v4699
      %v4851 = vmul.f32 %v4702, %v4702
      %v4852 = vmul.f32 %v4707, %v4707
      %v4853 = vmul.f32 %v4710, %v4710
      %v4854 = vmul.f32 %v4715, %v4715
      %v4855 = vmul.f32 %v4718, %v4718
      %v4856 = vsel %vm4721, %v4824, 0.0
      %v4857 = vsel %vm4721, %v4825, 0.0
      %v4858 = vadd.f32 %v4856, %v4857
      %v4859 = vsel %vm4721, %v4826, 0.0
      %v4860 = vadd.f32 %v4858, %v4859
      %v4861 = vsel %vm4721, %v4827, 0.0
      %v4862 = vadd.f32 %v4860, %v4861
      %v4863 = vsel %vm4721, %v4828, 0.0
      %v4864 = vadd.f32 %v4862, %v4863
      %v4865 = vsel %vm4721, %v4829, 0.0
      %v4866 = vadd.f32 %v4864, %v4865
      %v4867 = vsel %vm4721, %v4830, 0.0
      %v4868 = vadd.f32 %v4866, %v4867
      %v4869 = vsel %vm4721, %v4831, 0.0
      %v4870 = vadd.f32 %v4868, %v4869
      %v4871 = vsel %vm4721, %v4832, 0.0
      %v4872 = vadd.f32 %v4870, %v4871
      %v4873 = vsel %vm4721, %v4833, 0.0
      %v4874 = vadd.f32 %v4872, %v4873
      %v4875 = vsel %vm4721, %v4834, 0.0
      %v4876 = vadd.f32 %v4874, %v4875
      %v4877 = vsel %vm4721, %v4835, 0.0
      %v4878 = vadd.f32 %v4876, %v4877
      %v4879 = vsel %vm4721, %v4836, 0.0
      %v4880 = vadd.f32 %v4878, %v4879
      %v4881 = vsel %vm4721, %v4837, 0.0
      %v4882 = vadd.f32 %v4880, %v4881
      %v4883 = vsel %vm4721, %v4838, 0.0
      %v4884 = vadd.f32 %v4882, %v4883
      %v4885 = vsel %vm4721, %v4839, 0.0
      %v4886 = vadd.f32 %v4884, %v4885
      %v4887 = vsel %vm4721, %v4840, 0.0
      %v4888 = vadd.f32 %v4886, %v4887
      %v4889 = vsel %vm4721, %v4841, 0.0
      %v4890 = vadd.f32 %v4888, %v4889
      %v4891 = vsel %vm4721, %v4842, 0.0
      %v4892 = vadd.f32 %v4890, %v4891
      %v4893 = vsel %vm4721, %v4843, 0.0
      %v4894 = vadd.f32 %v4892, %v4893
      %v4895 = vsel %vm4721, %v4844, 0.0
      %v4896 = vadd.f32 %v4894, %v4895
      %v4897 = vsel %vm4721, %v4845, 0.0
      %v4898 = vadd.f32 %v4896, %v4897
      %v4899 = vsel %vm4721, %v4846, 0.0
      %v4900 = vadd.f32 %v4898, %v4899
      %v4901 = vsel %vm4721, %v4847, 0.0
      %v4902 = vadd.f32 %v4900, %v4901
      %v4903 = vsel %vm4721, %v4848, 0.0
      %v4904 = vadd.f32 %v4902, %v4903
      %v4905 = vsel %vm4721, %v4849, 0.0
      %v4906 = vadd.f32 %v4904, %v4905
      %v4907 = vsel %vm4721, %v4850, 0.0
      %v4908 = vadd.f32 %v4906, %v4907
      %v4909 = vsel %vm4721, %v4851, 0.0
      %v4910 = vadd.f32 %v4908, %v4909
      %v4911 = vsel %vm4721, %v4852, 0.0
      %v4912 = vadd.f32 %v4910, %v4911
      %v4913 = vsel %vm4721, %v4853, 0.0
      %v4914 = vadd.f32 %v4912, %v4913
      %v4915 = vsel %vm4721, %v4854, 0.0
      %v4916 = vadd.f32 %v4914, %v4915
      %v4917 = vsel %vm4721, %v4855, 0.0
      %v4918 = vadd.f32 %v4916, %v4917
      %v4919 = vrot.slane %v4918, 4
      %v4920 = vadd.f32 %v4918, %v4919
      %v4921 = vrot.slane %v4920, 2
      %v4922 = vadd.f32 %v4920, %v4921
      %v4923 = vrot.slane %v4922, 1
      %v4924 = vadd.f32 %v4922, %v4923
      %4925 = vst.msk [vmem:[%s463 + $0x1] sm:$0x1] %vm472, %v4924
      %s4926 = smul.u32 8, %s24
      %p4927 = scmp.lt.s32.totalorder %s23, 1
      %s4928 = scalar_select %p4927, %s23, 1
      %p4929 = scmp.lt.s32.totalorder %s4926, 31
      %s4930 = scalar_select %p4929, %s4926, 31
      %s4931 = smul.addr %s4930, 4
      %s4932 = smul.addr %s4928, 128
      %s4933 = sadd.s32 %s4931, %s4932
      %s4934 = smul.addr %s4933, 8
      %s4935 = scalar_lea.vmem %s6, %s4934
      %p4936 = scmp.lt.s32.totalorder %s23, 1
      %s4937 = scalar_select %p4936, %s23, 1
      %p4938 = scmp.lt.s32.totalorder %s24, 3
      %s4939 = scalar_select %p4938, %s24, 3
      %s4940 = smul.addr %s4937, 4
      %s4941 = sadd.s32 %s4939, %s4940
      %s4942 = smul.addr %s4941, 2
      %s4943 = scalar_lea.vmem %s7, %s4942
      // Predicated region
      $region53: #{unet_up_forward.6} parent=43 // pred_check
        %p4944 = pneg %p210
      $region54: #{unet_up_forward.6} parent=43 // pred_check_branch
        %4946 = sbr.rel (%p4944) target = $region56
      $region55: #{unet_up_forward.6} parent=43 // pred_region
        %s4947 = smul.u32 8, %s24
      $region56: #{unet_up_forward.6} parent=43 // pred_fallthru
        _
      // Predicated region
      $region57: #{unet_up_forward.6} parent=43 // pred_check
        %p4948 = pneg %p238
      $region58: #{unet_up_forward.6} parent=43 // pred_check_branch
        %4950 = sbr.rel (%p4948) target = $region60
      $region59: #{unet_up_forward.6} parent=43 // pred_region
        _
      $region60: #{unet_up_forward.6} parent=43 // pred_fallthru
        _
    $region44: #{unet_up_forward.6} parent=5 // pred_fallthru
      _
    %p4951 = scmp.le.s32.totalorder 2, %s14
    // Predicated region
    $region61: #{unet_up_forward.6} parent=5 // pred_check
      %p4952 = pneg %p4951
    $region62: #{unet_up_forward.6} parent=5 // pred_check_branch
      %4954 = sbr.rel (%p4952) target = $region64
    $region63: #{unet_up_forward.6} parent=5 // pred_region
      %s4955 = ssub.s32 %s14, 2
      // Predicated region
      $region65: #{unet_up_forward.6} parent=63 // pred_check
        %p4956 = pneg %p216
      $region66: #{unet_up_forward.6} parent=63 // pred_check_branch
        %4958 = sbr.rel (%p4956) target = $region68
      $region67: #{unet_up_forward.6} parent=63 // pred_region
        %s4959 = smul.u32 8, %s26
        %p4960 = scmp.lt.s32.totalorder %s25, 1
        %s4961 = scalar_select %p4960, %s25, 1
        %p4962 = scmp.lt.s32.totalorder %s4959, 31
        %s4963 = scalar_select %p4962, %s4959, 31
        %s4964 = smul.addr %s4963, 4
        %s4965 = smul.addr %s4961, 128
        %s4966 = sadd.s32 %s4964, %s4965
        %s4967 = smul.addr %s4966, 8
        %s4968 = scalar_lea.vmem %s6, %s4967
      $region68: #{unet_up_forward.6} parent=63 // pred_fallthru
        _
      // Predicated region
      $region69: #{unet_up_forward.6} parent=63 // pred_check
        %p4969 = pneg %p244
      $region70: #{unet_up_forward.6} parent=63 // pred_check_branch
        %4971 = sbr.rel (%p4969) target = $region72
      $region71: #{unet_up_forward.6} parent=63 // pred_region
        %p4972 = scmp.lt.s32.totalorder %s25, 1
        %s4973 = scalar_select %p4972, %s25, 1
        %p4974 = scmp.lt.s32.totalorder %s26, 3
        %s4975 = scalar_select %p4974, %s26, 3
        %s4976 = smul.addr %s4973, 4
        %s4977 = sadd.s32 %s4975, %s4976
        %s4978 = smul.addr %s4977, 2
        %s4979 = scalar_lea.vmem %s7, %s4978
      $region72: #{unet_up_forward.6} parent=63 // pred_fallthru
        _
    $region64: #{unet_up_forward.6} parent=5 // pred_fallthru
      _
  $region6: #{unet_up_forward.6} parent=0 // loop_footer
    %s18 = sadd.s32 1, %s14
  $region7: #{unet_up_forward.6} parent=0 // loop_footer_branch
    %13 = sbr.rel target = $region3
  $region8: #{unet_up_forward.6} parent=0 // loop_exit
    _

</llo_original>
